<compile_context>
chip_gen: v6e
topology: v6e:2x2x1
jax: 0.10.0
libtpu: 0.0.40
codegen_flags: <defaults>
</compile_context>

<pallas_src>
import functools

import jax
import jax.numpy as jnp
import numpy as np
from jax import lax
from jax.experimental import pallas as pl
from jax.experimental.pallas import tpu as pltpu


_TILE = 128      # anchor / contrast tile size (contrast tile == 128 lanes)
_D_CHUNK = 128   # feature-dim chunk for the online softmax


def _online_update(m, l, g, prod, d_valid):
    """One online-softmax update from a (TI, Dc, TJ) chunk of adc values."""
    # Padded feature dims hold zeros -> contribute exactly 0 to g.
    g = g + jnp.sum(prod, axis=1)                              # (TI, TJ)
    pm = prod if d_valid is None else jnp.where(d_valid, prod, -jnp.inf)
    cmax = jnp.max(pm, axis=1)                                 # (TI, TJ)
    m_new = jnp.maximum(m, cmax)
    l = l * jnp.exp(m - m_new) + jnp.sum(jnp.exp(pm - m_new[:, None, :]), axis=1)
    return m_new, l, g


def _contrastive_kernel(lo_ref, hi_ref, s_col_ref, s_row_ref, pi_ref, pj_ref,
                        out_ref, *, inv_t, d, d_pad, n_real):
    i = pl.program_id(0)
    j = pl.program_id(1)

    # Output block is resident across the whole j sweep (accumulator pattern).
    @pl.when(j == 0)
    def _():
        out_ref[...] = jnp.zeros(out_ref.shape, out_ref.dtype)

    # Only contrast tiles in [lo_i, hi_i) can contain same-attribute points.
    @pl.when((j >= lo_ref[i]) & (j < hi_ref[i]))
    def _():
        ti, tj = out_ref.shape

        m0 = jnp.full((ti, tj), -jnp.inf, jnp.float32)
        l0 = jnp.zeros((ti, tj), jnp.float32)
        g0 = jnp.zeros((ti, tj), jnp.float32)

        nf = d // _D_CHUNK                 # fully-real 128-wide chunks
        tail = d_pad - nf * _D_CHUNK       # 0..128, multiple of 8

        def full_chunk(c, carry):
            mm, ll, gg = carry
            off = pl.multiple_of(c * _D_CHUNK, _D_CHUNK)
            pic = pi_ref[:, pl.ds(off, _D_CHUNK)] * inv_t      # (TI, Dc)
            pjc = pj_ref[pl.ds(off, _D_CHUNK), :]              # (Dc, TJ)
            prod = pic[:, :, None] * pjc[None, :, :]           # (TI, Dc, TJ)
            return _online_update(mm, ll, gg, prod, None)

        if nf > 0:
            m, l, g = lax.fori_loop(0, nf, full_chunk, (m0, l0, g0),
                                    unroll=(nf <= 4))
        else:
            m, l, g = m0, l0, g0

        if tail > 0:
            off = nf * _D_CHUNK                                # static
            pic = pi_ref[:, off:off + tail] * inv_t            # (TI, tail)
            pjc = pj_ref[off:off + tail, :]                    # (tail, TJ)
            prod = pic[:, :, None] * pjc[None, :, :]
            d_valid = None
            if d_pad > d:  # zero-padded feature dims -> drop from max / exp sum
                d_valid = (lax.broadcasted_iota(jnp.int32, (1, tail, 1), 1)
                           + off) < d
            m, l, g = _online_update(m, l, g, prod, d_valid)

        # sum_d log_prob = sum_d adc - D * (row_max + log(sumexp)); l >= 1 so the
        # torch (sumexp == 0) guard is dead and log(l) is always finite.
        row_lp = g - jnp.float32(d) * (m + jnp.log(l))         # (TI, TJ)

        # Same-attribute mask; padded contrast columns excluded by column index
        # (robust to any attribute values, no sentinel collisions).
        col = lax.broadcasted_iota(jnp.int32, (1, tj), 1) + j * _TILE
        mask = (s_col_ref[...] == s_row_ref[...]) & (col < n_real)
        out_ref[...] += jnp.where(mask, row_lp, 0.0)


def _pick_vmem_limit_bytes():
    cap = 64 * 1024 * 1024
    try:
        cap = int(getattr(pltpu.get_tpu_info(), "vmem_capacity_bytes", cap))
    except Exception:
        pass
    # ~85% of physical VMEM, capped (v7x ~54 MiB, v5e/v6e 100 MiB).
    return max(32 * 1024 * 1024, min(int(cap * 0.85), 100 * 1024 * 1024))


def contrastive_loss(points, sensitive_attribute, t):
    """points: (N, D) float; sensitive_attribute: (N,) int; t: python float."""
    points = jnp.asarray(points, jnp.float32)
    s = jnp.asarray(sensitive_attribute).reshape(-1).astype(jnp.int32)
    n, d = points.shape
    tile = _TILE

    # Sort by attribute: the loss is a mean over anchors (permutation invariant),
    # and sorting makes every anchor tile's matches a contiguous tile range.
    order = jnp.argsort(s)
    s_sorted = s[order]
    pts = points[order]

    # Positive counts P_i (O(N log N), no (N, N) intermediate).
    p_cnt = (jnp.searchsorted(s_sorted, s_sorted, side="right")
             - jnp.searchsorted(s_sorted, s_sorted, side="left")).astype(jnp.float32)

    # Pad N to the tile and D to a multiple of 8 (zeros; handled in-kernel).
    n_pad = ((n + tile - 1) // tile) * tile
    d_pad = ((d + 7) // 8) * 8
    num_t = n_pad // tile
    pts = jnp.pad(pts, ((0, n_pad - n), (0, d_pad - d)))
    s_pad = jnp.pad(s_sorted, (0, n_pad - n))
    s_col = s_pad.reshape(n_pad, 1)        # anchors on sublanes
    s_row = s_pad.reshape(1, n_pad)        # contrasts on lanes
    pts_t = pts.T                          # (d_pad, n_pad): contrast tile on lanes

    # Contiguous matching contrast-tile range [lo, hi) per anchor tile.
    starts = jnp.arange(num_t, dtype=jnp.int32) * tile
    ends = jnp.minimum(starts + tile, n) - 1          # last real row per tile
    attr_lo = s_sorted[starts]
    attr_hi = s_sorted[ends]
    lo_elem = jnp.searchsorted(s_sorted, attr_lo, side="left")
    hi_elem = jnp.searchsorted(s_sorted, attr_hi, side="right")
    lo_t = (lo_elem // tile).astype(jnp.int32)
    hi_t = ((hi_elem - 1) // tile + 1).astype(jnp.int32)   # hi_t > lo_t always

    kernel = functools.partial(_contrastive_kernel, inv_t=float(1.0 / t),
                               d=d, d_pad=d_pad, n_real=n)

    def contrast_block(i, j, lo, hi):
        # Clamp so skipped steps map to an already-resident block (no re-DMA).
        jj = jnp.minimum(jnp.maximum(j, lo[i]), hi[i] - 1)
        return (0, jj)

    grid_spec = pltpu.PrefetchScalarGridSpec(
        num_scalar_prefetch=2,
        grid=(num_t, num_t),                        # (anchor tiles, contrast tiles)
        in_specs=[
            pl.BlockSpec((tile, 1), lambda i, j, lo, hi: (i, 0)),       # s_col
            pl.BlockSpec((1, tile), contrast_block),                    # s_row
            pl.BlockSpec((tile, d_pad), lambda i, j, lo, hi: (i, 0)),   # anchor pts
            pl.BlockSpec((d_pad, tile), contrast_block),                # contrast pts^T
        ],
        out_specs=pl.BlockSpec((tile, tile), lambda i, j, lo, hi: (i, 0)),
    )

    out = pl.pallas_call(
        kernel,
        out_shape=jax.ShapeDtypeStruct((n_pad, tile), jnp.float32),
        grid_spec=grid_spec,
        compiler_params=pltpu.CompilerParams(
            dimension_semantics=("parallel", "arbitrary"),   # anchor axis -> megacore
            vmem_limit_bytes=_pick_vmem_limit_bytes(),
        ),
    )(lo_t, hi_t, s_col, s_row, pts, pts_t)

    # out[i, lane] holds lane-partial masked log-prob row sums; finish outside.
    a = out[:n].sum(axis=1)
    return jnp.mean(-a / (p_cnt * p_cnt))


def _reference_loss(points, s, t):
    points = np.asarray(points, dtype=np.float32)
    s = np.asarray(s)
    n = points.shape[0]
    losses = np.zeros((n,), dtype=np.float64)
    for i in range(n):
        p = points[i]
        positives = points[s == s[i]]                      # (P_i, D)
        adc = p * positives / t
        lm = adc.max(axis=1, keepdims=True)
        logits = adc - lm
        es = np.exp(logits).sum(axis=1, keepdims=True)
        log_prob = logits - np.log(es + (es == 0) * 1.0)
        mlp = log_prob.sum(1) / positives.shape[0]
        losses[i] = -mlp.mean()
    return losses.mean()


if __name__ == "__main__":
    key = jax.random.PRNGKey(0)
    k1, k2, k3, k4, k5 = jax.random.split(key, 5)
    T = 0.07

    # Case 1: small single-tile problem (D < 128 -> single unmasked tail chunk).
    N, D = 8, 32
    points = jax.random.normal(k1, (N, D), dtype=jnp.float32)
    attrs = jax.random.randint(k2, (N,), 0, 2, dtype=jnp.int32)
    loss = jax.block_until_ready(contrastive_loss(points, attrs, T))
    ref = _reference_loss(points, attrs, T)
    assert np.allclose(float(loss), ref, rtol=5e-4, atol=5e-4), (float(loss), ref)

    # Case 2: multi-tile, interleaved attributes (exercises sorting, contiguous
    # [lo, hi) contrast ranges, cross-tile accumulation and tile skipping).
    N2, D2 = 384, 32
    points2 = jax.random.normal(k3, (N2, D2), dtype=jnp.float32)
    attrs2 = jax.random.randint(k4, (N2,), 0, 3, dtype=jnp.int32)
    loss2 = jax.block_until_ready(contrastive_loss(points2, attrs2, T))
    ref2 = _reference_loss(points2, attrs2, T)
    assert np.allclose(float(loss2), ref2, rtol=5e-4, atol=5e-4), (float(loss2), ref2)

    # Case 3: D > 128 and not a multiple of 8 (exercises the fori_loop chunking,
    # the masked tail chunk, and padded anchors/contrast columns).
    N3, D3 = 130, 133
    points3 = jax.random.normal(k5, (N3, D3), dtype=jnp.float32)
    attrs3 = jnp.concatenate([jnp.zeros((50,), jnp.int32),
                              jnp.ones((45,), jnp.int32),
                              jnp.full((35,), 7, jnp.int32)])
    loss3 = jax.block_until_ready(contrastive_loss(points3, attrs3, T))
    ref3 = _reference_loss(points3, attrs3, T)
    assert np.allclose(float(loss3), ref3, rtol=5e-4, atol=5e-4), (float(loss3), ref3)

    print("KERNEL_OK")
</pallas_src>

<mosaic_0001>
module attributes {stable_mosaic.version = 11 : i64} {
  func.func @_contrastive_kernel(%arg0: i32, %arg1: i32, %arg2: memref<1xi32, #tpu.memory_space<smem>>, %arg3: memref<1xi32, #tpu.memory_space<smem>>, %arg4: memref<128x1xi32, #tpu.memory_space<vmem>>, %arg5: memref<1x128xi32, #tpu.memory_space<vmem>>, %arg6: memref<128x32xf32, #tpu.memory_space<vmem>>, %arg7: memref<32x128xf32, #tpu.memory_space<vmem>>, %arg8: memref<128x128xf32, #tpu.memory_space<vmem>>) attributes {dimension_semantics = [#tpu.dimension_semantics<parallel>, #tpu.dimension_semantics<arbitrary>], iteration_bounds = array<i64: 1, 1>, scalar_prefetch = 2 : i64, scratch_operands = 0 : i64, tpu.core_type = #tpu.core_type<tc>, window_params = [{transform_indices = @transform_0, window_bounds = array<i64: 128, 1>}, {transform_indices = @transform_1, window_bounds = array<i64: 1, 128>}, {transform_indices = @transform_2, window_bounds = array<i64: 128, 32>}, {transform_indices = @transform_3, window_bounds = array<i64: 32, 128>}, {transform_indices = @transform_4, window_bounds = array<i64: 128, 128>}]} {
    %c0_i32 = arith.constant 0 : i32
    %0 = arith.cmpi eq, %arg1, %c0_i32 : i32
    %1 = arith.extui %0 : i1 to i32
    %c0_i32_0 = arith.constant 0 : i32
    %2 = arith.cmpi ne, %1, %c0_i32_0 : i32
    scf.if %2 {
      %cst = arith.constant 0.000000e+00 : f32
      %12 = vector.broadcast %cst : f32 to vector<128x128xf32>
      %c0 = arith.constant 0 : index
      %c0_2 = arith.constant 0 : index
      %13 = vector.load %arg8[%c0, %c0_2] : memref<128x128xf32, #tpu.memory_space<vmem>>, vector<128x128xf32>
      tpu.vector_store %arg8[%c0, %c0_2], %12 {strides = array<i32>} : memref<128x128xf32, #tpu.memory_space<vmem>>, vector<128x128xf32>,
    } else {
    }
    %3 = arith.index_cast %arg0 : i32 to index
    %4 = memref.load %arg2[%3] : memref<1xi32, #tpu.memory_space<smem>>
    %5 = arith.cmpi sge, %arg1, %4 : i32
    %6 = arith.index_cast %arg0 : i32 to index
    %7 = memref.load %arg3[%6] : memref<1xi32, #tpu.memory_space<smem>>
    %8 = arith.cmpi slt, %arg1, %7 : i32
    %9 = arith.andi %5, %8 : i1
    %10 = arith.extui %9 : i1 to i32
    %c0_i32_1 = arith.constant 0 : i32
    %11 = arith.cmpi ne, %10, %c0_i32_1 : i32
    scf.if %11 {
      %cst = arith.constant 0xFF800000 : f32
      %12 = vector.broadcast %cst : f32 to vector<128x128xf32>
      %cst_2 = arith.constant 0.000000e+00 : f32
      %13 = vector.broadcast %cst_2 : f32 to vector<128x128xf32>
      %cst_3 = arith.constant 0.000000e+00 : f32
      %14 = vector.broadcast %cst_3 : f32 to vector<128x128xf32>
      %c0 = arith.constant 0 : index
      %c0_4 = arith.constant 0 : index
      %15 = vector.load %arg6[%c0, %c0_4] : memref<128x32xf32, #tpu.memory_space<vmem>>, vector<128x32xf32>
      %cst_5 = arith.constant 14.2857141 : f32
      %16 = vector.broadcast %cst_5 : f32 to vector<128x32xf32>
      %17 = arith.mulf %15, %16 : vector<128x32xf32>
      %c0_6 = arith.constant 0 : index
      %c0_7 = arith.constant 0 : index
      %18 = vector.load %arg7[%c0_6, %c0_7] : memref<32x128xf32, #tpu.memory_space<vmem>>, vector<32x128xf32>
      %19 = vector.shape_cast %17 : vector<128x32xf32> to vector<128x32x1xf32>
      %20 = vector.shape_cast %18 : vector<32x128xf32> to vector<1x32x128xf32>
      %21 = vector.broadcast %19 : vector<128x32x1xf32> to vector<128x32x128xf32>
      %22 = vector.broadcast %20 : vector<1x32x128xf32> to vector<128x32x128xf32>
      %23 = arith.mulf %21, %22 : vector<128x32x128xf32>
      %cst_8 = arith.constant dense<0.000000e+00> : vector<128x128xf32>
      %24 = vector.multi_reduction <add>, %23, %cst_8 [1] : vector<128x32x128xf32> to vector<128x128xf32>
      %25 = arith.addf %14, %24 : vector<128x128xf32>
      %cst_9 = arith.constant dense<0xFF800000> : vector<128x128xf32>
      %26 = vector.multi_reduction <maximumf>, %23, %cst_9 [1] : vector<128x32x128xf32> to vector<128x128xf32>
      %27 = arith.maximumf %12, %26 : vector<128x128xf32>
      %28 = arith.subf %12, %27 : vector<128x128xf32>
      %29 = math.exp %28 : vector<128x128xf32>
      %30 = arith.mulf %13, %29 : vector<128x128xf32>
      %31 = vector.shape_cast %27 : vector<128x128xf32> to vector<128x1x128xf32>
      %32 = vector.broadcast %31 : vector<128x1x128xf32> to vector<128x32x128xf32>
      %33 = arith.subf %23, %32 : vector<128x32x128xf32>
      %34 = math.exp %33 : vector<128x32x128xf32>
      %cst_10 = arith.constant dense<0.000000e+00> : vector<128x128xf32>
      %35 = vector.multi_reduction <add>, %34, %cst_10 [1] : vector<128x32x128xf32> to vector<128x128xf32>
      %36 = arith.addf %30, %35 : vector<128x128xf32>
      %37 = math.log %36 : vector<128x128xf32>
      %38 = arith.addf %27, %37 : vector<128x128xf32>
      %cst_11 = arith.constant 3.200000e+01 : f32
      %39 = vector.broadcast %cst_11 : f32 to vector<128x128xf32>
      %40 = arith.mulf %39, %38 : vector<128x128xf32>
      %41 = arith.subf %25, %40 : vector<128x128xf32>
      %42 = tpu.iota {dimensions = array<i32: 1>} : vector<1x128xi32>
      %c128_i32 = arith.constant 128 : i32
      %43 = arith.muli %arg1, %c128_i32 : i32
      %44 = vector.broadcast %43 : i32 to vector<1x128xi32>
      %45 = arith.addi %42, %44 : vector<1x128xi32>
      %c0_12 = arith.constant 0 : index
      %c0_13 = arith.constant 0 : index
      %46 = vector.load %arg4[%c0_12, %c0_13] : memref<128x1xi32, #tpu.memory_space<vmem>>, vector<128x1xi32>
      %c0_14 = arith.constant 0 : index
      %c0_15 = arith.constant 0 : index
      %47 = vector.load %arg5[%c0_14, %c0_15] : memref<1x128xi32, #tpu.memory_space<vmem>>, vector<1x128xi32>
      %48 = vector.broadcast %46 : vector<128x1xi32> to vector<128x128xi32>
      %49 = vector.broadcast %47 : vector<1x128xi32> to vector<128x128xi32>
      %50 = arith.cmpi eq, %48, %49 : vector<128x128xi32>
      %c8_i32 = arith.constant 8 : i32
      %51 = vector.broadcast %c8_i32 : i32 to vector<1x128xi32>
      %52 = arith.cmpi slt, %45, %51 : vector<1x128xi32>
      %53 = vector.broadcast %52 : vector<1x128xi1> to vector<128x128xi1>
      %54 = arith.andi %50, %53 : vector<128x128xi1>
      %c0_16 = arith.constant 0 : index
      %c0_17 = arith.constant 0 : index
      %55 = vector.load %arg8[%c0_16, %c0_17] : memref<128x128xf32, #tpu.memory_space<vmem>>, vector<128x128xf32>
      %cst_18 = arith.constant 0.000000e+00 : f32
      %56 = vector.broadcast %cst_18 : f32 to vector<128x128xf32>
      %57 = arith.select %54, %41, %56 : vector<128x128xi1>, vector<128x128xf32>
      %58 = arith.addf %55, %57 : vector<128x128xf32>
      %c0_19 = arith.constant 0 : index
      %c0_20 = arith.constant 0 : index
      %59 = vector.load %arg8[%c0_19, %c0_20] : memref<128x128xf32, #tpu.memory_space<vmem>>, vector<128x128xf32>
      tpu.vector_store %arg8[%c0_19, %c0_20], %58 {strides = array<i32>} : memref<128x128xf32, #tpu.memory_space<vmem>>, vector<128x128xf32>,
    } else {
    }
    return
  }
  func.func @transform_0(%arg0: i32, %arg1: i32, %arg2: memref<1xi32, #tpu.memory_space<smem>>, %arg3: memref<1xi32, #tpu.memory_space<smem>>) -> (i32, i32) {
    %c0_i32 = arith.constant 0 : i32
    %c0_i32_0 = arith.constant 0 : i32
    return %arg0, %c0_i32 : i32, i32
  }
  func.func @transform_1(%arg0: i32, %arg1: i32, %arg2: memref<1xi32, #tpu.memory_space<smem>>, %arg3: memref<1xi32, #tpu.memory_space<smem>>) -> (i32, i32) {
    %0 = arith.index_cast %arg0 : i32 to index
    %1 = memref.load %arg2[%0] : memref<1xi32, #tpu.memory_space<smem>>
    %2 = arith.maxsi %arg1, %1 : i32
    %3 = arith.index_cast %arg0 : i32 to index
    %4 = memref.load %arg3[%3] : memref<1xi32, #tpu.memory_space<smem>>
    %c1_i32 = arith.constant 1 : i32
    %5 = arith.subi %4, %c1_i32 : i32
    %6 = arith.minsi %2, %5 : i32
    %c0_i32 = arith.constant 0 : i32
    %c0_i32_0 = arith.constant 0 : i32
    return %c0_i32, %6 : i32, i32
  }
  func.func @transform_2(%arg0: i32, %arg1: i32, %arg2: memref<1xi32, #tpu.memory_space<smem>>, %arg3: memref<1xi32, #tpu.memory_space<smem>>) -> (i32, i32) {
    %c0_i32 = arith.constant 0 : i32
    %c0_i32_0 = arith.constant 0 : i32
    return %arg0, %c0_i32 : i32, i32
  }
  func.func @transform_3(%arg0: i32, %arg1: i32, %arg2: memref<1xi32, #tpu.memory_space<smem>>, %arg3: memref<1xi32, #tpu.memory_space<smem>>) -> (i32, i32) {
    %0 = arith.index_cast %arg0 : i32 to index
    %1 = memref.load %arg2[%0] : memref<1xi32, #tpu.memory_space<smem>>
    %2 = arith.maxsi %arg1, %1 : i32
    %3 = arith.index_cast %arg0 : i32 to index
    %4 = memref.load %arg3[%3] : memref<1xi32, #tpu.memory_space<smem>>
    %c1_i32 = arith.constant 1 : i32
    %5 = arith.subi %4, %c1_i32 : i32
    %6 = arith.minsi %2, %5 : i32
    %c0_i32 = arith.constant 0 : i32
    %c0_i32_0 = arith.constant 0 : i32
    return %c0_i32, %6 : i32, i32
  }
  func.func @transform_4(%arg0: i32, %arg1: i32, %arg2: memref<1xi32, #tpu.memory_space<smem>>, %arg3: memref<1xi32, #tpu.memory_space<smem>>) -> (i32, i32) {
    %c0_i32 = arith.constant 0 : i32
    %c0_i32_0 = arith.constant 0 : i32
    return %arg0, %c0_i32 : i32, i32
  }
}

</mosaic_0001>

<llo_original>
// kernel: tpu_custom_call.1
$region0: #{tpu_custom_call.1}
  #allocation0 [shape = 'u32[]', space=smem, size = 0x4, offset = 0x4, fixed_abs, tag = 'smem constant byte address 0x4 - core index']
  #allocation1 [shape = 'u32[144,128]{1,0:T(1,128)}', space=vmem, size = 0x12000, scoped, tag = 'internal scratch']
  #allocation2 [shape = 's32[1]{0}', space=sflag, size = 0x4, scoped, tag = 'scoped memory for tpu_custom_call.1']
  #allocation3 [shape = 's32[1]{0:T(128)S(6)}', space=smem, size = 0x200, scoped, tag = 'prefetched SMEM operand 0']
  #allocation4 [shape = 's32[1]{0:T(128)S(6)}', space=smem, size = 0x200, scoped, tag = 'prefetched SMEM operand 1']
  %s0 = inlined_call_operand.<no memory space> [shape: s32[1], index: 0, kind: input, shape index: {}]
  %s1 = inlined_call_operand.<no memory space> [shape: s32[1], index: 1, kind: input, shape index: {}]
  %s2 = inlined_call_operand.vmem [shape: s32[128,1], index: 2, kind: input, shape index: {}]
  %s3 = inlined_call_operand.vmem [shape: s32[1,128], index: 3, kind: input, shape index: {}]
  %s4 = inlined_call_operand.vmem [shape: f32[128,32], index: 4, kind: input, shape index: {}]
  %s5 = inlined_call_operand.vmem [shape: f32[32,128], index: 5, kind: input, shape index: {}]
  %s6 = inlined_call_operand.hbm [shape: f32[128,128], index: 6, kind: output, shape index: {}]
  %s7 = sld [smem:[#allocation0]]
  $region34: #{tpu_custom_call.1} parent=0
    _
  %s9 = ssub.s32 1, %s7
  %s10 = scalar_select 0, %s9, %s7
  %11 = sst [smem:[#allocation3]] %s0
  %12 = sst [smem:[#allocation4]] %s1
  $region1: #{tpu_custom_call.1} parent=0
    #allocation5 [shape = 'u8[65536]{0}', space=vmem, size = 0x10000, scoped, tag = 'output window, operand 0, single buffered']
    #allocation6 [shape = 's32[1]{0}', space=sflag, size = 0x4, scoped, tag = 'scoped memory for tpu_custom_call.1']
    %13 = vsyncpa [#allocation6], 0
    // Predicated region
    $region2: #{tpu_custom_call.1} parent=1 // pred_check
      _
    $region3: #{tpu_custom_call.1} parent=1 // pred_check_branch
      %15 = sbr.rel (0) target = $region5
    $region4: #{tpu_custom_call.1} parent=1 // pred_region
      _
    $region5: #{tpu_custom_call.1} parent=1 // pred_fallthru
      _
    // Predicated region
    $region6: #{tpu_custom_call.1} parent=1 // pred_check
      _
    $region7: #{tpu_custom_call.1} parent=1 // pred_check_branch
      %17 = sbr.rel (0) target = $region9
    $region8: #{tpu_custom_call.1} parent=1 // pred_region
      %s18 = sld [smem:[#allocation3]]
      %p19 = scmp.gt.s32.totalorder 0, %s18
      %s20 = scalar_select %p19, 0, %s18
      %s21 = sld [smem:[#allocation4]]
      %s22 = ssub.s32 %s21, 1
      %p23 = scmp.lt.s32.totalorder %s20, %s22
      %s24 = scalar_select %p23, %s20, %s22
      %p25 = scmp.lt.s32.totalorder %s24, 0
      %s26 = scalar_select %p25, %s24, 0
      %s27 = scalar_lea.vmem %s3, %s26
      %s28 = sld [smem:[#allocation3]]
      %p29 = scmp.gt.s32.totalorder 0, %s28
      %s30 = scalar_select %p29, 0, %s28
      %s31 = sld [smem:[#allocation4]]
      %s32 = ssub.s32 %s31, 1
      %p33 = scmp.lt.s32.totalorder %s30, %s32
      %s34 = scalar_select %p33, %s30, %s32
    $region9: #{tpu_custom_call.1} parent=1 // pred_fallthru
      _
    // Predicated region
    $region10: #{tpu_custom_call.1} parent=1 // pred_check
      _
    $region11: #{tpu_custom_call.1} parent=1 // pred_check_branch
      %36 = sbr.rel (0) target = $region13
    $region12: #{tpu_custom_call.1} parent=1 // pred_region
      _
    $region13: #{tpu_custom_call.1} parent=1 // pred_fallthru
      _
    // Predicated region
    $region14: #{tpu_custom_call.1} parent=1 // pred_check
      _
    $region15: #{tpu_custom_call.1} parent=1 // pred_check_branch
      %38 = sbr.rel (0) target = $region17
    $region16: #{tpu_custom_call.1} parent=1 // pred_region
      %s39 = sld [smem:[#allocation3]]
      %p40 = scmp.gt.s32.totalorder 0, %s39
      %s41 = scalar_select %p40, 0, %s39
      %s42 = sld [smem:[#allocation4]]
      %s43 = ssub.s32 %s42, 1
      %p44 = scmp.lt.s32.totalorder %s41, %s43
      %s45 = scalar_select %p44, %s41, %s43
      %p46 = scmp.lt.s32.totalorder %s45, 0
      %s47 = scalar_select %p46, %s45, 0
      %s48 = smul.addr %s47, 8
      %s49 = scalar_lea.vmem %s5, %s48
      %s50 = sld [smem:[#allocation3]]
      %p51 = scmp.gt.s32.totalorder 0, %s50
      %s52 = scalar_select %p51, 0, %s50
      %s53 = sld [smem:[#allocation4]]
      %s54 = ssub.s32 %s53, 1
      %p55 = scmp.lt.s32.totalorder %s52, %s54
      %s56 = scalar_select %p55, %s52, %s54
    $region17: #{tpu_custom_call.1} parent=1 // pred_fallthru
      _
    %s57 = sld [smem:[#allocation3]]
    %p58 = scmp.gt.s32.totalorder 0, %s57
    %s59 = scalar_select %p58, 0, %s57
    %s60 = sld [smem:[#allocation4]]
    %s61 = ssub.s32 %s60, 1
    %p62 = scmp.lt.s32.totalorder %s59, %s61
    %s63 = scalar_select %p62, %s59, %s61
    %p64 = scmp.lt.s32.totalorder %s63, 0
    %s65 = scalar_select %p64, %s63, 0
    %s66 = scalar_lea.vmem %s3, %s65
    %s67 = sld [smem:[#allocation3]]
    %p68 = scmp.gt.s32.totalorder 0, %s67
    %s69 = scalar_select %p68, 0, %s67
    %s70 = sld [smem:[#allocation4]]
    %s71 = ssub.s32 %s70, 1
    %p72 = scmp.lt.s32.totalorder %s69, %s71
    %s73 = scalar_select %p72, %s69, %s71
    %p74 = scmp.lt.s32.totalorder %s73, 0
    %s75 = scalar_select %p74, %s73, 0
    %s76 = smul.addr %s75, 8
    %s77 = scalar_lea.vmem %s5, %s76
    %s78 = sld [smem:[#allocation3]]
    %p79 = scmp.gt.s32.totalorder 0, %s78
    %s80 = scalar_select %p79, 0, %s78
    %s81 = sld [smem:[#allocation4]]
    %s82 = ssub.s32 %s81, 1
    %p83 = scmp.lt.s32.totalorder %s80, %s82
    %s84 = scalar_select %p83, %s80, %s82
    %p85 = scmp.lt.s32.totalorder %s84, 0
    %s86 = scalar_select %p85, %s84, 0
    %s87 = scalar_lea.vmem %s3, %s86
    %s88 = sld [smem:[#allocation3]]
    %p89 = scmp.gt.s32.totalorder 0, %s88
    %s90 = scalar_select %p89, 0, %s88
    %s91 = sld [smem:[#allocation4]]
    %s92 = ssub.s32 %s91, 1
    %p93 = scmp.lt.s32.totalorder %s90, %s92
    %s94 = scalar_select %p93, %s90, %s92
    %s95 = sld [smem:[#allocation3]]
    %p96 = scmp.gt.s32.totalorder 0, %s95
    %s97 = scalar_select %p96, 0, %s95
    %s98 = sld [smem:[#allocation4]]
    %s99 = ssub.s32 %s98, 1
    %p100 = scmp.lt.s32.totalorder %s97, %s99
    %s101 = scalar_select %p100, %s97, %s99
    %p102 = scmp.lt.s32.totalorder %s101, 0
    %s103 = scalar_select %p102, %s101, 0
    %s104 = smul.addr %s103, 8
    %s105 = scalar_lea.vmem %s5, %s104
    %s106 = sld [smem:[#allocation3]]
    %p107 = scmp.gt.s32.totalorder 0, %s106
    %s108 = scalar_select %p107, 0, %s106
    %s109 = sld [smem:[#allocation4]]
    %s110 = ssub.s32 %s109, 1
    %p111 = scmp.lt.s32.totalorder %s108, %s110
    %s112 = scalar_select %p111, %s108, %s110
    %p113 = scmp.eq.s32.totalorder 0, 0
    // Predicated region
    $region18: #{tpu_custom_call.1} parent=1 // pred_check
      %p114 = pneg %p113
    $region19: #{tpu_custom_call.1} parent=1 // pred_check_branch
      %116 = sbr.rel (%p114) target = $region21
    $region20: #{tpu_custom_call.1} parent=1 // pred_region
      %117 = vst [vmem:[#allocation5] sm:$0xff] 0.0
      %118 = vst [vmem:[#allocation5 + $0x8] sm:$0xff] 0.0
      %119 = vst [vmem:[#allocation5 + $0x10] sm:$0xff] 0.0
      %120 = vst [vmem:[#allocation5 + $0x18] sm:$0xff] 0.0
      %121 = vst [vmem:[#allocation5 + $0x20] sm:$0xff] 0.0
      %122 = vst [vmem:[#allocation5 + $0x28] sm:$0xff] 0.0
      %123 = vst [vmem:[#allocation5 + $0x30] sm:$0xff] 0.0
      %124 = vst [vmem:[#allocation5 + $0x38] sm:$0xff] 0.0
      %125 = vst [vmem:[#allocation5 + $0x40] sm:$0xff] 0.0
      %126 = vst [vmem:[#allocation5 + $0x48] sm:$0xff] 0.0
      %127 = vst [vmem:[#allocation5 + $0x50] sm:$0xff] 0.0
      %128 = vst [vmem:[#allocation5 + $0x58] sm:$0xff] 0.0
      %129 = vst [vmem:[#allocation5 + $0x60] sm:$0xff] 0.0
      %130 = vst [vmem:[#allocation5 + $0x68] sm:$0xff] 0.0
      %131 = vst [vmem:[#allocation5 + $0x70] sm:$0xff] 0.0
      %132 = vst [vmem:[#allocation5 + $0x78] sm:$0xff] 0.0
    $region21: #{tpu_custom_call.1} parent=1 // pred_fallthru
      _
    %s133 = sld [smem:[#allocation3]]
    %p134 = scmp.ge.s32.totalorder 0, %s133
    %s135 = sld [smem:[#allocation4]]
    %p136 = scmp.lt.s32.totalorder 0, %s135
    %p137 = pnand %p134, %p136
    %p138 = pneg %p137
    // Predicated region
    $region22: #{tpu_custom_call.1} parent=1 // pred_check
      _
    $region23: #{tpu_custom_call.1} parent=1 // pred_check_branch
      %140 = sbr.rel (%p137) target = $region25
    $region24: #{tpu_custom_call.1} parent=1 // pred_region
      %v141 = vld [vmem:[%s4] sm:$0xff]
      %v142 = vld [vmem:[%s4 + $0x8] sm:$0xff]
      %v143 = vld [vmem:[%s4 + $0x10] sm:$0xff]
      %v144 = vld [vmem:[%s4 + $0x18] sm:$0xff]
      %v145 = vld [vmem:[%s4 + $0x20] sm:$0xff]
      %v146 = vld [vmem:[%s4 + $0x28] sm:$0xff]
      %v147 = vld [vmem:[%s4 + $0x30] sm:$0xff]
      %v148 = vld [vmem:[%s4 + $0x38] sm:$0xff]
      %v149 = vld [vmem:[%s4 + $0x40] sm:$0xff]
      %v150 = vld [vmem:[%s4 + $0x48] sm:$0xff]
      %v151 = vld [vmem:[%s4 + $0x50] sm:$0xff]
      %v152 = vld [vmem:[%s4 + $0x58] sm:$0xff]
      %v153 = vld [vmem:[%s4 + $0x60] sm:$0xff]
      %v154 = vld [vmem:[%s4 + $0x68] sm:$0xff]
      %v155 = vld [vmem:[%s4 + $0x70] sm:$0xff]
      %v156 = vld [vmem:[%s4 + $0x78] sm:$0xff]
      %v157 = vmul.f32 %v141, 14.285714
      %v158 = vmul.f32 %v142, 14.285714
      %v159 = vmul.f32 %v143, 14.285714
      %v160 = vmul.f32 %v144, 14.285714
      %v161 = vmul.f32 %v145, 14.285714
      %v162 = vmul.f32 %v146, 14.285714
      %v163 = vmul.f32 %v147, 14.285714
      %v164 = vmul.f32 %v148, 14.285714
      %v165 = vmul.f32 %v149, 14.285714
      %v166 = vmul.f32 %v150, 14.285714
      %v167 = vmul.f32 %v151, 14.285714
      %v168 = vmul.f32 %v152, 14.285714
      %v169 = vmul.f32 %v153, 14.285714
      %v170 = vmul.f32 %v154, 14.285714
      %v171 = vmul.f32 %v155, 14.285714
      %v172 = vmul.f32 %v156, 14.285714
      %v173 = vld [vmem:[%s105] sm:$0xff]
      %v174 = vld [vmem:[%s105 + $0x8] sm:$0xff]
      %v175 = vld [vmem:[%s105 + $0x10] sm:$0xff]
      %v176 = vld [vmem:[%s105 + $0x18] sm:$0xff]
      %v177 = vlaneseq
      %v178 = vshrl.u32 %v177, 7
      %v179 = vsub.s32 0, %v178
      %v180 = vrot.slane %v157, %v179
      %182 = vbcast.lane.b32.xlu0 %v180, 256
      %v183 = vpop.permute.xlu0 %182
      %s185 = sor.u32 256, 8
      %186 = vbcast.lane.b32.xlu0 %v180, %s185
      %v187 = vpop.permute.xlu0 %186
      %s189 = sor.u32 256, 16
      %190 = vbcast.lane.b32.xlu0 %v180, %s189
      %v191 = vpop.permute.xlu0 %190
      %s193 = sor.u32 256, 24
      %194 = vbcast.lane.b32.xlu0 %v180, %s193
      %v195 = vpop.permute.xlu0 %194
      %v196 = vlaneseq
      %v197 = vshrl.u32 %v196, 7
      %v198 = vsub.s32 1, %v197
      %v199 = vrot.slane %v157, %v198
      %201 = vbcast.lane.b32.xlu0 %v199, 256
      %v202 = vpop.permute.xlu0 %201
      %s204 = sor.u32 256, 8
      %205 = vbcast.lane.b32.xlu0 %v199, %s204
      %v206 = vpop.permute.xlu0 %205
      %s208 = sor.u32 256, 16
      %209 = vbcast.lane.b32.xlu0 %v199, %s208
      %v210 = vpop.permute.xlu0 %209
      %s212 = sor.u32 256, 24
      %213 = vbcast.lane.b32.xlu0 %v199, %s212
      %v214 = vpop.permute.xlu0 %213
      %v215 = vlaneseq
      %v216 = vshrl.u32 %v215, 7
      %v217 = vsub.s32 2, %v216
      %v218 = vrot.slane %v157, %v217
      %220 = vbcast.lane.b32.xlu0 %v218, 256
      %v221 = vpop.permute.xlu0 %220
      %s223 = sor.u32 256, 8
      %224 = vbcast.lane.b32.xlu0 %v218, %s223
      %v225 = vpop.permute.xlu0 %224
      %s227 = sor.u32 256, 16
      %228 = vbcast.lane.b32.xlu0 %v218, %s227
      %v229 = vpop.permute.xlu0 %228
      %s231 = sor.u32 256, 24
      %232 = vbcast.lane.b32.xlu0 %v218, %s231
      %v233 = vpop.permute.xlu0 %232
      %v234 = vlaneseq
      %v235 = vshrl.u32 %v234, 7
      %v236 = vsub.s32 3, %v235
      %v237 = vrot.slane %v157, %v236
      %239 = vbcast.lane.b32.xlu0 %v237, 256
      %v240 = vpop.permute.xlu0 %239
      %s242 = sor.u32 256, 8
      %243 = vbcast.lane.b32.xlu0 %v237, %s242
      %v244 = vpop.permute.xlu0 %243
      %s246 = sor.u32 256, 16
      %247 = vbcast.lane.b32.xlu0 %v237, %s246
      %v248 = vpop.permute.xlu0 %247
      %s250 = sor.u32 256, 24
      %251 = vbcast.lane.b32.xlu0 %v237, %s250
      %v252 = vpop.permute.xlu0 %251
      %v253 = vlaneseq
      %v254 = vshrl.u32 %v253, 7
      %v255 = vsub.s32 4, %v254
      %v256 = vrot.slane %v157, %v255
      %258 = vbcast.lane.b32.xlu0 %v256, 256
      %v259 = vpop.permute.xlu0 %258
      %s261 = sor.u32 256, 8
      %262 = vbcast.lane.b32.xlu0 %v256, %s261
      %v263 = vpop.permute.xlu0 %262
      %s265 = sor.u32 256, 16
      %266 = vbcast.lane.b32.xlu0 %v256, %s265
      %v267 = vpop.permute.xlu0 %266
      %s269 = sor.u32 256, 24
      %270 = vbcast.lane.b32.xlu0 %v256, %s269
      %v271 = vpop.permute.xlu0 %270
      %v272 = vlaneseq
      %v273 = vshrl.u32 %v272, 7
      %v274 = vsub.s32 5, %v273
      %v275 = vrot.slane %v157, %v274
      %277 = vbcast.lane.b32.xlu0 %v275, 256
      %v278 = vpop.permute.xlu0 %277
      %s280 = sor.u32 256, 8
      %281 = vbcast.lane.b32.xlu0 %v275, %s280
      %v282 = vpop.permute.xlu0 %281
      %s284 = sor.u32 256, 16
      %285 = vbcast.lane.b32.xlu0 %v275, %s284
      %v286 = vpop.permute.xlu0 %285
      %s288 = sor.u32 256, 24
      %289 = vbcast.lane.b32.xlu0 %v275, %s288
      %v290 = vpop.permute.xlu0 %289
      %v291 = vlaneseq
      %v292 = vshrl.u32 %v291, 7
      %v293 = vsub.s32 6, %v292
      %v294 = vrot.slane %v157, %v293
      %296 = vbcast.lane.b32.xlu0 %v294, 256
      %v297 = vpop.permute.xlu0 %296
      %s299 = sor.u32 256, 8
      %300 = vbcast.lane.b32.xlu0 %v294, %s299
      %v301 = vpop.permute.xlu0 %300
      %s303 = sor.u32 256, 16
      %304 = vbcast.lane.b32.xlu0 %v294, %s303
      %v305 = vpop.permute.xlu0 %304
      %s307 = sor.u32 256, 24
      %308 = vbcast.lane.b32.xlu0 %v294, %s307
      %v309 = vpop.permute.xlu0 %308
      %v310 = vlaneseq
      %v311 = vshrl.u32 %v310, 7
      %v312 = vsub.s32 7, %v311
      %v313 = vrot.slane %v157, %v312
      %315 = vbcast.lane.b32.xlu0 %v313, 256
      %v316 = vpop.permute.xlu0 %315
      %s318 = sor.u32 256, 8
      %319 = vbcast.lane.b32.xlu0 %v313, %s318
      %v320 = vpop.permute.xlu0 %319
      %s322 = sor.u32 256, 16
      %323 = vbcast.lane.b32.xlu0 %v313, %s322
      %v324 = vpop.permute.xlu0 %323
      %s326 = sor.u32 256, 24
      %327 = vbcast.lane.b32.xlu0 %v313, %s326
      %v328 = vpop.permute.xlu0 %327
      %v329 = vlaneseq
      %v330 = vshrl.u32 %v329, 7
      %v331 = vsub.s32 0, %v330
      %v332 = vrot.slane %v158, %v331
      %334 = vbcast.lane.b32.xlu0 %v332, 256
      %v335 = vpop.permute.xlu0 %334
      %s337 = sor.u32 256, 8
      %338 = vbcast.lane.b32.xlu0 %v332, %s337
      %v339 = vpop.permute.xlu0 %338
      %s341 = sor.u32 256, 16
      %342 = vbcast.lane.b32.xlu0 %v332, %s341
      %v343 = vpop.permute.xlu0 %342
      %s345 = sor.u32 256, 24
      %346 = vbcast.lane.b32.xlu0 %v332, %s345
      %v347 = vpop.permute.xlu0 %346
      %v348 = vlaneseq
      %v349 = vshrl.u32 %v348, 7
      %v350 = vsub.s32 1, %v349
      %v351 = vrot.slane %v158, %v350
      %353 = vbcast.lane.b32.xlu0 %v351, 256
      %v354 = vpop.permute.xlu0 %353
      %s356 = sor.u32 256, 8
      %357 = vbcast.lane.b32.xlu0 %v351, %s356
      %v358 = vpop.permute.xlu0 %357
      %s360 = sor.u32 256, 16
      %361 = vbcast.lane.b32.xlu0 %v351, %s360
      %v362 = vpop.permute.xlu0 %361
      %s364 = sor.u32 256, 24
      %365 = vbcast.lane.b32.xlu0 %v351, %s364
      %v366 = vpop.permute.xlu0 %365
      %v367 = vlaneseq
      %v368 = vshrl.u32 %v367, 7
      %v369 = vsub.s32 2, %v368
      %v370 = vrot.slane %v158, %v369
      %372 = vbcast.lane.b32.xlu0 %v370, 256
      %v373 = vpop.permute.xlu0 %372
      %s375 = sor.u32 256, 8
      %376 = vbcast.lane.b32.xlu0 %v370, %s375
      %v377 = vpop.permute.xlu0 %376
      %s379 = sor.u32 256, 16
      %380 = vbcast.lane.b32.xlu0 %v370, %s379
      %v381 = vpop.permute.xlu0 %380
      %s383 = sor.u32 256, 24
      %384 = vbcast.lane.b32.xlu0 %v370, %s383
      %v385 = vpop.permute.xlu0 %384
      %v386 = vlaneseq
      %v387 = vshrl.u32 %v386, 7
      %v388 = vsub.s32 3, %v387
      %v389 = vrot.slane %v158, %v388
      %391 = vbcast.lane.b32.xlu0 %v389, 256
      %v392 = vpop.permute.xlu0 %391
      %s394 = sor.u32 256, 8
      %395 = vbcast.lane.b32.xlu0 %v389, %s394
      %v396 = vpop.permute.xlu0 %395
      %s398 = sor.u32 256, 16
      %399 = vbcast.lane.b32.xlu0 %v389, %s398
      %v400 = vpop.permute.xlu0 %399
      %s402 = sor.u32 256, 24
      %403 = vbcast.lane.b32.xlu0 %v389, %s402
      %v404 = vpop.permute.xlu0 %403
      %v405 = vlaneseq
      %v406 = vshrl.u32 %v405, 7
      %v407 = vsub.s32 4, %v406
      %v408 = vrot.slane %v158, %v407
      %410 = vbcast.lane.b32.xlu0 %v408, 256
      %v411 = vpop.permute.xlu0 %410
      %s413 = sor.u32 256, 8
      %414 = vbcast.lane.b32.xlu0 %v408, %s413
      %v415 = vpop.permute.xlu0 %414
      %s417 = sor.u32 256, 16
      %418 = vbcast.lane.b32.xlu0 %v408, %s417
      %v419 = vpop.permute.xlu0 %418
      %s421 = sor.u32 256, 24
      %422 = vbcast.lane.b32.xlu0 %v408, %s421
      %v423 = vpop.permute.xlu0 %422
      %v424 = vlaneseq
      %v425 = vshrl.u32 %v424, 7
      %v426 = vsub.s32 5, %v425
      %v427 = vrot.slane %v158, %v426
      %429 = vbcast.lane.b32.xlu0 %v427, 256
      %v430 = vpop.permute.xlu0 %429
      %s432 = sor.u32 256, 8
      %433 = vbcast.lane.b32.xlu0 %v427, %s432
      %v434 = vpop.permute.xlu0 %433
      %s436 = sor.u32 256, 16
      %437 = vbcast.lane.b32.xlu0 %v427, %s436
      %v438 = vpop.permute.xlu0 %437
      %s440 = sor.u32 256, 24
      %441 = vbcast.lane.b32.xlu0 %v427, %s440
      %v442 = vpop.permute.xlu0 %441
      %v443 = vlaneseq
      %v444 = vshrl.u32 %v443, 7
      %v445 = vsub.s32 6, %v444
      %v446 = vrot.slane %v158, %v445
      %448 = vbcast.lane.b32.xlu0 %v446, 256
      %v449 = vpop.permute.xlu0 %448
      %s451 = sor.u32 256, 8
      %452 = vbcast.lane.b32.xlu0 %v446, %s451
      %v453 = vpop.permute.xlu0 %452
      %s455 = sor.u32 256, 16
      %456 = vbcast.lane.b32.xlu0 %v446, %s455
      %v457 = vpop.permute.xlu0 %456
      %s459 = sor.u32 256, 24
      %460 = vbcast.lane.b32.xlu0 %v446, %s459
      %v461 = vpop.permute.xlu0 %460
      %v462 = vlaneseq
      %v463 = vshrl.u32 %v462, 7
      %v464 = vsub.s32 7, %v463
      %v465 = vrot.slane %v158, %v464
      %467 = vbcast.lane.b32.xlu0 %v465, 256
      %v468 = vpop.permute.xlu0 %467
      %s470 = sor.u32 256, 8
      %471 = vbcast.lane.b32.xlu0 %v465, %s470
      %v472 = vpop.permute.xlu0 %471
      %s474 = sor.u32 256, 16
      %475 = vbcast.lane.b32.xlu0 %v465, %s474
      %v476 = vpop.permute.xlu0 %475
      %s478 = sor.u32 256, 24
      %479 = vbcast.lane.b32.xlu0 %v465, %s478
      %v480 = vpop.permute.xlu0 %479
      %v481 = vlaneseq
      %v482 = vshrl.u32 %v481, 7
      %v483 = vsub.s32 0, %v482
      %v484 = vrot.slane %v159, %v483
      %486 = vbcast.lane.b32.xlu0 %v484, 256
      %v487 = vpop.permute.xlu0 %486
      %s489 = sor.u32 256, 8
      %490 = vbcast.lane.b32.xlu0 %v484, %s489
      %v491 = vpop.permute.xlu0 %490
      %s493 = sor.u32 256, 16
      %494 = vbcast.lane.b32.xlu0 %v484, %s493
      %v495 = vpop.permute.xlu0 %494
      %s497 = sor.u32 256, 24
      %498 = vbcast.lane.b32.xlu0 %v484, %s497
      %v499 = vpop.permute.xlu0 %498
      %v500 = vlaneseq
      %v501 = vshrl.u32 %v500, 7
      %v502 = vsub.s32 1, %v501
      %v503 = vrot.slane %v159, %v502
      %505 = vbcast.lane.b32.xlu0 %v503, 256
      %v506 = vpop.permute.xlu0 %505
      %s508 = sor.u32 256, 8
      %509 = vbcast.lane.b32.xlu0 %v503, %s508
      %v510 = vpop.permute.xlu0 %509
      %s512 = sor.u32 256, 16
      %513 = vbcast.lane.b32.xlu0 %v503, %s512
      %v514 = vpop.permute.xlu0 %513
      %s516 = sor.u32 256, 24
      %517 = vbcast.lane.b32.xlu0 %v503, %s516
      %v518 = vpop.permute.xlu0 %517
      %v519 = vlaneseq
      %v520 = vshrl.u32 %v519, 7
      %v521 = vsub.s32 2, %v520
      %v522 = vrot.slane %v159, %v521
      %524 = vbcast.lane.b32.xlu0 %v522, 256
      %v525 = vpop.permute.xlu0 %524
      %s527 = sor.u32 256, 8
      %528 = vbcast.lane.b32.xlu0 %v522, %s527
      %v529 = vpop.permute.xlu0 %528
      %s531 = sor.u32 256, 16
      %532 = vbcast.lane.b32.xlu0 %v522, %s531
      %v533 = vpop.permute.xlu0 %532
      %s535 = sor.u32 256, 24
      %536 = vbcast.lane.b32.xlu0 %v522, %s535
      %v537 = vpop.permute.xlu0 %536
      %v538 = vlaneseq
      %v539 = vshrl.u32 %v538, 7
      %v540 = vsub.s32 3, %v539
      %v541 = vrot.slane %v159, %v540
      %543 = vbcast.lane.b32.xlu0 %v541, 256
      %v544 = vpop.permute.xlu0 %543
      %s546 = sor.u32 256, 8
      %547 = vbcast.lane.b32.xlu0 %v541, %s546
      %v548 = vpop.permute.xlu0 %547
      %s550 = sor.u32 256, 16
      %551 = vbcast.lane.b32.xlu0 %v541, %s550
      %v552 = vpop.permute.xlu0 %551
      %s554 = sor.u32 256, 24
      %555 = vbcast.lane.b32.xlu0 %v541, %s554
      %v556 = vpop.permute.xlu0 %555
      %v557 = vlaneseq
      %v558 = vshrl.u32 %v557, 7
      %v559 = vsub.s32 4, %v558
      %v560 = vrot.slane %v159, %v559
      %562 = vbcast.lane.b32.xlu0 %v560, 256
      %v563 = vpop.permute.xlu0 %562
      %s565 = sor.u32 256, 8
      %566 = vbcast.lane.b32.xlu0 %v560, %s565
      %v567 = vpop.permute.xlu0 %566
      %s569 = sor.u32 256, 16
      %570 = vbcast.lane.b32.xlu0 %v560, %s569
      %v571 = vpop.permute.xlu0 %570
      %s573 = sor.u32 256, 24
      %574 = vbcast.lane.b32.xlu0 %v560, %s573
      %v575 = vpop.permute.xlu0 %574
      %v576 = vlaneseq
      %v577 = vshrl.u32 %v576, 7
      %v578 = vsub.s32 5, %v577
      %v579 = vrot.slane %v159, %v578
      %581 = vbcast.lane.b32.xlu0 %v579, 256
      %v582 = vpop.permute.xlu0 %581
      %s584 = sor.u32 256, 8
      %585 = vbcast.lane.b32.xlu0 %v579, %s584
      %v586 = vpop.permute.xlu0 %585
      %s588 = sor.u32 256, 16
      %589 = vbcast.lane.b32.xlu0 %v579, %s588
      %v590 = vpop.permute.xlu0 %589
      %s592 = sor.u32 256, 24
      %593 = vbcast.lane.b32.xlu0 %v579, %s592
      %v594 = vpop.permute.xlu0 %593
      %v595 = vlaneseq
      %v596 = vshrl.u32 %v595, 7
      %v597 = vsub.s32 6, %v596
      %v598 = vrot.slane %v159, %v597
      %600 = vbcast.lane.b32.xlu0 %v598, 256
      %v601 = vpop.permute.xlu0 %600
      %s603 = sor.u32 256, 8
      %604 = vbcast.lane.b32.xlu0 %v598, %s603
      %v605 = vpop.permute.xlu0 %604
      %s607 = sor.u32 256, 16
      %608 = vbcast.lane.b32.xlu0 %v598, %s607
      %v609 = vpop.permute.xlu0 %608
      %s611 = sor.u32 256, 24
      %612 = vbcast.lane.b32.xlu0 %v598, %s611
      %v613 = vpop.permute.xlu0 %612
      %v614 = vlaneseq
      %v615 = vshrl.u32 %v614, 7
      %v616 = vsub.s32 7, %v615
      %v617 = vrot.slane %v159, %v616
      %619 = vbcast.lane.b32.xlu0 %v617, 256
      %v620 = vpop.permute.xlu0 %619
      %s622 = sor.u32 256, 8
      %623 = vbcast.lane.b32.xlu0 %v617, %s622
      %v624 = vpop.permute.xlu0 %623
      %s626 = sor.u32 256, 16
      %627 = vbcast.lane.b32.xlu0 %v617, %s626
      %v628 = vpop.permute.xlu0 %627
      %s630 = sor.u32 256, 24
      %631 = vbcast.lane.b32.xlu0 %v617, %s630
      %v632 = vpop.permute.xlu0 %631
      %v633 = vlaneseq
      %v634 = vshrl.u32 %v633, 7
      %v635 = vsub.s32 0, %v634
      %v636 = vrot.slane %v160, %v635
      %638 = vbcast.lane.b32.xlu0 %v636, 256
      %v639 = vpop.permute.xlu0 %638
      %s641 = sor.u32 256, 8
      %642 = vbcast.lane.b32.xlu0 %v636, %s641
      %v643 = vpop.permute.xlu0 %642
      %s645 = sor.u32 256, 16
      %646 = vbcast.lane.b32.xlu0 %v636, %s645
      %v647 = vpop.permute.xlu0 %646
      %s649 = sor.u32 256, 24
      %650 = vbcast.lane.b32.xlu0 %v636, %s649
      %v651 = vpop.permute.xlu0 %650
      %v652 = vlaneseq
      %v653 = vshrl.u32 %v652, 7
      %v654 = vsub.s32 1, %v653
      %v655 = vrot.slane %v160, %v654
      %657 = vbcast.lane.b32.xlu0 %v655, 256
      %v658 = vpop.permute.xlu0 %657
      %s660 = sor.u32 256, 8
      %661 = vbcast.lane.b32.xlu0 %v655, %s660
      %v662 = vpop.permute.xlu0 %661
      %s664 = sor.u32 256, 16
      %665 = vbcast.lane.b32.xlu0 %v655, %s664
      %v666 = vpop.permute.xlu0 %665
      %s668 = sor.u32 256, 24
      %669 = vbcast.lane.b32.xlu0 %v655, %s668
      %v670 = vpop.permute.xlu0 %669
      %v671 = vlaneseq
      %v672 = vshrl.u32 %v671, 7
      %v673 = vsub.s32 2, %v672
      %v674 = vrot.slane %v160, %v673
      %676 = vbcast.lane.b32.xlu0 %v674, 256
      %v677 = vpop.permute.xlu0 %676
      %s679 = sor.u32 256, 8
      %680 = vbcast.lane.b32.xlu0 %v674, %s679
      %v681 = vpop.permute.xlu0 %680
      %s683 = sor.u32 256, 16
      %684 = vbcast.lane.b32.xlu0 %v674, %s683
      %v685 = vpop.permute.xlu0 %684
      %s687 = sor.u32 256, 24
      %688 = vbcast.lane.b32.xlu0 %v674, %s687
      %v689 = vpop.permute.xlu0 %688
      %v690 = vlaneseq
      %v691 = vshrl.u32 %v690, 7
      %v692 = vsub.s32 3, %v691
      %v693 = vrot.slane %v160, %v692
      %695 = vbcast.lane.b32.xlu0 %v693, 256
      %v696 = vpop.permute.xlu0 %695
      %s698 = sor.u32 256, 8
      %699 = vbcast.lane.b32.xlu0 %v693, %s698
      %v700 = vpop.permute.xlu0 %699
      %s702 = sor.u32 256, 16
      %703 = vbcast.lane.b32.xlu0 %v693, %s702
      %v704 = vpop.permute.xlu0 %703
      %s706 = sor.u32 256, 24
      %707 = vbcast.lane.b32.xlu0 %v693, %s706
      %v708 = vpop.permute.xlu0 %707
      %v709 = vlaneseq
      %v710 = vshrl.u32 %v709, 7
      %v711 = vsub.s32 4, %v710
      %v712 = vrot.slane %v160, %v711
      %714 = vbcast.lane.b32.xlu0 %v712, 256
      %v715 = vpop.permute.xlu0 %714
      %s717 = sor.u32 256, 8
      %718 = vbcast.lane.b32.xlu0 %v712, %s717
      %v719 = vpop.permute.xlu0 %718
      %s721 = sor.u32 256, 16
      %722 = vbcast.lane.b32.xlu0 %v712, %s721
      %v723 = vpop.permute.xlu0 %722
      %s725 = sor.u32 256, 24
      %726 = vbcast.lane.b32.xlu0 %v712, %s725
      %v727 = vpop.permute.xlu0 %726
      %v728 = vlaneseq
      %v729 = vshrl.u32 %v728, 7
      %v730 = vsub.s32 5, %v729
      %v731 = vrot.slane %v160, %v730
      %733 = vbcast.lane.b32.xlu0 %v731, 256
      %v734 = vpop.permute.xlu0 %733
      %s736 = sor.u32 256, 8
      %737 = vbcast.lane.b32.xlu0 %v731, %s736
      %v738 = vpop.permute.xlu0 %737
      %s740 = sor.u32 256, 16
      %741 = vbcast.lane.b32.xlu0 %v731, %s740
      %v742 = vpop.permute.xlu0 %741
      %s744 = sor.u32 256, 24
      %745 = vbcast.lane.b32.xlu0 %v731, %s744
      %v746 = vpop.permute.xlu0 %745
      %v747 = vlaneseq
      %v748 = vshrl.u32 %v747, 7
      %v749 = vsub.s32 6, %v748
      %v750 = vrot.slane %v160, %v749
      %752 = vbcast.lane.b32.xlu0 %v750, 256
      %v753 = vpop.permute.xlu0 %752
      %s755 = sor.u32 256, 8
      %756 = vbcast.lane.b32.xlu0 %v750, %s755
      %v757 = vpop.permute.xlu0 %756
      %s759 = sor.u32 256, 16
      %760 = vbcast.lane.b32.xlu0 %v750, %s759
      %v761 = vpop.permute.xlu0 %760
      %s763 = sor.u32 256, 24
      %764 = vbcast.lane.b32.xlu0 %v750, %s763
      %v765 = vpop.permute.xlu0 %764
      %v766 = vlaneseq
      %v767 = vshrl.u32 %v766, 7
      %v768 = vsub.s32 7, %v767
      %v769 = vrot.slane %v160, %v768
      %771 = vbcast.lane.b32.xlu0 %v769, 256
      %v772 = vpop.permute.xlu0 %771
      %s774 = sor.u32 256, 8
      %775 = vbcast.lane.b32.xlu0 %v769, %s774
      %v776 = vpop.permute.xlu0 %775
      %s778 = sor.u32 256, 16
      %779 = vbcast.lane.b32.xlu0 %v769, %s778
      %v780 = vpop.permute.xlu0 %779
      %s782 = sor.u32 256, 24
      %783 = vbcast.lane.b32.xlu0 %v769, %s782
      %v784 = vpop.permute.xlu0 %783
      %v785 = vlaneseq
      %v786 = vshrl.u32 %v785, 7
      %v787 = vsub.s32 0, %v786
      %v788 = vrot.slane %v161, %v787
      %790 = vbcast.lane.b32.xlu0 %v788, 256
      %v791 = vpop.permute.xlu0 %790
      %s793 = sor.u32 256, 8
      %794 = vbcast.lane.b32.xlu0 %v788, %s793
      %v795 = vpop.permute.xlu0 %794
      %s797 = sor.u32 256, 16
      %798 = vbcast.lane.b32.xlu0 %v788, %s797
      %v799 = vpop.permute.xlu0 %798
      %s801 = sor.u32 256, 24
      %802 = vbcast.lane.b32.xlu0 %v788, %s801
      %v803 = vpop.permute.xlu0 %802
      %v804 = vlaneseq
      %v805 = vshrl.u32 %v804, 7
      %v806 = vsub.s32 1, %v805
      %v807 = vrot.slane %v161, %v806
      %809 = vbcast.lane.b32.xlu0 %v807, 256
      %v810 = vpop.permute.xlu0 %809
      %s812 = sor.u32 256, 8
      %813 = vbcast.lane.b32.xlu0 %v807, %s812
      %v814 = vpop.permute.xlu0 %813
      %s816 = sor.u32 256, 16
      %817 = vbcast.lane.b32.xlu0 %v807, %s816
      %v818 = vpop.permute.xlu0 %817
      %s820 = sor.u32 256, 24
      %821 = vbcast.lane.b32.xlu0 %v807, %s820
      %v822 = vpop.permute.xlu0 %821
      %v823 = vlaneseq
      %v824 = vshrl.u32 %v823, 7
      %v825 = vsub.s32 2, %v824
      %v826 = vrot.slane %v161, %v825
      %828 = vbcast.lane.b32.xlu0 %v826, 256
      %v829 = vpop.permute.xlu0 %828
      %s831 = sor.u32 256, 8
      %832 = vbcast.lane.b32.xlu0 %v826, %s831
      %v833 = vpop.permute.xlu0 %832
      %s835 = sor.u32 256, 16
      %836 = vbcast.lane.b32.xlu0 %v826, %s835
      %v837 = vpop.permute.xlu0 %836
      %s839 = sor.u32 256, 24
      %840 = vbcast.lane.b32.xlu0 %v826, %s839
      %v841 = vpop.permute.xlu0 %840
      %v842 = vlaneseq
      %v843 = vshrl.u32 %v842, 7
      %v844 = vsub.s32 3, %v843
      %v845 = vrot.slane %v161, %v844
      %847 = vbcast.lane.b32.xlu0 %v845, 256
      %v848 = vpop.permute.xlu0 %847
      %s850 = sor.u32 256, 8
      %851 = vbcast.lane.b32.xlu0 %v845, %s850
      %v852 = vpop.permute.xlu0 %851
      %s854 = sor.u32 256, 16
      %855 = vbcast.lane.b32.xlu0 %v845, %s854
      %v856 = vpop.permute.xlu0 %855
      %s858 = sor.u32 256, 24
      %859 = vbcast.lane.b32.xlu0 %v845, %s858
      %v860 = vpop.permute.xlu0 %859
      %v861 = vlaneseq
      %v862 = vshrl.u32 %v861, 7
      %v863 = vsub.s32 4, %v862
      %v864 = vrot.slane %v161, %v863
      %866 = vbcast.lane.b32.xlu0 %v864, 256
      %v867 = vpop.permute.xlu0 %866
      %s869 = sor.u32 256, 8
      %870 = vbcast.lane.b32.xlu0 %v864, %s869
      %v871 = vpop.permute.xlu0 %870
      %s873 = sor.u32 256, 16
      %874 = vbcast.lane.b32.xlu0 %v864, %s873
      %v875 = vpop.permute.xlu0 %874
      %s877 = sor.u32 256, 24
      %878 = vbcast.lane.b32.xlu0 %v864, %s877
      %v879 = vpop.permute.xlu0 %878
      %v880 = vlaneseq
      %v881 = vshrl.u32 %v880, 7
      %v882 = vsub.s32 5, %v881
      %v883 = vrot.slane %v161, %v882
      %885 = vbcast.lane.b32.xlu0 %v883, 256
      %v886 = vpop.permute.xlu0 %885
      %s888 = sor.u32 256, 8
      %889 = vbcast.lane.b32.xlu0 %v883, %s888
      %v890 = vpop.permute.xlu0 %889
      %s892 = sor.u32 256, 16
      %893 = vbcast.lane.b32.xlu0 %v883, %s892
      %v894 = vpop.permute.xlu0 %893
      %s896 = sor.u32 256, 24
      %897 = vbcast.lane.b32.xlu0 %v883, %s896
      %v898 = vpop.permute.xlu0 %897
      %v899 = vlaneseq
      %v900 = vshrl.u32 %v899, 7
      %v901 = vsub.s32 6, %v900
      %v902 = vrot.slane %v161, %v901
      %904 = vbcast.lane.b32.xlu0 %v902, 256
      %v905 = vpop.permute.xlu0 %904
      %s907 = sor.u32 256, 8
      %908 = vbcast.lane.b32.xlu0 %v902, %s907
      %v909 = vpop.permute.xlu0 %908
      %s911 = sor.u32 256, 16
      %912 = vbcast.lane.b32.xlu0 %v902, %s911
      %v913 = vpop.permute.xlu0 %912
      %s915 = sor.u32 256, 24
      %916 = vbcast.lane.b32.xlu0 %v902, %s915
      %v917 = vpop.permute.xlu0 %916
      %v918 = vlaneseq
      %v919 = vshrl.u32 %v918, 7
      %v920 = vsub.s32 7, %v919
      %v921 = vrot.slane %v161, %v920
      %923 = vbcast.lane.b32.xlu0 %v921, 256
      %v924 = vpop.permute.xlu0 %923
      %s926 = sor.u32 256, 8
      %927 = vbcast.lane.b32.xlu0 %v921, %s926
      %v928 = vpop.permute.xlu0 %927
      %s930 = sor.u32 256, 16
      %931 = vbcast.lane.b32.xlu0 %v921, %s930
      %v932 = vpop.permute.xlu0 %931
      %s934 = sor.u32 256, 24
      %935 = vbcast.lane.b32.xlu0 %v921, %s934
      %v936 = vpop.permute.xlu0 %935
      %v937 = vlaneseq
      %v938 = vshrl.u32 %v937, 7
      %v939 = vsub.s32 0, %v938
      %v940 = vrot.slane %v162, %v939
      %942 = vbcast.lane.b32.xlu0 %v940, 256
      %v943 = vpop.permute.xlu0 %942
      %s945 = sor.u32 256, 8
      %946 = vbcast.lane.b32.xlu0 %v940, %s945
      %v947 = vpop.permute.xlu0 %946
      %s949 = sor.u32 256, 16
      %950 = vbcast.lane.b32.xlu0 %v940, %s949
      %v951 = vpop.permute.xlu0 %950
      %s953 = sor.u32 256, 24
      %954 = vbcast.lane.b32.xlu0 %v940, %s953
      %v955 = vpop.permute.xlu0 %954
      %v956 = vlaneseq
      %v957 = vshrl.u32 %v956, 7
      %v958 = vsub.s32 1, %v957
      %v959 = vrot.slane %v162, %v958
      %961 = vbcast.lane.b32.xlu0 %v959, 256
      %v962 = vpop.permute.xlu0 %961
      %s964 = sor.u32 256, 8
      %965 = vbcast.lane.b32.xlu0 %v959, %s964
      %v966 = vpop.permute.xlu0 %965
      %s968 = sor.u32 256, 16
      %969 = vbcast.lane.b32.xlu0 %v959, %s968
      %v970 = vpop.permute.xlu0 %969
      %s972 = sor.u32 256, 24
      %973 = vbcast.lane.b32.xlu0 %v959, %s972
      %v974 = vpop.permute.xlu0 %973
      %v975 = vlaneseq
      %v976 = vshrl.u32 %v975, 7
      %v977 = vsub.s32 2, %v976
      %v978 = vrot.slane %v162, %v977
      %980 = vbcast.lane.b32.xlu0 %v978, 256
      %v981 = vpop.permute.xlu0 %980
      %s983 = sor.u32 256, 8
      %984 = vbcast.lane.b32.xlu0 %v978, %s983
      %v985 = vpop.permute.xlu0 %984
      %s987 = sor.u32 256, 16
      %988 = vbcast.lane.b32.xlu0 %v978, %s987
      %v989 = vpop.permute.xlu0 %988
      %s991 = sor.u32 256, 24
      %992 = vbcast.lane.b32.xlu0 %v978, %s991
      %v993 = vpop.permute.xlu0 %992
      %v994 = vlaneseq
      %v995 = vshrl.u32 %v994, 7
      %v996 = vsub.s32 3, %v995
      %v997 = vrot.slane %v162, %v996
      %999 = vbcast.lane.b32.xlu0 %v997, 256
      %v1000 = vpop.permute.xlu0 %999
      %s1002 = sor.u32 256, 8
      %1003 = vbcast.lane.b32.xlu0 %v997, %s1002
      %v1004 = vpop.permute.xlu0 %1003
      %s1006 = sor.u32 256, 16
      %1007 = vbcast.lane.b32.xlu0 %v997, %s1006
      %v1008 = vpop.permute.xlu0 %1007
      %s1010 = sor.u32 256, 24
      %1011 = vbcast.lane.b32.xlu0 %v997, %s1010
      %v1012 = vpop.permute.xlu0 %1011
      %v1013 = vlaneseq
      %v1014 = vshrl.u32 %v1013, 7
      %v1015 = vsub.s32 4, %v1014
      %v1016 = vrot.slane %v162, %v1015
      %1018 = vbcast.lane.b32.xlu0 %v1016, 256
      %v1019 = vpop.permute.xlu0 %1018
      %s1021 = sor.u32 256, 8
      %1022 = vbcast.lane.b32.xlu0 %v1016, %s1021
      %v1023 = vpop.permute.xlu0 %1022
      %s1025 = sor.u32 256, 16
      %1026 = vbcast.lane.b32.xlu0 %v1016, %s1025
      %v1027 = vpop.permute.xlu0 %1026
      %s1029 = sor.u32 256, 24
      %1030 = vbcast.lane.b32.xlu0 %v1016, %s1029
      %v1031 = vpop.permute.xlu0 %1030
      %v1032 = vlaneseq
      %v1033 = vshrl.u32 %v1032, 7
      %v1034 = vsub.s32 5, %v1033
      %v1035 = vrot.slane %v162, %v1034
      %1037 = vbcast.lane.b32.xlu0 %v1035, 256
      %v1038 = vpop.permute.xlu0 %1037
      %s1040 = sor.u32 256, 8
      %1041 = vbcast.lane.b32.xlu0 %v1035, %s1040
      %v1042 = vpop.permute.xlu0 %1041
      %s1044 = sor.u32 256, 16
      %1045 = vbcast.lane.b32.xlu0 %v1035, %s1044
      %v1046 = vpop.permute.xlu0 %1045
      %s1048 = sor.u32 256, 24
      %1049 = vbcast.lane.b32.xlu0 %v1035, %s1048
      %v1050 = vpop.permute.xlu0 %1049
      %v1051 = vlaneseq
      %v1052 = vshrl.u32 %v1051, 7
      %v1053 = vsub.s32 6, %v1052
      %v1054 = vrot.slane %v162, %v1053
      %1056 = vbcast.lane.b32.xlu0 %v1054, 256
      %v1057 = vpop.permute.xlu0 %1056
      %s1059 = sor.u32 256, 8
      %1060 = vbcast.lane.b32.xlu0 %v1054, %s1059
      %v1061 = vpop.permute.xlu0 %1060
      %s1063 = sor.u32 256, 16
      %1064 = vbcast.lane.b32.xlu0 %v1054, %s1063
      %v1065 = vpop.permute.xlu0 %1064
      %s1067 = sor.u32 256, 24
      %1068 = vbcast.lane.b32.xlu0 %v1054, %s1067
      %v1069 = vpop.permute.xlu0 %1068
      %v1070 = vlaneseq
      %v1071 = vshrl.u32 %v1070, 7
      %v1072 = vsub.s32 7, %v1071
      %v1073 = vrot.slane %v162, %v1072
      %1075 = vbcast.lane.b32.xlu0 %v1073, 256
      %v1076 = vpop.permute.xlu0 %1075
      %s1078 = sor.u32 256, 8
      %1079 = vbcast.lane.b32.xlu0 %v1073, %s1078
      %v1080 = vpop.permute.xlu0 %1079
      %s1082 = sor.u32 256, 16
      %1083 = vbcast.lane.b32.xlu0 %v1073, %s1082
      %v1084 = vpop.permute.xlu0 %1083
      %s1086 = sor.u32 256, 24
      %1087 = vbcast.lane.b32.xlu0 %v1073, %s1086
      %v1088 = vpop.permute.xlu0 %1087
      %v1089 = vlaneseq
      %v1090 = vshrl.u32 %v1089, 7
      %v1091 = vsub.s32 0, %v1090
      %v1092 = vrot.slane %v163, %v1091
      %1094 = vbcast.lane.b32.xlu0 %v1092, 256
      %v1095 = vpop.permute.xlu0 %1094
      %s1097 = sor.u32 256, 8
      %1098 = vbcast.lane.b32.xlu0 %v1092, %s1097
      %v1099 = vpop.permute.xlu0 %1098
      %s1101 = sor.u32 256, 16
      %1102 = vbcast.lane.b32.xlu0 %v1092, %s1101
      %v1103 = vpop.permute.xlu0 %1102
      %s1105 = sor.u32 256, 24
      %1106 = vbcast.lane.b32.xlu0 %v1092, %s1105
      %v1107 = vpop.permute.xlu0 %1106
      %v1108 = vlaneseq
      %v1109 = vshrl.u32 %v1108, 7
      %v1110 = vsub.s32 1, %v1109
      %v1111 = vrot.slane %v163, %v1110
      %1113 = vbcast.lane.b32.xlu0 %v1111, 256
      %v1114 = vpop.permute.xlu0 %1113
      %s1116 = sor.u32 256, 8
      %1117 = vbcast.lane.b32.xlu0 %v1111, %s1116
      %v1118 = vpop.permute.xlu0 %1117
      %s1120 = sor.u32 256, 16
      %1121 = vbcast.lane.b32.xlu0 %v1111, %s1120
      %v1122 = vpop.permute.xlu0 %1121
      %s1124 = sor.u32 256, 24
      %1125 = vbcast.lane.b32.xlu0 %v1111, %s1124
      %v1126 = vpop.permute.xlu0 %1125
      %v1127 = vlaneseq
      %v1128 = vshrl.u32 %v1127, 7
      %v1129 = vsub.s32 2, %v1128
      %v1130 = vrot.slane %v163, %v1129
      %1132 = vbcast.lane.b32.xlu0 %v1130, 256
      %v1133 = vpop.permute.xlu0 %1132
      %s1135 = sor.u32 256, 8
      %1136 = vbcast.lane.b32.xlu0 %v1130, %s1135
      %v1137 = vpop.permute.xlu0 %1136
      %s1139 = sor.u32 256, 16
      %1140 = vbcast.lane.b32.xlu0 %v1130, %s1139
      %v1141 = vpop.permute.xlu0 %1140
      %s1143 = sor.u32 256, 24
      %1144 = vbcast.lane.b32.xlu0 %v1130, %s1143
      %v1145 = vpop.permute.xlu0 %1144
      %v1146 = vlaneseq
      %v1147 = vshrl.u32 %v1146, 7
      %v1148 = vsub.s32 3, %v1147
      %v1149 = vrot.slane %v163, %v1148
      %1151 = vbcast.lane.b32.xlu0 %v1149, 256
      %v1152 = vpop.permute.xlu0 %1151
      %s1154 = sor.u32 256, 8
      %1155 = vbcast.lane.b32.xlu0 %v1149, %s1154
      %v1156 = vpop.permute.xlu0 %1155
      %s1158 = sor.u32 256, 16
      %1159 = vbcast.lane.b32.xlu0 %v1149, %s1158
      %v1160 = vpop.permute.xlu0 %1159
      %s1162 = sor.u32 256, 24
      %1163 = vbcast.lane.b32.xlu0 %v1149, %s1162
      %v1164 = vpop.permute.xlu0 %1163
      %v1165 = vlaneseq
      %v1166 = vshrl.u32 %v1165, 7
      %v1167 = vsub.s32 4, %v1166
      %v1168 = vrot.slane %v163, %v1167
      %1170 = vbcast.lane.b32.xlu0 %v1168, 256
      %v1171 = vpop.permute.xlu0 %1170
      %s1173 = sor.u32 256, 8
      %1174 = vbcast.lane.b32.xlu0 %v1168, %s1173
      %v1175 = vpop.permute.xlu0 %1174
      %s1177 = sor.u32 256, 16
      %1178 = vbcast.lane.b32.xlu0 %v1168, %s1177
      %v1179 = vpop.permute.xlu0 %1178
      %s1181 = sor.u32 256, 24
      %1182 = vbcast.lane.b32.xlu0 %v1168, %s1181
      %v1183 = vpop.permute.xlu0 %1182
      %v1184 = vlaneseq
      %v1185 = vshrl.u32 %v1184, 7
      %v1186 = vsub.s32 5, %v1185
      %v1187 = vrot.slane %v163, %v1186
      %1189 = vbcast.lane.b32.xlu0 %v1187, 256
      %v1190 = vpop.permute.xlu0 %1189
      %s1192 = sor.u32 256, 8
      %1193 = vbcast.lane.b32.xlu0 %v1187, %s1192
      %v1194 = vpop.permute.xlu0 %1193
      %s1196 = sor.u32 256, 16
      %1197 = vbcast.lane.b32.xlu0 %v1187, %s1196
      %v1198 = vpop.permute.xlu0 %1197
      %s1200 = sor.u32 256, 24
      %1201 = vbcast.lane.b32.xlu0 %v1187, %s1200
      %v1202 = vpop.permute.xlu0 %1201
      %v1203 = vlaneseq
      %v1204 = vshrl.u32 %v1203, 7
      %v1205 = vsub.s32 6, %v1204
      %v1206 = vrot.slane %v163, %v1205
      %1208 = vbcast.lane.b32.xlu0 %v1206, 256
      %v1209 = vpop.permute.xlu0 %1208
      %s1211 = sor.u32 256, 8
      %1212 = vbcast.lane.b32.xlu0 %v1206, %s1211
      %v1213 = vpop.permute.xlu0 %1212
      %s1215 = sor.u32 256, 16
      %1216 = vbcast.lane.b32.xlu0 %v1206, %s1215
      %v1217 = vpop.permute.xlu0 %1216
      %s1219 = sor.u32 256, 24
      %1220 = vbcast.lane.b32.xlu0 %v1206, %s1219
      %v1221 = vpop.permute.xlu0 %1220
      %v1222 = vlaneseq
      %v1223 = vshrl.u32 %v1222, 7
      %v1224 = vsub.s32 7, %v1223
      %v1225 = vrot.slane %v163, %v1224
      %1227 = vbcast.lane.b32.xlu0 %v1225, 256
      %v1228 = vpop.permute.xlu0 %1227
      %s1230 = sor.u32 256, 8
      %1231 = vbcast.lane.b32.xlu0 %v1225, %s1230
      %v1232 = vpop.permute.xlu0 %1231
      %s1234 = sor.u32 256, 16
      %1235 = vbcast.lane.b32.xlu0 %v1225, %s1234
      %v1236 = vpop.permute.xlu0 %1235
      %s1238 = sor.u32 256, 24
      %1239 = vbcast.lane.b32.xlu0 %v1225, %s1238
      %v1240 = vpop.permute.xlu0 %1239
      %v1241 = vlaneseq
      %v1242 = vshrl.u32 %v1241, 7
      %v1243 = vsub.s32 0, %v1242
      %v1244 = vrot.slane %v164, %v1243
      %1246 = vbcast.lane.b32.xlu0 %v1244, 256
      %v1247 = vpop.permute.xlu0 %1246
      %s1249 = sor.u32 256, 8
      %1250 = vbcast.lane.b32.xlu0 %v1244, %s1249
      %v1251 = vpop.permute.xlu0 %1250
      %s1253 = sor.u32 256, 16
      %1254 = vbcast.lane.b32.xlu0 %v1244, %s1253
      %v1255 = vpop.permute.xlu0 %1254
      %s1257 = sor.u32 256, 24
      %1258 = vbcast.lane.b32.xlu0 %v1244, %s1257
      %v1259 = vpop.permute.xlu0 %1258
      %v1260 = vlaneseq
      %v1261 = vshrl.u32 %v1260, 7
      %v1262 = vsub.s32 1, %v1261
      %v1263 = vrot.slane %v164, %v1262
      %1265 = vbcast.lane.b32.xlu0 %v1263, 256
      %v1266 = vpop.permute.xlu0 %1265
      %s1268 = sor.u32 256, 8
      %1269 = vbcast.lane.b32.xlu0 %v1263, %s1268
      %v1270 = vpop.permute.xlu0 %1269
      %s1272 = sor.u32 256, 16
      %1273 = vbcast.lane.b32.xlu0 %v1263, %s1272
      %v1274 = vpop.permute.xlu0 %1273
      %s1276 = sor.u32 256, 24
      %1277 = vbcast.lane.b32.xlu0 %v1263, %s1276
      %v1278 = vpop.permute.xlu0 %1277
      %v1279 = vlaneseq
      %v1280 = vshrl.u32 %v1279, 7
      %v1281 = vsub.s32 2, %v1280
      %v1282 = vrot.slane %v164, %v1281
      %1284 = vbcast.lane.b32.xlu0 %v1282, 256
      %v1285 = vpop.permute.xlu0 %1284
      %s1287 = sor.u32 256, 8
      %1288 = vbcast.lane.b32.xlu0 %v1282, %s1287
      %v1289 = vpop.permute.xlu0 %1288
      %s1291 = sor.u32 256, 16
      %1292 = vbcast.lane.b32.xlu0 %v1282, %s1291
      %v1293 = vpop.permute.xlu0 %1292
      %s1295 = sor.u32 256, 24
      %1296 = vbcast.lane.b32.xlu0 %v1282, %s1295
      %v1297 = vpop.permute.xlu0 %1296
      %v1298 = vlaneseq
      %v1299 = vshrl.u32 %v1298, 7
      %v1300 = vsub.s32 3, %v1299
      %v1301 = vrot.slane %v164, %v1300
      %1303 = vbcast.lane.b32.xlu0 %v1301, 256
      %v1304 = vpop.permute.xlu0 %1303
      %s1306 = sor.u32 256, 8
      %1307 = vbcast.lane.b32.xlu0 %v1301, %s1306
      %v1308 = vpop.permute.xlu0 %1307
      %s1310 = sor.u32 256, 16
      %1311 = vbcast.lane.b32.xlu0 %v1301, %s1310
      %v1312 = vpop.permute.xlu0 %1311
      %s1314 = sor.u32 256, 24
      %1315 = vbcast.lane.b32.xlu0 %v1301, %s1314
      %v1316 = vpop.permute.xlu0 %1315
      %v1317 = vlaneseq
      %v1318 = vshrl.u32 %v1317, 7
      %v1319 = vsub.s32 4, %v1318
      %v1320 = vrot.slane %v164, %v1319
      %1322 = vbcast.lane.b32.xlu0 %v1320, 256
      %v1323 = vpop.permute.xlu0 %1322
      %s1325 = sor.u32 256, 8
      %1326 = vbcast.lane.b32.xlu0 %v1320, %s1325
      %v1327 = vpop.permute.xlu0 %1326
      %s1329 = sor.u32 256, 16
      %1330 = vbcast.lane.b32.xlu0 %v1320, %s1329
      %v1331 = vpop.permute.xlu0 %1330
      %s1333 = sor.u32 256, 24
      %1334 = vbcast.lane.b32.xlu0 %v1320, %s1333
      %v1335 = vpop.permute.xlu0 %1334
      %v1336 = vlaneseq
      %v1337 = vshrl.u32 %v1336, 7
      %v1338 = vsub.s32 5, %v1337
      %v1339 = vrot.slane %v164, %v1338
      %1341 = vbcast.lane.b32.xlu0 %v1339, 256
      %v1342 = vpop.permute.xlu0 %1341
      %s1344 = sor.u32 256, 8
      %1345 = vbcast.lane.b32.xlu0 %v1339, %s1344
      %v1346 = vpop.permute.xlu0 %1345
      %s1348 = sor.u32 256, 16
      %1349 = vbcast.lane.b32.xlu0 %v1339, %s1348
      %v1350 = vpop.permute.xlu0 %1349
      %s1352 = sor.u32 256, 24
      %1353 = vbcast.lane.b32.xlu0 %v1339, %s1352
      %v1354 = vpop.permute.xlu0 %1353
      %v1355 = vlaneseq
      %v1356 = vshrl.u32 %v1355, 7
      %v1357 = vsub.s32 6, %v1356
      %v1358 = vrot.slane %v164, %v1357
      %1360 = vbcast.lane.b32.xlu0 %v1358, 256
      %v1361 = vpop.permute.xlu0 %1360
      %s1363 = sor.u32 256, 8
      %1364 = vbcast.lane.b32.xlu0 %v1358, %s1363
      %v1365 = vpop.permute.xlu0 %1364
      %s1367 = sor.u32 256, 16
      %1368 = vbcast.lane.b32.xlu0 %v1358, %s1367
      %v1369 = vpop.permute.xlu0 %1368
      %s1371 = sor.u32 256, 24
      %1372 = vbcast.lane.b32.xlu0 %v1358, %s1371
      %v1373 = vpop.permute.xlu0 %1372
      %v1374 = vlaneseq
      %v1375 = vshrl.u32 %v1374, 7
      %v1376 = vsub.s32 7, %v1375
      %v1377 = vrot.slane %v164, %v1376
      %1379 = vbcast.lane.b32.xlu0 %v1377, 256
      %v1380 = vpop.permute.xlu0 %1379
      %s1382 = sor.u32 256, 8
      %1383 = vbcast.lane.b32.xlu0 %v1377, %s1382
      %v1384 = vpop.permute.xlu0 %1383
      %s1386 = sor.u32 256, 16
      %1387 = vbcast.lane.b32.xlu0 %v1377, %s1386
      %v1388 = vpop.permute.xlu0 %1387
      %s1390 = sor.u32 256, 24
      %1391 = vbcast.lane.b32.xlu0 %v1377, %s1390
      %v1392 = vpop.permute.xlu0 %1391
      %v1393 = vlaneseq
      %v1394 = vshrl.u32 %v1393, 7
      %v1395 = vsub.s32 0, %v1394
      %v1396 = vrot.slane %v165, %v1395
      %1398 = vbcast.lane.b32.xlu0 %v1396, 256
      %v1399 = vpop.permute.xlu0 %1398
      %s1401 = sor.u32 256, 8
      %1402 = vbcast.lane.b32.xlu0 %v1396, %s1401
      %v1403 = vpop.permute.xlu0 %1402
      %s1405 = sor.u32 256, 16
      %1406 = vbcast.lane.b32.xlu0 %v1396, %s1405
      %v1407 = vpop.permute.xlu0 %1406
      %s1409 = sor.u32 256, 24
      %1410 = vbcast.lane.b32.xlu0 %v1396, %s1409
      %v1411 = vpop.permute.xlu0 %1410
      %v1412 = vlaneseq
      %v1413 = vshrl.u32 %v1412, 7
      %v1414 = vsub.s32 1, %v1413
      %v1415 = vrot.slane %v165, %v1414
      %1417 = vbcast.lane.b32.xlu0 %v1415, 256
      %v1418 = vpop.permute.xlu0 %1417
      %s1420 = sor.u32 256, 8
      %1421 = vbcast.lane.b32.xlu0 %v1415, %s1420
      %v1422 = vpop.permute.xlu0 %1421
      %s1424 = sor.u32 256, 16
      %1425 = vbcast.lane.b32.xlu0 %v1415, %s1424
      %v1426 = vpop.permute.xlu0 %1425
      %s1428 = sor.u32 256, 24
      %1429 = vbcast.lane.b32.xlu0 %v1415, %s1428
      %v1430 = vpop.permute.xlu0 %1429
      %v1431 = vlaneseq
      %v1432 = vshrl.u32 %v1431, 7
      %v1433 = vsub.s32 2, %v1432
      %v1434 = vrot.slane %v165, %v1433
      %1436 = vbcast.lane.b32.xlu0 %v1434, 256
      %v1437 = vpop.permute.xlu0 %1436
      %s1439 = sor.u32 256, 8
      %1440 = vbcast.lane.b32.xlu0 %v1434, %s1439
      %v1441 = vpop.permute.xlu0 %1440
      %s1443 = sor.u32 256, 16
      %1444 = vbcast.lane.b32.xlu0 %v1434, %s1443
      %v1445 = vpop.permute.xlu0 %1444
      %s1447 = sor.u32 256, 24
      %1448 = vbcast.lane.b32.xlu0 %v1434, %s1447
      %v1449 = vpop.permute.xlu0 %1448
      %v1450 = vlaneseq
      %v1451 = vshrl.u32 %v1450, 7
      %v1452 = vsub.s32 3, %v1451
      %v1453 = vrot.slane %v165, %v1452
      %1455 = vbcast.lane.b32.xlu0 %v1453, 256
      %v1456 = vpop.permute.xlu0 %1455
      %s1458 = sor.u32 256, 8
      %1459 = vbcast.lane.b32.xlu0 %v1453, %s1458
      %v1460 = vpop.permute.xlu0 %1459
      %s1462 = sor.u32 256, 16
      %1463 = vbcast.lane.b32.xlu0 %v1453, %s1462
      %v1464 = vpop.permute.xlu0 %1463
      %s1466 = sor.u32 256, 24
      %1467 = vbcast.lane.b32.xlu0 %v1453, %s1466
      %v1468 = vpop.permute.xlu0 %1467
      %v1469 = vlaneseq
      %v1470 = vshrl.u32 %v1469, 7
      %v1471 = vsub.s32 4, %v1470
      %v1472 = vrot.slane %v165, %v1471
      %1474 = vbcast.lane.b32.xlu0 %v1472, 256
      %v1475 = vpop.permute.xlu0 %1474
      %s1477 = sor.u32 256, 8
      %1478 = vbcast.lane.b32.xlu0 %v1472, %s1477
      %v1479 = vpop.permute.xlu0 %1478
      %s1481 = sor.u32 256, 16
      %1482 = vbcast.lane.b32.xlu0 %v1472, %s1481
      %v1483 = vpop.permute.xlu0 %1482
      %s1485 = sor.u32 256, 24
      %1486 = vbcast.lane.b32.xlu0 %v1472, %s1485
      %v1487 = vpop.permute.xlu0 %1486
      %v1488 = vlaneseq
      %v1489 = vshrl.u32 %v1488, 7
      %v1490 = vsub.s32 5, %v1489
      %v1491 = vrot.slane %v165, %v1490
      %1493 = vbcast.lane.b32.xlu0 %v1491, 256
      %v1494 = vpop.permute.xlu0 %1493
      %s1496 = sor.u32 256, 8
      %1497 = vbcast.lane.b32.xlu0 %v1491, %s1496
      %v1498 = vpop.permute.xlu0 %1497
      %s1500 = sor.u32 256, 16
      %1501 = vbcast.lane.b32.xlu0 %v1491, %s1500
      %v1502 = vpop.permute.xlu0 %1501
      %s1504 = sor.u32 256, 24
      %1505 = vbcast.lane.b32.xlu0 %v1491, %s1504
      %v1506 = vpop.permute.xlu0 %1505
      %v1507 = vlaneseq
      %v1508 = vshrl.u32 %v1507, 7
      %v1509 = vsub.s32 6, %v1508
      %v1510 = vrot.slane %v165, %v1509
      %1512 = vbcast.lane.b32.xlu0 %v1510, 256
      %v1513 = vpop.permute.xlu0 %1512
      %s1515 = sor.u32 256, 8
      %1516 = vbcast.lane.b32.xlu0 %v1510, %s1515
      %v1517 = vpop.permute.xlu0 %1516
      %s1519 = sor.u32 256, 16
      %1520 = vbcast.lane.b32.xlu0 %v1510, %s1519
      %v1521 = vpop.permute.xlu0 %1520
      %s1523 = sor.u32 256, 24
      %1524 = vbcast.lane.b32.xlu0 %v1510, %s1523
      %v1525 = vpop.permute.xlu0 %1524
      %v1526 = vlaneseq
      %v1527 = vshrl.u32 %v1526, 7
      %v1528 = vsub.s32 7, %v1527
      %v1529 = vrot.slane %v165, %v1528
      %1531 = vbcast.lane.b32.xlu0 %v1529, 256
      %v1532 = vpop.permute.xlu0 %1531
      %s1534 = sor.u32 256, 8
      %1535 = vbcast.lane.b32.xlu0 %v1529, %s1534
      %v1536 = vpop.permute.xlu0 %1535
      %s1538 = sor.u32 256, 16
      %1539 = vbcast.lane.b32.xlu0 %v1529, %s1538
      %v1540 = vpop.permute.xlu0 %1539
      %s1542 = sor.u32 256, 24
      %1543 = vbcast.lane.b32.xlu0 %v1529, %s1542
      %v1544 = vpop.permute.xlu0 %1543
      %v1545 = vlaneseq
      %v1546 = vshrl.u32 %v1545, 7
      %v1547 = vsub.s32 0, %v1546
      %v1548 = vrot.slane %v166, %v1547
      %1550 = vbcast.lane.b32.xlu0 %v1548, 256
      %v1551 = vpop.permute.xlu0 %1550
      %s1553 = sor.u32 256, 8
      %1554 = vbcast.lane.b32.xlu0 %v1548, %s1553
      %v1555 = vpop.permute.xlu0 %1554
      %s1557 = sor.u32 256, 16
      %1558 = vbcast.lane.b32.xlu0 %v1548, %s1557
      %v1559 = vpop.permute.xlu0 %1558
      %s1561 = sor.u32 256, 24
      %1562 = vbcast.lane.b32.xlu0 %v1548, %s1561
      %v1563 = vpop.permute.xlu0 %1562
      %v1564 = vlaneseq
      %v1565 = vshrl.u32 %v1564, 7
      %v1566 = vsub.s32 1, %v1565
      %v1567 = vrot.slane %v166, %v1566
      %1569 = vbcast.lane.b32.xlu0 %v1567, 256
      %v1570 = vpop.permute.xlu0 %1569
      %s1572 = sor.u32 256, 8
      %1573 = vbcast.lane.b32.xlu0 %v1567, %s1572
      %v1574 = vpop.permute.xlu0 %1573
      %s1576 = sor.u32 256, 16
      %1577 = vbcast.lane.b32.xlu0 %v1567, %s1576
      %v1578 = vpop.permute.xlu0 %1577
      %s1580 = sor.u32 256, 24
      %1581 = vbcast.lane.b32.xlu0 %v1567, %s1580
      %v1582 = vpop.permute.xlu0 %1581
      %v1583 = vlaneseq
      %v1584 = vshrl.u32 %v1583, 7
      %v1585 = vsub.s32 2, %v1584
      %v1586 = vrot.slane %v166, %v1585
      %1588 = vbcast.lane.b32.xlu0 %v1586, 256
      %v1589 = vpop.permute.xlu0 %1588
      %s1591 = sor.u32 256, 8
      %1592 = vbcast.lane.b32.xlu0 %v1586, %s1591
      %v1593 = vpop.permute.xlu0 %1592
      %s1595 = sor.u32 256, 16
      %1596 = vbcast.lane.b32.xlu0 %v1586, %s1595
      %v1597 = vpop.permute.xlu0 %1596
      %s1599 = sor.u32 256, 24
      %1600 = vbcast.lane.b32.xlu0 %v1586, %s1599
      %v1601 = vpop.permute.xlu0 %1600
      %v1602 = vlaneseq
      %v1603 = vshrl.u32 %v1602, 7
      %v1604 = vsub.s32 3, %v1603
      %v1605 = vrot.slane %v166, %v1604
      %1607 = vbcast.lane.b32.xlu0 %v1605, 256
      %v1608 = vpop.permute.xlu0 %1607
      %s1610 = sor.u32 256, 8
      %1611 = vbcast.lane.b32.xlu0 %v1605, %s1610
      %v1612 = vpop.permute.xlu0 %1611
      %s1614 = sor.u32 256, 16
      %1615 = vbcast.lane.b32.xlu0 %v1605, %s1614
      %v1616 = vpop.permute.xlu0 %1615
      %s1618 = sor.u32 256, 24
      %1619 = vbcast.lane.b32.xlu0 %v1605, %s1618
      %v1620 = vpop.permute.xlu0 %1619
      %v1621 = vlaneseq
      %v1622 = vshrl.u32 %v1621, 7
      %v1623 = vsub.s32 4, %v1622
      %v1624 = vrot.slane %v166, %v1623
      %1626 = vbcast.lane.b32.xlu0 %v1624, 256
      %v1627 = vpop.permute.xlu0 %1626
      %s1629 = sor.u32 256, 8
      %1630 = vbcast.lane.b32.xlu0 %v1624, %s1629
      %v1631 = vpop.permute.xlu0 %1630
      %s1633 = sor.u32 256, 16
      %1634 = vbcast.lane.b32.xlu0 %v1624, %s1633
      %v1635 = vpop.permute.xlu0 %1634
      %s1637 = sor.u32 256, 24
      %1638 = vbcast.lane.b32.xlu0 %v1624, %s1637
      %v1639 = vpop.permute.xlu0 %1638
      %v1640 = vlaneseq
      %v1641 = vshrl.u32 %v1640, 7
      %v1642 = vsub.s32 5, %v1641
      %v1643 = vrot.slane %v166, %v1642
      %1645 = vbcast.lane.b32.xlu0 %v1643, 256
      %v1646 = vpop.permute.xlu0 %1645
      %s1648 = sor.u32 256, 8
      %1649 = vbcast.lane.b32.xlu0 %v1643, %s1648
      %v1650 = vpop.permute.xlu0 %1649
      %s1652 = sor.u32 256, 16
      %1653 = vbcast.lane.b32.xlu0 %v1643, %s1652
      %v1654 = vpop.permute.xlu0 %1653
      %s1656 = sor.u32 256, 24
      %1657 = vbcast.lane.b32.xlu0 %v1643, %s1656
      %v1658 = vpop.permute.xlu0 %1657
      %v1659 = vlaneseq
      %v1660 = vshrl.u32 %v1659, 7
      %v1661 = vsub.s32 6, %v1660
      %v1662 = vrot.slane %v166, %v1661
      %1664 = vbcast.lane.b32.xlu0 %v1662, 256
      %v1665 = vpop.permute.xlu0 %1664
      %s1667 = sor.u32 256, 8
      %1668 = vbcast.lane.b32.xlu0 %v1662, %s1667
      %v1669 = vpop.permute.xlu0 %1668
      %s1671 = sor.u32 256, 16
      %1672 = vbcast.lane.b32.xlu0 %v1662, %s1671
      %v1673 = vpop.permute.xlu0 %1672
      %s1675 = sor.u32 256, 24
      %1676 = vbcast.lane.b32.xlu0 %v1662, %s1675
      %v1677 = vpop.permute.xlu0 %1676
      %v1678 = vlaneseq
      %v1679 = vshrl.u32 %v1678, 7
      %v1680 = vsub.s32 7, %v1679
      %v1681 = vrot.slane %v166, %v1680
      %1683 = vbcast.lane.b32.xlu0 %v1681, 256
      %v1684 = vpop.permute.xlu0 %1683
      %s1686 = sor.u32 256, 8
      %1687 = vbcast.lane.b32.xlu0 %v1681, %s1686
      %v1688 = vpop.permute.xlu0 %1687
      %s1690 = sor.u32 256, 16
      %1691 = vbcast.lane.b32.xlu0 %v1681, %s1690
      %v1692 = vpop.permute.xlu0 %1691
      %s1694 = sor.u32 256, 24
      %1695 = vbcast.lane.b32.xlu0 %v1681, %s1694
      %v1696 = vpop.permute.xlu0 %1695
      %v1697 = vlaneseq
      %v1698 = vshrl.u32 %v1697, 7
      %v1699 = vsub.s32 0, %v1698
      %v1700 = vrot.slane %v167, %v1699
      %1702 = vbcast.lane.b32.xlu0 %v1700, 256
      %v1703 = vpop.permute.xlu0 %1702
      %s1705 = sor.u32 256, 8
      %1706 = vbcast.lane.b32.xlu0 %v1700, %s1705
      %v1707 = vpop.permute.xlu0 %1706
      %s1709 = sor.u32 256, 16
      %1710 = vbcast.lane.b32.xlu0 %v1700, %s1709
      %v1711 = vpop.permute.xlu0 %1710
      %s1713 = sor.u32 256, 24
      %1714 = vbcast.lane.b32.xlu0 %v1700, %s1713
      %v1715 = vpop.permute.xlu0 %1714
      %v1716 = vlaneseq
      %v1717 = vshrl.u32 %v1716, 7
      %v1718 = vsub.s32 1, %v1717
      %v1719 = vrot.slane %v167, %v1718
      %1721 = vbcast.lane.b32.xlu0 %v1719, 256
      %v1722 = vpop.permute.xlu0 %1721
      %s1724 = sor.u32 256, 8
      %1725 = vbcast.lane.b32.xlu0 %v1719, %s1724
      %v1726 = vpop.permute.xlu0 %1725
      %s1728 = sor.u32 256, 16
      %1729 = vbcast.lane.b32.xlu0 %v1719, %s1728
      %v1730 = vpop.permute.xlu0 %1729
      %s1732 = sor.u32 256, 24
      %1733 = vbcast.lane.b32.xlu0 %v1719, %s1732
      %v1734 = vpop.permute.xlu0 %1733
      %v1735 = vlaneseq
      %v1736 = vshrl.u32 %v1735, 7
      %v1737 = vsub.s32 2, %v1736
      %v1738 = vrot.slane %v167, %v1737
      %1740 = vbcast.lane.b32.xlu0 %v1738, 256
      %v1741 = vpop.permute.xlu0 %1740
      %s1743 = sor.u32 256, 8
      %1744 = vbcast.lane.b32.xlu0 %v1738, %s1743
      %v1745 = vpop.permute.xlu0 %1744
      %s1747 = sor.u32 256, 16
      %1748 = vbcast.lane.b32.xlu0 %v1738, %s1747
      %v1749 = vpop.permute.xlu0 %1748
      %s1751 = sor.u32 256, 24
      %1752 = vbcast.lane.b32.xlu0 %v1738, %s1751
      %v1753 = vpop.permute.xlu0 %1752
      %v1754 = vlaneseq
      %v1755 = vshrl.u32 %v1754, 7
      %v1756 = vsub.s32 3, %v1755
      %v1757 = vrot.slane %v167, %v1756
      %1759 = vbcast.lane.b32.xlu0 %v1757, 256
      %v1760 = vpop.permute.xlu0 %1759
      %s1762 = sor.u32 256, 8
      %1763 = vbcast.lane.b32.xlu0 %v1757, %s1762
      %v1764 = vpop.permute.xlu0 %1763
      %s1766 = sor.u32 256, 16
      %1767 = vbcast.lane.b32.xlu0 %v1757, %s1766
      %v1768 = vpop.permute.xlu0 %1767
      %s1770 = sor.u32 256, 24
      %1771 = vbcast.lane.b32.xlu0 %v1757, %s1770
      %v1772 = vpop.permute.xlu0 %1771
      %v1773 = vlaneseq
      %v1774 = vshrl.u32 %v1773, 7
      %v1775 = vsub.s32 4, %v1774
      %v1776 = vrot.slane %v167, %v1775
      %1778 = vbcast.lane.b32.xlu0 %v1776, 256
      %v1779 = vpop.permute.xlu0 %1778
      %s1781 = sor.u32 256, 8
      %1782 = vbcast.lane.b32.xlu0 %v1776, %s1781
      %v1783 = vpop.permute.xlu0 %1782
      %s1785 = sor.u32 256, 16
      %1786 = vbcast.lane.b32.xlu0 %v1776, %s1785
      %v1787 = vpop.permute.xlu0 %1786
      %s1789 = sor.u32 256, 24
      %1790 = vbcast.lane.b32.xlu0 %v1776, %s1789
      %v1791 = vpop.permute.xlu0 %1790
      %v1792 = vlaneseq
      %v1793 = vshrl.u32 %v1792, 7
      %v1794 = vsub.s32 5, %v1793
      %v1795 = vrot.slane %v167, %v1794
      %1797 = vbcast.lane.b32.xlu0 %v1795, 256
      %v1798 = vpop.permute.xlu0 %1797
      %s1800 = sor.u32 256, 8
      %1801 = vbcast.lane.b32.xlu0 %v1795, %s1800
      %v1802 = vpop.permute.xlu0 %1801
      %s1804 = sor.u32 256, 16
      %1805 = vbcast.lane.b32.xlu0 %v1795, %s1804
      %v1806 = vpop.permute.xlu0 %1805
      %s1808 = sor.u32 256, 24
      %1809 = vbcast.lane.b32.xlu0 %v1795, %s1808
      %v1810 = vpop.permute.xlu0 %1809
      %v1811 = vlaneseq
      %v1812 = vshrl.u32 %v1811, 7
      %v1813 = vsub.s32 6, %v1812
      %v1814 = vrot.slane %v167, %v1813
      %1816 = vbcast.lane.b32.xlu0 %v1814, 256
      %v1817 = vpop.permute.xlu0 %1816
      %s1819 = sor.u32 256, 8
      %1820 = vbcast.lane.b32.xlu0 %v1814, %s1819
      %v1821 = vpop.permute.xlu0 %1820
      %s1823 = sor.u32 256, 16
      %1824 = vbcast.lane.b32.xlu0 %v1814, %s1823
      %v1825 = vpop.permute.xlu0 %1824
      %s1827 = sor.u32 256, 24
      %1828 = vbcast.lane.b32.xlu0 %v1814, %s1827
      %v1829 = vpop.permute.xlu0 %1828
      %v1830 = vlaneseq
      %v1831 = vshrl.u32 %v1830, 7
      %v1832 = vsub.s32 7, %v1831
      %v1833 = vrot.slane %v167, %v1832
      %1835 = vbcast.lane.b32.xlu0 %v1833, 256
      %v1836 = vpop.permute.xlu0 %1835
      %s1838 = sor.u32 256, 8
      %1839 = vbcast.lane.b32.xlu0 %v1833, %s1838
      %v1840 = vpop.permute.xlu0 %1839
      %s1842 = sor.u32 256, 16
      %1843 = vbcast.lane.b32.xlu0 %v1833, %s1842
      %v1844 = vpop.permute.xlu0 %1843
      %s1846 = sor.u32 256, 24
      %1847 = vbcast.lane.b32.xlu0 %v1833, %s1846
      %v1848 = vpop.permute.xlu0 %1847
      %v1849 = vlaneseq
      %v1850 = vshrl.u32 %v1849, 7
      %v1851 = vsub.s32 0, %v1850
      %v1852 = vrot.slane %v168, %v1851
      %1854 = vbcast.lane.b32.xlu0 %v1852, 256
      %v1855 = vpop.permute.xlu0 %1854
      %s1857 = sor.u32 256, 8
      %1858 = vbcast.lane.b32.xlu0 %v1852, %s1857
      %v1859 = vpop.permute.xlu0 %1858
      %s1861 = sor.u32 256, 16
      %1862 = vbcast.lane.b32.xlu0 %v1852, %s1861
      %v1863 = vpop.permute.xlu0 %1862
      %s1865 = sor.u32 256, 24
      %1866 = vbcast.lane.b32.xlu0 %v1852, %s1865
      %v1867 = vpop.permute.xlu0 %1866
      %v1868 = vlaneseq
      %v1869 = vshrl.u32 %v1868, 7
      %v1870 = vsub.s32 1, %v1869
      %v1871 = vrot.slane %v168, %v1870
      %1873 = vbcast.lane.b32.xlu0 %v1871, 256
      %v1874 = vpop.permute.xlu0 %1873
      %s1876 = sor.u32 256, 8
      %1877 = vbcast.lane.b32.xlu0 %v1871, %s1876
      %v1878 = vpop.permute.xlu0 %1877
      %s1880 = sor.u32 256, 16
      %1881 = vbcast.lane.b32.xlu0 %v1871, %s1880
      %v1882 = vpop.permute.xlu0 %1881
      %s1884 = sor.u32 256, 24
      %1885 = vbcast.lane.b32.xlu0 %v1871, %s1884
      %v1886 = vpop.permute.xlu0 %1885
      %v1887 = vlaneseq
      %v1888 = vshrl.u32 %v1887, 7
      %v1889 = vsub.s32 2, %v1888
      %v1890 = vrot.slane %v168, %v1889
      %1892 = vbcast.lane.b32.xlu0 %v1890, 256
      %v1893 = vpop.permute.xlu0 %1892
      %s1895 = sor.u32 256, 8
      %1896 = vbcast.lane.b32.xlu0 %v1890, %s1895
      %v1897 = vpop.permute.xlu0 %1896
      %s1899 = sor.u32 256, 16
      %1900 = vbcast.lane.b32.xlu0 %v1890, %s1899
      %v1901 = vpop.permute.xlu0 %1900
      %s1903 = sor.u32 256, 24
      %1904 = vbcast.lane.b32.xlu0 %v1890, %s1903
      %v1905 = vpop.permute.xlu0 %1904
      %v1906 = vlaneseq
      %v1907 = vshrl.u32 %v1906, 7
      %v1908 = vsub.s32 3, %v1907
      %v1909 = vrot.slane %v168, %v1908
      %1911 = vbcast.lane.b32.xlu0 %v1909, 256
      %v1912 = vpop.permute.xlu0 %1911
      %s1914 = sor.u32 256, 8
      %1915 = vbcast.lane.b32.xlu0 %v1909, %s1914
      %v1916 = vpop.permute.xlu0 %1915
      %s1918 = sor.u32 256, 16
      %1919 = vbcast.lane.b32.xlu0 %v1909, %s1918
      %v1920 = vpop.permute.xlu0 %1919
      %s1922 = sor.u32 256, 24
      %1923 = vbcast.lane.b32.xlu0 %v1909, %s1922
      %v1924 = vpop.permute.xlu0 %1923
      %v1925 = vlaneseq
      %v1926 = vshrl.u32 %v1925, 7
      %v1927 = vsub.s32 4, %v1926
      %v1928 = vrot.slane %v168, %v1927
      %1930 = vbcast.lane.b32.xlu0 %v1928, 256
      %v1931 = vpop.permute.xlu0 %1930
      %s1933 = sor.u32 256, 8
      %1934 = vbcast.lane.b32.xlu0 %v1928, %s1933
      %v1935 = vpop.permute.xlu0 %1934
      %s1937 = sor.u32 256, 16
      %1938 = vbcast.lane.b32.xlu0 %v1928, %s1937
      %v1939 = vpop.permute.xlu0 %1938
      %s1941 = sor.u32 256, 24
      %1942 = vbcast.lane.b32.xlu0 %v1928, %s1941
      %v1943 = vpop.permute.xlu0 %1942
      %v1944 = vlaneseq
      %v1945 = vshrl.u32 %v1944, 7
      %v1946 = vsub.s32 5, %v1945
      %v1947 = vrot.slane %v168, %v1946
      %1949 = vbcast.lane.b32.xlu0 %v1947, 256
      %v1950 = vpop.permute.xlu0 %1949
      %s1952 = sor.u32 256, 8
      %1953 = vbcast.lane.b32.xlu0 %v1947, %s1952
      %v1954 = vpop.permute.xlu0 %1953
      %s1956 = sor.u32 256, 16
      %1957 = vbcast.lane.b32.xlu0 %v1947, %s1956
      %v1958 = vpop.permute.xlu0 %1957
      %s1960 = sor.u32 256, 24
      %1961 = vbcast.lane.b32.xlu0 %v1947, %s1960
      %v1962 = vpop.permute.xlu0 %1961
      %v1963 = vlaneseq
      %v1964 = vshrl.u32 %v1963, 7
      %v1965 = vsub.s32 6, %v1964
      %v1966 = vrot.slane %v168, %v1965
      %1968 = vbcast.lane.b32.xlu0 %v1966, 256
      %v1969 = vpop.permute.xlu0 %1968
      %s1971 = sor.u32 256, 8
      %1972 = vbcast.lane.b32.xlu0 %v1966, %s1971
      %v1973 = vpop.permute.xlu0 %1972
      %s1975 = sor.u32 256, 16
      %1976 = vbcast.lane.b32.xlu0 %v1966, %s1975
      %v1977 = vpop.permute.xlu0 %1976
      %s1979 = sor.u32 256, 24
      %1980 = vbcast.lane.b32.xlu0 %v1966, %s1979
      %v1981 = vpop.permute.xlu0 %1980
      %v1982 = vlaneseq
      %v1983 = vshrl.u32 %v1982, 7
      %v1984 = vsub.s32 7, %v1983
      %v1985 = vrot.slane %v168, %v1984
      %1987 = vbcast.lane.b32.xlu0 %v1985, 256
      %v1988 = vpop.permute.xlu0 %1987
      %s1990 = sor.u32 256, 8
      %1991 = vbcast.lane.b32.xlu0 %v1985, %s1990
      %v1992 = vpop.permute.xlu0 %1991
      %s1994 = sor.u32 256, 16
      %1995 = vbcast.lane.b32.xlu0 %v1985, %s1994
      %v1996 = vpop.permute.xlu0 %1995
      %s1998 = sor.u32 256, 24
      %1999 = vbcast.lane.b32.xlu0 %v1985, %s1998
      %v2000 = vpop.permute.xlu0 %1999
      %v2001 = vlaneseq
      %v2002 = vshrl.u32 %v2001, 7
      %v2003 = vsub.s32 0, %v2002
      %v2004 = vrot.slane %v169, %v2003
      %2006 = vbcast.lane.b32.xlu0 %v2004, 256
      %v2007 = vpop.permute.xlu0 %2006
      %s2009 = sor.u32 256, 8
      %2010 = vbcast.lane.b32.xlu0 %v2004, %s2009
      %v2011 = vpop.permute.xlu0 %2010
      %s2013 = sor.u32 256, 16
      %2014 = vbcast.lane.b32.xlu0 %v2004, %s2013
      %v2015 = vpop.permute.xlu0 %2014
      %s2017 = sor.u32 256, 24
      %2018 = vbcast.lane.b32.xlu0 %v2004, %s2017
      %v2019 = vpop.permute.xlu0 %2018
      %v2020 = vlaneseq
      %v2021 = vshrl.u32 %v2020, 7
      %v2022 = vsub.s32 1, %v2021
      %v2023 = vrot.slane %v169, %v2022
      %2025 = vbcast.lane.b32.xlu0 %v2023, 256
      %v2026 = vpop.permute.xlu0 %2025
      %s2028 = sor.u32 256, 8
      %2029 = vbcast.lane.b32.xlu0 %v2023, %s2028
      %v2030 = vpop.permute.xlu0 %2029
      %s2032 = sor.u32 256, 16
      %2033 = vbcast.lane.b32.xlu0 %v2023, %s2032
      %v2034 = vpop.permute.xlu0 %2033
      %s2036 = sor.u32 256, 24
      %2037 = vbcast.lane.b32.xlu0 %v2023, %s2036
      %v2038 = vpop.permute.xlu0 %2037
      %v2039 = vlaneseq
      %v2040 = vshrl.u32 %v2039, 7
      %v2041 = vsub.s32 2, %v2040
      %v2042 = vrot.slane %v169, %v2041
      %2044 = vbcast.lane.b32.xlu0 %v2042, 256
      %v2045 = vpop.permute.xlu0 %2044
      %s2047 = sor.u32 256, 8
      %2048 = vbcast.lane.b32.xlu0 %v2042, %s2047
      %v2049 = vpop.permute.xlu0 %2048
      %s2051 = sor.u32 256, 16
      %2052 = vbcast.lane.b32.xlu0 %v2042, %s2051
      %v2053 = vpop.permute.xlu0 %2052
      %s2055 = sor.u32 256, 24
      %2056 = vbcast.lane.b32.xlu0 %v2042, %s2055
      %v2057 = vpop.permute.xlu0 %2056
      %v2058 = vlaneseq
      %v2059 = vshrl.u32 %v2058, 7
      %v2060 = vsub.s32 3, %v2059
      %v2061 = vrot.slane %v169, %v2060
      %2063 = vbcast.lane.b32.xlu0 %v2061, 256
      %v2064 = vpop.permute.xlu0 %2063
      %s2066 = sor.u32 256, 8
      %2067 = vbcast.lane.b32.xlu0 %v2061, %s2066
      %v2068 = vpop.permute.xlu0 %2067
      %s2070 = sor.u32 256, 16
      %2071 = vbcast.lane.b32.xlu0 %v2061, %s2070
      %v2072 = vpop.permute.xlu0 %2071
      %s2074 = sor.u32 256, 24
      %2075 = vbcast.lane.b32.xlu0 %v2061, %s2074
      %v2076 = vpop.permute.xlu0 %2075
      %v2077 = vlaneseq
      %v2078 = vshrl.u32 %v2077, 7
      %v2079 = vsub.s32 4, %v2078
      %v2080 = vrot.slane %v169, %v2079
      %2082 = vbcast.lane.b32.xlu0 %v2080, 256
      %v2083 = vpop.permute.xlu0 %2082
      %s2085 = sor.u32 256, 8
      %2086 = vbcast.lane.b32.xlu0 %v2080, %s2085
      %v2087 = vpop.permute.xlu0 %2086
      %s2089 = sor.u32 256, 16
      %2090 = vbcast.lane.b32.xlu0 %v2080, %s2089
      %v2091 = vpop.permute.xlu0 %2090
      %s2093 = sor.u32 256, 24
      %2094 = vbcast.lane.b32.xlu0 %v2080, %s2093
      %v2095 = vpop.permute.xlu0 %2094
      %v2096 = vlaneseq
      %v2097 = vshrl.u32 %v2096, 7
      %v2098 = vsub.s32 5, %v2097
      %v2099 = vrot.slane %v169, %v2098
      %2101 = vbcast.lane.b32.xlu0 %v2099, 256
      %v2102 = vpop.permute.xlu0 %2101
      %s2104 = sor.u32 256, 8
      %2105 = vbcast.lane.b32.xlu0 %v2099, %s2104
      %v2106 = vpop.permute.xlu0 %2105
      %s2108 = sor.u32 256, 16
      %2109 = vbcast.lane.b32.xlu0 %v2099, %s2108
      %v2110 = vpop.permute.xlu0 %2109
      %s2112 = sor.u32 256, 24
      %2113 = vbcast.lane.b32.xlu0 %v2099, %s2112
      %v2114 = vpop.permute.xlu0 %2113
      %v2115 = vlaneseq
      %v2116 = vshrl.u32 %v2115, 7
      %v2117 = vsub.s32 6, %v2116
      %v2118 = vrot.slane %v169, %v2117
      %2120 = vbcast.lane.b32.xlu0 %v2118, 256
      %v2121 = vpop.permute.xlu0 %2120
      %s2123 = sor.u32 256, 8
      %2124 = vbcast.lane.b32.xlu0 %v2118, %s2123
      %v2125 = vpop.permute.xlu0 %2124
      %s2127 = sor.u32 256, 16
      %2128 = vbcast.lane.b32.xlu0 %v2118, %s2127
      %v2129 = vpop.permute.xlu0 %2128
      %s2131 = sor.u32 256, 24
      %2132 = vbcast.lane.b32.xlu0 %v2118, %s2131
      %v2133 = vpop.permute.xlu0 %2132
      %v2134 = vlaneseq
      %v2135 = vshrl.u32 %v2134, 7
      %v2136 = vsub.s32 7, %v2135
      %v2137 = vrot.slane %v169, %v2136
      %2139 = vbcast.lane.b32.xlu0 %v2137, 256
      %v2140 = vpop.permute.xlu0 %2139
      %s2142 = sor.u32 256, 8
      %2143 = vbcast.lane.b32.xlu0 %v2137, %s2142
      %v2144 = vpop.permute.xlu0 %2143
      %s2146 = sor.u32 256, 16
      %2147 = vbcast.lane.b32.xlu0 %v2137, %s2146
      %v2148 = vpop.permute.xlu0 %2147
      %s2150 = sor.u32 256, 24
      %2151 = vbcast.lane.b32.xlu0 %v2137, %s2150
      %v2152 = vpop.permute.xlu0 %2151
      %v2153 = vlaneseq
      %v2154 = vshrl.u32 %v2153, 7
      %v2155 = vsub.s32 0, %v2154
      %v2156 = vrot.slane %v170, %v2155
      %2158 = vbcast.lane.b32.xlu0 %v2156, 256
      %v2159 = vpop.permute.xlu0 %2158
      %s2161 = sor.u32 256, 8
      %2162 = vbcast.lane.b32.xlu0 %v2156, %s2161
      %v2163 = vpop.permute.xlu0 %2162
      %s2165 = sor.u32 256, 16
      %2166 = vbcast.lane.b32.xlu0 %v2156, %s2165
      %v2167 = vpop.permute.xlu0 %2166
      %s2169 = sor.u32 256, 24
      %2170 = vbcast.lane.b32.xlu0 %v2156, %s2169
      %v2171 = vpop.permute.xlu0 %2170
      %v2172 = vlaneseq
      %v2173 = vshrl.u32 %v2172, 7
      %v2174 = vsub.s32 1, %v2173
      %v2175 = vrot.slane %v170, %v2174
      %2177 = vbcast.lane.b32.xlu0 %v2175, 256
      %v2178 = vpop.permute.xlu0 %2177
      %s2180 = sor.u32 256, 8
      %2181 = vbcast.lane.b32.xlu0 %v2175, %s2180
      %v2182 = vpop.permute.xlu0 %2181
      %s2184 = sor.u32 256, 16
      %2185 = vbcast.lane.b32.xlu0 %v2175, %s2184
      %v2186 = vpop.permute.xlu0 %2185
      %s2188 = sor.u32 256, 24
      %2189 = vbcast.lane.b32.xlu0 %v2175, %s2188
      %v2190 = vpop.permute.xlu0 %2189
      %v2191 = vlaneseq
      %v2192 = vshrl.u32 %v2191, 7
      %v2193 = vsub.s32 2, %v2192
      %v2194 = vrot.slane %v170, %v2193
      %2196 = vbcast.lane.b32.xlu0 %v2194, 256
      %v2197 = vpop.permute.xlu0 %2196
      %s2199 = sor.u32 256, 8
      %2200 = vbcast.lane.b32.xlu0 %v2194, %s2199
      %v2201 = vpop.permute.xlu0 %2200
      %s2203 = sor.u32 256, 16
      %2204 = vbcast.lane.b32.xlu0 %v2194, %s2203
      %v2205 = vpop.permute.xlu0 %2204
      %s2207 = sor.u32 256, 24
      %2208 = vbcast.lane.b32.xlu0 %v2194, %s2207
      %v2209 = vpop.permute.xlu0 %2208
      %v2210 = vlaneseq
      %v2211 = vshrl.u32 %v2210, 7
      %v2212 = vsub.s32 3, %v2211
      %v2213 = vrot.slane %v170, %v2212
      %2215 = vbcast.lane.b32.xlu0 %v2213, 256
      %v2216 = vpop.permute.xlu0 %2215
      %s2218 = sor.u32 256, 8
      %2219 = vbcast.lane.b32.xlu0 %v2213, %s2218
      %v2220 = vpop.permute.xlu0 %2219
      %s2222 = sor.u32 256, 16
      %2223 = vbcast.lane.b32.xlu0 %v2213, %s2222
      %v2224 = vpop.permute.xlu0 %2223
      %s2226 = sor.u32 256, 24
      %2227 = vbcast.lane.b32.xlu0 %v2213, %s2226
      %v2228 = vpop.permute.xlu0 %2227
      %v2229 = vlaneseq
      %v2230 = vshrl.u32 %v2229, 7
      %v2231 = vsub.s32 4, %v2230
      %v2232 = vrot.slane %v170, %v2231
      %2234 = vbcast.lane.b32.xlu0 %v2232, 256
      %v2235 = vpop.permute.xlu0 %2234
      %s2237 = sor.u32 256, 8
      %2238 = vbcast.lane.b32.xlu0 %v2232, %s2237
      %v2239 = vpop.permute.xlu0 %2238
      %s2241 = sor.u32 256, 16
      %2242 = vbcast.lane.b32.xlu0 %v2232, %s2241
      %v2243 = vpop.permute.xlu0 %2242
      %s2245 = sor.u32 256, 24
      %2246 = vbcast.lane.b32.xlu0 %v2232, %s2245
      %v2247 = vpop.permute.xlu0 %2246
      %v2248 = vlaneseq
      %v2249 = vshrl.u32 %v2248, 7
      %v2250 = vsub.s32 5, %v2249
      %v2251 = vrot.slane %v170, %v2250
      %2253 = vbcast.lane.b32.xlu0 %v2251, 256
      %v2254 = vpop.permute.xlu0 %2253
      %s2256 = sor.u32 256, 8
      %2257 = vbcast.lane.b32.xlu0 %v2251, %s2256
      %v2258 = vpop.permute.xlu0 %2257
      %s2260 = sor.u32 256, 16
      %2261 = vbcast.lane.b32.xlu0 %v2251, %s2260
      %v2262 = vpop.permute.xlu0 %2261
      %s2264 = sor.u32 256, 24
      %2265 = vbcast.lane.b32.xlu0 %v2251, %s2264
      %v2266 = vpop.permute.xlu0 %2265
      %v2267 = vlaneseq
      %v2268 = vshrl.u32 %v2267, 7
      %v2269 = vsub.s32 6, %v2268
      %v2270 = vrot.slane %v170, %v2269
      %2272 = vbcast.lane.b32.xlu0 %v2270, 256
      %v2273 = vpop.permute.xlu0 %2272
      %s2275 = sor.u32 256, 8
      %2276 = vbcast.lane.b32.xlu0 %v2270, %s2275
      %v2277 = vpop.permute.xlu0 %2276
      %s2279 = sor.u32 256, 16
      %2280 = vbcast.lane.b32.xlu0 %v2270, %s2279
      %v2281 = vpop.permute.xlu0 %2280
      %s2283 = sor.u32 256, 24
      %2284 = vbcast.lane.b32.xlu0 %v2270, %s2283
      %v2285 = vpop.permute.xlu0 %2284
      %v2286 = vlaneseq
      %v2287 = vshrl.u32 %v2286, 7
      %v2288 = vsub.s32 7, %v2287
      %v2289 = vrot.slane %v170, %v2288
      %2291 = vbcast.lane.b32.xlu0 %v2289, 256
      %v2292 = vpop.permute.xlu0 %2291
      %s2294 = sor.u32 256, 8
      %2295 = vbcast.lane.b32.xlu0 %v2289, %s2294
      %v2296 = vpop.permute.xlu0 %2295
      %s2298 = sor.u32 256, 16
      %2299 = vbcast.lane.b32.xlu0 %v2289, %s2298
      %v2300 = vpop.permute.xlu0 %2299
      %s2302 = sor.u32 256, 24
      %2303 = vbcast.lane.b32.xlu0 %v2289, %s2302
      %v2304 = vpop.permute.xlu0 %2303
      %v2305 = vlaneseq
      %v2306 = vshrl.u32 %v2305, 7
      %v2307 = vsub.s32 0, %v2306
      %v2308 = vrot.slane %v171, %v2307
      %2310 = vbcast.lane.b32.xlu0 %v2308, 256
      %v2311 = vpop.permute.xlu0 %2310
      %s2313 = sor.u32 256, 8
      %2314 = vbcast.lane.b32.xlu0 %v2308, %s2313
      %v2315 = vpop.permute.xlu0 %2314
      %s2317 = sor.u32 256, 16
      %2318 = vbcast.lane.b32.xlu0 %v2308, %s2317
      %v2319 = vpop.permute.xlu0 %2318
      %s2321 = sor.u32 256, 24
      %2322 = vbcast.lane.b32.xlu0 %v2308, %s2321
      %v2323 = vpop.permute.xlu0 %2322
      %v2324 = vlaneseq
      %v2325 = vshrl.u32 %v2324, 7
      %v2326 = vsub.s32 1, %v2325
      %v2327 = vrot.slane %v171, %v2326
      %2329 = vbcast.lane.b32.xlu0 %v2327, 256
      %v2330 = vpop.permute.xlu0 %2329
      %s2332 = sor.u32 256, 8
      %2333 = vbcast.lane.b32.xlu0 %v2327, %s2332
      %v2334 = vpop.permute.xlu0 %2333
      %s2336 = sor.u32 256, 16
      %2337 = vbcast.lane.b32.xlu0 %v2327, %s2336
      %v2338 = vpop.permute.xlu0 %2337
      %s2340 = sor.u32 256, 24
      %2341 = vbcast.lane.b32.xlu0 %v2327, %s2340
      %v2342 = vpop.permute.xlu0 %2341
      %v2343 = vlaneseq
      %v2344 = vshrl.u32 %v2343, 7
      %v2345 = vsub.s32 2, %v2344
      %v2346 = vrot.slane %v171, %v2345
      %2348 = vbcast.lane.b32.xlu0 %v2346, 256
      %v2349 = vpop.permute.xlu0 %2348
      %s2351 = sor.u32 256, 8
      %2352 = vbcast.lane.b32.xlu0 %v2346, %s2351
      %v2353 = vpop.permute.xlu0 %2352
      %s2355 = sor.u32 256, 16
      %2356 = vbcast.lane.b32.xlu0 %v2346, %s2355
      %v2357 = vpop.permute.xlu0 %2356
      %s2359 = sor.u32 256, 24
      %2360 = vbcast.lane.b32.xlu0 %v2346, %s2359
      %v2361 = vpop.permute.xlu0 %2360
      %v2362 = vlaneseq
      %v2363 = vshrl.u32 %v2362, 7
      %v2364 = vsub.s32 3, %v2363
      %v2365 = vrot.slane %v171, %v2364
      %2367 = vbcast.lane.b32.xlu0 %v2365, 256
      %v2368 = vpop.permute.xlu0 %2367
      %s2370 = sor.u32 256, 8
      %2371 = vbcast.lane.b32.xlu0 %v2365, %s2370
      %v2372 = vpop.permute.xlu0 %2371
      %s2374 = sor.u32 256, 16
      %2375 = vbcast.lane.b32.xlu0 %v2365, %s2374
      %v2376 = vpop.permute.xlu0 %2375
      %s2378 = sor.u32 256, 24
      %2379 = vbcast.lane.b32.xlu0 %v2365, %s2378
      %v2380 = vpop.permute.xlu0 %2379
      %v2381 = vlaneseq
      %v2382 = vshrl.u32 %v2381, 7
      %v2383 = vsub.s32 4, %v2382
      %v2384 = vrot.slane %v171, %v2383
      %2386 = vbcast.lane.b32.xlu0 %v2384, 256
      %v2387 = vpop.permute.xlu0 %2386
      %s2389 = sor.u32 256, 8
      %2390 = vbcast.lane.b32.xlu0 %v2384, %s2389
      %v2391 = vpop.permute.xlu0 %2390
      %s2393 = sor.u32 256, 16
      %2394 = vbcast.lane.b32.xlu0 %v2384, %s2393
      %v2395 = vpop.permute.xlu0 %2394
      %s2397 = sor.u32 256, 24
      %2398 = vbcast.lane.b32.xlu0 %v2384, %s2397
      %v2399 = vpop.permute.xlu0 %2398
      %v2400 = vlaneseq
      %v2401 = vshrl.u32 %v2400, 7
      %v2402 = vsub.s32 5, %v2401
      %v2403 = vrot.slane %v171, %v2402
      %2405 = vbcast.lane.b32.xlu0 %v2403, 256
      %v2406 = vpop.permute.xlu0 %2405
      %s2408 = sor.u32 256, 8
      %2409 = vbcast.lane.b32.xlu0 %v2403, %s2408
      %v2410 = vpop.permute.xlu0 %2409
      %s2412 = sor.u32 256, 16
      %2413 = vbcast.lane.b32.xlu0 %v2403, %s2412
      %v2414 = vpop.permute.xlu0 %2413
      %s2416 = sor.u32 256, 24
      %2417 = vbcast.lane.b32.xlu0 %v2403, %s2416
      %v2418 = vpop.permute.xlu0 %2417
      %v2419 = vlaneseq
      %v2420 = vshrl.u32 %v2419, 7
      %v2421 = vsub.s32 6, %v2420
      %v2422 = vrot.slane %v171, %v2421
      %2424 = vbcast.lane.b32.xlu0 %v2422, 256
      %v2425 = vpop.permute.xlu0 %2424
      %s2427 = sor.u32 256, 8
      %2428 = vbcast.lane.b32.xlu0 %v2422, %s2427
      %v2429 = vpop.permute.xlu0 %2428
      %s2431 = sor.u32 256, 16
      %2432 = vbcast.lane.b32.xlu0 %v2422, %s2431
      %v2433 = vpop.permute.xlu0 %2432
      %s2435 = sor.u32 256, 24
      %2436 = vbcast.lane.b32.xlu0 %v2422, %s2435
      %v2437 = vpop.permute.xlu0 %2436
      %v2438 = vlaneseq
      %v2439 = vshrl.u32 %v2438, 7
      %v2440 = vsub.s32 7, %v2439
      %v2441 = vrot.slane %v171, %v2440
      %2443 = vbcast.lane.b32.xlu0 %v2441, 256
      %v2444 = vpop.permute.xlu0 %2443
      %s2446 = sor.u32 256, 8
      %2447 = vbcast.lane.b32.xlu0 %v2441, %s2446
      %v2448 = vpop.permute.xlu0 %2447
      %s2450 = sor.u32 256, 16
      %2451 = vbcast.lane.b32.xlu0 %v2441, %s2450
      %v2452 = vpop.permute.xlu0 %2451
      %s2454 = sor.u32 256, 24
      %2455 = vbcast.lane.b32.xlu0 %v2441, %s2454
      %v2456 = vpop.permute.xlu0 %2455
      %v2457 = vlaneseq
      %v2458 = vshrl.u32 %v2457, 7
      %v2459 = vsub.s32 0, %v2458
      %v2460 = vrot.slane %v172, %v2459
      %2462 = vbcast.lane.b32.xlu0 %v2460, 256
      %v2463 = vpop.permute.xlu0 %2462
      %s2465 = sor.u32 256, 8
      %2466 = vbcast.lane.b32.xlu0 %v2460, %s2465
      %v2467 = vpop.permute.xlu0 %2466
      %s2469 = sor.u32 256, 16
      %2470 = vbcast.lane.b32.xlu0 %v2460, %s2469
      %v2471 = vpop.permute.xlu0 %2470
      %s2473 = sor.u32 256, 24
      %2474 = vbcast.lane.b32.xlu0 %v2460, %s2473
      %v2475 = vpop.permute.xlu0 %2474
      %v2476 = vlaneseq
      %v2477 = vshrl.u32 %v2476, 7
      %v2478 = vsub.s32 1, %v2477
      %v2479 = vrot.slane %v172, %v2478
      %2481 = vbcast.lane.b32.xlu0 %v2479, 256
      %v2482 = vpop.permute.xlu0 %2481
      %s2484 = sor.u32 256, 8
      %2485 = vbcast.lane.b32.xlu0 %v2479, %s2484
      %v2486 = vpop.permute.xlu0 %2485
      %s2488 = sor.u32 256, 16
      %2489 = vbcast.lane.b32.xlu0 %v2479, %s2488
      %v2490 = vpop.permute.xlu0 %2489
      %s2492 = sor.u32 256, 24
      %2493 = vbcast.lane.b32.xlu0 %v2479, %s2492
      %v2494 = vpop.permute.xlu0 %2493
      %v2495 = vlaneseq
      %v2496 = vshrl.u32 %v2495, 7
      %v2497 = vsub.s32 2, %v2496
      %v2498 = vrot.slane %v172, %v2497
      %2500 = vbcast.lane.b32.xlu0 %v2498, 256
      %v2501 = vpop.permute.xlu0 %2500
      %s2503 = sor.u32 256, 8
      %2504 = vbcast.lane.b32.xlu0 %v2498, %s2503
      %v2505 = vpop.permute.xlu0 %2504
      %s2507 = sor.u32 256, 16
      %2508 = vbcast.lane.b32.xlu0 %v2498, %s2507
      %v2509 = vpop.permute.xlu0 %2508
      %s2511 = sor.u32 256, 24
      %2512 = vbcast.lane.b32.xlu0 %v2498, %s2511
      %v2513 = vpop.permute.xlu0 %2512
      %v2514 = vlaneseq
      %v2515 = vshrl.u32 %v2514, 7
      %v2516 = vsub.s32 3, %v2515
      %v2517 = vrot.slane %v172, %v2516
      %2519 = vbcast.lane.b32.xlu0 %v2517, 256
      %v2520 = vpop.permute.xlu0 %2519
      %s2522 = sor.u32 256, 8
      %2523 = vbcast.lane.b32.xlu0 %v2517, %s2522
      %v2524 = vpop.permute.xlu0 %2523
      %s2526 = sor.u32 256, 16
      %2527 = vbcast.lane.b32.xlu0 %v2517, %s2526
      %v2528 = vpop.permute.xlu0 %2527
      %s2530 = sor.u32 256, 24
      %2531 = vbcast.lane.b32.xlu0 %v2517, %s2530
      %v2532 = vpop.permute.xlu0 %2531
      %v2533 = vlaneseq
      %v2534 = vshrl.u32 %v2533, 7
      %v2535 = vsub.s32 4, %v2534
      %v2536 = vrot.slane %v172, %v2535
      %2538 = vbcast.lane.b32.xlu0 %v2536, 256
      %v2539 = vpop.permute.xlu0 %2538
      %s2541 = sor.u32 256, 8
      %2542 = vbcast.lane.b32.xlu0 %v2536, %s2541
      %v2543 = vpop.permute.xlu0 %2542
      %s2545 = sor.u32 256, 16
      %2546 = vbcast.lane.b32.xlu0 %v2536, %s2545
      %v2547 = vpop.permute.xlu0 %2546
      %s2549 = sor.u32 256, 24
      %2550 = vbcast.lane.b32.xlu0 %v2536, %s2549
      %v2551 = vpop.permute.xlu0 %2550
      %v2552 = vlaneseq
      %v2553 = vshrl.u32 %v2552, 7
      %v2554 = vsub.s32 5, %v2553
      %v2555 = vrot.slane %v172, %v2554
      %2557 = vbcast.lane.b32.xlu0 %v2555, 256
      %v2558 = vpop.permute.xlu0 %2557
      %s2560 = sor.u32 256, 8
      %2561 = vbcast.lane.b32.xlu0 %v2555, %s2560
      %v2562 = vpop.permute.xlu0 %2561
      %s2564 = sor.u32 256, 16
      %2565 = vbcast.lane.b32.xlu0 %v2555, %s2564
      %v2566 = vpop.permute.xlu0 %2565
      %s2568 = sor.u32 256, 24
      %2569 = vbcast.lane.b32.xlu0 %v2555, %s2568
      %v2570 = vpop.permute.xlu0 %2569
      %v2571 = vlaneseq
      %v2572 = vshrl.u32 %v2571, 7
      %v2573 = vsub.s32 6, %v2572
      %v2574 = vrot.slane %v172, %v2573
      %2576 = vbcast.lane.b32.xlu0 %v2574, 256
      %v2577 = vpop.permute.xlu0 %2576
      %s2579 = sor.u32 256, 8
      %2580 = vbcast.lane.b32.xlu0 %v2574, %s2579
      %v2581 = vpop.permute.xlu0 %2580
      %s2583 = sor.u32 256, 16
      %2584 = vbcast.lane.b32.xlu0 %v2574, %s2583
      %v2585 = vpop.permute.xlu0 %2584
      %s2587 = sor.u32 256, 24
      %2588 = vbcast.lane.b32.xlu0 %v2574, %s2587
      %v2589 = vpop.permute.xlu0 %2588
      %v2590 = vlaneseq
      %v2591 = vshrl.u32 %v2590, 7
      %v2592 = vsub.s32 7, %v2591
      %v2593 = vrot.slane %v172, %v2592
      %2595 = vbcast.lane.b32.xlu0 %v2593, 256
      %v2596 = vpop.permute.xlu0 %2595
      %s2598 = sor.u32 256, 8
      %2599 = vbcast.lane.b32.xlu0 %v2593, %s2598
      %v2600 = vpop.permute.xlu0 %2599
      %s2602 = sor.u32 256, 16
      %2603 = vbcast.lane.b32.xlu0 %v2593, %s2602
      %v2604 = vpop.permute.xlu0 %2603
      %s2606 = sor.u32 256, 24
      %2607 = vbcast.lane.b32.xlu0 %v2593, %s2606
      %v2608 = vpop.permute.xlu0 %2607
      %v2609 = vmul.f32 %v183, %v173
      %v2610 = vmul.f32 %v187, %v174
      %v2611 = vmul.f32 %v191, %v175
      %v2612 = vmul.f32 %v195, %v176
      %v2613 = vmul.f32 %v202, %v173
      %v2614 = vmul.f32 %v206, %v174
      %v2615 = vmul.f32 %v210, %v175
      %v2616 = vmul.f32 %v214, %v176
      %v2617 = vmul.f32 %v221, %v173
      %v2618 = vmul.f32 %v225, %v174
      %v2619 = vmul.f32 %v229, %v175
      %v2620 = vmul.f32 %v233, %v176
      %v2621 = vmul.f32 %v240, %v173
      %v2622 = vmul.f32 %v244, %v174
      %v2623 = vmul.f32 %v248, %v175
      %v2624 = vmul.f32 %v252, %v176
      %v2625 = vmul.f32 %v259, %v173
      %v2626 = vmul.f32 %v263, %v174
      %v2627 = vmul.f32 %v267, %v175
      %v2628 = vmul.f32 %v271, %v176
      %v2629 = vmul.f32 %v278, %v173
      %v2630 = vmul.f32 %v282, %v174
      %v2631 = vmul.f32 %v286, %v175
      %v2632 = vmul.f32 %v290, %v176
      %v2633 = vmul.f32 %v297, %v173
      %v2634 = vmul.f32 %v301, %v174
      %v2635 = vmul.f32 %v305, %v175
      %v2636 = vmul.f32 %v309, %v176
      %v2637 = vmul.f32 %v316, %v173
      %v2638 = vmul.f32 %v320, %v174
      %v2639 = vmul.f32 %v324, %v175
      %v2640 = vmul.f32 %v328, %v176
      %v2641 = vmul.f32 %v335, %v173
      %v2642 = vmul.f32 %v339, %v174
      %v2643 = vmul.f32 %v343, %v175
      %v2644 = vmul.f32 %v347, %v176
      %v2645 = vmul.f32 %v354, %v173
      %v2646 = vmul.f32 %v358, %v174
      %v2647 = vmul.f32 %v362, %v175
      %v2648 = vmul.f32 %v366, %v176
      %v2649 = vmul.f32 %v373, %v173
      %v2650 = vmul.f32 %v377, %v174
      %v2651 = vmul.f32 %v381, %v175
      %v2652 = vmul.f32 %v385, %v176
      %v2653 = vmul.f32 %v392, %v173
      %v2654 = vmul.f32 %v396, %v174
      %v2655 = vmul.f32 %v400, %v175
      %v2656 = vmul.f32 %v404, %v176
      %v2657 = vmul.f32 %v411, %v173
      %v2658 = vmul.f32 %v415, %v174
      %v2659 = vmul.f32 %v419, %v175
      %v2660 = vmul.f32 %v423, %v176
      %v2661 = vmul.f32 %v430, %v173
      %v2662 = vmul.f32 %v434, %v174
      %v2663 = vmul.f32 %v438, %v175
      %v2664 = vmul.f32 %v442, %v176
      %v2665 = vmul.f32 %v449, %v173
      %v2666 = vmul.f32 %v453, %v174
      %v2667 = vmul.f32 %v457, %v175
      %v2668 = vmul.f32 %v461, %v176
      %v2669 = vmul.f32 %v468, %v173
      %v2670 = vmul.f32 %v472, %v174
      %v2671 = vmul.f32 %v476, %v175
      %v2672 = vmul.f32 %v480, %v176
      %v2673 = vmul.f32 %v487, %v173
      %v2674 = vmul.f32 %v491, %v174
      %v2675 = vmul.f32 %v495, %v175
      %v2676 = vmul.f32 %v499, %v176
      %v2677 = vmul.f32 %v506, %v173
      %v2678 = vmul.f32 %v510, %v174
      %v2679 = vmul.f32 %v514, %v175
      %v2680 = vmul.f32 %v518, %v176
      %v2681 = vmul.f32 %v525, %v173
      %v2682 = vmul.f32 %v529, %v174
      %v2683 = vmul.f32 %v533, %v175
      %v2684 = vmul.f32 %v537, %v176
      %v2685 = vmul.f32 %v544, %v173
      %v2686 = vmul.f32 %v548, %v174
      %v2687 = vmul.f32 %v552, %v175
      %v2688 = vmul.f32 %v556, %v176
      %v2689 = vmul.f32 %v563, %v173
      %v2690 = vmul.f32 %v567, %v174
      %v2691 = vmul.f32 %v571, %v175
      %v2692 = vmul.f32 %v575, %v176
      %v2693 = vmul.f32 %v582, %v173
      %v2694 = vmul.f32 %v586, %v174
      %v2695 = vmul.f32 %v590, %v175
      %v2696 = vmul.f32 %v594, %v176
      %v2697 = vmul.f32 %v601, %v173
      %v2698 = vmul.f32 %v605, %v174
      %v2699 = vmul.f32 %v609, %v175
      %v2700 = vmul.f32 %v613, %v176
      %v2701 = vmul.f32 %v620, %v173
      %v2702 = vmul.f32 %v624, %v174
      %v2703 = vmul.f32 %v628, %v175
      %v2704 = vmul.f32 %v632, %v176
      %v2705 = vmul.f32 %v639, %v173
      %v2706 = vmul.f32 %v643, %v174
      %v2707 = vmul.f32 %v647, %v175
      %v2708 = vmul.f32 %v651, %v176
      %v2709 = vmul.f32 %v658, %v173
      %v2710 = vmul.f32 %v662, %v174
      %v2711 = vmul.f32 %v666, %v175
      %v2712 = vmul.f32 %v670, %v176
      %v2713 = vmul.f32 %v677, %v173
      %v2714 = vmul.f32 %v681, %v174
      %v2715 = vmul.f32 %v685, %v175
      %v2716 = vmul.f32 %v689, %v176
      %v2717 = vmul.f32 %v696, %v173
      %v2718 = vmul.f32 %v700, %v174
      %v2719 = vmul.f32 %v704, %v175
      %v2720 = vmul.f32 %v708, %v176
      %v2721 = vmul.f32 %v715, %v173
      %v2722 = vmul.f32 %v719, %v174
      %v2723 = vmul.f32 %v723, %v175
      %v2724 = vmul.f32 %v727, %v176
      %v2725 = vmul.f32 %v734, %v173
      %v2726 = vmul.f32 %v738, %v174
      %v2727 = vmul.f32 %v742, %v175
      %v2728 = vmul.f32 %v746, %v176
      %v2729 = vmul.f32 %v753, %v173
      %v2730 = vmul.f32 %v757, %v174
      %v2731 = vmul.f32 %v761, %v175
      %v2732 = vmul.f32 %v765, %v176
      %v2733 = vmul.f32 %v772, %v173
      %v2734 = vmul.f32 %v776, %v174
      %v2735 = vmul.f32 %v780, %v175
      %v2736 = vmul.f32 %v784, %v176
      %v2737 = vmul.f32 %v791, %v173
      %v2738 = vmul.f32 %v795, %v174
      %v2739 = vmul.f32 %v799, %v175
      %v2740 = vmul.f32 %v803, %v176
      %v2741 = vmul.f32 %v810, %v173
      %v2742 = vmul.f32 %v814, %v174
      %v2743 = vmul.f32 %v818, %v175
      %v2744 = vmul.f32 %v822, %v176
      %v2745 = vmul.f32 %v829, %v173
      %v2746 = vmul.f32 %v833, %v174
      %v2747 = vmul.f32 %v837, %v175
      %v2748 = vmul.f32 %v841, %v176
      %v2749 = vmul.f32 %v848, %v173
      %v2750 = vmul.f32 %v852, %v174
      %v2751 = vmul.f32 %v856, %v175
      %v2752 = vmul.f32 %v860, %v176
      %v2753 = vmul.f32 %v867, %v173
      %v2754 = vmul.f32 %v871, %v174
      %v2755 = vmul.f32 %v875, %v175
      %v2756 = vmul.f32 %v879, %v176
      %v2757 = vmul.f32 %v886, %v173
      %v2758 = vmul.f32 %v890, %v174
      %v2759 = vmul.f32 %v894, %v175
      %v2760 = vmul.f32 %v898, %v176
      %v2761 = vmul.f32 %v905, %v173
      %v2762 = vmul.f32 %v909, %v174
      %v2763 = vmul.f32 %v913, %v175
      %v2764 = vmul.f32 %v917, %v176
      %v2765 = vmul.f32 %v924, %v173
      %v2766 = vmul.f32 %v928, %v174
      %v2767 = vmul.f32 %v932, %v175
      %v2768 = vmul.f32 %v936, %v176
      %v2769 = vmul.f32 %v943, %v173
      %v2770 = vmul.f32 %v947, %v174
      %v2771 = vmul.f32 %v951, %v175
      %v2772 = vmul.f32 %v955, %v176
      %v2773 = vmul.f32 %v962, %v173
      %v2774 = vmul.f32 %v966, %v174
      %v2775 = vmul.f32 %v970, %v175
      %v2776 = vmul.f32 %v974, %v176
      %v2777 = vmul.f32 %v981, %v173
      %v2778 = vmul.f32 %v985, %v174
      %v2779 = vmul.f32 %v989, %v175
      %v2780 = vmul.f32 %v993, %v176
      %v2781 = vmul.f32 %v1000, %v173
      %v2782 = vmul.f32 %v1004, %v174
      %v2783 = vmul.f32 %v1008, %v175
      %v2784 = vmul.f32 %v1012, %v176
      %v2785 = vmul.f32 %v1019, %v173
      %v2786 = vmul.f32 %v1023, %v174
      %v2787 = vmul.f32 %v1027, %v175
      %v2788 = vmul.f32 %v1031, %v176
      %v2789 = vmul.f32 %v1038, %v173
      %v2790 = vmul.f32 %v1042, %v174
      %v2791 = vmul.f32 %v1046, %v175
      %v2792 = vmul.f32 %v1050, %v176
      %v2793 = vmul.f32 %v1057, %v173
      %v2794 = vmul.f32 %v1061, %v174
      %v2795 = vmul.f32 %v1065, %v175
      %v2796 = vmul.f32 %v1069, %v176
      %v2797 = vmul.f32 %v1076, %v173
      %v2798 = vmul.f32 %v1080, %v174
      %v2799 = vmul.f32 %v1084, %v175
      %v2800 = vmul.f32 %v1088, %v176
      %v2801 = vmul.f32 %v1095, %v173
      %v2802 = vmul.f32 %v1099, %v174
      %v2803 = vmul.f32 %v1103, %v175
      %v2804 = vmul.f32 %v1107, %v176
      %v2805 = vmul.f32 %v1114, %v173
      %v2806 = vmul.f32 %v1118, %v174
      %v2807 = vmul.f32 %v1122, %v175
      %v2808 = vmul.f32 %v1126, %v176
      %v2809 = vmul.f32 %v1133, %v173
      %v2810 = vmul.f32 %v1137, %v174
      %v2811 = vmul.f32 %v1141, %v175
      %v2812 = vmul.f32 %v1145, %v176
      %v2813 = vmul.f32 %v1152, %v173
      %v2814 = vmul.f32 %v1156, %v174
      %v2815 = vmul.f32 %v1160, %v175
      %v2816 = vmul.f32 %v1164, %v176
      %v2817 = vmul.f32 %v1171, %v173
      %v2818 = vmul.f32 %v1175, %v174
      %v2819 = vmul.f32 %v1179, %v175
      %v2820 = vmul.f32 %v1183, %v176
      %v2821 = vmul.f32 %v1190, %v173
      %v2822 = vmul.f32 %v1194, %v174
      %v2823 = vmul.f32 %v1198, %v175
      %v2824 = vmul.f32 %v1202, %v176
      %v2825 = vmul.f32 %v1209, %v173
      %v2826 = vmul.f32 %v1213, %v174
      %v2827 = vmul.f32 %v1217, %v175
      %v2828 = vmul.f32 %v1221, %v176
      %v2829 = vmul.f32 %v1228, %v173
      %v2830 = vmul.f32 %v1232, %v174
      %v2831 = vmul.f32 %v1236, %v175
      %v2832 = vmul.f32 %v1240, %v176
      %v2833 = vmul.f32 %v1247, %v173
      %v2834 = vmul.f32 %v1251, %v174
      %v2835 = vmul.f32 %v1255, %v175
      %v2836 = vmul.f32 %v1259, %v176
      %v2837 = vmul.f32 %v1266, %v173
      %v2838 = vmul.f32 %v1270, %v174
      %v2839 = vmul.f32 %v1274, %v175
      %v2840 = vmul.f32 %v1278, %v176
      %v2841 = vmul.f32 %v1285, %v173
      %v2842 = vmul.f32 %v1289, %v174
      %v2843 = vmul.f32 %v1293, %v175
      %v2844 = vmul.f32 %v1297, %v176
      %v2845 = vmul.f32 %v1304, %v173
      %v2846 = vmul.f32 %v1308, %v174
      %v2847 = vmul.f32 %v1312, %v175
      %v2848 = vmul.f32 %v1316, %v176
      %v2849 = vmul.f32 %v1323, %v173
      %v2850 = vmul.f32 %v1327, %v174
      %v2851 = vmul.f32 %v1331, %v175
      %v2852 = vmul.f32 %v1335, %v176
      %v2853 = vmul.f32 %v1342, %v173
      %v2854 = vmul.f32 %v1346, %v174
      %v2855 = vmul.f32 %v1350, %v175
      %v2856 = vmul.f32 %v1354, %v176
      %v2857 = vmul.f32 %v1361, %v173
      %v2858 = vmul.f32 %v1365, %v174
      %v2859 = vmul.f32 %v1369, %v175
      %v2860 = vmul.f32 %v1373, %v176
      %v2861 = vmul.f32 %v1380, %v173
      %v2862 = vmul.f32 %v1384, %v174
      %v2863 = vmul.f32 %v1388, %v175
      %v2864 = vmul.f32 %v1392, %v176
      %v2865 = vmul.f32 %v1399, %v173
      %v2866 = vmul.f32 %v1403, %v174
      %v2867 = vmul.f32 %v1407, %v175
      %v2868 = vmul.f32 %v1411, %v176
      %v2869 = vmul.f32 %v1418, %v173
      %v2870 = vmul.f32 %v1422, %v174
      %v2871 = vmul.f32 %v1426, %v175
      %v2872 = vmul.f32 %v1430, %v176
      %v2873 = vmul.f32 %v1437, %v173
      %v2874 = vmul.f32 %v1441, %v174
      %v2875 = vmul.f32 %v1445, %v175
      %v2876 = vmul.f32 %v1449, %v176
      %v2877 = vmul.f32 %v1456, %v173
      %v2878 = vmul.f32 %v1460, %v174
      %v2879 = vmul.f32 %v1464, %v175
      %v2880 = vmul.f32 %v1468, %v176
      %v2881 = vmul.f32 %v1475, %v173
      %v2882 = vmul.f32 %v1479, %v174
      %v2883 = vmul.f32 %v1483, %v175
      %v2884 = vmul.f32 %v1487, %v176
      %v2885 = vmul.f32 %v1494, %v173
      %v2886 = vmul.f32 %v1498, %v174
      %v2887 = vmul.f32 %v1502, %v175
      %v2888 = vmul.f32 %v1506, %v176
      %v2889 = vmul.f32 %v1513, %v173
      %v2890 = vmul.f32 %v1517, %v174
      %v2891 = vmul.f32 %v1521, %v175
      %v2892 = vmul.f32 %v1525, %v176
      %v2893 = vmul.f32 %v1532, %v173
      %v2894 = vmul.f32 %v1536, %v174
      %v2895 = vmul.f32 %v1540, %v175
      %v2896 = vmul.f32 %v1544, %v176
      %v2897 = vmul.f32 %v1551, %v173
      %v2898 = vmul.f32 %v1555, %v174
      %v2899 = vmul.f32 %v1559, %v175
      %v2900 = vmul.f32 %v1563, %v176
      %v2901 = vmul.f32 %v1570, %v173
      %v2902 = vmul.f32 %v1574, %v174
      %v2903 = vmul.f32 %v1578, %v175
      %v2904 = vmul.f32 %v1582, %v176
      %v2905 = vmul.f32 %v1589, %v173
      %v2906 = vmul.f32 %v1593, %v174
      %v2907 = vmul.f32 %v1597, %v175
      %v2908 = vmul.f32 %v1601, %v176
      %v2909 = vmul.f32 %v1608, %v173
      %v2910 = vmul.f32 %v1612, %v174
      %v2911 = vmul.f32 %v1616, %v175
      %v2912 = vmul.f32 %v1620, %v176
      %v2913 = vmul.f32 %v1627, %v173
      %v2914 = vmul.f32 %v1631, %v174
      %v2915 = vmul.f32 %v1635, %v175
      %v2916 = vmul.f32 %v1639, %v176
      %v2917 = vmul.f32 %v1646, %v173
      %v2918 = vmul.f32 %v1650, %v174
      %v2919 = vmul.f32 %v1654, %v175
      %v2920 = vmul.f32 %v1658, %v176
      %v2921 = vmul.f32 %v1665, %v173
      %v2922 = vmul.f32 %v1669, %v174
      %v2923 = vmul.f32 %v1673, %v175
      %v2924 = vmul.f32 %v1677, %v176
      %v2925 = vmul.f32 %v1684, %v173
      %v2926 = vmul.f32 %v1688, %v174
      %v2927 = vmul.f32 %v1692, %v175
      %v2928 = vmul.f32 %v1696, %v176
      %v2929 = vmul.f32 %v1703, %v173
      %v2930 = vmul.f32 %v1707, %v174
      %v2931 = vmul.f32 %v1711, %v175
      %v2932 = vmul.f32 %v1715, %v176
      %v2933 = vmul.f32 %v1722, %v173
      %v2934 = vmul.f32 %v1726, %v174
      %v2935 = vmul.f32 %v1730, %v175
      %v2936 = vmul.f32 %v1734, %v176
      %v2937 = vmul.f32 %v1741, %v173
      %v2938 = vmul.f32 %v1745, %v174
      %v2939 = vmul.f32 %v1749, %v175
      %v2940 = vmul.f32 %v1753, %v176
      %v2941 = vmul.f32 %v1760, %v173
      %v2942 = vmul.f32 %v1764, %v174
      %v2943 = vmul.f32 %v1768, %v175
      %v2944 = vmul.f32 %v1772, %v176
      %v2945 = vmul.f32 %v1779, %v173
      %v2946 = vmul.f32 %v1783, %v174
      %v2947 = vmul.f32 %v1787, %v175
      %v2948 = vmul.f32 %v1791, %v176
      %v2949 = vmul.f32 %v1798, %v173
      %v2950 = vmul.f32 %v1802, %v174
      %v2951 = vmul.f32 %v1806, %v175
      %v2952 = vmul.f32 %v1810, %v176
      %v2953 = vmul.f32 %v1817, %v173
      %v2954 = vmul.f32 %v1821, %v174
      %v2955 = vmul.f32 %v1825, %v175
      %v2956 = vmul.f32 %v1829, %v176
      %v2957 = vmul.f32 %v1836, %v173
      %v2958 = vmul.f32 %v1840, %v174
      %v2959 = vmul.f32 %v1844, %v175
      %v2960 = vmul.f32 %v1848, %v176
      %v2961 = vmul.f32 %v1855, %v173
      %v2962 = vmul.f32 %v1859, %v174
      %v2963 = vmul.f32 %v1863, %v175
      %v2964 = vmul.f32 %v1867, %v176
      %v2965 = vmul.f32 %v1874, %v173
      %v2966 = vmul.f32 %v1878, %v174
      %v2967 = vmul.f32 %v1882, %v175
      %v2968 = vmul.f32 %v1886, %v176
      %v2969 = vmul.f32 %v1893, %v173
      %v2970 = vmul.f32 %v1897, %v174
      %v2971 = vmul.f32 %v1901, %v175
      %v2972 = vmul.f32 %v1905, %v176
      %v2973 = vmul.f32 %v1912, %v173
      %v2974 = vmul.f32 %v1916, %v174
      %v2975 = vmul.f32 %v1920, %v175
      %v2976 = vmul.f32 %v1924, %v176
      %v2977 = vmul.f32 %v1931, %v173
      %v2978 = vmul.f32 %v1935, %v174
      %v2979 = vmul.f32 %v1939, %v175
      %v2980 = vmul.f32 %v1943, %v176
      %v2981 = vmul.f32 %v1950, %v173
      %v2982 = vmul.f32 %v1954, %v174
      %v2983 = vmul.f32 %v1958, %v175
      %v2984 = vmul.f32 %v1962, %v176
      %v2985 = vmul.f32 %v1969, %v173
      %v2986 = vmul.f32 %v1973, %v174
      %v2987 = vmul.f32 %v1977, %v175
      %v2988 = vmul.f32 %v1981, %v176
      %v2989 = vmul.f32 %v1988, %v173
      %v2990 = vmul.f32 %v1992, %v174
      %v2991 = vmul.f32 %v1996, %v175
      %v2992 = vmul.f32 %v2000, %v176
      %v2993 = vmul.f32 %v2007, %v173
      %v2994 = vmul.f32 %v2011, %v174
      %v2995 = vmul.f32 %v2015, %v175
      %v2996 = vmul.f32 %v2019, %v176
      %v2997 = vmul.f32 %v2026, %v173
      %v2998 = vmul.f32 %v2030, %v174
      %v2999 = vmul.f32 %v2034, %v175
      %v3000 = vmul.f32 %v2038, %v176
      %v3001 = vmul.f32 %v2045, %v173
      %v3002 = vmul.f32 %v2049, %v174
      %v3003 = vmul.f32 %v2053, %v175
      %v3004 = vmul.f32 %v2057, %v176
      %v3005 = vmul.f32 %v2064, %v173
      %v3006 = vmul.f32 %v2068, %v174
      %v3007 = vmul.f32 %v2072, %v175
      %v3008 = vmul.f32 %v2076, %v176
      %v3009 = vmul.f32 %v2083, %v173
      %v3010 = vmul.f32 %v2087, %v174
      %v3011 = vmul.f32 %v2091, %v175
      %v3012 = vmul.f32 %v2095, %v176
      %v3013 = vmul.f32 %v2102, %v173
      %v3014 = vmul.f32 %v2106, %v174
      %v3015 = vmul.f32 %v2110, %v175
      %v3016 = vmul.f32 %v2114, %v176
      %v3017 = vmul.f32 %v2121, %v173
      %v3018 = vmul.f32 %v2125, %v174
      %v3019 = vmul.f32 %v2129, %v175
      %v3020 = vmul.f32 %v2133, %v176
      %v3021 = vmul.f32 %v2140, %v173
      %v3022 = vmul.f32 %v2144, %v174
      %v3023 = vmul.f32 %v2148, %v175
      %v3024 = vmul.f32 %v2152, %v176
      %v3025 = vmul.f32 %v2159, %v173
      %v3026 = vmul.f32 %v2163, %v174
      %v3027 = vmul.f32 %v2167, %v175
      %v3028 = vmul.f32 %v2171, %v176
      %v3029 = vmul.f32 %v2178, %v173
      %v3030 = vmul.f32 %v2182, %v174
      %v3031 = vmul.f32 %v2186, %v175
      %v3032 = vmul.f32 %v2190, %v176
      %v3033 = vmul.f32 %v2197, %v173
      %v3034 = vmul.f32 %v2201, %v174
      %v3035 = vmul.f32 %v2205, %v175
      %v3036 = vmul.f32 %v2209, %v176
      %v3037 = vmul.f32 %v2216, %v173
      %v3038 = vmul.f32 %v2220, %v174
      %v3039 = vmul.f32 %v2224, %v175
      %v3040 = vmul.f32 %v2228, %v176
      %v3041 = vmul.f32 %v2235, %v173
      %v3042 = vmul.f32 %v2239, %v174
      %v3043 = vmul.f32 %v2243, %v175
      %v3044 = vmul.f32 %v2247, %v176
      %v3045 = vmul.f32 %v2254, %v173
      %v3046 = vmul.f32 %v2258, %v174
      %v3047 = vmul.f32 %v2262, %v175
      %v3048 = vmul.f32 %v2266, %v176
      %v3049 = vmul.f32 %v2273, %v173
      %v3050 = vmul.f32 %v2277, %v174
      %v3051 = vmul.f32 %v2281, %v175
      %v3052 = vmul.f32 %v2285, %v176
      %v3053 = vmul.f32 %v2292, %v173
      %v3054 = vmul.f32 %v2296, %v174
      %v3055 = vmul.f32 %v2300, %v175
      %v3056 = vmul.f32 %v2304, %v176
      %v3057 = vmul.f32 %v2311, %v173
      %v3058 = vmul.f32 %v2315, %v174
      %v3059 = vmul.f32 %v2319, %v175
      %v3060 = vmul.f32 %v2323, %v176
      %v3061 = vmul.f32 %v2330, %v173
      %v3062 = vmul.f32 %v2334, %v174
      %v3063 = vmul.f32 %v2338, %v175
      %v3064 = vmul.f32 %v2342, %v176
      %v3065 = vmul.f32 %v2349, %v173
      %v3066 = vmul.f32 %v2353, %v174
      %v3067 = vmul.f32 %v2357, %v175
      %v3068 = vmul.f32 %v2361, %v176
      %v3069 = vmul.f32 %v2368, %v173
      %v3070 = vmul.f32 %v2372, %v174
      %v3071 = vmul.f32 %v2376, %v175
      %v3072 = vmul.f32 %v2380, %v176
      %v3073 = vmul.f32 %v2387, %v173
      %v3074 = vmul.f32 %v2391, %v174
      %v3075 = vmul.f32 %v2395, %v175
      %v3076 = vmul.f32 %v2399, %v176
      %v3077 = vmul.f32 %v2406, %v173
      %v3078 = vmul.f32 %v2410, %v174
      %v3079 = vmul.f32 %v2414, %v175
      %v3080 = vmul.f32 %v2418, %v176
      %v3081 = vmul.f32 %v2425, %v173
      %v3082 = vmul.f32 %v2429, %v174
      %v3083 = vmul.f32 %v2433, %v175
      %v3084 = vmul.f32 %v2437, %v176
      %v3085 = vmul.f32 %v2444, %v173
      %v3086 = vmul.f32 %v2448, %v174
      %v3087 = vmul.f32 %v2452, %v175
      %v3088 = vmul.f32 %v2456, %v176
      %v3089 = vmul.f32 %v2463, %v173
      %v3090 = vmul.f32 %v2467, %v174
      %v3091 = vmul.f32 %v2471, %v175
      %v3092 = vmul.f32 %v2475, %v176
      %v3093 = vmul.f32 %v2482, %v173
      %v3094 = vmul.f32 %v2486, %v174
      %v3095 = vmul.f32 %v2490, %v175
      %v3096 = vmul.f32 %v2494, %v176
      %v3097 = vmul.f32 %v2501, %v173
      %v3098 = vmul.f32 %v2505, %v174
      %v3099 = vmul.f32 %v2509, %v175
      %v3100 = vmul.f32 %v2513, %v176
      %v3101 = vmul.f32 %v2520, %v173
      %v3102 = vmul.f32 %v2524, %v174
      %v3103 = vmul.f32 %v2528, %v175
      %v3104 = vmul.f32 %v2532, %v176
      %v3105 = vmul.f32 %v2539, %v173
      %v3106 = vmul.f32 %v2543, %v174
      %v3107 = vmul.f32 %v2547, %v175
      %v3108 = vmul.f32 %v2551, %v176
      %v3109 = vmul.f32 %v2558, %v173
      %v3110 = vmul.f32 %v2562, %v174
      %v3111 = vmul.f32 %v2566, %v175
      %v3112 = vmul.f32 %v2570, %v176
      %v3113 = vmul.f32 %v2577, %v173
      %v3114 = vmul.f32 %v2581, %v174
      %v3115 = vmul.f32 %v2585, %v175
      %v3116 = vmul.f32 %v2589, %v176
      %v3117 = vmul.f32 %v2596, %v173
      %v3118 = vmul.f32 %v2600, %v174
      %v3119 = vmul.f32 %v2604, %v175
      %v3120 = vmul.f32 %v2608, %v176
      %v3121 = vadd.f32 %v2609, %v2610
      %v3122 = vadd.f32 %v3121, %v2611
      %v3123 = vadd.f32 %v3122, %v2612
      %v3124 = vrot.slane %v3123, 4
      %v3125 = vadd.f32 %v3123, %v3124
      %v3126 = vrot.slane %v3125, 2
      %v3127 = vadd.f32 %v3125, %v3126
      %v3128 = vrot.slane %v3127, 1
      %v3129 = vadd.f32 %v3127, %v3128
      %v3130 = vadd.f32 %v2613, %v2614
      %v3131 = vadd.f32 %v3130, %v2615
      %v3132 = vadd.f32 %v3131, %v2616
      %v3133 = vrot.slane %v3132, 4
      %v3134 = vadd.f32 %v3132, %v3133
      %v3135 = vrot.slane %v3134, 2
      %v3136 = vadd.f32 %v3134, %v3135
      %v3137 = vrot.slane %v3136, 1
      %v3138 = vadd.f32 %v3136, %v3137
      %v3139 = vadd.f32 %v2617, %v2618
      %v3140 = vadd.f32 %v3139, %v2619
      %v3141 = vadd.f32 %v3140, %v2620
      %v3142 = vrot.slane %v3141, 4
      %v3143 = vadd.f32 %v3141, %v3142
      %v3144 = vrot.slane %v3143, 2
      %v3145 = vadd.f32 %v3143, %v3144
      %v3146 = vrot.slane %v3145, 1
      %v3147 = vadd.f32 %v3145, %v3146
      %v3148 = vadd.f32 %v2621, %v2622
      %v3149 = vadd.f32 %v3148, %v2623
      %v3150 = vadd.f32 %v3149, %v2624
      %v3151 = vrot.slane %v3150, 4
      %v3152 = vadd.f32 %v3150, %v3151
      %v3153 = vrot.slane %v3152, 2
      %v3154 = vadd.f32 %v3152, %v3153
      %v3155 = vrot.slane %v3154, 1
      %v3156 = vadd.f32 %v3154, %v3155
      %v3157 = vadd.f32 %v2625, %v2626
      %v3158 = vadd.f32 %v3157, %v2627
      %v3159 = vadd.f32 %v3158, %v2628
      %v3160 = vrot.slane %v3159, 4
      %v3161 = vadd.f32 %v3159, %v3160
      %v3162 = vrot.slane %v3161, 2
      %v3163 = vadd.f32 %v3161, %v3162
      %v3164 = vrot.slane %v3163, 1
      %v3165 = vadd.f32 %v3163, %v3164
      %v3166 = vadd.f32 %v2629, %v2630
      %v3167 = vadd.f32 %v3166, %v2631
      %v3168 = vadd.f32 %v3167, %v2632
      %v3169 = vrot.slane %v3168, 4
      %v3170 = vadd.f32 %v3168, %v3169
      %v3171 = vrot.slane %v3170, 2
      %v3172 = vadd.f32 %v3170, %v3171
      %v3173 = vrot.slane %v3172, 1
      %v3174 = vadd.f32 %v3172, %v3173
      %v3175 = vadd.f32 %v2633, %v2634
      %v3176 = vadd.f32 %v3175, %v2635
      %v3177 = vadd.f32 %v3176, %v2636
      %v3178 = vrot.slane %v3177, 4
      %v3179 = vadd.f32 %v3177, %v3178
      %v3180 = vrot.slane %v3179, 2
      %v3181 = vadd.f32 %v3179, %v3180
      %v3182 = vrot.slane %v3181, 1
      %v3183 = vadd.f32 %v3181, %v3182
      %v3184 = vadd.f32 %v2637, %v2638
      %v3185 = vadd.f32 %v3184, %v2639
      %v3186 = vadd.f32 %v3185, %v2640
      %v3187 = vrot.slane %v3186, 4
      %v3188 = vadd.f32 %v3186, %v3187
      %v3189 = vrot.slane %v3188, 2
      %v3190 = vadd.f32 %v3188, %v3189
      %v3191 = vrot.slane %v3190, 1
      %v3192 = vadd.f32 %v3190, %v3191
      %v3193 = vadd.f32 %v2641, %v2642
      %v3194 = vadd.f32 %v3193, %v2643
      %v3195 = vadd.f32 %v3194, %v2644
      %v3196 = vrot.slane %v3195, 4
      %v3197 = vadd.f32 %v3195, %v3196
      %v3198 = vrot.slane %v3197, 2
      %v3199 = vadd.f32 %v3197, %v3198
      %v3200 = vrot.slane %v3199, 1
      %v3201 = vadd.f32 %v3199, %v3200
      %v3202 = vadd.f32 %v2645, %v2646
      %v3203 = vadd.f32 %v3202, %v2647
      %v3204 = vadd.f32 %v3203, %v2648
      %v3205 = vrot.slane %v3204, 4
      %v3206 = vadd.f32 %v3204, %v3205
      %v3207 = vrot.slane %v3206, 2
      %v3208 = vadd.f32 %v3206, %v3207
      %v3209 = vrot.slane %v3208, 1
      %v3210 = vadd.f32 %v3208, %v3209
      %v3211 = vadd.f32 %v2649, %v2650
      %v3212 = vadd.f32 %v3211, %v2651
      %v3213 = vadd.f32 %v3212, %v2652
      %v3214 = vrot.slane %v3213, 4
      %v3215 = vadd.f32 %v3213, %v3214
      %v3216 = vrot.slane %v3215, 2
      %v3217 = vadd.f32 %v3215, %v3216
      %v3218 = vrot.slane %v3217, 1
      %v3219 = vadd.f32 %v3217, %v3218
      %v3220 = vadd.f32 %v2653, %v2654
      %v3221 = vadd.f32 %v3220, %v2655
      %v3222 = vadd.f32 %v3221, %v2656
      %v3223 = vrot.slane %v3222, 4
      %v3224 = vadd.f32 %v3222, %v3223
      %v3225 = vrot.slane %v3224, 2
      %v3226 = vadd.f32 %v3224, %v3225
      %v3227 = vrot.slane %v3226, 1
      %v3228 = vadd.f32 %v3226, %v3227
      %v3229 = vadd.f32 %v2657, %v2658
      %v3230 = vadd.f32 %v3229, %v2659
      %v3231 = vadd.f32 %v3230, %v2660
      %v3232 = vrot.slane %v3231, 4
      %v3233 = vadd.f32 %v3231, %v3232
      %v3234 = vrot.slane %v3233, 2
      %v3235 = vadd.f32 %v3233, %v3234
      %v3236 = vrot.slane %v3235, 1
      %v3237 = vadd.f32 %v3235, %v3236
      %v3238 = vadd.f32 %v2661, %v2662
      %v3239 = vadd.f32 %v3238, %v2663
      %v3240 = vadd.f32 %v3239, %v2664
      %v3241 = vrot.slane %v3240, 4
      %v3242 = vadd.f32 %v3240, %v3241
      %v3243 = vrot.slane %v3242, 2
      %v3244 = vadd.f32 %v3242, %v3243
      %v3245 = vrot.slane %v3244, 1
      %v3246 = vadd.f32 %v3244, %v3245
      %v3247 = vadd.f32 %v2665, %v2666
      %v3248 = vadd.f32 %v3247, %v2667
      %v3249 = vadd.f32 %v3248, %v2668
      %v3250 = vrot.slane %v3249, 4
      %v3251 = vadd.f32 %v3249, %v3250
      %v3252 = vrot.slane %v3251, 2
      %v3253 = vadd.f32 %v3251, %v3252
      %v3254 = vrot.slane %v3253, 1
      %v3255 = vadd.f32 %v3253, %v3254
      %v3256 = vadd.f32 %v2669, %v2670
      %v3257 = vadd.f32 %v3256, %v2671
      %v3258 = vadd.f32 %v3257, %v2672
      %v3259 = vrot.slane %v3258, 4
      %v3260 = vadd.f32 %v3258, %v3259
      %v3261 = vrot.slane %v3260, 2
      %v3262 = vadd.f32 %v3260, %v3261
      %v3263 = vrot.slane %v3262, 1
      %v3264 = vadd.f32 %v3262, %v3263
      %v3265 = vadd.f32 %v2673, %v2674
      %v3266 = vadd.f32 %v3265, %v2675
      %v3267 = vadd.f32 %v3266, %v2676
      %v3268 = vrot.slane %v3267, 4
      %v3269 = vadd.f32 %v3267, %v3268
      %v3270 = vrot.slane %v3269, 2
      %v3271 = vadd.f32 %v3269, %v3270
      %v3272 = vrot.slane %v3271, 1
      %v3273 = vadd.f32 %v3271, %v3272
      %v3274 = vadd.f32 %v2677, %v2678
      %v3275 = vadd.f32 %v3274, %v2679
      %v3276 = vadd.f32 %v3275, %v2680
      %v3277 = vrot.slane %v3276, 4
      %v3278 = vadd.f32 %v3276, %v3277
      %v3279 = vrot.slane %v3278, 2
      %v3280 = vadd.f32 %v3278, %v3279
      %v3281 = vrot.slane %v3280, 1
      %v3282 = vadd.f32 %v3280, %v3281
      %v3283 = vadd.f32 %v2681, %v2682
      %v3284 = vadd.f32 %v3283, %v2683
      %v3285 = vadd.f32 %v3284, %v2684
      %v3286 = vrot.slane %v3285, 4
      %v3287 = vadd.f32 %v3285, %v3286
      %v3288 = vrot.slane %v3287, 2
      %v3289 = vadd.f32 %v3287, %v3288
      %v3290 = vrot.slane %v3289, 1
      %v3291 = vadd.f32 %v3289, %v3290
      %v3292 = vadd.f32 %v2685, %v2686
      %v3293 = vadd.f32 %v3292, %v2687
      %v3294 = vadd.f32 %v3293, %v2688
      %v3295 = vrot.slane %v3294, 4
      %v3296 = vadd.f32 %v3294, %v3295
      %v3297 = vrot.slane %v3296, 2
      %v3298 = vadd.f32 %v3296, %v3297
      %v3299 = vrot.slane %v3298, 1
      %v3300 = vadd.f32 %v3298, %v3299
      %v3301 = vadd.f32 %v2689, %v2690
      %v3302 = vadd.f32 %v3301, %v2691
      %v3303 = vadd.f32 %v3302, %v2692
      %v3304 = vrot.slane %v3303, 4
      %v3305 = vadd.f32 %v3303, %v3304
      %v3306 = vrot.slane %v3305, 2
      %v3307 = vadd.f32 %v3305, %v3306
      %v3308 = vrot.slane %v3307, 1
      %v3309 = vadd.f32 %v3307, %v3308
      %v3310 = vadd.f32 %v2693, %v2694
      %v3311 = vadd.f32 %v3310, %v2695
      %v3312 = vadd.f32 %v3311, %v2696
      %v3313 = vrot.slane %v3312, 4
      %v3314 = vadd.f32 %v3312, %v3313
      %v3315 = vrot.slane %v3314, 2
      %v3316 = vadd.f32 %v3314, %v3315
      %v3317 = vrot.slane %v3316, 1
      %v3318 = vadd.f32 %v3316, %v3317
      %v3319 = vadd.f32 %v2697, %v2698
      %v3320 = vadd.f32 %v3319, %v2699
      %v3321 = vadd.f32 %v3320, %v2700
      %v3322 = vrot.slane %v3321, 4
      %v3323 = vadd.f32 %v3321, %v3322
      %v3324 = vrot.slane %v3323, 2
      %v3325 = vadd.f32 %v3323, %v3324
      %v3326 = vrot.slane %v3325, 1
      %v3327 = vadd.f32 %v3325, %v3326
      %v3328 = vadd.f32 %v2701, %v2702
      %v3329 = vadd.f32 %v3328, %v2703
      %v3330 = vadd.f32 %v3329, %v2704
      %v3331 = vrot.slane %v3330, 4
      %v3332 = vadd.f32 %v3330, %v3331
      %v3333 = vrot.slane %v3332, 2
      %v3334 = vadd.f32 %v3332, %v3333
      %v3335 = vrot.slane %v3334, 1
      %v3336 = vadd.f32 %v3334, %v3335
      %v3337 = vadd.f32 %v2705, %v2706
      %v3338 = vadd.f32 %v3337, %v2707
      %v3339 = vadd.f32 %v3338, %v2708
      %v3340 = vrot.slane %v3339, 4
      %v3341 = vadd.f32 %v3339, %v3340
      %v3342 = vrot.slane %v3341, 2
      %v3343 = vadd.f32 %v3341, %v3342
      %v3344 = vrot.slane %v3343, 1
      %v3345 = vadd.f32 %v3343, %v3344
      %v3346 = vadd.f32 %v2709, %v2710
      %v3347 = vadd.f32 %v3346, %v2711
      %v3348 = vadd.f32 %v3347, %v2712
      %v3349 = vrot.slane %v3348, 4
      %v3350 = vadd.f32 %v3348, %v3349
      %v3351 = vrot.slane %v3350, 2
      %v3352 = vadd.f32 %v3350, %v3351
      %v3353 = vrot.slane %v3352, 1
      %v3354 = vadd.f32 %v3352, %v3353
      %v3355 = vadd.f32 %v2713, %v2714
      %v3356 = vadd.f32 %v3355, %v2715
      %v3357 = vadd.f32 %v3356, %v2716
      %v3358 = vrot.slane %v3357, 4
      %v3359 = vadd.f32 %v3357, %v3358
      %v3360 = vrot.slane %v3359, 2
      %v3361 = vadd.f32 %v3359, %v3360
      %v3362 = vrot.slane %v3361, 1
      %v3363 = vadd.f32 %v3361, %v3362
      %v3364 = vadd.f32 %v2717, %v2718
      %v3365 = vadd.f32 %v3364, %v2719
      %v3366 = vadd.f32 %v3365, %v2720
      %v3367 = vrot.slane %v3366, 4
      %v3368 = vadd.f32 %v3366, %v3367
      %v3369 = vrot.slane %v3368, 2
      %v3370 = vadd.f32 %v3368, %v3369
      %v3371 = vrot.slane %v3370, 1
      %v3372 = vadd.f32 %v3370, %v3371
      %v3373 = vadd.f32 %v2721, %v2722
      %v3374 = vadd.f32 %v3373, %v2723
      %v3375 = vadd.f32 %v3374, %v2724
      %v3376 = vrot.slane %v3375, 4
      %v3377 = vadd.f32 %v3375, %v3376
      %v3378 = vrot.slane %v3377, 2
      %v3379 = vadd.f32 %v3377, %v3378
      %v3380 = vrot.slane %v3379, 1
      %v3381 = vadd.f32 %v3379, %v3380
      %v3382 = vadd.f32 %v2725, %v2726
      %v3383 = vadd.f32 %v3382, %v2727
      %v3384 = vadd.f32 %v3383, %v2728
      %v3385 = vrot.slane %v3384, 4
      %v3386 = vadd.f32 %v3384, %v3385
      %v3387 = vrot.slane %v3386, 2
      %v3388 = vadd.f32 %v3386, %v3387
      %v3389 = vrot.slane %v3388, 1
      %v3390 = vadd.f32 %v3388, %v3389
      %v3391 = vadd.f32 %v2729, %v2730
      %v3392 = vadd.f32 %v3391, %v2731
      %v3393 = vadd.f32 %v3392, %v2732
      %v3394 = vrot.slane %v3393, 4
      %v3395 = vadd.f32 %v3393, %v3394
      %v3396 = vrot.slane %v3395, 2
      %v3397 = vadd.f32 %v3395, %v3396
      %v3398 = vrot.slane %v3397, 1
      %v3399 = vadd.f32 %v3397, %v3398
      %v3400 = vadd.f32 %v2733, %v2734
      %v3401 = vadd.f32 %v3400, %v2735
      %v3402 = vadd.f32 %v3401, %v2736
      %v3403 = vrot.slane %v3402, 4
      %v3404 = vadd.f32 %v3402, %v3403
      %v3405 = vrot.slane %v3404, 2
      %v3406 = vadd.f32 %v3404, %v3405
      %v3407 = vrot.slane %v3406, 1
      %v3408 = vadd.f32 %v3406, %v3407
      %v3409 = vadd.f32 %v2737, %v2738
      %v3410 = vadd.f32 %v3409, %v2739
      %v3411 = vadd.f32 %v3410, %v2740
      %v3412 = vrot.slane %v3411, 4
      %v3413 = vadd.f32 %v3411, %v3412
      %v3414 = vrot.slane %v3413, 2
      %v3415 = vadd.f32 %v3413, %v3414
      %v3416 = vrot.slane %v3415, 1
      %v3417 = vadd.f32 %v3415, %v3416
      %v3418 = vadd.f32 %v2741, %v2742
      %v3419 = vadd.f32 %v3418, %v2743
      %v3420 = vadd.f32 %v3419, %v2744
      %v3421 = vrot.slane %v3420, 4
      %v3422 = vadd.f32 %v3420, %v3421
      %v3423 = vrot.slane %v3422, 2
      %v3424 = vadd.f32 %v3422, %v3423
      %v3425 = vrot.slane %v3424, 1
      %v3426 = vadd.f32 %v3424, %v3425
      %v3427 = vadd.f32 %v2745, %v2746
      %v3428 = vadd.f32 %v3427, %v2747
      %v3429 = vadd.f32 %v3428, %v2748
      %v3430 = vrot.slane %v3429, 4
      %v3431 = vadd.f32 %v3429, %v3430
      %v3432 = vrot.slane %v3431, 2
      %v3433 = vadd.f32 %v3431, %v3432
      %v3434 = vrot.slane %v3433, 1
      %v3435 = vadd.f32 %v3433, %v3434
      %v3436 = vadd.f32 %v2749, %v2750
      %v3437 = vadd.f32 %v3436, %v2751
      %v3438 = vadd.f32 %v3437, %v2752
      %v3439 = vrot.slane %v3438, 4
      %v3440 = vadd.f32 %v3438, %v3439
      %v3441 = vrot.slane %v3440, 2
      %v3442 = vadd.f32 %v3440, %v3441
      %v3443 = vrot.slane %v3442, 1
      %v3444 = vadd.f32 %v3442, %v3443
      %v3445 = vadd.f32 %v2753, %v2754
      %v3446 = vadd.f32 %v3445, %v2755
      %v3447 = vadd.f32 %v3446, %v2756
      %v3448 = vrot.slane %v3447, 4
      %v3449 = vadd.f32 %v3447, %v3448
      %v3450 = vrot.slane %v3449, 2
      %v3451 = vadd.f32 %v3449, %v3450
      %v3452 = vrot.slane %v3451, 1
      %v3453 = vadd.f32 %v3451, %v3452
      %v3454 = vadd.f32 %v2757, %v2758
      %v3455 = vadd.f32 %v3454, %v2759
      %v3456 = vadd.f32 %v3455, %v2760
      %v3457 = vrot.slane %v3456, 4
      %v3458 = vadd.f32 %v3456, %v3457
      %v3459 = vrot.slane %v3458, 2
      %v3460 = vadd.f32 %v3458, %v3459
      %v3461 = vrot.slane %v3460, 1
      %v3462 = vadd.f32 %v3460, %v3461
      %v3463 = vadd.f32 %v2761, %v2762
      %v3464 = vadd.f32 %v3463, %v2763
      %v3465 = vadd.f32 %v3464, %v2764
      %v3466 = vrot.slane %v3465, 4
      %v3467 = vadd.f32 %v3465, %v3466
      %v3468 = vrot.slane %v3467, 2
      %v3469 = vadd.f32 %v3467, %v3468
      %v3470 = vrot.slane %v3469, 1
      %v3471 = vadd.f32 %v3469, %v3470
      %v3472 = vadd.f32 %v2765, %v2766
      %v3473 = vadd.f32 %v3472, %v2767
      %v3474 = vadd.f32 %v3473, %v2768
      %v3475 = vrot.slane %v3474, 4
      %v3476 = vadd.f32 %v3474, %v3475
      %v3477 = vrot.slane %v3476, 2
      %v3478 = vadd.f32 %v3476, %v3477
      %v3479 = vrot.slane %v3478, 1
      %v3480 = vadd.f32 %v3478, %v3479
      %v3481 = vadd.f32 %v2769, %v2770
      %v3482 = vadd.f32 %v3481, %v2771
      %v3483 = vadd.f32 %v3482, %v2772
      %v3484 = vrot.slane %v3483, 4
      %v3485 = vadd.f32 %v3483, %v3484
      %v3486 = vrot.slane %v3485, 2
      %v3487 = vadd.f32 %v3485, %v3486
      %v3488 = vrot.slane %v3487, 1
      %v3489 = vadd.f32 %v3487, %v3488
      %v3490 = vadd.f32 %v2773, %v2774
      %v3491 = vadd.f32 %v3490, %v2775
      %v3492 = vadd.f32 %v3491, %v2776
      %v3493 = vrot.slane %v3492, 4
      %v3494 = vadd.f32 %v3492, %v3493
      %v3495 = vrot.slane %v3494, 2
      %v3496 = vadd.f32 %v3494, %v3495
      %v3497 = vrot.slane %v3496, 1
      %v3498 = vadd.f32 %v3496, %v3497
      %v3499 = vadd.f32 %v2777, %v2778
      %v3500 = vadd.f32 %v3499, %v2779
      %v3501 = vadd.f32 %v3500, %v2780
      %v3502 = vrot.slane %v3501, 4
      %v3503 = vadd.f32 %v3501, %v3502
      %v3504 = vrot.slane %v3503, 2
      %v3505 = vadd.f32 %v3503, %v3504
      %v3506 = vrot.slane %v3505, 1
      %v3507 = vadd.f32 %v3505, %v3506
      %v3508 = vadd.f32 %v2781, %v2782
      %v3509 = vadd.f32 %v3508, %v2783
      %v3510 = vadd.f32 %v3509, %v2784
      %v3511 = vrot.slane %v3510, 4
      %v3512 = vadd.f32 %v3510, %v3511
      %v3513 = vrot.slane %v3512, 2
      %v3514 = vadd.f32 %v3512, %v3513
      %v3515 = vrot.slane %v3514, 1
      %v3516 = vadd.f32 %v3514, %v3515
      %v3517 = vadd.f32 %v2785, %v2786
      %v3518 = vadd.f32 %v3517, %v2787
      %v3519 = vadd.f32 %v3518, %v2788
      %v3520 = vrot.slane %v3519, 4
      %v3521 = vadd.f32 %v3519, %v3520
      %v3522 = vrot.slane %v3521, 2
      %v3523 = vadd.f32 %v3521, %v3522
      %v3524 = vrot.slane %v3523, 1
      %v3525 = vadd.f32 %v3523, %v3524
      %v3526 = vadd.f32 %v2789, %v2790
      %v3527 = vadd.f32 %v3526, %v2791
      %v3528 = vadd.f32 %v3527, %v2792
      %v3529 = vrot.slane %v3528, 4
      %v3530 = vadd.f32 %v3528, %v3529
      %v3531 = vrot.slane %v3530, 2
      %v3532 = vadd.f32 %v3530, %v3531
      %v3533 = vrot.slane %v3532, 1
      %v3534 = vadd.f32 %v3532, %v3533
      %v3535 = vadd.f32 %v2793, %v2794
      %v3536 = vadd.f32 %v3535, %v2795
      %v3537 = vadd.f32 %v3536, %v2796
      %v3538 = vrot.slane %v3537, 4
      %v3539 = vadd.f32 %v3537, %v3538
      %v3540 = vrot.slane %v3539, 2
      %v3541 = vadd.f32 %v3539, %v3540
      %v3542 = vrot.slane %v3541, 1
      %v3543 = vadd.f32 %v3541, %v3542
      %v3544 = vadd.f32 %v2797, %v2798
      %v3545 = vadd.f32 %v3544, %v2799
      %v3546 = vadd.f32 %v3545, %v2800
      %v3547 = vrot.slane %v3546, 4
      %v3548 = vadd.f32 %v3546, %v3547
      %v3549 = vrot.slane %v3548, 2
      %v3550 = vadd.f32 %v3548, %v3549
      %v3551 = vrot.slane %v3550, 1
      %v3552 = vadd.f32 %v3550, %v3551
      %v3553 = vadd.f32 %v2801, %v2802
      %v3554 = vadd.f32 %v3553, %v2803
      %v3555 = vadd.f32 %v3554, %v2804
      %v3556 = vrot.slane %v3555, 4
      %v3557 = vadd.f32 %v3555, %v3556
      %v3558 = vrot.slane %v3557, 2
      %v3559 = vadd.f32 %v3557, %v3558
      %v3560 = vrot.slane %v3559, 1
      %v3561 = vadd.f32 %v3559, %v3560
      %v3562 = vadd.f32 %v2805, %v2806
      %v3563 = vadd.f32 %v3562, %v2807
      %v3564 = vadd.f32 %v3563, %v2808
      %v3565 = vrot.slane %v3564, 4
      %v3566 = vadd.f32 %v3564, %v3565
      %v3567 = vrot.slane %v3566, 2
      %v3568 = vadd.f32 %v3566, %v3567
      %v3569 = vrot.slane %v3568, 1
      %v3570 = vadd.f32 %v3568, %v3569
      %v3571 = vadd.f32 %v2809, %v2810
      %v3572 = vadd.f32 %v3571, %v2811
      %v3573 = vadd.f32 %v3572, %v2812
      %v3574 = vrot.slane %v3573, 4
      %v3575 = vadd.f32 %v3573, %v3574
      %v3576 = vrot.slane %v3575, 2
      %v3577 = vadd.f32 %v3575, %v3576
      %v3578 = vrot.slane %v3577, 1
      %v3579 = vadd.f32 %v3577, %v3578
      %v3580 = vadd.f32 %v2813, %v2814
      %v3581 = vadd.f32 %v3580, %v2815
      %v3582 = vadd.f32 %v3581, %v2816
      %v3583 = vrot.slane %v3582, 4
      %v3584 = vadd.f32 %v3582, %v3583
      %v3585 = vrot.slane %v3584, 2
      %v3586 = vadd.f32 %v3584, %v3585
      %v3587 = vrot.slane %v3586, 1
      %v3588 = vadd.f32 %v3586, %v3587
      %v3589 = vadd.f32 %v2817, %v2818
      %v3590 = vadd.f32 %v3589, %v2819
      %v3591 = vadd.f32 %v3590, %v2820
      %v3592 = vrot.slane %v3591, 4
      %v3593 = vadd.f32 %v3591, %v3592
      %v3594 = vrot.slane %v3593, 2
      %v3595 = vadd.f32 %v3593, %v3594
      %v3596 = vrot.slane %v3595, 1
      %v3597 = vadd.f32 %v3595, %v3596
      %v3598 = vadd.f32 %v2821, %v2822
      %v3599 = vadd.f32 %v3598, %v2823
      %v3600 = vadd.f32 %v3599, %v2824
      %v3601 = vrot.slane %v3600, 4
      %v3602 = vadd.f32 %v3600, %v3601
      %v3603 = vrot.slane %v3602, 2
      %v3604 = vadd.f32 %v3602, %v3603
      %v3605 = vrot.slane %v3604, 1
      %v3606 = vadd.f32 %v3604, %v3605
      %v3607 = vadd.f32 %v2825, %v2826
      %v3608 = vadd.f32 %v3607, %v2827
      %v3609 = vadd.f32 %v3608, %v2828
      %v3610 = vrot.slane %v3609, 4
      %v3611 = vadd.f32 %v3609, %v3610
      %v3612 = vrot.slane %v3611, 2
      %v3613 = vadd.f32 %v3611, %v3612
      %v3614 = vrot.slane %v3613, 1
      %v3615 = vadd.f32 %v3613, %v3614
      %v3616 = vadd.f32 %v2829, %v2830
      %v3617 = vadd.f32 %v3616, %v2831
      %v3618 = vadd.f32 %v3617, %v2832
      %v3619 = vrot.slane %v3618, 4
      %v3620 = vadd.f32 %v3618, %v3619
      %v3621 = vrot.slane %v3620, 2
      %v3622 = vadd.f32 %v3620, %v3621
      %v3623 = vrot.slane %v3622, 1
      %v3624 = vadd.f32 %v3622, %v3623
      %v3625 = vadd.f32 %v2833, %v2834
      %v3626 = vadd.f32 %v3625, %v2835
      %v3627 = vadd.f32 %v3626, %v2836
      %v3628 = vrot.slane %v3627, 4
      %v3629 = vadd.f32 %v3627, %v3628
      %v3630 = vrot.slane %v3629, 2
      %v3631 = vadd.f32 %v3629, %v3630
      %v3632 = vrot.slane %v3631, 1
      %v3633 = vadd.f32 %v3631, %v3632
      %v3634 = vadd.f32 %v2837, %v2838
      %v3635 = vadd.f32 %v3634, %v2839
      %v3636 = vadd.f32 %v3635, %v2840
      %v3637 = vrot.slane %v3636, 4
      %v3638 = vadd.f32 %v3636, %v3637
      %v3639 = vrot.slane %v3638, 2
      %v3640 = vadd.f32 %v3638, %v3639
      %v3641 = vrot.slane %v3640, 1
      %v3642 = vadd.f32 %v3640, %v3641
      %v3643 = vadd.f32 %v2841, %v2842
      %v3644 = vadd.f32 %v3643, %v2843
      %v3645 = vadd.f32 %v3644, %v2844
      %v3646 = vrot.slane %v3645, 4
      %v3647 = vadd.f32 %v3645, %v3646
      %v3648 = vrot.slane %v3647, 2
      %v3649 = vadd.f32 %v3647, %v3648
      %v3650 = vrot.slane %v3649, 1
      %v3651 = vadd.f32 %v3649, %v3650
      %v3652 = vadd.f32 %v2845, %v2846
      %v3653 = vadd.f32 %v3652, %v2847
      %v3654 = vadd.f32 %v3653, %v2848
      %v3655 = vrot.slane %v3654, 4
      %v3656 = vadd.f32 %v3654, %v3655
      %v3657 = vrot.slane %v3656, 2
      %v3658 = vadd.f32 %v3656, %v3657
      %v3659 = vrot.slane %v3658, 1
      %v3660 = vadd.f32 %v3658, %v3659
      %v3661 = vadd.f32 %v2849, %v2850
      %v3662 = vadd.f32 %v3661, %v2851
      %v3663 = vadd.f32 %v3662, %v2852
      %v3664 = vrot.slane %v3663, 4
      %v3665 = vadd.f32 %v3663, %v3664
      %v3666 = vrot.slane %v3665, 2
      %v3667 = vadd.f32 %v3665, %v3666
      %v3668 = vrot.slane %v3667, 1
      %v3669 = vadd.f32 %v3667, %v3668
      %v3670 = vadd.f32 %v2853, %v2854
      %v3671 = vadd.f32 %v3670, %v2855
      %v3672 = vadd.f32 %v3671, %v2856
      %v3673 = vrot.slane %v3672, 4
      %v3674 = vadd.f32 %v3672, %v3673
      %v3675 = vrot.slane %v3674, 2
      %v3676 = vadd.f32 %v3674, %v3675
      %v3677 = vrot.slane %v3676, 1
      %v3678 = vadd.f32 %v3676, %v3677
      %v3679 = vadd.f32 %v2857, %v2858
      %v3680 = vadd.f32 %v3679, %v2859
      %v3681 = vadd.f32 %v3680, %v2860
      %v3682 = vrot.slane %v3681, 4
      %v3683 = vadd.f32 %v3681, %v3682
      %v3684 = vrot.slane %v3683, 2
      %v3685 = vadd.f32 %v3683, %v3684
      %v3686 = vrot.slane %v3685, 1
      %v3687 = vadd.f32 %v3685, %v3686
      %v3688 = vadd.f32 %v2861, %v2862
      %v3689 = vadd.f32 %v3688, %v2863
      %v3690 = vadd.f32 %v3689, %v2864
      %v3691 = vrot.slane %v3690, 4
      %v3692 = vadd.f32 %v3690, %v3691
      %v3693 = vrot.slane %v3692, 2
      %v3694 = vadd.f32 %v3692, %v3693
      %v3695 = vrot.slane %v3694, 1
      %v3696 = vadd.f32 %v3694, %v3695
      %v3697 = vadd.f32 %v2865, %v2866
      %v3698 = vadd.f32 %v3697, %v2867
      %v3699 = vadd.f32 %v3698, %v2868
      %v3700 = vrot.slane %v3699, 4
      %v3701 = vadd.f32 %v3699, %v3700
      %v3702 = vrot.slane %v3701, 2
      %v3703 = vadd.f32 %v3701, %v3702
      %v3704 = vrot.slane %v3703, 1
      %v3705 = vadd.f32 %v3703, %v3704
      %v3706 = vadd.f32 %v2869, %v2870
      %v3707 = vadd.f32 %v3706, %v2871
      %v3708 = vadd.f32 %v3707, %v2872
      %v3709 = vrot.slane %v3708, 4
      %v3710 = vadd.f32 %v3708, %v3709
      %v3711 = vrot.slane %v3710, 2
      %v3712 = vadd.f32 %v3710, %v3711
      %v3713 = vrot.slane %v3712, 1
      %v3714 = vadd.f32 %v3712, %v3713
      %v3715 = vadd.f32 %v2873, %v2874
      %v3716 = vadd.f32 %v3715, %v2875
      %v3717 = vadd.f32 %v3716, %v2876
      %v3718 = vrot.slane %v3717, 4
      %v3719 = vadd.f32 %v3717, %v3718
      %v3720 = vrot.slane %v3719, 2
      %v3721 = vadd.f32 %v3719, %v3720
      %v3722 = vrot.slane %v3721, 1
      %v3723 = vadd.f32 %v3721, %v3722
      %v3724 = vadd.f32 %v2877, %v2878
      %v3725 = vadd.f32 %v3724, %v2879
      %v3726 = vadd.f32 %v3725, %v2880
      %v3727 = vrot.slane %v3726, 4
      %v3728 = vadd.f32 %v3726, %v3727
      %v3729 = vrot.slane %v3728, 2
      %v3730 = vadd.f32 %v3728, %v3729
      %v3731 = vrot.slane %v3730, 1
      %v3732 = vadd.f32 %v3730, %v3731
      %v3733 = vadd.f32 %v2881, %v2882
      %v3734 = vadd.f32 %v3733, %v2883
      %v3735 = vadd.f32 %v3734, %v2884
      %v3736 = vrot.slane %v3735, 4
      %v3737 = vadd.f32 %v3735, %v3736
      %v3738 = vrot.slane %v3737, 2
      %v3739 = vadd.f32 %v3737, %v3738
      %v3740 = vrot.slane %v3739, 1
      %v3741 = vadd.f32 %v3739, %v3740
      %v3742 = vadd.f32 %v2885, %v2886
      %v3743 = vadd.f32 %v3742, %v2887
      %v3744 = vadd.f32 %v3743, %v2888
      %v3745 = vrot.slane %v3744, 4
      %v3746 = vadd.f32 %v3744, %v3745
      %v3747 = vrot.slane %v3746, 2
      %v3748 = vadd.f32 %v3746, %v3747
      %v3749 = vrot.slane %v3748, 1
      %v3750 = vadd.f32 %v3748, %v3749
      %v3751 = vadd.f32 %v2889, %v2890
      %v3752 = vadd.f32 %v3751, %v2891
      %v3753 = vadd.f32 %v3752, %v2892
      %v3754 = vrot.slane %v3753, 4
      %v3755 = vadd.f32 %v3753, %v3754
      %v3756 = vrot.slane %v3755, 2
      %v3757 = vadd.f32 %v3755, %v3756
      %v3758 = vrot.slane %v3757, 1
      %v3759 = vadd.f32 %v3757, %v3758
      %v3760 = vadd.f32 %v2893, %v2894
      %v3761 = vadd.f32 %v3760, %v2895
      %v3762 = vadd.f32 %v3761, %v2896
      %v3763 = vrot.slane %v3762, 4
      %v3764 = vadd.f32 %v3762, %v3763
      %v3765 = vrot.slane %v3764, 2
      %v3766 = vadd.f32 %v3764, %v3765
      %v3767 = vrot.slane %v3766, 1
      %v3768 = vadd.f32 %v3766, %v3767
      %v3769 = vadd.f32 %v2897, %v2898
      %v3770 = vadd.f32 %v3769, %v2899
      %v3771 = vadd.f32 %v3770, %v2900
      %v3772 = vrot.slane %v3771, 4
      %v3773 = vadd.f32 %v3771, %v3772
      %v3774 = vrot.slane %v3773, 2
      %v3775 = vadd.f32 %v3773, %v3774
      %v3776 = vrot.slane %v3775, 1
      %v3777 = vadd.f32 %v3775, %v3776
      %v3778 = vadd.f32 %v2901, %v2902
      %v3779 = vadd.f32 %v3778, %v2903
      %v3780 = vadd.f32 %v3779, %v2904
      %v3781 = vrot.slane %v3780, 4
      %v3782 = vadd.f32 %v3780, %v3781
      %v3783 = vrot.slane %v3782, 2
      %v3784 = vadd.f32 %v3782, %v3783
      %v3785 = vrot.slane %v3784, 1
      %v3786 = vadd.f32 %v3784, %v3785
      %v3787 = vadd.f32 %v2905, %v2906
      %v3788 = vadd.f32 %v3787, %v2907
      %v3789 = vadd.f32 %v3788, %v2908
      %v3790 = vrot.slane %v3789, 4
      %v3791 = vadd.f32 %v3789, %v3790
      %v3792 = vrot.slane %v3791, 2
      %v3793 = vadd.f32 %v3791, %v3792
      %v3794 = vrot.slane %v3793, 1
      %v3795 = vadd.f32 %v3793, %v3794
      %v3796 = vadd.f32 %v2909, %v2910
      %v3797 = vadd.f32 %v3796, %v2911
      %v3798 = vadd.f32 %v3797, %v2912
      %v3799 = vrot.slane %v3798, 4
      %v3800 = vadd.f32 %v3798, %v3799
      %v3801 = vrot.slane %v3800, 2
      %v3802 = vadd.f32 %v3800, %v3801
      %v3803 = vrot.slane %v3802, 1
      %v3804 = vadd.f32 %v3802, %v3803
      %v3805 = vadd.f32 %v2913, %v2914
      %v3806 = vadd.f32 %v3805, %v2915
      %v3807 = vadd.f32 %v3806, %v2916
      %v3808 = vrot.slane %v3807, 4
      %v3809 = vadd.f32 %v3807, %v3808
      %v3810 = vrot.slane %v3809, 2
      %v3811 = vadd.f32 %v3809, %v3810
      %v3812 = vrot.slane %v3811, 1
      %v3813 = vadd.f32 %v3811, %v3812
      %v3814 = vadd.f32 %v2917, %v2918
      %v3815 = vadd.f32 %v3814, %v2919
      %v3816 = vadd.f32 %v3815, %v2920
      %v3817 = vrot.slane %v3816, 4
      %v3818 = vadd.f32 %v3816, %v3817
      %v3819 = vrot.slane %v3818, 2
      %v3820 = vadd.f32 %v3818, %v3819
      %v3821 = vrot.slane %v3820, 1
      %v3822 = vadd.f32 %v3820, %v3821
      %v3823 = vadd.f32 %v2921, %v2922
      %v3824 = vadd.f32 %v3823, %v2923
      %v3825 = vadd.f32 %v3824, %v2924
      %v3826 = vrot.slane %v3825, 4
      %v3827 = vadd.f32 %v3825, %v3826
      %v3828 = vrot.slane %v3827, 2
      %v3829 = vadd.f32 %v3827, %v3828
      %v3830 = vrot.slane %v3829, 1
      %v3831 = vadd.f32 %v3829, %v3830
      %v3832 = vadd.f32 %v2925, %v2926
      %v3833 = vadd.f32 %v3832, %v2927
      %v3834 = vadd.f32 %v3833, %v2928
      %v3835 = vrot.slane %v3834, 4
      %v3836 = vadd.f32 %v3834, %v3835
      %v3837 = vrot.slane %v3836, 2
      %v3838 = vadd.f32 %v3836, %v3837
      %v3839 = vrot.slane %v3838, 1
      %v3840 = vadd.f32 %v3838, %v3839
      %v3841 = vadd.f32 %v2929, %v2930
      %v3842 = vadd.f32 %v3841, %v2931
      %v3843 = vadd.f32 %v3842, %v2932
      %v3844 = vrot.slane %v3843, 4
      %v3845 = vadd.f32 %v3843, %v3844
      %v3846 = vrot.slane %v3845, 2
      %v3847 = vadd.f32 %v3845, %v3846
      %v3848 = vrot.slane %v3847, 1
      %v3849 = vadd.f32 %v3847, %v3848
      %v3850 = vadd.f32 %v2933, %v2934
      %v3851 = vadd.f32 %v3850, %v2935
      %v3852 = vadd.f32 %v3851, %v2936
      %v3853 = vrot.slane %v3852, 4
      %v3854 = vadd.f32 %v3852, %v3853
      %v3855 = vrot.slane %v3854, 2
      %v3856 = vadd.f32 %v3854, %v3855
      %v3857 = vrot.slane %v3856, 1
      %v3858 = vadd.f32 %v3856, %v3857
      %v3859 = vadd.f32 %v2937, %v2938
      %v3860 = vadd.f32 %v3859, %v2939
      %v3861 = vadd.f32 %v3860, %v2940
      %v3862 = vrot.slane %v3861, 4
      %v3863 = vadd.f32 %v3861, %v3862
      %v3864 = vrot.slane %v3863, 2
      %v3865 = vadd.f32 %v3863, %v3864
      %v3866 = vrot.slane %v3865, 1
      %v3867 = vadd.f32 %v3865, %v3866
      %v3868 = vadd.f32 %v2941, %v2942
      %v3869 = vadd.f32 %v3868, %v2943
      %v3870 = vadd.f32 %v3869, %v2944
      %v3871 = vrot.slane %v3870, 4
      %v3872 = vadd.f32 %v3870, %v3871
      %v3873 = vrot.slane %v3872, 2
      %v3874 = vadd.f32 %v3872, %v3873
      %v3875 = vrot.slane %v3874, 1
      %v3876 = vadd.f32 %v3874, %v3875
      %v3877 = vadd.f32 %v2945, %v2946
      %v3878 = vadd.f32 %v3877, %v2947
      %v3879 = vadd.f32 %v3878, %v2948
      %v3880 = vrot.slane %v3879, 4
      %v3881 = vadd.f32 %v3879, %v3880
      %v3882 = vrot.slane %v3881, 2
      %v3883 = vadd.f32 %v3881, %v3882
      %v3884 = vrot.slane %v3883, 1
      %v3885 = vadd.f32 %v3883, %v3884
      %v3886 = vadd.f32 %v2949, %v2950
      %v3887 = vadd.f32 %v3886, %v2951
      %v3888 = vadd.f32 %v3887, %v2952
      %v3889 = vrot.slane %v3888, 4
      %v3890 = vadd.f32 %v3888, %v3889
      %v3891 = vrot.slane %v3890, 2
      %v3892 = vadd.f32 %v3890, %v3891
      %v3893 = vrot.slane %v3892, 1
      %v3894 = vadd.f32 %v3892, %v3893
      %v3895 = vadd.f32 %v2953, %v2954
      %v3896 = vadd.f32 %v3895, %v2955
      %v3897 = vadd.f32 %v3896, %v2956
      %v3898 = vrot.slane %v3897, 4
      %v3899 = vadd.f32 %v3897, %v3898
      %v3900 = vrot.slane %v3899, 2
      %v3901 = vadd.f32 %v3899, %v3900
      %v3902 = vrot.slane %v3901, 1
      %v3903 = vadd.f32 %v3901, %v3902
      %v3904 = vadd.f32 %v2957, %v2958
      %v3905 = vadd.f32 %v3904, %v2959
      %v3906 = vadd.f32 %v3905, %v2960
      %v3907 = vrot.slane %v3906, 4
      %v3908 = vadd.f32 %v3906, %v3907
      %v3909 = vrot.slane %v3908, 2
      %v3910 = vadd.f32 %v3908, %v3909
      %v3911 = vrot.slane %v3910, 1
      %v3912 = vadd.f32 %v3910, %v3911
      %v3913 = vadd.f32 %v2961, %v2962
      %v3914 = vadd.f32 %v3913, %v2963
      %v3915 = vadd.f32 %v3914, %v2964
      %v3916 = vrot.slane %v3915, 4
      %v3917 = vadd.f32 %v3915, %v3916
      %v3918 = vrot.slane %v3917, 2
      %v3919 = vadd.f32 %v3917, %v3918
      %v3920 = vrot.slane %v3919, 1
      %v3921 = vadd.f32 %v3919, %v3920
      %v3922 = vadd.f32 %v2965, %v2966
      %v3923 = vadd.f32 %v3922, %v2967
      %v3924 = vadd.f32 %v3923, %v2968
      %v3925 = vrot.slane %v3924, 4
      %v3926 = vadd.f32 %v3924, %v3925
      %v3927 = vrot.slane %v3926, 2
      %v3928 = vadd.f32 %v3926, %v3927
      %v3929 = vrot.slane %v3928, 1
      %v3930 = vadd.f32 %v3928, %v3929
      %v3931 = vadd.f32 %v2969, %v2970
      %v3932 = vadd.f32 %v3931, %v2971
      %v3933 = vadd.f32 %v3932, %v2972
      %v3934 = vrot.slane %v3933, 4
      %v3935 = vadd.f32 %v3933, %v3934
      %v3936 = vrot.slane %v3935, 2
      %v3937 = vadd.f32 %v3935, %v3936
      %v3938 = vrot.slane %v3937, 1
      %v3939 = vadd.f32 %v3937, %v3938
      %v3940 = vadd.f32 %v2973, %v2974
      %v3941 = vadd.f32 %v3940, %v2975
      %v3942 = vadd.f32 %v3941, %v2976
      %v3943 = vrot.slane %v3942, 4
      %v3944 = vadd.f32 %v3942, %v3943
      %v3945 = vrot.slane %v3944, 2
      %v3946 = vadd.f32 %v3944, %v3945
      %v3947 = vrot.slane %v3946, 1
      %v3948 = vadd.f32 %v3946, %v3947
      %v3949 = vadd.f32 %v2977, %v2978
      %v3950 = vadd.f32 %v3949, %v2979
      %v3951 = vadd.f32 %v3950, %v2980
      %v3952 = vrot.slane %v3951, 4
      %v3953 = vadd.f32 %v3951, %v3952
      %v3954 = vrot.slane %v3953, 2
      %v3955 = vadd.f32 %v3953, %v3954
      %v3956 = vrot.slane %v3955, 1
      %v3957 = vadd.f32 %v3955, %v3956
      %v3958 = vadd.f32 %v2981, %v2982
      %v3959 = vadd.f32 %v3958, %v2983
      %v3960 = vadd.f32 %v3959, %v2984
      %v3961 = vrot.slane %v3960, 4
      %v3962 = vadd.f32 %v3960, %v3961
      %v3963 = vrot.slane %v3962, 2
      %v3964 = vadd.f32 %v3962, %v3963
      %v3965 = vrot.slane %v3964, 1
      %v3966 = vadd.f32 %v3964, %v3965
      %v3967 = vadd.f32 %v2985, %v2986
      %v3968 = vadd.f32 %v3967, %v2987
      %v3969 = vadd.f32 %v3968, %v2988
      %v3970 = vrot.slane %v3969, 4
      %v3971 = vadd.f32 %v3969, %v3970
      %v3972 = vrot.slane %v3971, 2
      %v3973 = vadd.f32 %v3971, %v3972
      %v3974 = vrot.slane %v3973, 1
      %v3975 = vadd.f32 %v3973, %v3974
      %v3976 = vadd.f32 %v2989, %v2990
      %v3977 = vadd.f32 %v3976, %v2991
      %v3978 = vadd.f32 %v3977, %v2992
      %v3979 = vrot.slane %v3978, 4
      %v3980 = vadd.f32 %v3978, %v3979
      %v3981 = vrot.slane %v3980, 2
      %v3982 = vadd.f32 %v3980, %v3981
      %v3983 = vrot.slane %v3982, 1
      %v3984 = vadd.f32 %v3982, %v3983
      %v3985 = vadd.f32 %v2993, %v2994
      %v3986 = vadd.f32 %v3985, %v2995
      %v3987 = vadd.f32 %v3986, %v2996
      %v3988 = vrot.slane %v3987, 4
      %v3989 = vadd.f32 %v3987, %v3988
      %v3990 = vrot.slane %v3989, 2
      %v3991 = vadd.f32 %v3989, %v3990
      %v3992 = vrot.slane %v3991, 1
      %v3993 = vadd.f32 %v3991, %v3992
      %v3994 = vadd.f32 %v2997, %v2998
      %v3995 = vadd.f32 %v3994, %v2999
      %v3996 = vadd.f32 %v3995, %v3000
      %v3997 = vrot.slane %v3996, 4
      %v3998 = vadd.f32 %v3996, %v3997
      %v3999 = vrot.slane %v3998, 2
      %v4000 = vadd.f32 %v3998, %v3999
      %v4001 = vrot.slane %v4000, 1
      %v4002 = vadd.f32 %v4000, %v4001
      %v4003 = vadd.f32 %v3001, %v3002
      %v4004 = vadd.f32 %v4003, %v3003
      %v4005 = vadd.f32 %v4004, %v3004
      %v4006 = vrot.slane %v4005, 4
      %v4007 = vadd.f32 %v4005, %v4006
      %v4008 = vrot.slane %v4007, 2
      %v4009 = vadd.f32 %v4007, %v4008
      %v4010 = vrot.slane %v4009, 1
      %v4011 = vadd.f32 %v4009, %v4010
      %v4012 = vadd.f32 %v3005, %v3006
      %v4013 = vadd.f32 %v4012, %v3007
      %v4014 = vadd.f32 %v4013, %v3008
      %v4015 = vrot.slane %v4014, 4
      %v4016 = vadd.f32 %v4014, %v4015
      %v4017 = vrot.slane %v4016, 2
      %v4018 = vadd.f32 %v4016, %v4017
      %v4019 = vrot.slane %v4018, 1
      %v4020 = vadd.f32 %v4018, %v4019
      %v4021 = vadd.f32 %v3009, %v3010
      %v4022 = vadd.f32 %v4021, %v3011
      %v4023 = vadd.f32 %v4022, %v3012
      %v4024 = vrot.slane %v4023, 4
      %v4025 = vadd.f32 %v4023, %v4024
      %v4026 = vrot.slane %v4025, 2
      %v4027 = vadd.f32 %v4025, %v4026
      %v4028 = vrot.slane %v4027, 1
      %v4029 = vadd.f32 %v4027, %v4028
      %v4030 = vadd.f32 %v3013, %v3014
      %v4031 = vadd.f32 %v4030, %v3015
      %v4032 = vadd.f32 %v4031, %v3016
      %v4033 = vrot.slane %v4032, 4
      %v4034 = vadd.f32 %v4032, %v4033
      %v4035 = vrot.slane %v4034, 2
      %v4036 = vadd.f32 %v4034, %v4035
      %v4037 = vrot.slane %v4036, 1
      %v4038 = vadd.f32 %v4036, %v4037
      %v4039 = vadd.f32 %v3017, %v3018
      %v4040 = vadd.f32 %v4039, %v3019
      %v4041 = vadd.f32 %v4040, %v3020
      %v4042 = vrot.slane %v4041, 4
      %v4043 = vadd.f32 %v4041, %v4042
      %v4044 = vrot.slane %v4043, 2
      %v4045 = vadd.f32 %v4043, %v4044
      %v4046 = vrot.slane %v4045, 1
      %v4047 = vadd.f32 %v4045, %v4046
      %v4048 = vadd.f32 %v3021, %v3022
      %v4049 = vadd.f32 %v4048, %v3023
      %v4050 = vadd.f32 %v4049, %v3024
      %v4051 = vrot.slane %v4050, 4
      %v4052 = vadd.f32 %v4050, %v4051
      %v4053 = vrot.slane %v4052, 2
      %v4054 = vadd.f32 %v4052, %v4053
      %v4055 = vrot.slane %v4054, 1
      %v4056 = vadd.f32 %v4054, %v4055
      %v4057 = vadd.f32 %v3025, %v3026
      %v4058 = vadd.f32 %v4057, %v3027
      %v4059 = vadd.f32 %v4058, %v3028
      %v4060 = vrot.slane %v4059, 4
      %v4061 = vadd.f32 %v4059, %v4060
      %v4062 = vrot.slane %v4061, 2
      %v4063 = vadd.f32 %v4061, %v4062
      %v4064 = vrot.slane %v4063, 1
      %v4065 = vadd.f32 %v4063, %v4064
      %v4066 = vadd.f32 %v3029, %v3030
      %v4067 = vadd.f32 %v4066, %v3031
      %v4068 = vadd.f32 %v4067, %v3032
      %v4069 = vrot.slane %v4068, 4
      %v4070 = vadd.f32 %v4068, %v4069
      %v4071 = vrot.slane %v4070, 2
      %v4072 = vadd.f32 %v4070, %v4071
      %v4073 = vrot.slane %v4072, 1
      %v4074 = vadd.f32 %v4072, %v4073
      %v4075 = vadd.f32 %v3033, %v3034
      %v4076 = vadd.f32 %v4075, %v3035
      %v4077 = vadd.f32 %v4076, %v3036
      %v4078 = vrot.slane %v4077, 4
      %v4079 = vadd.f32 %v4077, %v4078
      %v4080 = vrot.slane %v4079, 2
      %v4081 = vadd.f32 %v4079, %v4080
      %v4082 = vrot.slane %v4081, 1
      %v4083 = vadd.f32 %v4081, %v4082
      %v4084 = vadd.f32 %v3037, %v3038
      %v4085 = vadd.f32 %v4084, %v3039
      %v4086 = vadd.f32 %v4085, %v3040
      %v4087 = vrot.slane %v4086, 4
      %v4088 = vadd.f32 %v4086, %v4087
      %v4089 = vrot.slane %v4088, 2
      %v4090 = vadd.f32 %v4088, %v4089
      %v4091 = vrot.slane %v4090, 1
      %v4092 = vadd.f32 %v4090, %v4091
      %v4093 = vadd.f32 %v3041, %v3042
      %v4094 = vadd.f32 %v4093, %v3043
      %v4095 = vadd.f32 %v4094, %v3044
      %v4096 = vrot.slane %v4095, 4
      %v4097 = vadd.f32 %v4095, %v4096
      %v4098 = vrot.slane %v4097, 2
      %v4099 = vadd.f32 %v4097, %v4098
      %v4100 = vrot.slane %v4099, 1
      %v4101 = vadd.f32 %v4099, %v4100
      %v4102 = vadd.f32 %v3045, %v3046
      %v4103 = vadd.f32 %v4102, %v3047
      %v4104 = vadd.f32 %v4103, %v3048
      %v4105 = vrot.slane %v4104, 4
      %v4106 = vadd.f32 %v4104, %v4105
      %v4107 = vrot.slane %v4106, 2
      %v4108 = vadd.f32 %v4106, %v4107
      %v4109 = vrot.slane %v4108, 1
      %v4110 = vadd.f32 %v4108, %v4109
      %v4111 = vadd.f32 %v3049, %v3050
      %v4112 = vadd.f32 %v4111, %v3051
      %v4113 = vadd.f32 %v4112, %v3052
      %v4114 = vrot.slane %v4113, 4
      %v4115 = vadd.f32 %v4113, %v4114
      %v4116 = vrot.slane %v4115, 2
      %v4117 = vadd.f32 %v4115, %v4116
      %v4118 = vrot.slane %v4117, 1
      %v4119 = vadd.f32 %v4117, %v4118
      %v4120 = vadd.f32 %v3053, %v3054
      %v4121 = vadd.f32 %v4120, %v3055
      %v4122 = vadd.f32 %v4121, %v3056
      %v4123 = vrot.slane %v4122, 4
      %v4124 = vadd.f32 %v4122, %v4123
      %v4125 = vrot.slane %v4124, 2
      %v4126 = vadd.f32 %v4124, %v4125
      %v4127 = vrot.slane %v4126, 1
      %v4128 = vadd.f32 %v4126, %v4127
      %v4129 = vadd.f32 %v3057, %v3058
      %v4130 = vadd.f32 %v4129, %v3059
      %v4131 = vadd.f32 %v4130, %v3060
      %v4132 = vrot.slane %v4131, 4
      %v4133 = vadd.f32 %v4131, %v4132
      %v4134 = vrot.slane %v4133, 2
      %v4135 = vadd.f32 %v4133, %v4134
      %v4136 = vrot.slane %v4135, 1
      %v4137 = vadd.f32 %v4135, %v4136
      %v4138 = vadd.f32 %v3061, %v3062
      %v4139 = vadd.f32 %v4138, %v3063
      %v4140 = vadd.f32 %v4139, %v3064
      %v4141 = vrot.slane %v4140, 4
      %v4142 = vadd.f32 %v4140, %v4141
      %v4143 = vrot.slane %v4142, 2
      %v4144 = vadd.f32 %v4142, %v4143
      %v4145 = vrot.slane %v4144, 1
      %v4146 = vadd.f32 %v4144, %v4145
      %v4147 = vadd.f32 %v3065, %v3066
      %v4148 = vadd.f32 %v4147, %v3067
      %v4149 = vadd.f32 %v4148, %v3068
      %v4150 = vrot.slane %v4149, 4
      %v4151 = vadd.f32 %v4149, %v4150
      %v4152 = vrot.slane %v4151, 2
      %v4153 = vadd.f32 %v4151, %v4152
      %v4154 = vrot.slane %v4153, 1
      %v4155 = vadd.f32 %v4153, %v4154
      %v4156 = vadd.f32 %v3069, %v3070
      %v4157 = vadd.f32 %v4156, %v3071
      %v4158 = vadd.f32 %v4157, %v3072
      %v4159 = vrot.slane %v4158, 4
      %v4160 = vadd.f32 %v4158, %v4159
      %v4161 = vrot.slane %v4160, 2
      %v4162 = vadd.f32 %v4160, %v4161
      %v4163 = vrot.slane %v4162, 1
      %v4164 = vadd.f32 %v4162, %v4163
      %v4165 = vadd.f32 %v3073, %v3074
      %v4166 = vadd.f32 %v4165, %v3075
      %v4167 = vadd.f32 %v4166, %v3076
      %v4168 = vrot.slane %v4167, 4
      %v4169 = vadd.f32 %v4167, %v4168
      %v4170 = vrot.slane %v4169, 2
      %v4171 = vadd.f32 %v4169, %v4170
      %v4172 = vrot.slane %v4171, 1
      %v4173 = vadd.f32 %v4171, %v4172
      %v4174 = vadd.f32 %v3077, %v3078
      %v4175 = vadd.f32 %v4174, %v3079
      %v4176 = vadd.f32 %v4175, %v3080
      %v4177 = vrot.slane %v4176, 4
      %v4178 = vadd.f32 %v4176, %v4177
      %v4179 = vrot.slane %v4178, 2
      %v4180 = vadd.f32 %v4178, %v4179
      %v4181 = vrot.slane %v4180, 1
      %v4182 = vadd.f32 %v4180, %v4181
      %v4183 = vadd.f32 %v3081, %v3082
      %v4184 = vadd.f32 %v4183, %v3083
      %v4185 = vadd.f32 %v4184, %v3084
      %v4186 = vrot.slane %v4185, 4
      %v4187 = vadd.f32 %v4185, %v4186
      %v4188 = vrot.slane %v4187, 2
      %v4189 = vadd.f32 %v4187, %v4188
      %v4190 = vrot.slane %v4189, 1
      %v4191 = vadd.f32 %v4189, %v4190
      %v4192 = vadd.f32 %v3085, %v3086
      %v4193 = vadd.f32 %v4192, %v3087
      %v4194 = vadd.f32 %v4193, %v3088
      %v4195 = vrot.slane %v4194, 4
      %v4196 = vadd.f32 %v4194, %v4195
      %v4197 = vrot.slane %v4196, 2
      %v4198 = vadd.f32 %v4196, %v4197
      %v4199 = vrot.slane %v4198, 1
      %v4200 = vadd.f32 %v4198, %v4199
      %v4201 = vadd.f32 %v3089, %v3090
      %v4202 = vadd.f32 %v4201, %v3091
      %v4203 = vadd.f32 %v4202, %v3092
      %v4204 = vrot.slane %v4203, 4
      %v4205 = vadd.f32 %v4203, %v4204
      %v4206 = vrot.slane %v4205, 2
      %v4207 = vadd.f32 %v4205, %v4206
      %v4208 = vrot.slane %v4207, 1
      %v4209 = vadd.f32 %v4207, %v4208
      %v4210 = vadd.f32 %v3093, %v3094
      %v4211 = vadd.f32 %v4210, %v3095
      %v4212 = vadd.f32 %v4211, %v3096
      %v4213 = vrot.slane %v4212, 4
      %v4214 = vadd.f32 %v4212, %v4213
      %v4215 = vrot.slane %v4214, 2
      %v4216 = vadd.f32 %v4214, %v4215
      %v4217 = vrot.slane %v4216, 1
      %v4218 = vadd.f32 %v4216, %v4217
      %v4219 = vadd.f32 %v3097, %v3098
      %v4220 = vadd.f32 %v4219, %v3099
      %v4221 = vadd.f32 %v4220, %v3100
      %v4222 = vrot.slane %v4221, 4
      %v4223 = vadd.f32 %v4221, %v4222
      %v4224 = vrot.slane %v4223, 2
      %v4225 = vadd.f32 %v4223, %v4224
      %v4226 = vrot.slane %v4225, 1
      %v4227 = vadd.f32 %v4225, %v4226
      %v4228 = vadd.f32 %v3101, %v3102
      %v4229 = vadd.f32 %v4228, %v3103
      %v4230 = vadd.f32 %v4229, %v3104
      %v4231 = vrot.slane %v4230, 4
      %v4232 = vadd.f32 %v4230, %v4231
      %v4233 = vrot.slane %v4232, 2
      %v4234 = vadd.f32 %v4232, %v4233
      %v4235 = vrot.slane %v4234, 1
      %v4236 = vadd.f32 %v4234, %v4235
      %v4237 = vadd.f32 %v3105, %v3106
      %v4238 = vadd.f32 %v4237, %v3107
      %v4239 = vadd.f32 %v4238, %v3108
      %v4240 = vrot.slane %v4239, 4
      %v4241 = vadd.f32 %v4239, %v4240
      %v4242 = vrot.slane %v4241, 2
      %v4243 = vadd.f32 %v4241, %v4242
      %v4244 = vrot.slane %v4243, 1
      %v4245 = vadd.f32 %v4243, %v4244
      %v4246 = vadd.f32 %v3109, %v3110
      %v4247 = vadd.f32 %v4246, %v3111
      %v4248 = vadd.f32 %v4247, %v3112
      %v4249 = vrot.slane %v4248, 4
      %v4250 = vadd.f32 %v4248, %v4249
      %v4251 = vrot.slane %v4250, 2
      %v4252 = vadd.f32 %v4250, %v4251
      %v4253 = vrot.slane %v4252, 1
      %v4254 = vadd.f32 %v4252, %v4253
      %v4255 = vadd.f32 %v3113, %v3114
      %v4256 = vadd.f32 %v4255, %v3115
      %v4257 = vadd.f32 %v4256, %v3116
      %v4258 = vrot.slane %v4257, 4
      %v4259 = vadd.f32 %v4257, %v4258
      %v4260 = vrot.slane %v4259, 2
      %v4261 = vadd.f32 %v4259, %v4260
      %v4262 = vrot.slane %v4261, 1
      %v4263 = vadd.f32 %v4261, %v4262
      %v4264 = vadd.f32 %v3117, %v3118
      %v4265 = vadd.f32 %v4264, %v3119
      %v4266 = vadd.f32 %v4265, %v3120
      %v4267 = vrot.slane %v4266, 4
      %v4268 = vadd.f32 %v4266, %v4267
      %v4269 = vrot.slane %v4268, 2
      %v4270 = vadd.f32 %v4268, %v4269
      %v4271 = vrot.slane %v4270, 1
      %v4272 = vadd.f32 %v4270, %v4271
      %v4273 = vadd.f32 %v3129, 0.0
      %v4274 = vadd.f32 %v3138, 0.0
      %v4275 = vadd.f32 %v3147, 0.0
      %v4276 = vadd.f32 %v3156, 0.0
      %v4277 = vadd.f32 %v3165, 0.0
      %v4278 = vadd.f32 %v3174, 0.0
      %v4279 = vadd.f32 %v3183, 0.0
      %v4280 = vadd.f32 %v3192, 0.0
      %v4281 = vadd.f32 %v3201, 0.0
      %v4282 = vadd.f32 %v3210, 0.0
      %v4283 = vadd.f32 %v3219, 0.0
      %v4284 = vadd.f32 %v3228, 0.0
      %v4285 = vadd.f32 %v3237, 0.0
      %v4286 = vadd.f32 %v3246, 0.0
      %v4287 = vadd.f32 %v3255, 0.0
      %v4288 = vadd.f32 %v3264, 0.0
      %v4289 = vadd.f32 %v3273, 0.0
      %v4290 = vadd.f32 %v3282, 0.0
      %v4291 = vadd.f32 %v3291, 0.0
      %v4292 = vadd.f32 %v3300, 0.0
      %v4293 = vadd.f32 %v3309, 0.0
      %v4294 = vadd.f32 %v3318, 0.0
      %v4295 = vadd.f32 %v3327, 0.0
      %v4296 = vadd.f32 %v3336, 0.0
      %v4297 = vadd.f32 %v3345, 0.0
      %v4298 = vadd.f32 %v3354, 0.0
      %v4299 = vadd.f32 %v3363, 0.0
      %v4300 = vadd.f32 %v3372, 0.0
      %v4301 = vadd.f32 %v3381, 0.0
      %v4302 = vadd.f32 %v3390, 0.0
      %v4303 = vadd.f32 %v3399, 0.0
      %v4304 = vadd.f32 %v3408, 0.0
      %v4305 = vadd.f32 %v3417, 0.0
      %v4306 = vadd.f32 %v3426, 0.0
      %v4307 = vadd.f32 %v3435, 0.0
      %v4308 = vadd.f32 %v3444, 0.0
      %v4309 = vadd.f32 %v3453, 0.0
      %v4310 = vadd.f32 %v3462, 0.0
      %v4311 = vadd.f32 %v3471, 0.0
      %v4312 = vadd.f32 %v3480, 0.0
      %v4313 = vadd.f32 %v3489, 0.0
      %v4314 = vadd.f32 %v3498, 0.0
      %v4315 = vadd.f32 %v3507, 0.0
      %v4316 = vadd.f32 %v3516, 0.0
      %v4317 = vadd.f32 %v3525, 0.0
      %v4318 = vadd.f32 %v3534, 0.0
      %v4319 = vadd.f32 %v3543, 0.0
      %v4320 = vadd.f32 %v3552, 0.0
      %v4321 = vadd.f32 %v3561, 0.0
      %v4322 = vadd.f32 %v3570, 0.0
      %v4323 = vadd.f32 %v3579, 0.0
      %v4324 = vadd.f32 %v3588, 0.0
      %v4325 = vadd.f32 %v3597, 0.0
      %v4326 = vadd.f32 %v3606, 0.0
      %v4327 = vadd.f32 %v3615, 0.0
      %v4328 = vadd.f32 %v3624, 0.0
      %v4329 = vadd.f32 %v3633, 0.0
      %v4330 = vadd.f32 %v3642, 0.0
      %v4331 = vadd.f32 %v3651, 0.0
      %v4332 = vadd.f32 %v3660, 0.0
      %v4333 = vadd.f32 %v3669, 0.0
      %v4334 = vadd.f32 %v3678, 0.0
      %v4335 = vadd.f32 %v3687, 0.0
      %v4336 = vadd.f32 %v3696, 0.0
      %v4337 = vadd.f32 %v3705, 0.0
      %v4338 = vadd.f32 %v3714, 0.0
      %v4339 = vadd.f32 %v3723, 0.0
      %v4340 = vadd.f32 %v3732, 0.0
      %v4341 = vadd.f32 %v3741, 0.0
      %v4342 = vadd.f32 %v3750, 0.0
      %v4343 = vadd.f32 %v3759, 0.0
      %v4344 = vadd.f32 %v3768, 0.0
      %v4345 = vadd.f32 %v3777, 0.0
      %v4346 = vadd.f32 %v3786, 0.0
      %v4347 = vadd.f32 %v3795, 0.0
      %v4348 = vadd.f32 %v3804, 0.0
      %v4349 = vadd.f32 %v3813, 0.0
      %v4350 = vadd.f32 %v3822, 0.0
      %v4351 = vadd.f32 %v3831, 0.0
      %v4352 = vadd.f32 %v3840, 0.0
      %v4353 = vadd.f32 %v3849, 0.0
      %v4354 = vadd.f32 %v3858, 0.0
      %v4355 = vadd.f32 %v3867, 0.0
      %v4356 = vadd.f32 %v3876, 0.0
      %v4357 = vadd.f32 %v3885, 0.0
      %v4358 = vadd.f32 %v3894, 0.0
      %v4359 = vadd.f32 %v3903, 0.0
      %v4360 = vadd.f32 %v3912, 0.0
      %v4361 = vadd.f32 %v3921, 0.0
      %v4362 = vadd.f32 %v3930, 0.0
      %v4363 = vadd.f32 %v3939, 0.0
      %v4364 = vadd.f32 %v3948, 0.0
      %v4365 = vadd.f32 %v3957, 0.0
      %v4366 = vadd.f32 %v3966, 0.0
      %v4367 = vadd.f32 %v3975, 0.0
      %v4368 = vadd.f32 %v3984, 0.0
      %v4369 = vadd.f32 %v3993, 0.0
      %v4370 = vadd.f32 %v4002, 0.0
      %v4371 = vadd.f32 %v4011, 0.0
      %v4372 = vadd.f32 %v4020, 0.0
      %v4373 = vadd.f32 %v4029, 0.0
      %v4374 = vadd.f32 %v4038, 0.0
      %v4375 = vadd.f32 %v4047, 0.0
      %v4376 = vadd.f32 %v4056, 0.0
      %v4377 = vadd.f32 %v4065, 0.0
      %v4378 = vadd.f32 %v4074, 0.0
      %v4379 = vadd.f32 %v4083, 0.0
      %v4380 = vadd.f32 %v4092, 0.0
      %v4381 = vadd.f32 %v4101, 0.0
      %v4382 = vadd.f32 %v4110, 0.0
      %v4383 = vadd.f32 %v4119, 0.0
      %v4384 = vadd.f32 %v4128, 0.0
      %v4385 = vadd.f32 %v4137, 0.0
      %v4386 = vadd.f32 %v4146, 0.0
      %v4387 = vadd.f32 %v4155, 0.0
      %v4388 = vadd.f32 %v4164, 0.0
      %v4389 = vadd.f32 %v4173, 0.0
      %v4390 = vadd.f32 %v4182, 0.0
      %v4391 = vadd.f32 %v4191, 0.0
      %v4392 = vadd.f32 %v4200, 0.0
      %v4393 = vadd.f32 %v4209, 0.0
      %v4394 = vadd.f32 %v4218, 0.0
      %v4395 = vadd.f32 %v4227, 0.0
      %v4396 = vadd.f32 %v4236, 0.0
      %v4397 = vadd.f32 %v4245, 0.0
      %v4398 = vadd.f32 %v4254, 0.0
      %v4399 = vadd.f32 %v4263, 0.0
      %v4400 = vadd.f32 %v4272, 0.0
      %v4401 = vmax.f32 %v2609, %v2610
      %v4402 = vmax.f32 %v4401, %v2611
      %v4403 = vmax.f32 %v4402, %v2612
      %v4404 = vrot.slane %v4403, 4
      %v4405 = vmax.f32 %v4403, %v4404
      %v4406 = vrot.slane %v4405, 2
      %v4407 = vmax.f32 %v4405, %v4406
      %v4408 = vrot.slane %v4407, 1
      %v4409 = vmax.f32 %v4407, %v4408
      %v4410 = vmax.f32 %v2613, %v2614
      %v4411 = vmax.f32 %v4410, %v2615
      %v4412 = vmax.f32 %v4411, %v2616
      %v4413 = vrot.slane %v4412, 4
      %v4414 = vmax.f32 %v4412, %v4413
      %v4415 = vrot.slane %v4414, 2
      %v4416 = vmax.f32 %v4414, %v4415
      %v4417 = vrot.slane %v4416, 1
      %v4418 = vmax.f32 %v4416, %v4417
      %v4419 = vmax.f32 %v2617, %v2618
      %v4420 = vmax.f32 %v4419, %v2619
      %v4421 = vmax.f32 %v4420, %v2620
      %v4422 = vrot.slane %v4421, 4
      %v4423 = vmax.f32 %v4421, %v4422
      %v4424 = vrot.slane %v4423, 2
      %v4425 = vmax.f32 %v4423, %v4424
      %v4426 = vrot.slane %v4425, 1
      %v4427 = vmax.f32 %v4425, %v4426
      %v4428 = vmax.f32 %v2621, %v2622
      %v4429 = vmax.f32 %v4428, %v2623
      %v4430 = vmax.f32 %v4429, %v2624
      %v4431 = vrot.slane %v4430, 4
      %v4432 = vmax.f32 %v4430, %v4431
      %v4433 = vrot.slane %v4432, 2
      %v4434 = vmax.f32 %v4432, %v4433
      %v4435 = vrot.slane %v4434, 1
      %v4436 = vmax.f32 %v4434, %v4435
      %v4437 = vmax.f32 %v2625, %v2626
      %v4438 = vmax.f32 %v4437, %v2627
      %v4439 = vmax.f32 %v4438, %v2628
      %v4440 = vrot.slane %v4439, 4
      %v4441 = vmax.f32 %v4439, %v4440
      %v4442 = vrot.slane %v4441, 2
      %v4443 = vmax.f32 %v4441, %v4442
      %v4444 = vrot.slane %v4443, 1
      %v4445 = vmax.f32 %v4443, %v4444
      %v4446 = vmax.f32 %v2629, %v2630
      %v4447 = vmax.f32 %v4446, %v2631
      %v4448 = vmax.f32 %v4447, %v2632
      %v4449 = vrot.slane %v4448, 4
      %v4450 = vmax.f32 %v4448, %v4449
      %v4451 = vrot.slane %v4450, 2
      %v4452 = vmax.f32 %v4450, %v4451
      %v4453 = vrot.slane %v4452, 1
      %v4454 = vmax.f32 %v4452, %v4453
      %v4455 = vmax.f32 %v2633, %v2634
      %v4456 = vmax.f32 %v4455, %v2635
      %v4457 = vmax.f32 %v4456, %v2636
      %v4458 = vrot.slane %v4457, 4
      %v4459 = vmax.f32 %v4457, %v4458
      %v4460 = vrot.slane %v4459, 2
      %v4461 = vmax.f32 %v4459, %v4460
      %v4462 = vrot.slane %v4461, 1
      %v4463 = vmax.f32 %v4461, %v4462
      %v4464 = vmax.f32 %v2637, %v2638
      %v4465 = vmax.f32 %v4464, %v2639
      %v4466 = vmax.f32 %v4465, %v2640
      %v4467 = vrot.slane %v4466, 4
      %v4468 = vmax.f32 %v4466, %v4467
      %v4469 = vrot.slane %v4468, 2
      %v4470 = vmax.f32 %v4468, %v4469
      %v4471 = vrot.slane %v4470, 1
      %v4472 = vmax.f32 %v4470, %v4471
      %v4473 = vmax.f32 %v2641, %v2642
      %v4474 = vmax.f32 %v4473, %v2643
      %v4475 = vmax.f32 %v4474, %v2644
      %v4476 = vrot.slane %v4475, 4
      %v4477 = vmax.f32 %v4475, %v4476
      %v4478 = vrot.slane %v4477, 2
      %v4479 = vmax.f32 %v4477, %v4478
      %v4480 = vrot.slane %v4479, 1
      %v4481 = vmax.f32 %v4479, %v4480
      %v4482 = vmax.f32 %v2645, %v2646
      %v4483 = vmax.f32 %v4482, %v2647
      %v4484 = vmax.f32 %v4483, %v2648
      %v4485 = vrot.slane %v4484, 4
      %v4486 = vmax.f32 %v4484, %v4485
      %v4487 = vrot.slane %v4486, 2
      %v4488 = vmax.f32 %v4486, %v4487
      %v4489 = vrot.slane %v4488, 1
      %v4490 = vmax.f32 %v4488, %v4489
      %v4491 = vmax.f32 %v2649, %v2650
      %v4492 = vmax.f32 %v4491, %v2651
      %v4493 = vmax.f32 %v4492, %v2652
      %v4494 = vrot.slane %v4493, 4
      %v4495 = vmax.f32 %v4493, %v4494
      %v4496 = vrot.slane %v4495, 2
      %v4497 = vmax.f32 %v4495, %v4496
      %v4498 = vrot.slane %v4497, 1
      %v4499 = vmax.f32 %v4497, %v4498
      %v4500 = vmax.f32 %v2653, %v2654
      %v4501 = vmax.f32 %v4500, %v2655
      %v4502 = vmax.f32 %v4501, %v2656
      %v4503 = vrot.slane %v4502, 4
      %v4504 = vmax.f32 %v4502, %v4503
      %v4505 = vrot.slane %v4504, 2
      %v4506 = vmax.f32 %v4504, %v4505
      %v4507 = vrot.slane %v4506, 1
      %v4508 = vmax.f32 %v4506, %v4507
      %v4509 = vmax.f32 %v2657, %v2658
      %v4510 = vmax.f32 %v4509, %v2659
      %v4511 = vmax.f32 %v4510, %v2660
      %v4512 = vrot.slane %v4511, 4
      %v4513 = vmax.f32 %v4511, %v4512
      %v4514 = vrot.slane %v4513, 2
      %v4515 = vmax.f32 %v4513, %v4514
      %v4516 = vrot.slane %v4515, 1
      %v4517 = vmax.f32 %v4515, %v4516
      %v4518 = vmax.f32 %v2661, %v2662
      %v4519 = vmax.f32 %v4518, %v2663
      %v4520 = vmax.f32 %v4519, %v2664
      %v4521 = vrot.slane %v4520, 4
      %v4522 = vmax.f32 %v4520, %v4521
      %v4523 = vrot.slane %v4522, 2
      %v4524 = vmax.f32 %v4522, %v4523
      %v4525 = vrot.slane %v4524, 1
      %v4526 = vmax.f32 %v4524, %v4525
      %v4527 = vmax.f32 %v2665, %v2666
      %v4528 = vmax.f32 %v4527, %v2667
      %v4529 = vmax.f32 %v4528, %v2668
      %v4530 = vrot.slane %v4529, 4
      %v4531 = vmax.f32 %v4529, %v4530
      %v4532 = vrot.slane %v4531, 2
      %v4533 = vmax.f32 %v4531, %v4532
      %v4534 = vrot.slane %v4533, 1
      %v4535 = vmax.f32 %v4533, %v4534
      %v4536 = vmax.f32 %v2669, %v2670
      %v4537 = vmax.f32 %v4536, %v2671
      %v4538 = vmax.f32 %v4537, %v2672
      %v4539 = vrot.slane %v4538, 4
      %v4540 = vmax.f32 %v4538, %v4539
      %v4541 = vrot.slane %v4540, 2
      %v4542 = vmax.f32 %v4540, %v4541
      %v4543 = vrot.slane %v4542, 1
      %v4544 = vmax.f32 %v4542, %v4543
      %v4545 = vmax.f32 %v2673, %v2674
      %v4546 = vmax.f32 %v4545, %v2675
      %v4547 = vmax.f32 %v4546, %v2676
      %v4548 = vrot.slane %v4547, 4
      %v4549 = vmax.f32 %v4547, %v4548
      %v4550 = vrot.slane %v4549, 2
      %v4551 = vmax.f32 %v4549, %v4550
      %v4552 = vrot.slane %v4551, 1
      %v4553 = vmax.f32 %v4551, %v4552
      %v4554 = vmax.f32 %v2677, %v2678
      %v4555 = vmax.f32 %v4554, %v2679
      %v4556 = vmax.f32 %v4555, %v2680
      %v4557 = vrot.slane %v4556, 4
      %v4558 = vmax.f32 %v4556, %v4557
      %v4559 = vrot.slane %v4558, 2
      %v4560 = vmax.f32 %v4558, %v4559
      %v4561 = vrot.slane %v4560, 1
      %v4562 = vmax.f32 %v4560, %v4561
      %v4563 = vmax.f32 %v2681, %v2682
      %v4564 = vmax.f32 %v4563, %v2683
      %v4565 = vmax.f32 %v4564, %v2684
      %v4566 = vrot.slane %v4565, 4
      %v4567 = vmax.f32 %v4565, %v4566
      %v4568 = vrot.slane %v4567, 2
      %v4569 = vmax.f32 %v4567, %v4568
      %v4570 = vrot.slane %v4569, 1
      %v4571 = vmax.f32 %v4569, %v4570
      %v4572 = vmax.f32 %v2685, %v2686
      %v4573 = vmax.f32 %v4572, %v2687
      %v4574 = vmax.f32 %v4573, %v2688
      %v4575 = vrot.slane %v4574, 4
      %v4576 = vmax.f32 %v4574, %v4575
      %v4577 = vrot.slane %v4576, 2
      %v4578 = vmax.f32 %v4576, %v4577
      %v4579 = vrot.slane %v4578, 1
      %v4580 = vmax.f32 %v4578, %v4579
      %v4581 = vmax.f32 %v2689, %v2690
      %v4582 = vmax.f32 %v4581, %v2691
      %v4583 = vmax.f32 %v4582, %v2692
      %v4584 = vrot.slane %v4583, 4
      %v4585 = vmax.f32 %v4583, %v4584
      %v4586 = vrot.slane %v4585, 2
      %v4587 = vmax.f32 %v4585, %v4586
      %v4588 = vrot.slane %v4587, 1
      %v4589 = vmax.f32 %v4587, %v4588
      %v4590 = vmax.f32 %v2693, %v2694
      %v4591 = vmax.f32 %v4590, %v2695
      %v4592 = vmax.f32 %v4591, %v2696
      %v4593 = vrot.slane %v4592, 4
      %v4594 = vmax.f32 %v4592, %v4593
      %v4595 = vrot.slane %v4594, 2
      %v4596 = vmax.f32 %v4594, %v4595
      %v4597 = vrot.slane %v4596, 1
      %v4598 = vmax.f32 %v4596, %v4597
      %v4599 = vmax.f32 %v2697, %v2698
      %v4600 = vmax.f32 %v4599, %v2699
      %v4601 = vmax.f32 %v4600, %v2700
      %v4602 = vrot.slane %v4601, 4
      %v4603 = vmax.f32 %v4601, %v4602
      %v4604 = vrot.slane %v4603, 2
      %v4605 = vmax.f32 %v4603, %v4604
      %v4606 = vrot.slane %v4605, 1
      %v4607 = vmax.f32 %v4605, %v4606
      %v4608 = vmax.f32 %v2701, %v2702
      %v4609 = vmax.f32 %v4608, %v2703
      %v4610 = vmax.f32 %v4609, %v2704
      %v4611 = vrot.slane %v4610, 4
      %v4612 = vmax.f32 %v4610, %v4611
      %v4613 = vrot.slane %v4612, 2
      %v4614 = vmax.f32 %v4612, %v4613
      %v4615 = vrot.slane %v4614, 1
      %v4616 = vmax.f32 %v4614, %v4615
      %v4617 = vmax.f32 %v2705, %v2706
      %v4618 = vmax.f32 %v4617, %v2707
      %v4619 = vmax.f32 %v4618, %v2708
      %v4620 = vrot.slane %v4619, 4
      %v4621 = vmax.f32 %v4619, %v4620
      %v4622 = vrot.slane %v4621, 2
      %v4623 = vmax.f32 %v4621, %v4622
      %v4624 = vrot.slane %v4623, 1
      %v4625 = vmax.f32 %v4623, %v4624
      %v4626 = vmax.f32 %v2709, %v2710
      %v4627 = vmax.f32 %v4626, %v2711
      %v4628 = vmax.f32 %v4627, %v2712
      %v4629 = vrot.slane %v4628, 4
      %v4630 = vmax.f32 %v4628, %v4629
      %v4631 = vrot.slane %v4630, 2
      %v4632 = vmax.f32 %v4630, %v4631
      %v4633 = vrot.slane %v4632, 1
      %v4634 = vmax.f32 %v4632, %v4633
      %v4635 = vmax.f32 %v2713, %v2714
      %v4636 = vmax.f32 %v4635, %v2715
      %v4637 = vmax.f32 %v4636, %v2716
      %v4638 = vrot.slane %v4637, 4
      %v4639 = vmax.f32 %v4637, %v4638
      %v4640 = vrot.slane %v4639, 2
      %v4641 = vmax.f32 %v4639, %v4640
      %v4642 = vrot.slane %v4641, 1
      %v4643 = vmax.f32 %v4641, %v4642
      %v4644 = vmax.f32 %v2717, %v2718
      %v4645 = vmax.f32 %v4644, %v2719
      %v4646 = vmax.f32 %v4645, %v2720
      %v4647 = vrot.slane %v4646, 4
      %v4648 = vmax.f32 %v4646, %v4647
      %v4649 = vrot.slane %v4648, 2
      %v4650 = vmax.f32 %v4648, %v4649
      %v4651 = vrot.slane %v4650, 1
      %v4652 = vmax.f32 %v4650, %v4651
      %v4653 = vmax.f32 %v2721, %v2722
      %v4654 = vmax.f32 %v4653, %v2723
      %v4655 = vmax.f32 %v4654, %v2724
      %v4656 = vrot.slane %v4655, 4
      %v4657 = vmax.f32 %v4655, %v4656
      %v4658 = vrot.slane %v4657, 2
      %v4659 = vmax.f32 %v4657, %v4658
      %v4660 = vrot.slane %v4659, 1
      %v4661 = vmax.f32 %v4659, %v4660
      %v4662 = vmax.f32 %v2725, %v2726
      %v4663 = vmax.f32 %v4662, %v2727
      %v4664 = vmax.f32 %v4663, %v2728
      %v4665 = vrot.slane %v4664, 4
      %v4666 = vmax.f32 %v4664, %v4665
      %v4667 = vrot.slane %v4666, 2
      %v4668 = vmax.f32 %v4666, %v4667
      %v4669 = vrot.slane %v4668, 1
      %v4670 = vmax.f32 %v4668, %v4669
      %v4671 = vmax.f32 %v2729, %v2730
      %v4672 = vmax.f32 %v4671, %v2731
      %v4673 = vmax.f32 %v4672, %v2732
      %v4674 = vrot.slane %v4673, 4
      %v4675 = vmax.f32 %v4673, %v4674
      %v4676 = vrot.slane %v4675, 2
      %v4677 = vmax.f32 %v4675, %v4676
      %v4678 = vrot.slane %v4677, 1
      %v4679 = vmax.f32 %v4677, %v4678
      %v4680 = vmax.f32 %v2733, %v2734
      %v4681 = vmax.f32 %v4680, %v2735
      %v4682 = vmax.f32 %v4681, %v2736
      %v4683 = vrot.slane %v4682, 4
      %v4684 = vmax.f32 %v4682, %v4683
      %v4685 = vrot.slane %v4684, 2
      %v4686 = vmax.f32 %v4684, %v4685
      %v4687 = vrot.slane %v4686, 1
      %v4688 = vmax.f32 %v4686, %v4687
      %v4689 = vmax.f32 %v2737, %v2738
      %v4690 = vmax.f32 %v4689, %v2739
      %v4691 = vmax.f32 %v4690, %v2740
      %v4692 = vrot.slane %v4691, 4
      %v4693 = vmax.f32 %v4691, %v4692
      %v4694 = vrot.slane %v4693, 2
      %v4695 = vmax.f32 %v4693, %v4694
      %v4696 = vrot.slane %v4695, 1
      %v4697 = vmax.f32 %v4695, %v4696
      %v4698 = vmax.f32 %v2741, %v2742
      %v4699 = vmax.f32 %v4698, %v2743
      %v4700 = vmax.f32 %v4699, %v2744
      %v4701 = vrot.slane %v4700, 4
      %v4702 = vmax.f32 %v4700, %v4701
      %v4703 = vrot.slane %v4702, 2
      %v4704 = vmax.f32 %v4702, %v4703
      %v4705 = vrot.slane %v4704, 1
      %v4706 = vmax.f32 %v4704, %v4705
      %v4707 = vmax.f32 %v2745, %v2746
      %v4708 = vmax.f32 %v4707, %v2747
      %v4709 = vmax.f32 %v4708, %v2748
      %v4710 = vrot.slane %v4709, 4
      %v4711 = vmax.f32 %v4709, %v4710
      %v4712 = vrot.slane %v4711, 2
      %v4713 = vmax.f32 %v4711, %v4712
      %v4714 = vrot.slane %v4713, 1
      %v4715 = vmax.f32 %v4713, %v4714
      %v4716 = vmax.f32 %v2749, %v2750
      %v4717 = vmax.f32 %v4716, %v2751
      %v4718 = vmax.f32 %v4717, %v2752
      %v4719 = vrot.slane %v4718, 4
      %v4720 = vmax.f32 %v4718, %v4719
      %v4721 = vrot.slane %v4720, 2
      %v4722 = vmax.f32 %v4720, %v4721
      %v4723 = vrot.slane %v4722, 1
      %v4724 = vmax.f32 %v4722, %v4723
      %v4725 = vmax.f32 %v2753, %v2754
      %v4726 = vmax.f32 %v4725, %v2755
      %v4727 = vmax.f32 %v4726, %v2756
      %v4728 = vrot.slane %v4727, 4
      %v4729 = vmax.f32 %v4727, %v4728
      %v4730 = vrot.slane %v4729, 2
      %v4731 = vmax.f32 %v4729, %v4730
      %v4732 = vrot.slane %v4731, 1
      %v4733 = vmax.f32 %v4731, %v4732
      %v4734 = vmax.f32 %v2757, %v2758
      %v4735 = vmax.f32 %v4734, %v2759
      %v4736 = vmax.f32 %v4735, %v2760
      %v4737 = vrot.slane %v4736, 4
      %v4738 = vmax.f32 %v4736, %v4737
      %v4739 = vrot.slane %v4738, 2
      %v4740 = vmax.f32 %v4738, %v4739
      %v4741 = vrot.slane %v4740, 1
      %v4742 = vmax.f32 %v4740, %v4741
      %v4743 = vmax.f32 %v2761, %v2762
      %v4744 = vmax.f32 %v4743, %v2763
      %v4745 = vmax.f32 %v4744, %v2764
      %v4746 = vrot.slane %v4745, 4
      %v4747 = vmax.f32 %v4745, %v4746
      %v4748 = vrot.slane %v4747, 2
      %v4749 = vmax.f32 %v4747, %v4748
      %v4750 = vrot.slane %v4749, 1
      %v4751 = vmax.f32 %v4749, %v4750
      %v4752 = vmax.f32 %v2765, %v2766
      %v4753 = vmax.f32 %v4752, %v2767
      %v4754 = vmax.f32 %v4753, %v2768
      %v4755 = vrot.slane %v4754, 4
      %v4756 = vmax.f32 %v4754, %v4755
      %v4757 = vrot.slane %v4756, 2
      %v4758 = vmax.f32 %v4756, %v4757
      %v4759 = vrot.slane %v4758, 1
      %v4760 = vmax.f32 %v4758, %v4759
      %v4761 = vmax.f32 %v2769, %v2770
      %v4762 = vmax.f32 %v4761, %v2771
      %v4763 = vmax.f32 %v4762, %v2772
      %v4764 = vrot.slane %v4763, 4
      %v4765 = vmax.f32 %v4763, %v4764
      %v4766 = vrot.slane %v4765, 2
      %v4767 = vmax.f32 %v4765, %v4766
      %v4768 = vrot.slane %v4767, 1
      %v4769 = vmax.f32 %v4767, %v4768
      %v4770 = vmax.f32 %v2773, %v2774
      %v4771 = vmax.f32 %v4770, %v2775
      %v4772 = vmax.f32 %v4771, %v2776
      %v4773 = vrot.slane %v4772, 4
      %v4774 = vmax.f32 %v4772, %v4773
      %v4775 = vrot.slane %v4774, 2
      %v4776 = vmax.f32 %v4774, %v4775
      %v4777 = vrot.slane %v4776, 1
      %v4778 = vmax.f32 %v4776, %v4777
      %v4779 = vmax.f32 %v2777, %v2778
      %v4780 = vmax.f32 %v4779, %v2779
      %v4781 = vmax.f32 %v4780, %v2780
      %v4782 = vrot.slane %v4781, 4
      %v4783 = vmax.f32 %v4781, %v4782
      %v4784 = vrot.slane %v4783, 2
      %v4785 = vmax.f32 %v4783, %v4784
      %v4786 = vrot.slane %v4785, 1
      %v4787 = vmax.f32 %v4785, %v4786
      %v4788 = vmax.f32 %v2781, %v2782
      %v4789 = vmax.f32 %v4788, %v2783
      %v4790 = vmax.f32 %v4789, %v2784
      %v4791 = vrot.slane %v4790, 4
      %v4792 = vmax.f32 %v4790, %v4791
      %v4793 = vrot.slane %v4792, 2
      %v4794 = vmax.f32 %v4792, %v4793
      %v4795 = vrot.slane %v4794, 1
      %v4796 = vmax.f32 %v4794, %v4795
      %v4797 = vmax.f32 %v2785, %v2786
      %v4798 = vmax.f32 %v4797, %v2787
      %v4799 = vmax.f32 %v4798, %v2788
      %v4800 = vrot.slane %v4799, 4
      %v4801 = vmax.f32 %v4799, %v4800
      %v4802 = vrot.slane %v4801, 2
      %v4803 = vmax.f32 %v4801, %v4802
      %v4804 = vrot.slane %v4803, 1
      %v4805 = vmax.f32 %v4803, %v4804
      %v4806 = vmax.f32 %v2789, %v2790
      %v4807 = vmax.f32 %v4806, %v2791
      %v4808 = vmax.f32 %v4807, %v2792
      %v4809 = vrot.slane %v4808, 4
      %v4810 = vmax.f32 %v4808, %v4809
      %v4811 = vrot.slane %v4810, 2
      %v4812 = vmax.f32 %v4810, %v4811
      %v4813 = vrot.slane %v4812, 1
      %v4814 = vmax.f32 %v4812, %v4813
      %v4815 = vmax.f32 %v2793, %v2794
      %v4816 = vmax.f32 %v4815, %v2795
      %v4817 = vmax.f32 %v4816, %v2796
      %v4818 = vrot.slane %v4817, 4
      %v4819 = vmax.f32 %v4817, %v4818
      %v4820 = vrot.slane %v4819, 2
      %v4821 = vmax.f32 %v4819, %v4820
      %v4822 = vrot.slane %v4821, 1
      %v4823 = vmax.f32 %v4821, %v4822
      %v4824 = vmax.f32 %v2797, %v2798
      %v4825 = vmax.f32 %v4824, %v2799
      %v4826 = vmax.f32 %v4825, %v2800
      %v4827 = vrot.slane %v4826, 4
      %v4828 = vmax.f32 %v4826, %v4827
      %v4829 = vrot.slane %v4828, 2
      %v4830 = vmax.f32 %v4828, %v4829
      %v4831 = vrot.slane %v4830, 1
      %v4832 = vmax.f32 %v4830, %v4831
      %v4833 = vmax.f32 %v2801, %v2802
      %v4834 = vmax.f32 %v4833, %v2803
      %v4835 = vmax.f32 %v4834, %v2804
      %v4836 = vrot.slane %v4835, 4
      %v4837 = vmax.f32 %v4835, %v4836
      %v4838 = vrot.slane %v4837, 2
      %v4839 = vmax.f32 %v4837, %v4838
      %v4840 = vrot.slane %v4839, 1
      %v4841 = vmax.f32 %v4839, %v4840
      %v4842 = vmax.f32 %v2805, %v2806
      %v4843 = vmax.f32 %v4842, %v2807
      %v4844 = vmax.f32 %v4843, %v2808
      %v4845 = vrot.slane %v4844, 4
      %v4846 = vmax.f32 %v4844, %v4845
      %v4847 = vrot.slane %v4846, 2
      %v4848 = vmax.f32 %v4846, %v4847
      %v4849 = vrot.slane %v4848, 1
      %v4850 = vmax.f32 %v4848, %v4849
      %v4851 = vmax.f32 %v2809, %v2810
      %v4852 = vmax.f32 %v4851, %v2811
      %v4853 = vmax.f32 %v4852, %v2812
      %v4854 = vrot.slane %v4853, 4
      %v4855 = vmax.f32 %v4853, %v4854
      %v4856 = vrot.slane %v4855, 2
      %v4857 = vmax.f32 %v4855, %v4856
      %v4858 = vrot.slane %v4857, 1
      %v4859 = vmax.f32 %v4857, %v4858
      %v4860 = vmax.f32 %v2813, %v2814
      %v4861 = vmax.f32 %v4860, %v2815
      %v4862 = vmax.f32 %v4861, %v2816
      %v4863 = vrot.slane %v4862, 4
      %v4864 = vmax.f32 %v4862, %v4863
      %v4865 = vrot.slane %v4864, 2
      %v4866 = vmax.f32 %v4864, %v4865
      %v4867 = vrot.slane %v4866, 1
      %v4868 = vmax.f32 %v4866, %v4867
      %v4869 = vmax.f32 %v2817, %v2818
      %v4870 = vmax.f32 %v4869, %v2819
      %v4871 = vmax.f32 %v4870, %v2820
      %v4872 = vrot.slane %v4871, 4
      %v4873 = vmax.f32 %v4871, %v4872
      %v4874 = vrot.slane %v4873, 2
      %v4875 = vmax.f32 %v4873, %v4874
      %v4876 = vrot.slane %v4875, 1
      %v4877 = vmax.f32 %v4875, %v4876
      %v4878 = vmax.f32 %v2821, %v2822
      %v4879 = vmax.f32 %v4878, %v2823
      %v4880 = vmax.f32 %v4879, %v2824
      %v4881 = vrot.slane %v4880, 4
      %v4882 = vmax.f32 %v4880, %v4881
      %v4883 = vrot.slane %v4882, 2
      %v4884 = vmax.f32 %v4882, %v4883
      %v4885 = vrot.slane %v4884, 1
      %v4886 = vmax.f32 %v4884, %v4885
      %v4887 = vmax.f32 %v2825, %v2826
      %v4888 = vmax.f32 %v4887, %v2827
      %v4889 = vmax.f32 %v4888, %v2828
      %v4890 = vrot.slane %v4889, 4
      %v4891 = vmax.f32 %v4889, %v4890
      %v4892 = vrot.slane %v4891, 2
      %v4893 = vmax.f32 %v4891, %v4892
      %v4894 = vrot.slane %v4893, 1
      %v4895 = vmax.f32 %v4893, %v4894
      %v4896 = vmax.f32 %v2829, %v2830
      %v4897 = vmax.f32 %v4896, %v2831
      %v4898 = vmax.f32 %v4897, %v2832
      %v4899 = vrot.slane %v4898, 4
      %v4900 = vmax.f32 %v4898, %v4899
      %v4901 = vrot.slane %v4900, 2
      %v4902 = vmax.f32 %v4900, %v4901
      %v4903 = vrot.slane %v4902, 1
      %v4904 = vmax.f32 %v4902, %v4903
      %v4905 = vmax.f32 %v2833, %v2834
      %v4906 = vmax.f32 %v4905, %v2835
      %v4907 = vmax.f32 %v4906, %v2836
      %v4908 = vrot.slane %v4907, 4
      %v4909 = vmax.f32 %v4907, %v4908
      %v4910 = vrot.slane %v4909, 2
      %v4911 = vmax.f32 %v4909, %v4910
      %v4912 = vrot.slane %v4911, 1
      %v4913 = vmax.f32 %v4911, %v4912
      %v4914 = vmax.f32 %v2837, %v2838
      %v4915 = vmax.f32 %v4914, %v2839
      %v4916 = vmax.f32 %v4915, %v2840
      %v4917 = vrot.slane %v4916, 4
      %v4918 = vmax.f32 %v4916, %v4917
      %v4919 = vrot.slane %v4918, 2
      %v4920 = vmax.f32 %v4918, %v4919
      %v4921 = vrot.slane %v4920, 1
      %v4922 = vmax.f32 %v4920, %v4921
      %v4923 = vmax.f32 %v2841, %v2842
      %v4924 = vmax.f32 %v4923, %v2843
      %v4925 = vmax.f32 %v4924, %v2844
      %v4926 = vrot.slane %v4925, 4
      %v4927 = vmax.f32 %v4925, %v4926
      %v4928 = vrot.slane %v4927, 2
      %v4929 = vmax.f32 %v4927, %v4928
      %v4930 = vrot.slane %v4929, 1
      %v4931 = vmax.f32 %v4929, %v4930
      %v4932 = vmax.f32 %v2845, %v2846
      %v4933 = vmax.f32 %v4932, %v2847
      %v4934 = vmax.f32 %v4933, %v2848
      %v4935 = vrot.slane %v4934, 4
      %v4936 = vmax.f32 %v4934, %v4935
      %v4937 = vrot.slane %v4936, 2
      %v4938 = vmax.f32 %v4936, %v4937
      %v4939 = vrot.slane %v4938, 1
      %v4940 = vmax.f32 %v4938, %v4939
      %v4941 = vmax.f32 %v2849, %v2850
      %v4942 = vmax.f32 %v4941, %v2851
      %v4943 = vmax.f32 %v4942, %v2852
      %v4944 = vrot.slane %v4943, 4
      %v4945 = vmax.f32 %v4943, %v4944
      %v4946 = vrot.slane %v4945, 2
      %v4947 = vmax.f32 %v4945, %v4946
      %v4948 = vrot.slane %v4947, 1
      %v4949 = vmax.f32 %v4947, %v4948
      %v4950 = vmax.f32 %v2853, %v2854
      %v4951 = vmax.f32 %v4950, %v2855
      %v4952 = vmax.f32 %v4951, %v2856
      %v4953 = vrot.slane %v4952, 4
      %v4954 = vmax.f32 %v4952, %v4953
      %v4955 = vrot.slane %v4954, 2
      %v4956 = vmax.f32 %v4954, %v4955
      %v4957 = vrot.slane %v4956, 1
      %v4958 = vmax.f32 %v4956, %v4957
      %v4959 = vmax.f32 %v2857, %v2858
      %v4960 = vmax.f32 %v4959, %v2859
      %v4961 = vmax.f32 %v4960, %v2860
      %v4962 = vrot.slane %v4961, 4
      %v4963 = vmax.f32 %v4961, %v4962
      %v4964 = vrot.slane %v4963, 2
      %v4965 = vmax.f32 %v4963, %v4964
      %v4966 = vrot.slane %v4965, 1
      %v4967 = vmax.f32 %v4965, %v4966
      %v4968 = vmax.f32 %v2861, %v2862
      %v4969 = vmax.f32 %v4968, %v2863
      %v4970 = vmax.f32 %v4969, %v2864
      %v4971 = vrot.slane %v4970, 4
      %v4972 = vmax.f32 %v4970, %v4971
      %v4973 = vrot.slane %v4972, 2
      %v4974 = vmax.f32 %v4972, %v4973
      %v4975 = vrot.slane %v4974, 1
      %v4976 = vmax.f32 %v4974, %v4975
      %v4977 = vmax.f32 %v2865, %v2866
      %v4978 = vmax.f32 %v4977, %v2867
      %v4979 = vmax.f32 %v4978, %v2868
      %v4980 = vrot.slane %v4979, 4
      %v4981 = vmax.f32 %v4979, %v4980
      %v4982 = vrot.slane %v4981, 2
      %v4983 = vmax.f32 %v4981, %v4982
      %v4984 = vrot.slane %v4983, 1
      %v4985 = vmax.f32 %v4983, %v4984
      %v4986 = vmax.f32 %v2869, %v2870
      %v4987 = vmax.f32 %v4986, %v2871
      %v4988 = vmax.f32 %v4987, %v2872
      %v4989 = vrot.slane %v4988, 4
      %v4990 = vmax.f32 %v4988, %v4989
      %v4991 = vrot.slane %v4990, 2
      %v4992 = vmax.f32 %v4990, %v4991
      %v4993 = vrot.slane %v4992, 1
      %v4994 = vmax.f32 %v4992, %v4993
      %v4995 = vmax.f32 %v2873, %v2874
      %v4996 = vmax.f32 %v4995, %v2875
      %v4997 = vmax.f32 %v4996, %v2876
      %v4998 = vrot.slane %v4997, 4
      %v4999 = vmax.f32 %v4997, %v4998
      %v5000 = vrot.slane %v4999, 2
      %v5001 = vmax.f32 %v4999, %v5000
      %v5002 = vrot.slane %v5001, 1
      %v5003 = vmax.f32 %v5001, %v5002
      %v5004 = vmax.f32 %v2877, %v2878
      %v5005 = vmax.f32 %v5004, %v2879
      %v5006 = vmax.f32 %v5005, %v2880
      %v5007 = vrot.slane %v5006, 4
      %v5008 = vmax.f32 %v5006, %v5007
      %v5009 = vrot.slane %v5008, 2
      %v5010 = vmax.f32 %v5008, %v5009
      %v5011 = vrot.slane %v5010, 1
      %v5012 = vmax.f32 %v5010, %v5011
      %v5013 = vmax.f32 %v2881, %v2882
      %v5014 = vmax.f32 %v5013, %v2883
      %v5015 = vmax.f32 %v5014, %v2884
      %v5016 = vrot.slane %v5015, 4
      %v5017 = vmax.f32 %v5015, %v5016
      %v5018 = vrot.slane %v5017, 2
      %v5019 = vmax.f32 %v5017, %v5018
      %v5020 = vrot.slane %v5019, 1
      %v5021 = vmax.f32 %v5019, %v5020
      %v5022 = vmax.f32 %v2885, %v2886
      %v5023 = vmax.f32 %v5022, %v2887
      %v5024 = vmax.f32 %v5023, %v2888
      %v5025 = vrot.slane %v5024, 4
      %v5026 = vmax.f32 %v5024, %v5025
      %v5027 = vrot.slane %v5026, 2
      %v5028 = vmax.f32 %v5026, %v5027
      %v5029 = vrot.slane %v5028, 1
      %v5030 = vmax.f32 %v5028, %v5029
      %v5031 = vmax.f32 %v2889, %v2890
      %v5032 = vmax.f32 %v5031, %v2891
      %v5033 = vmax.f32 %v5032, %v2892
      %v5034 = vrot.slane %v5033, 4
      %v5035 = vmax.f32 %v5033, %v5034
      %v5036 = vrot.slane %v5035, 2
      %v5037 = vmax.f32 %v5035, %v5036
      %v5038 = vrot.slane %v5037, 1
      %v5039 = vmax.f32 %v5037, %v5038
      %v5040 = vmax.f32 %v2893, %v2894
      %v5041 = vmax.f32 %v5040, %v2895
      %v5042 = vmax.f32 %v5041, %v2896
      %v5043 = vrot.slane %v5042, 4
      %v5044 = vmax.f32 %v5042, %v5043
      %v5045 = vrot.slane %v5044, 2
      %v5046 = vmax.f32 %v5044, %v5045
      %v5047 = vrot.slane %v5046, 1
      %v5048 = vmax.f32 %v5046, %v5047
      %v5049 = vmax.f32 %v2897, %v2898
      %v5050 = vmax.f32 %v5049, %v2899
      %v5051 = vmax.f32 %v5050, %v2900
      %v5052 = vrot.slane %v5051, 4
      %v5053 = vmax.f32 %v5051, %v5052
      %v5054 = vrot.slane %v5053, 2
      %v5055 = vmax.f32 %v5053, %v5054
      %v5056 = vrot.slane %v5055, 1
      %v5057 = vmax.f32 %v5055, %v5056
      %v5058 = vmax.f32 %v2901, %v2902
      %v5059 = vmax.f32 %v5058, %v2903
      %v5060 = vmax.f32 %v5059, %v2904
      %v5061 = vrot.slane %v5060, 4
      %v5062 = vmax.f32 %v5060, %v5061
      %v5063 = vrot.slane %v5062, 2
      %v5064 = vmax.f32 %v5062, %v5063
      %v5065 = vrot.slane %v5064, 1
      %v5066 = vmax.f32 %v5064, %v5065
      %v5067 = vmax.f32 %v2905, %v2906
      %v5068 = vmax.f32 %v5067, %v2907
      %v5069 = vmax.f32 %v5068, %v2908
      %v5070 = vrot.slane %v5069, 4
      %v5071 = vmax.f32 %v5069, %v5070
      %v5072 = vrot.slane %v5071, 2
      %v5073 = vmax.f32 %v5071, %v5072
      %v5074 = vrot.slane %v5073, 1
      %v5075 = vmax.f32 %v5073, %v5074
      %v5076 = vmax.f32 %v2909, %v2910
      %v5077 = vmax.f32 %v5076, %v2911
      %v5078 = vmax.f32 %v5077, %v2912
      %v5079 = vrot.slane %v5078, 4
      %v5080 = vmax.f32 %v5078, %v5079
      %v5081 = vrot.slane %v5080, 2
      %v5082 = vmax.f32 %v5080, %v5081
      %v5083 = vrot.slane %v5082, 1
      %v5084 = vmax.f32 %v5082, %v5083
      %v5085 = vmax.f32 %v2913, %v2914
      %v5086 = vmax.f32 %v5085, %v2915
      %v5087 = vmax.f32 %v5086, %v2916
      %v5088 = vrot.slane %v5087, 4
      %v5089 = vmax.f32 %v5087, %v5088
      %v5090 = vrot.slane %v5089, 2
      %v5091 = vmax.f32 %v5089, %v5090
      %v5092 = vrot.slane %v5091, 1
      %v5093 = vmax.f32 %v5091, %v5092
      %v5094 = vmax.f32 %v2917, %v2918
      %v5095 = vmax.f32 %v5094, %v2919
      %v5096 = vmax.f32 %v5095, %v2920
      %v5097 = vrot.slane %v5096, 4
      %v5098 = vmax.f32 %v5096, %v5097
      %v5099 = vrot.slane %v5098, 2
      %v5100 = vmax.f32 %v5098, %v5099
      %v5101 = vrot.slane %v5100, 1
      %v5102 = vmax.f32 %v5100, %v5101
      %v5103 = vmax.f32 %v2921, %v2922
      %v5104 = vmax.f32 %v5103, %v2923
      %v5105 = vmax.f32 %v5104, %v2924
      %v5106 = vrot.slane %v5105, 4
      %v5107 = vmax.f32 %v5105, %v5106
      %v5108 = vrot.slane %v5107, 2
      %v5109 = vmax.f32 %v5107, %v5108
      %v5110 = vrot.slane %v5109, 1
      %v5111 = vmax.f32 %v5109, %v5110
      %v5112 = vmax.f32 %v2925, %v2926
      %v5113 = vmax.f32 %v5112, %v2927
      %v5114 = vmax.f32 %v5113, %v2928
      %v5115 = vrot.slane %v5114, 4
      %v5116 = vmax.f32 %v5114, %v5115
      %v5117 = vrot.slane %v5116, 2
      %v5118 = vmax.f32 %v5116, %v5117
      %v5119 = vrot.slane %v5118, 1
      %v5120 = vmax.f32 %v5118, %v5119
      %v5121 = vmax.f32 %v2929, %v2930
      %v5122 = vmax.f32 %v5121, %v2931
      %v5123 = vmax.f32 %v5122, %v2932
      %v5124 = vrot.slane %v5123, 4
      %v5125 = vmax.f32 %v5123, %v5124
      %v5126 = vrot.slane %v5125, 2
      %v5127 = vmax.f32 %v5125, %v5126
      %v5128 = vrot.slane %v5127, 1
      %v5129 = vmax.f32 %v5127, %v5128
      %v5130 = vmax.f32 %v2933, %v2934
      %v5131 = vmax.f32 %v5130, %v2935
      %v5132 = vmax.f32 %v5131, %v2936
      %v5133 = vrot.slane %v5132, 4
      %v5134 = vmax.f32 %v5132, %v5133
      %v5135 = vrot.slane %v5134, 2
      %v5136 = vmax.f32 %v5134, %v5135
      %v5137 = vrot.slane %v5136, 1
      %v5138 = vmax.f32 %v5136, %v5137
      %v5139 = vmax.f32 %v2937, %v2938
      %v5140 = vmax.f32 %v5139, %v2939
      %v5141 = vmax.f32 %v5140, %v2940
      %v5142 = vrot.slane %v5141, 4
      %v5143 = vmax.f32 %v5141, %v5142
      %v5144 = vrot.slane %v5143, 2
      %v5145 = vmax.f32 %v5143, %v5144
      %v5146 = vrot.slane %v5145, 1
      %v5147 = vmax.f32 %v5145, %v5146
      %v5148 = vmax.f32 %v2941, %v2942
      %v5149 = vmax.f32 %v5148, %v2943
      %v5150 = vmax.f32 %v5149, %v2944
      %v5151 = vrot.slane %v5150, 4
      %v5152 = vmax.f32 %v5150, %v5151
      %v5153 = vrot.slane %v5152, 2
      %v5154 = vmax.f32 %v5152, %v5153
      %v5155 = vrot.slane %v5154, 1
      %v5156 = vmax.f32 %v5154, %v5155
      %v5157 = vmax.f32 %v2945, %v2946
      %v5158 = vmax.f32 %v5157, %v2947
      %v5159 = vmax.f32 %v5158, %v2948
      %v5160 = vrot.slane %v5159, 4
      %v5161 = vmax.f32 %v5159, %v5160
      %v5162 = vrot.slane %v5161, 2
      %v5163 = vmax.f32 %v5161, %v5162
      %v5164 = vrot.slane %v5163, 1
      %v5165 = vmax.f32 %v5163, %v5164
      %v5166 = vmax.f32 %v2949, %v2950
      %v5167 = vmax.f32 %v5166, %v2951
      %v5168 = vmax.f32 %v5167, %v2952
      %v5169 = vrot.slane %v5168, 4
      %v5170 = vmax.f32 %v5168, %v5169
      %v5171 = vrot.slane %v5170, 2
      %v5172 = vmax.f32 %v5170, %v5171
      %v5173 = vrot.slane %v5172, 1
      %v5174 = vmax.f32 %v5172, %v5173
      %v5175 = vmax.f32 %v2953, %v2954
      %v5176 = vmax.f32 %v5175, %v2955
      %v5177 = vmax.f32 %v5176, %v2956
      %v5178 = vrot.slane %v5177, 4
      %v5179 = vmax.f32 %v5177, %v5178
      %v5180 = vrot.slane %v5179, 2
      %v5181 = vmax.f32 %v5179, %v5180
      %v5182 = vrot.slane %v5181, 1
      %v5183 = vmax.f32 %v5181, %v5182
      %v5184 = vmax.f32 %v2957, %v2958
      %v5185 = vmax.f32 %v5184, %v2959
      %v5186 = vmax.f32 %v5185, %v2960
      %v5187 = vrot.slane %v5186, 4
      %v5188 = vmax.f32 %v5186, %v5187
      %v5189 = vrot.slane %v5188, 2
      %v5190 = vmax.f32 %v5188, %v5189
      %v5191 = vrot.slane %v5190, 1
      %v5192 = vmax.f32 %v5190, %v5191
      %v5193 = vmax.f32 %v2961, %v2962
      %v5194 = vmax.f32 %v5193, %v2963
      %v5195 = vmax.f32 %v5194, %v2964
      %v5196 = vrot.slane %v5195, 4
      %v5197 = vmax.f32 %v5195, %v5196
      %v5198 = vrot.slane %v5197, 2
      %v5199 = vmax.f32 %v5197, %v5198
      %v5200 = vrot.slane %v5199, 1
      %v5201 = vmax.f32 %v5199, %v5200
      %v5202 = vmax.f32 %v2965, %v2966
      %v5203 = vmax.f32 %v5202, %v2967
      %v5204 = vmax.f32 %v5203, %v2968
      %v5205 = vrot.slane %v5204, 4
      %v5206 = vmax.f32 %v5204, %v5205
      %v5207 = vrot.slane %v5206, 2
      %v5208 = vmax.f32 %v5206, %v5207
      %v5209 = vrot.slane %v5208, 1
      %v5210 = vmax.f32 %v5208, %v5209
      %v5211 = vmax.f32 %v2969, %v2970
      %v5212 = vmax.f32 %v5211, %v2971
      %v5213 = vmax.f32 %v5212, %v2972
      %v5214 = vrot.slane %v5213, 4
      %v5215 = vmax.f32 %v5213, %v5214
      %v5216 = vrot.slane %v5215, 2
      %v5217 = vmax.f32 %v5215, %v5216
      %v5218 = vrot.slane %v5217, 1
      %v5219 = vmax.f32 %v5217, %v5218
      %v5220 = vmax.f32 %v2973, %v2974
      %v5221 = vmax.f32 %v5220, %v2975
      %v5222 = vmax.f32 %v5221, %v2976
      %v5223 = vrot.slane %v5222, 4
      %v5224 = vmax.f32 %v5222, %v5223
      %v5225 = vrot.slane %v5224, 2
      %v5226 = vmax.f32 %v5224, %v5225
      %v5227 = vrot.slane %v5226, 1
      %v5228 = vmax.f32 %v5226, %v5227
      %v5229 = vmax.f32 %v2977, %v2978
      %v5230 = vmax.f32 %v5229, %v2979
      %v5231 = vmax.f32 %v5230, %v2980
      %v5232 = vrot.slane %v5231, 4
      %v5233 = vmax.f32 %v5231, %v5232
      %v5234 = vrot.slane %v5233, 2
      %v5235 = vmax.f32 %v5233, %v5234
      %v5236 = vrot.slane %v5235, 1
      %v5237 = vmax.f32 %v5235, %v5236
      %v5238 = vmax.f32 %v2981, %v2982
      %v5239 = vmax.f32 %v5238, %v2983
      %v5240 = vmax.f32 %v5239, %v2984
      %v5241 = vrot.slane %v5240, 4
      %v5242 = vmax.f32 %v5240, %v5241
      %v5243 = vrot.slane %v5242, 2
      %v5244 = vmax.f32 %v5242, %v5243
      %v5245 = vrot.slane %v5244, 1
      %v5246 = vmax.f32 %v5244, %v5245
      %v5247 = vmax.f32 %v2985, %v2986
      %v5248 = vmax.f32 %v5247, %v2987
      %v5249 = vmax.f32 %v5248, %v2988
      %v5250 = vrot.slane %v5249, 4
      %v5251 = vmax.f32 %v5249, %v5250
      %v5252 = vrot.slane %v5251, 2
      %v5253 = vmax.f32 %v5251, %v5252
      %v5254 = vrot.slane %v5253, 1
      %v5255 = vmax.f32 %v5253, %v5254
      %v5256 = vmax.f32 %v2989, %v2990
      %v5257 = vmax.f32 %v5256, %v2991
      %v5258 = vmax.f32 %v5257, %v2992
      %v5259 = vrot.slane %v5258, 4
      %v5260 = vmax.f32 %v5258, %v5259
      %v5261 = vrot.slane %v5260, 2
      %v5262 = vmax.f32 %v5260, %v5261
      %v5263 = vrot.slane %v5262, 1
      %v5264 = vmax.f32 %v5262, %v5263
      %v5265 = vmax.f32 %v2993, %v2994
      %v5266 = vmax.f32 %v5265, %v2995
      %v5267 = vmax.f32 %v5266, %v2996
      %v5268 = vrot.slane %v5267, 4
      %v5269 = vmax.f32 %v5267, %v5268
      %v5270 = vrot.slane %v5269, 2
      %v5271 = vmax.f32 %v5269, %v5270
      %v5272 = vrot.slane %v5271, 1
      %v5273 = vmax.f32 %v5271, %v5272
      %v5274 = vmax.f32 %v2997, %v2998
      %v5275 = vmax.f32 %v5274, %v2999
      %v5276 = vmax.f32 %v5275, %v3000
      %v5277 = vrot.slane %v5276, 4
      %v5278 = vmax.f32 %v5276, %v5277
      %v5279 = vrot.slane %v5278, 2
      %v5280 = vmax.f32 %v5278, %v5279
      %v5281 = vrot.slane %v5280, 1
      %v5282 = vmax.f32 %v5280, %v5281
      %v5283 = vmax.f32 %v3001, %v3002
      %v5284 = vmax.f32 %v5283, %v3003
      %v5285 = vmax.f32 %v5284, %v3004
      %v5286 = vrot.slane %v5285, 4
      %v5287 = vmax.f32 %v5285, %v5286
      %v5288 = vrot.slane %v5287, 2
      %v5289 = vmax.f32 %v5287, %v5288
      %v5290 = vrot.slane %v5289, 1
      %v5291 = vmax.f32 %v5289, %v5290
      %v5292 = vmax.f32 %v3005, %v3006
      %v5293 = vmax.f32 %v5292, %v3007
      %v5294 = vmax.f32 %v5293, %v3008
      %v5295 = vrot.slane %v5294, 4
      %v5296 = vmax.f32 %v5294, %v5295
      %v5297 = vrot.slane %v5296, 2
      %v5298 = vmax.f32 %v5296, %v5297
      %v5299 = vrot.slane %v5298, 1
      %v5300 = vmax.f32 %v5298, %v5299
      %v5301 = vmax.f32 %v3009, %v3010
      %v5302 = vmax.f32 %v5301, %v3011
      %v5303 = vmax.f32 %v5302, %v3012
      %v5304 = vrot.slane %v5303, 4
      %v5305 = vmax.f32 %v5303, %v5304
      %v5306 = vrot.slane %v5305, 2
      %v5307 = vmax.f32 %v5305, %v5306
      %v5308 = vrot.slane %v5307, 1
      %v5309 = vmax.f32 %v5307, %v5308
      %v5310 = vmax.f32 %v3013, %v3014
      %v5311 = vmax.f32 %v5310, %v3015
      %v5312 = vmax.f32 %v5311, %v3016
      %v5313 = vrot.slane %v5312, 4
      %v5314 = vmax.f32 %v5312, %v5313
      %v5315 = vrot.slane %v5314, 2
      %v5316 = vmax.f32 %v5314, %v5315
      %v5317 = vrot.slane %v5316, 1
      %v5318 = vmax.f32 %v5316, %v5317
      %v5319 = vmax.f32 %v3017, %v3018
      %v5320 = vmax.f32 %v5319, %v3019
      %v5321 = vmax.f32 %v5320, %v3020
      %v5322 = vrot.slane %v5321, 4
      %v5323 = vmax.f32 %v5321, %v5322
      %v5324 = vrot.slane %v5323, 2
      %v5325 = vmax.f32 %v5323, %v5324
      %v5326 = vrot.slane %v5325, 1
      %v5327 = vmax.f32 %v5325, %v5326
      %v5328 = vmax.f32 %v3021, %v3022
      %v5329 = vmax.f32 %v5328, %v3023
      %v5330 = vmax.f32 %v5329, %v3024
      %v5331 = vrot.slane %v5330, 4
      %v5332 = vmax.f32 %v5330, %v5331
      %v5333 = vrot.slane %v5332, 2
      %v5334 = vmax.f32 %v5332, %v5333
      %v5335 = vrot.slane %v5334, 1
      %v5336 = vmax.f32 %v5334, %v5335
      %v5337 = vmax.f32 %v3025, %v3026
      %v5338 = vmax.f32 %v5337, %v3027
      %v5339 = vmax.f32 %v5338, %v3028
      %v5340 = vrot.slane %v5339, 4
      %v5341 = vmax.f32 %v5339, %v5340
      %v5342 = vrot.slane %v5341, 2
      %v5343 = vmax.f32 %v5341, %v5342
      %v5344 = vrot.slane %v5343, 1
      %v5345 = vmax.f32 %v5343, %v5344
      %v5346 = vmax.f32 %v3029, %v3030
      %v5347 = vmax.f32 %v5346, %v3031
      %v5348 = vmax.f32 %v5347, %v3032
      %v5349 = vrot.slane %v5348, 4
      %v5350 = vmax.f32 %v5348, %v5349
      %v5351 = vrot.slane %v5350, 2
      %v5352 = vmax.f32 %v5350, %v5351
      %v5353 = vrot.slane %v5352, 1
      %v5354 = vmax.f32 %v5352, %v5353
      %v5355 = vmax.f32 %v3033, %v3034
      %v5356 = vmax.f32 %v5355, %v3035
      %v5357 = vmax.f32 %v5356, %v3036
      %v5358 = vrot.slane %v5357, 4
      %v5359 = vmax.f32 %v5357, %v5358
      %v5360 = vrot.slane %v5359, 2
      %v5361 = vmax.f32 %v5359, %v5360
      %v5362 = vrot.slane %v5361, 1
      %v5363 = vmax.f32 %v5361, %v5362
      %v5364 = vmax.f32 %v3037, %v3038
      %v5365 = vmax.f32 %v5364, %v3039
      %v5366 = vmax.f32 %v5365, %v3040
      %v5367 = vrot.slane %v5366, 4
      %v5368 = vmax.f32 %v5366, %v5367
      %v5369 = vrot.slane %v5368, 2
      %v5370 = vmax.f32 %v5368, %v5369
      %v5371 = vrot.slane %v5370, 1
      %v5372 = vmax.f32 %v5370, %v5371
      %v5373 = vmax.f32 %v3041, %v3042
      %v5374 = vmax.f32 %v5373, %v3043
      %v5375 = vmax.f32 %v5374, %v3044
      %v5376 = vrot.slane %v5375, 4
      %v5377 = vmax.f32 %v5375, %v5376
      %v5378 = vrot.slane %v5377, 2
      %v5379 = vmax.f32 %v5377, %v5378
      %v5380 = vrot.slane %v5379, 1
      %v5381 = vmax.f32 %v5379, %v5380
      %v5382 = vmax.f32 %v3045, %v3046
      %v5383 = vmax.f32 %v5382, %v3047
      %v5384 = vmax.f32 %v5383, %v3048
      %v5385 = vrot.slane %v5384, 4
      %v5386 = vmax.f32 %v5384, %v5385
      %v5387 = vrot.slane %v5386, 2
      %v5388 = vmax.f32 %v5386, %v5387
      %v5389 = vrot.slane %v5388, 1
      %v5390 = vmax.f32 %v5388, %v5389
      %v5391 = vmax.f32 %v3049, %v3050
      %v5392 = vmax.f32 %v5391, %v3051
      %v5393 = vmax.f32 %v5392, %v3052
      %v5394 = vrot.slane %v5393, 4
      %v5395 = vmax.f32 %v5393, %v5394
      %v5396 = vrot.slane %v5395, 2
      %v5397 = vmax.f32 %v5395, %v5396
      %v5398 = vrot.slane %v5397, 1
      %v5399 = vmax.f32 %v5397, %v5398
      %v5400 = vmax.f32 %v3053, %v3054
      %v5401 = vmax.f32 %v5400, %v3055
      %v5402 = vmax.f32 %v5401, %v3056
      %v5403 = vrot.slane %v5402, 4
      %v5404 = vmax.f32 %v5402, %v5403
      %v5405 = vrot.slane %v5404, 2
      %v5406 = vmax.f32 %v5404, %v5405
      %v5407 = vrot.slane %v5406, 1
      %v5408 = vmax.f32 %v5406, %v5407
      %v5409 = vmax.f32 %v3057, %v3058
      %v5410 = vmax.f32 %v5409, %v3059
      %v5411 = vmax.f32 %v5410, %v3060
      %v5412 = vrot.slane %v5411, 4
      %v5413 = vmax.f32 %v5411, %v5412
      %v5414 = vrot.slane %v5413, 2
      %v5415 = vmax.f32 %v5413, %v5414
      %v5416 = vrot.slane %v5415, 1
      %v5417 = vmax.f32 %v5415, %v5416
      %v5418 = vmax.f32 %v3061, %v3062
      %v5419 = vmax.f32 %v5418, %v3063
      %v5420 = vmax.f32 %v5419, %v3064
      %v5421 = vrot.slane %v5420, 4
      %v5422 = vmax.f32 %v5420, %v5421
      %v5423 = vrot.slane %v5422, 2
      %v5424 = vmax.f32 %v5422, %v5423
      %v5425 = vrot.slane %v5424, 1
      %v5426 = vmax.f32 %v5424, %v5425
      %v5427 = vmax.f32 %v3065, %v3066
      %v5428 = vmax.f32 %v5427, %v3067
      %v5429 = vmax.f32 %v5428, %v3068
      %v5430 = vrot.slane %v5429, 4
      %v5431 = vmax.f32 %v5429, %v5430
      %v5432 = vrot.slane %v5431, 2
      %v5433 = vmax.f32 %v5431, %v5432
      %v5434 = vrot.slane %v5433, 1
      %v5435 = vmax.f32 %v5433, %v5434
      %v5436 = vmax.f32 %v3069, %v3070
      %v5437 = vmax.f32 %v5436, %v3071
      %v5438 = vmax.f32 %v5437, %v3072
      %v5439 = vrot.slane %v5438, 4
      %v5440 = vmax.f32 %v5438, %v5439
      %v5441 = vrot.slane %v5440, 2
      %v5442 = vmax.f32 %v5440, %v5441
      %v5443 = vrot.slane %v5442, 1
      %v5444 = vmax.f32 %v5442, %v5443
      %v5445 = vmax.f32 %v3073, %v3074
      %v5446 = vmax.f32 %v5445, %v3075
      %v5447 = vmax.f32 %v5446, %v3076
      %v5448 = vrot.slane %v5447, 4
      %v5449 = vmax.f32 %v5447, %v5448
      %v5450 = vrot.slane %v5449, 2
      %v5451 = vmax.f32 %v5449, %v5450
      %v5452 = vrot.slane %v5451, 1
      %v5453 = vmax.f32 %v5451, %v5452
      %v5454 = vmax.f32 %v3077, %v3078
      %v5455 = vmax.f32 %v5454, %v3079
      %v5456 = vmax.f32 %v5455, %v3080
      %v5457 = vrot.slane %v5456, 4
      %v5458 = vmax.f32 %v5456, %v5457
      %v5459 = vrot.slane %v5458, 2
      %v5460 = vmax.f32 %v5458, %v5459
      %v5461 = vrot.slane %v5460, 1
      %v5462 = vmax.f32 %v5460, %v5461
      %v5463 = vmax.f32 %v3081, %v3082
      %v5464 = vmax.f32 %v5463, %v3083
      %v5465 = vmax.f32 %v5464, %v3084
      %v5466 = vrot.slane %v5465, 4
      %v5467 = vmax.f32 %v5465, %v5466
      %v5468 = vrot.slane %v5467, 2
      %v5469 = vmax.f32 %v5467, %v5468
      %v5470 = vrot.slane %v5469, 1
      %v5471 = vmax.f32 %v5469, %v5470
      %v5472 = vmax.f32 %v3085, %v3086
      %v5473 = vmax.f32 %v5472, %v3087
      %v5474 = vmax.f32 %v5473, %v3088
      %v5475 = vrot.slane %v5474, 4
      %v5476 = vmax.f32 %v5474, %v5475
      %v5477 = vrot.slane %v5476, 2
      %v5478 = vmax.f32 %v5476, %v5477
      %v5479 = vrot.slane %v5478, 1
      %v5480 = vmax.f32 %v5478, %v5479
      %v5481 = vmax.f32 %v3089, %v3090
      %v5482 = vmax.f32 %v5481, %v3091
      %v5483 = vmax.f32 %v5482, %v3092
      %v5484 = vrot.slane %v5483, 4
      %v5485 = vmax.f32 %v5483, %v5484
      %v5486 = vrot.slane %v5485, 2
      %v5487 = vmax.f32 %v5485, %v5486
      %v5488 = vrot.slane %v5487, 1
      %v5489 = vmax.f32 %v5487, %v5488
      %v5490 = vmax.f32 %v3093, %v3094
      %v5491 = vmax.f32 %v5490, %v3095
      %v5492 = vmax.f32 %v5491, %v3096
      %v5493 = vrot.slane %v5492, 4
      %v5494 = vmax.f32 %v5492, %v5493
      %v5495 = vrot.slane %v5494, 2
      %v5496 = vmax.f32 %v5494, %v5495
      %v5497 = vrot.slane %v5496, 1
      %v5498 = vmax.f32 %v5496, %v5497
      %v5499 = vmax.f32 %v3097, %v3098
      %v5500 = vmax.f32 %v5499, %v3099
      %v5501 = vmax.f32 %v5500, %v3100
      %v5502 = vrot.slane %v5501, 4
      %v5503 = vmax.f32 %v5501, %v5502
      %v5504 = vrot.slane %v5503, 2
      %v5505 = vmax.f32 %v5503, %v5504
      %v5506 = vrot.slane %v5505, 1
      %v5507 = vmax.f32 %v5505, %v5506
      %v5508 = vmax.f32 %v3101, %v3102
      %v5509 = vmax.f32 %v5508, %v3103
      %v5510 = vmax.f32 %v5509, %v3104
      %v5511 = vrot.slane %v5510, 4
      %v5512 = vmax.f32 %v5510, %v5511
      %v5513 = vrot.slane %v5512, 2
      %v5514 = vmax.f32 %v5512, %v5513
      %v5515 = vrot.slane %v5514, 1
      %v5516 = vmax.f32 %v5514, %v5515
      %v5517 = vmax.f32 %v3105, %v3106
      %v5518 = vmax.f32 %v5517, %v3107
      %v5519 = vmax.f32 %v5518, %v3108
      %v5520 = vrot.slane %v5519, 4
      %v5521 = vmax.f32 %v5519, %v5520
      %v5522 = vrot.slane %v5521, 2
      %v5523 = vmax.f32 %v5521, %v5522
      %v5524 = vrot.slane %v5523, 1
      %v5525 = vmax.f32 %v5523, %v5524
      %v5526 = vmax.f32 %v3109, %v3110
      %v5527 = vmax.f32 %v5526, %v3111
      %v5528 = vmax.f32 %v5527, %v3112
      %v5529 = vrot.slane %v5528, 4
      %v5530 = vmax.f32 %v5528, %v5529
      %v5531 = vrot.slane %v5530, 2
      %v5532 = vmax.f32 %v5530, %v5531
      %v5533 = vrot.slane %v5532, 1
      %v5534 = vmax.f32 %v5532, %v5533
      %v5535 = vmax.f32 %v3113, %v3114
      %v5536 = vmax.f32 %v5535, %v3115
      %v5537 = vmax.f32 %v5536, %v3116
      %v5538 = vrot.slane %v5537, 4
      %v5539 = vmax.f32 %v5537, %v5538
      %v5540 = vrot.slane %v5539, 2
      %v5541 = vmax.f32 %v5539, %v5540
      %v5542 = vrot.slane %v5541, 1
      %v5543 = vmax.f32 %v5541, %v5542
      %v5544 = vmax.f32 %v3117, %v3118
      %v5545 = vmax.f32 %v5544, %v3119
      %v5546 = vmax.f32 %v5545, %v3120
      %v5547 = vrot.slane %v5546, 4
      %v5548 = vmax.f32 %v5546, %v5547
      %v5549 = vrot.slane %v5548, 2
      %v5550 = vmax.f32 %v5548, %v5549
      %v5551 = vrot.slane %v5550, 1
      %v5552 = vmax.f32 %v5550, %v5551
      %v5553 = vsub.f32 -inf, %v4409
      %v5554 = vsub.f32 -inf, %v4418
      %v5555 = vsub.f32 -inf, %v4427
      %v5556 = vsub.f32 -inf, %v4436
      %v5557 = vsub.f32 -inf, %v4445
      %v5558 = vsub.f32 -inf, %v4454
      %v5559 = vsub.f32 -inf, %v4463
      %v5560 = vsub.f32 -inf, %v4472
      %v5561 = vsub.f32 -inf, %v4481
      %v5562 = vsub.f32 -inf, %v4490
      %v5563 = vsub.f32 -inf, %v4499
      %v5564 = vsub.f32 -inf, %v4508
      %v5565 = vsub.f32 -inf, %v4517
      %v5566 = vsub.f32 -inf, %v4526
      %v5567 = vsub.f32 -inf, %v4535
      %v5568 = vsub.f32 -inf, %v4544
      %v5569 = vsub.f32 -inf, %v4553
      %v5570 = vsub.f32 -inf, %v4562
      %v5571 = vsub.f32 -inf, %v4571
      %v5572 = vsub.f32 -inf, %v4580
      %v5573 = vsub.f32 -inf, %v4589
      %v5574 = vsub.f32 -inf, %v4598
      %v5575 = vsub.f32 -inf, %v4607
      %v5576 = vsub.f32 -inf, %v4616
      %v5577 = vsub.f32 -inf, %v4625
      %v5578 = vsub.f32 -inf, %v4634
      %v5579 = vsub.f32 -inf, %v4643
      %v5580 = vsub.f32 -inf, %v4652
      %v5581 = vsub.f32 -inf, %v4661
      %v5582 = vsub.f32 -inf, %v4670
      %v5583 = vsub.f32 -inf, %v4679
      %v5584 = vsub.f32 -inf, %v4688
      %v5585 = vsub.f32 -inf, %v4697
      %v5586 = vsub.f32 -inf, %v4706
      %v5587 = vsub.f32 -inf, %v4715
      %v5588 = vsub.f32 -inf, %v4724
      %v5589 = vsub.f32 -inf, %v4733
      %v5590 = vsub.f32 -inf, %v4742
      %v5591 = vsub.f32 -inf, %v4751
      %v5592 = vsub.f32 -inf, %v4760
      %v5593 = vsub.f32 -inf, %v4769
      %v5594 = vsub.f32 -inf, %v4778
      %v5595 = vsub.f32 -inf, %v4787
      %v5596 = vsub.f32 -inf, %v4796
      %v5597 = vsub.f32 -inf, %v4805
      %v5598 = vsub.f32 -inf, %v4814
      %v5599 = vsub.f32 -inf, %v4823
      %v5600 = vsub.f32 -inf, %v4832
      %v5601 = vsub.f32 -inf, %v4841
      %v5602 = vsub.f32 -inf, %v4850
      %v5603 = vsub.f32 -inf, %v4859
      %v5604 = vsub.f32 -inf, %v4868
      %v5605 = vsub.f32 -inf, %v4877
      %v5606 = vsub.f32 -inf, %v4886
      %v5607 = vsub.f32 -inf, %v4895
      %v5608 = vsub.f32 -inf, %v4904
      %v5609 = vsub.f32 -inf, %v4913
      %v5610 = vsub.f32 -inf, %v4922
      %v5611 = vsub.f32 -inf, %v4931
      %v5612 = vsub.f32 -inf, %v4940
      %v5613 = vsub.f32 -inf, %v4949
      %v5614 = vsub.f32 -inf, %v4958
      %v5615 = vsub.f32 -inf, %v4967
      %v5616 = vsub.f32 -inf, %v4976
      %v5617 = vsub.f32 -inf, %v4985
      %v5618 = vsub.f32 -inf, %v4994
      %v5619 = vsub.f32 -inf, %v5003
      %v5620 = vsub.f32 -inf, %v5012
      %v5621 = vsub.f32 -inf, %v5021
      %v5622 = vsub.f32 -inf, %v5030
      %v5623 = vsub.f32 -inf, %v5039
      %v5624 = vsub.f32 -inf, %v5048
      %v5625 = vsub.f32 -inf, %v5057
      %v5626 = vsub.f32 -inf, %v5066
      %v5627 = vsub.f32 -inf, %v5075
      %v5628 = vsub.f32 -inf, %v5084
      %v5629 = vsub.f32 -inf, %v5093
      %v5630 = vsub.f32 -inf, %v5102
      %v5631 = vsub.f32 -inf, %v5111
      %v5632 = vsub.f32 -inf, %v5120
      %v5633 = vsub.f32 -inf, %v5129
      %v5634 = vsub.f32 -inf, %v5138
      %v5635 = vsub.f32 -inf, %v5147
      %v5636 = vsub.f32 -inf, %v5156
      %v5637 = vsub.f32 -inf, %v5165
      %v5638 = vsub.f32 -inf, %v5174
      %v5639 = vsub.f32 -inf, %v5183
      %v5640 = vsub.f32 -inf, %v5192
      %v5641 = vsub.f32 -inf, %v5201
      %v5642 = vsub.f32 -inf, %v5210
      %v5643 = vsub.f32 -inf, %v5219
      %v5644 = vsub.f32 -inf, %v5228
      %v5645 = vsub.f32 -inf, %v5237
      %v5646 = vsub.f32 -inf, %v5246
      %v5647 = vsub.f32 -inf, %v5255
      %v5648 = vsub.f32 -inf, %v5264
      %v5649 = vsub.f32 -inf, %v5273
      %v5650 = vsub.f32 -inf, %v5282
      %v5651 = vsub.f32 -inf, %v5291
      %v5652 = vsub.f32 -inf, %v5300
      %v5653 = vsub.f32 -inf, %v5309
      %v5654 = vsub.f32 -inf, %v5318
      %v5655 = vsub.f32 -inf, %v5327
      %v5656 = vsub.f32 -inf, %v5336
      %v5657 = vsub.f32 -inf, %v5345
      %v5658 = vsub.f32 -inf, %v5354
      %v5659 = vsub.f32 -inf, %v5363
      %v5660 = vsub.f32 -inf, %v5372
      %v5661 = vsub.f32 -inf, %v5381
      %v5662 = vsub.f32 -inf, %v5390
      %v5663 = vsub.f32 -inf, %v5399
      %v5664 = vsub.f32 -inf, %v5408
      %v5665 = vsub.f32 -inf, %v5417
      %v5666 = vsub.f32 -inf, %v5426
      %v5667 = vsub.f32 -inf, %v5435
      %v5668 = vsub.f32 -inf, %v5444
      %v5669 = vsub.f32 -inf, %v5453
      %v5670 = vsub.f32 -inf, %v5462
      %v5671 = vsub.f32 -inf, %v5471
      %v5672 = vsub.f32 -inf, %v5480
      %v5673 = vsub.f32 -inf, %v5489
      %v5674 = vsub.f32 -inf, %v5498
      %v5675 = vsub.f32 -inf, %v5507
      %v5676 = vsub.f32 -inf, %v5516
      %v5677 = vsub.f32 -inf, %v5525
      %v5678 = vsub.f32 -inf, %v5534
      %v5679 = vsub.f32 -inf, %v5543
      %v5680 = vsub.f32 -inf, %v5552
      %v5681 = vmul.f32 %v5553, 1.442695
      %v5682 = vpow.pop %v5681
      %v5683 = vmul.f32 %v5554, 1.442695
      %v5684 = vpow.pop %v5683
      %v5685 = vmul.f32 %v5555, 1.442695
      %v5686 = vpow.pop %v5685
      %v5687 = vmul.f32 %v5556, 1.442695
      %v5688 = vpow.pop %v5687
      %v5689 = vmul.f32 %v5557, 1.442695
      %v5690 = vpow.pop %v5689
      %v5691 = vmul.f32 %v5558, 1.442695
      %v5692 = vpow.pop %v5691
      %v5693 = vmul.f32 %v5559, 1.442695
      %v5694 = vpow.pop %v5693
      %v5695 = vmul.f32 %v5560, 1.442695
      %v5696 = vpow.pop %v5695
      %v5697 = vmul.f32 %v5561, 1.442695
      %v5698 = vpow.pop %v5697
      %v5699 = vmul.f32 %v5562, 1.442695
      %v5700 = vpow.pop %v5699
      %v5701 = vmul.f32 %v5563, 1.442695
      %v5702 = vpow.pop %v5701
      %v5703 = vmul.f32 %v5564, 1.442695
      %v5704 = vpow.pop %v5703
      %v5705 = vmul.f32 %v5565, 1.442695
      %v5706 = vpow.pop %v5705
      %v5707 = vmul.f32 %v5566, 1.442695
      %v5708 = vpow.pop %v5707
      %v5709 = vmul.f32 %v5567, 1.442695
      %v5710 = vpow.pop %v5709
      %v5711 = vmul.f32 %v5568, 1.442695
      %v5712 = vpow.pop %v5711
      %v5713 = vmul.f32 %v5569, 1.442695
      %v5714 = vpow.pop %v5713
      %v5715 = vmul.f32 %v5570, 1.442695
      %v5716 = vpow.pop %v5715
      %v5717 = vmul.f32 %v5571, 1.442695
      %v5718 = vpow.pop %v5717
      %v5719 = vmul.f32 %v5572, 1.442695
      %v5720 = vpow.pop %v5719
      %v5721 = vmul.f32 %v5573, 1.442695
      %v5722 = vpow.pop %v5721
      %v5723 = vmul.f32 %v5574, 1.442695
      %v5724 = vpow.pop %v5723
      %v5725 = vmul.f32 %v5575, 1.442695
      %v5726 = vpow.pop %v5725
      %v5727 = vmul.f32 %v5576, 1.442695
      %v5728 = vpow.pop %v5727
      %v5729 = vmul.f32 %v5577, 1.442695
      %v5730 = vpow.pop %v5729
      %v5731 = vmul.f32 %v5578, 1.442695
      %v5732 = vpow.pop %v5731
      %v5733 = vmul.f32 %v5579, 1.442695
      %v5734 = vpow.pop %v5733
      %v5735 = vmul.f32 %v5580, 1.442695
      %v5736 = vpow.pop %v5735
      %v5737 = vmul.f32 %v5581, 1.442695
      %v5738 = vpow.pop %v5737
      %v5739 = vmul.f32 %v5582, 1.442695
      %v5740 = vpow.pop %v5739
      %v5741 = vmul.f32 %v5583, 1.442695
      %v5742 = vpow.pop %v5741
      %v5743 = vmul.f32 %v5584, 1.442695
      %v5744 = vpow.pop %v5743
      %v5745 = vmul.f32 %v5585, 1.442695
      %v5746 = vpow.pop %v5745
      %v5747 = vmul.f32 %v5586, 1.442695
      %v5748 = vpow.pop %v5747
      %v5749 = vmul.f32 %v5587, 1.442695
      %v5750 = vpow.pop %v5749
      %v5751 = vmul.f32 %v5588, 1.442695
      %v5752 = vpow.pop %v5751
      %v5753 = vmul.f32 %v5589, 1.442695
      %v5754 = vpow.pop %v5753
      %v5755 = vmul.f32 %v5590, 1.442695
      %v5756 = vpow.pop %v5755
      %v5757 = vmul.f32 %v5591, 1.442695
      %v5758 = vpow.pop %v5757
      %v5759 = vmul.f32 %v5592, 1.442695
      %v5760 = vpow.pop %v5759
      %v5761 = vmul.f32 %v5593, 1.442695
      %v5762 = vpow.pop %v5761
      %v5763 = vmul.f32 %v5594, 1.442695
      %v5764 = vpow.pop %v5763
      %v5765 = vmul.f32 %v5595, 1.442695
      %v5766 = vpow.pop %v5765
      %v5767 = vmul.f32 %v5596, 1.442695
      %v5768 = vpow.pop %v5767
      %v5769 = vmul.f32 %v5597, 1.442695
      %v5770 = vpow.pop %v5769
      %v5771 = vmul.f32 %v5598, 1.442695
      %v5772 = vpow.pop %v5771
      %v5773 = vmul.f32 %v5599, 1.442695
      %v5774 = vpow.pop %v5773
      %v5775 = vmul.f32 %v5600, 1.442695
      %v5776 = vpow.pop %v5775
      %v5777 = vmul.f32 %v5601, 1.442695
      %v5778 = vpow.pop %v5777
      %v5779 = vmul.f32 %v5602, 1.442695
      %v5780 = vpow.pop %v5779
      %v5781 = vmul.f32 %v5603, 1.442695
      %v5782 = vpow.pop %v5781
      %v5783 = vmul.f32 %v5604, 1.442695
      %v5784 = vpow.pop %v5783
      %v5785 = vmul.f32 %v5605, 1.442695
      %v5786 = vpow.pop %v5785
      %v5787 = vmul.f32 %v5606, 1.442695
      %v5788 = vpow.pop %v5787
      %v5789 = vmul.f32 %v5607, 1.442695
      %v5790 = vpow.pop %v5789
      %v5791 = vmul.f32 %v5608, 1.442695
      %v5792 = vpow.pop %v5791
      %v5793 = vmul.f32 %v5609, 1.442695
      %v5794 = vpow.pop %v5793
      %v5795 = vmul.f32 %v5610, 1.442695
      %v5796 = vpow.pop %v5795
      %v5797 = vmul.f32 %v5611, 1.442695
      %v5798 = vpow.pop %v5797
      %v5799 = vmul.f32 %v5612, 1.442695
      %v5800 = vpow.pop %v5799
      %v5801 = vmul.f32 %v5613, 1.442695
      %v5802 = vpow.pop %v5801
      %v5803 = vmul.f32 %v5614, 1.442695
      %v5804 = vpow.pop %v5803
      %v5805 = vmul.f32 %v5615, 1.442695
      %v5806 = vpow.pop %v5805
      %v5807 = vmul.f32 %v5616, 1.442695
      %v5808 = vpow.pop %v5807
      %v5809 = vmul.f32 %v5617, 1.442695
      %v5810 = vpow.pop %v5809
      %v5811 = vmul.f32 %v5618, 1.442695
      %v5812 = vpow.pop %v5811
      %v5813 = vmul.f32 %v5619, 1.442695
      %v5814 = vpow.pop %v5813
      %v5815 = vmul.f32 %v5620, 1.442695
      %v5816 = vpow.pop %v5815
      %v5817 = vmul.f32 %v5621, 1.442695
      %v5818 = vpow.pop %v5817
      %v5819 = vmul.f32 %v5622, 1.442695
      %v5820 = vpow.pop %v5819
      %v5821 = vmul.f32 %v5623, 1.442695
      %v5822 = vpow.pop %v5821
      %v5823 = vmul.f32 %v5624, 1.442695
      %v5824 = vpow.pop %v5823
      %v5825 = vmul.f32 %v5625, 1.442695
      %v5826 = vpow.pop %v5825
      %v5827 = vmul.f32 %v5626, 1.442695
      %v5828 = vpow.pop %v5827
      %v5829 = vmul.f32 %v5627, 1.442695
      %v5830 = vpow.pop %v5829
      %v5831 = vmul.f32 %v5628, 1.442695
      %v5832 = vpow.pop %v5831
      %v5833 = vmul.f32 %v5629, 1.442695
      %v5834 = vpow.pop %v5833
      %v5835 = vmul.f32 %v5630, 1.442695
      %v5836 = vpow.pop %v5835
      %v5837 = vmul.f32 %v5631, 1.442695
      %v5838 = vpow.pop %v5837
      %v5839 = vmul.f32 %v5632, 1.442695
      %v5840 = vpow.pop %v5839
      %v5841 = vmul.f32 %v5633, 1.442695
      %v5842 = vpow.pop %v5841
      %v5843 = vmul.f32 %v5634, 1.442695
      %v5844 = vpow.pop %v5843
      %v5845 = vmul.f32 %v5635, 1.442695
      %v5846 = vpow.pop %v5845
      %v5847 = vmul.f32 %v5636, 1.442695
      %v5848 = vpow.pop %v5847
      %v5849 = vmul.f32 %v5637, 1.442695
      %v5850 = vpow.pop %v5849
      %v5851 = vmul.f32 %v5638, 1.442695
      %v5852 = vpow.pop %v5851
      %v5853 = vmul.f32 %v5639, 1.442695
      %v5854 = vpow.pop %v5853
      %v5855 = vmul.f32 %v5640, 1.442695
      %v5856 = vpow.pop %v5855
      %v5857 = vmul.f32 %v5641, 1.442695
      %v5858 = vpow.pop %v5857
      %v5859 = vmul.f32 %v5642, 1.442695
      %v5860 = vpow.pop %v5859
      %v5861 = vmul.f32 %v5643, 1.442695
      %v5862 = vpow.pop %v5861
      %v5863 = vmul.f32 %v5644, 1.442695
      %v5864 = vpow.pop %v5863
      %v5865 = vmul.f32 %v5645, 1.442695
      %v5866 = vpow.pop %v5865
      %v5867 = vmul.f32 %v5646, 1.442695
      %v5868 = vpow.pop %v5867
      %v5869 = vmul.f32 %v5647, 1.442695
      %v5870 = vpow.pop %v5869
      %v5871 = vmul.f32 %v5648, 1.442695
      %v5872 = vpow.pop %v5871
      %v5873 = vmul.f32 %v5649, 1.442695
      %v5874 = vpow.pop %v5873
      %v5875 = vmul.f32 %v5650, 1.442695
      %v5876 = vpow.pop %v5875
      %v5877 = vmul.f32 %v5651, 1.442695
      %v5878 = vpow.pop %v5877
      %v5879 = vmul.f32 %v5652, 1.442695
      %v5880 = vpow.pop %v5879
      %v5881 = vmul.f32 %v5653, 1.442695
      %v5882 = vpow.pop %v5881
      %v5883 = vmul.f32 %v5654, 1.442695
      %v5884 = vpow.pop %v5883
      %v5885 = vmul.f32 %v5655, 1.442695
      %v5886 = vpow.pop %v5885
      %v5887 = vmul.f32 %v5656, 1.442695
      %v5888 = vpow.pop %v5887
      %v5889 = vmul.f32 %v5657, 1.442695
      %v5890 = vpow.pop %v5889
      %v5891 = vmul.f32 %v5658, 1.442695
      %v5892 = vpow.pop %v5891
      %v5893 = vmul.f32 %v5659, 1.442695
      %v5894 = vpow.pop %v5893
      %v5895 = vmul.f32 %v5660, 1.442695
      %v5896 = vpow.pop %v5895
      %v5897 = vmul.f32 %v5661, 1.442695
      %v5898 = vpow.pop %v5897
      %v5899 = vmul.f32 %v5662, 1.442695
      %v5900 = vpow.pop %v5899
      %v5901 = vmul.f32 %v5663, 1.442695
      %v5902 = vpow.pop %v5901
      %v5903 = vmul.f32 %v5664, 1.442695
      %v5904 = vpow.pop %v5903
      %v5905 = vmul.f32 %v5665, 1.442695
      %v5906 = vpow.pop %v5905
      %v5907 = vmul.f32 %v5666, 1.442695
      %v5908 = vpow.pop %v5907
      %v5909 = vmul.f32 %v5667, 1.442695
      %v5910 = vpow.pop %v5909
      %v5911 = vmul.f32 %v5668, 1.442695
      %v5912 = vpow.pop %v5911
      %v5913 = vmul.f32 %v5669, 1.442695
      %v5914 = vpow.pop %v5913
      %v5915 = vmul.f32 %v5670, 1.442695
      %v5916 = vpow.pop %v5915
      %v5917 = vmul.f32 %v5671, 1.442695
      %v5918 = vpow.pop %v5917
      %v5919 = vmul.f32 %v5672, 1.442695
      %v5920 = vpow.pop %v5919
      %v5921 = vmul.f32 %v5673, 1.442695
      %v5922 = vpow.pop %v5921
      %v5923 = vmul.f32 %v5674, 1.442695
      %v5924 = vpow.pop %v5923
      %v5925 = vmul.f32 %v5675, 1.442695
      %v5926 = vpow.pop %v5925
      %v5927 = vmul.f32 %v5676, 1.442695
      %v5928 = vpow.pop %v5927
      %v5929 = vmul.f32 %v5677, 1.442695
      %v5930 = vpow.pop %v5929
      %v5931 = vmul.f32 %v5678, 1.442695
      %v5932 = vpow.pop %v5931
      %v5933 = vmul.f32 %v5679, 1.442695
      %v5934 = vpow.pop %v5933
      %v5935 = vmul.f32 %v5680, 1.442695
      %v5936 = vpow.pop %v5935
      %v5937 = vmul.f32 %v5682, 0.0
      %v5938 = vmul.f32 %v5684, 0.0
      %v5939 = vmul.f32 %v5686, 0.0
      %v5940 = vmul.f32 %v5688, 0.0
      %v5941 = vmul.f32 %v5690, 0.0
      %v5942 = vmul.f32 %v5692, 0.0
      %v5943 = vmul.f32 %v5694, 0.0
      %v5944 = vmul.f32 %v5696, 0.0
      %v5945 = vmul.f32 %v5698, 0.0
      %v5946 = vmul.f32 %v5700, 0.0
      %v5947 = vmul.f32 %v5702, 0.0
      %v5948 = vmul.f32 %v5704, 0.0
      %v5949 = vmul.f32 %v5706, 0.0
      %v5950 = vmul.f32 %v5708, 0.0
      %v5951 = vmul.f32 %v5710, 0.0
      %v5952 = vmul.f32 %v5712, 0.0
      %v5953 = vmul.f32 %v5714, 0.0
      %v5954 = vmul.f32 %v5716, 0.0
      %v5955 = vmul.f32 %v5718, 0.0
      %v5956 = vmul.f32 %v5720, 0.0
      %v5957 = vmul.f32 %v5722, 0.0
      %v5958 = vmul.f32 %v5724, 0.0
      %v5959 = vmul.f32 %v5726, 0.0
      %v5960 = vmul.f32 %v5728, 0.0
      %v5961 = vmul.f32 %v5730, 0.0
      %v5962 = vmul.f32 %v5732, 0.0
      %v5963 = vmul.f32 %v5734, 0.0
      %v5964 = vmul.f32 %v5736, 0.0
      %v5965 = vmul.f32 %v5738, 0.0
      %v5966 = vmul.f32 %v5740, 0.0
      %v5967 = vmul.f32 %v5742, 0.0
      %v5968 = vmul.f32 %v5744, 0.0
      %v5969 = vmul.f32 %v5746, 0.0
      %v5970 = vmul.f32 %v5748, 0.0
      %v5971 = vmul.f32 %v5750, 0.0
      %v5972 = vmul.f32 %v5752, 0.0
      %v5973 = vmul.f32 %v5754, 0.0
      %v5974 = vmul.f32 %v5756, 0.0
      %v5975 = vmul.f32 %v5758, 0.0
      %v5976 = vmul.f32 %v5760, 0.0
      %v5977 = vmul.f32 %v5762, 0.0
      %v5978 = vmul.f32 %v5764, 0.0
      %v5979 = vmul.f32 %v5766, 0.0
      %v5980 = vmul.f32 %v5768, 0.0
      %v5981 = vmul.f32 %v5770, 0.0
      %v5982 = vmul.f32 %v5772, 0.0
      %v5983 = vmul.f32 %v5774, 0.0
      %v5984 = vmul.f32 %v5776, 0.0
      %v5985 = vmul.f32 %v5778, 0.0
      %v5986 = vmul.f32 %v5780, 0.0
      %v5987 = vmul.f32 %v5782, 0.0
      %v5988 = vmul.f32 %v5784, 0.0
      %v5989 = vmul.f32 %v5786, 0.0
      %v5990 = vmul.f32 %v5788, 0.0
      %v5991 = vmul.f32 %v5790, 0.0
      %v5992 = vmul.f32 %v5792, 0.0
      %v5993 = vmul.f32 %v5794, 0.0
      %v5994 = vmul.f32 %v5796, 0.0
      %v5995 = vmul.f32 %v5798, 0.0
      %v5996 = vmul.f32 %v5800, 0.0
      %v5997 = vmul.f32 %v5802, 0.0
      %v5998 = vmul.f32 %v5804, 0.0
      %v5999 = vmul.f32 %v5806, 0.0
      %v6000 = vmul.f32 %v5808, 0.0
      %v6001 = vmul.f32 %v5810, 0.0
      %v6002 = vmul.f32 %v5812, 0.0
      %v6003 = vmul.f32 %v5814, 0.0
      %v6004 = vmul.f32 %v5816, 0.0
      %v6005 = vmul.f32 %v5818, 0.0
      %v6006 = vmul.f32 %v5820, 0.0
      %v6007 = vmul.f32 %v5822, 0.0
      %v6008 = vmul.f32 %v5824, 0.0
      %v6009 = vmul.f32 %v5826, 0.0
      %v6010 = vmul.f32 %v5828, 0.0
      %v6011 = vmul.f32 %v5830, 0.0
      %v6012 = vmul.f32 %v5832, 0.0
      %v6013 = vmul.f32 %v5834, 0.0
      %v6014 = vmul.f32 %v5836, 0.0
      %v6015 = vmul.f32 %v5838, 0.0
      %v6016 = vmul.f32 %v5840, 0.0
      %v6017 = vmul.f32 %v5842, 0.0
      %v6018 = vmul.f32 %v5844, 0.0
      %v6019 = vmul.f32 %v5846, 0.0
      %v6020 = vmul.f32 %v5848, 0.0
      %v6021 = vmul.f32 %v5850, 0.0
      %v6022 = vmul.f32 %v5852, 0.0
      %v6023 = vmul.f32 %v5854, 0.0
      %v6024 = vmul.f32 %v5856, 0.0
      %v6025 = vmul.f32 %v5858, 0.0
      %v6026 = vmul.f32 %v5860, 0.0
      %v6027 = vmul.f32 %v5862, 0.0
      %v6028 = vmul.f32 %v5864, 0.0
      %v6029 = vmul.f32 %v5866, 0.0
      %v6030 = vmul.f32 %v5868, 0.0
      %v6031 = vmul.f32 %v5870, 0.0
      %v6032 = vmul.f32 %v5872, 0.0
      %v6033 = vmul.f32 %v5874, 0.0
      %v6034 = vmul.f32 %v5876, 0.0
      %v6035 = vmul.f32 %v5878, 0.0
      %v6036 = vmul.f32 %v5880, 0.0
      %v6037 = vmul.f32 %v5882, 0.0
      %v6038 = vmul.f32 %v5884, 0.0
      %v6039 = vmul.f32 %v5886, 0.0
      %v6040 = vmul.f32 %v5888, 0.0
      %v6041 = vmul.f32 %v5890, 0.0
      %v6042 = vmul.f32 %v5892, 0.0
      %v6043 = vmul.f32 %v5894, 0.0
      %v6044 = vmul.f32 %v5896, 0.0
      %v6045 = vmul.f32 %v5898, 0.0
      %v6046 = vmul.f32 %v5900, 0.0
      %v6047 = vmul.f32 %v5902, 0.0
      %v6048 = vmul.f32 %v5904, 0.0
      %v6049 = vmul.f32 %v5906, 0.0
      %v6050 = vmul.f32 %v5908, 0.0
      %v6051 = vmul.f32 %v5910, 0.0
      %v6052 = vmul.f32 %v5912, 0.0
      %v6053 = vmul.f32 %v5914, 0.0
      %v6054 = vmul.f32 %v5916, 0.0
      %v6055 = vmul.f32 %v5918, 0.0
      %v6056 = vmul.f32 %v5920, 0.0
      %v6057 = vmul.f32 %v5922, 0.0
      %v6058 = vmul.f32 %v5924, 0.0
      %v6059 = vmul.f32 %v5926, 0.0
      %v6060 = vmul.f32 %v5928, 0.0
      %v6061 = vmul.f32 %v5930, 0.0
      %v6062 = vmul.f32 %v5932, 0.0
      %v6063 = vmul.f32 %v5934, 0.0
      %v6064 = vmul.f32 %v5936, 0.0
      %v6065 = vsub.f32 %v2609, %v4409
      %v6066 = vsub.f32 %v2610, %v4409
      %v6067 = vsub.f32 %v2611, %v4409
      %v6068 = vsub.f32 %v2612, %v4409
      %v6069 = vsub.f32 %v2613, %v4418
      %v6070 = vsub.f32 %v2614, %v4418
      %v6071 = vsub.f32 %v2615, %v4418
      %v6072 = vsub.f32 %v2616, %v4418
      %v6073 = vsub.f32 %v2617, %v4427
      %v6074 = vsub.f32 %v2618, %v4427
      %v6075 = vsub.f32 %v2619, %v4427
      %v6076 = vsub.f32 %v2620, %v4427
      %v6077 = vsub.f32 %v2621, %v4436
      %v6078 = vsub.f32 %v2622, %v4436
      %v6079 = vsub.f32 %v2623, %v4436
      %v6080 = vsub.f32 %v2624, %v4436
      %v6081 = vsub.f32 %v2625, %v4445
      %v6082 = vsub.f32 %v2626, %v4445
      %v6083 = vsub.f32 %v2627, %v4445
      %v6084 = vsub.f32 %v2628, %v4445
      %v6085 = vsub.f32 %v2629, %v4454
      %v6086 = vsub.f32 %v2630, %v4454
      %v6087 = vsub.f32 %v2631, %v4454
      %v6088 = vsub.f32 %v2632, %v4454
      %v6089 = vsub.f32 %v2633, %v4463
      %v6090 = vsub.f32 %v2634, %v4463
      %v6091 = vsub.f32 %v2635, %v4463
      %v6092 = vsub.f32 %v2636, %v4463
      %v6093 = vsub.f32 %v2637, %v4472
      %v6094 = vsub.f32 %v2638, %v4472
      %v6095 = vsub.f32 %v2639, %v4472
      %v6096 = vsub.f32 %v2640, %v4472
      %v6097 = vsub.f32 %v2641, %v4481
      %v6098 = vsub.f32 %v2642, %v4481
      %v6099 = vsub.f32 %v2643, %v4481
      %v6100 = vsub.f32 %v2644, %v4481
      %v6101 = vsub.f32 %v2645, %v4490
      %v6102 = vsub.f32 %v2646, %v4490
      %v6103 = vsub.f32 %v2647, %v4490
      %v6104 = vsub.f32 %v2648, %v4490
      %v6105 = vsub.f32 %v2649, %v4499
      %v6106 = vsub.f32 %v2650, %v4499
      %v6107 = vsub.f32 %v2651, %v4499
      %v6108 = vsub.f32 %v2652, %v4499
      %v6109 = vsub.f32 %v2653, %v4508
      %v6110 = vsub.f32 %v2654, %v4508
      %v6111 = vsub.f32 %v2655, %v4508
      %v6112 = vsub.f32 %v2656, %v4508
      %v6113 = vsub.f32 %v2657, %v4517
      %v6114 = vsub.f32 %v2658, %v4517
      %v6115 = vsub.f32 %v2659, %v4517
      %v6116 = vsub.f32 %v2660, %v4517
      %v6117 = vsub.f32 %v2661, %v4526
      %v6118 = vsub.f32 %v2662, %v4526
      %v6119 = vsub.f32 %v2663, %v4526
      %v6120 = vsub.f32 %v2664, %v4526
      %v6121 = vsub.f32 %v2665, %v4535
      %v6122 = vsub.f32 %v2666, %v4535
      %v6123 = vsub.f32 %v2667, %v4535
      %v6124 = vsub.f32 %v2668, %v4535
      %v6125 = vsub.f32 %v2669, %v4544
      %v6126 = vsub.f32 %v2670, %v4544
      %v6127 = vsub.f32 %v2671, %v4544
      %v6128 = vsub.f32 %v2672, %v4544
      %v6129 = vsub.f32 %v2673, %v4553
      %v6130 = vsub.f32 %v2674, %v4553
      %v6131 = vsub.f32 %v2675, %v4553
      %v6132 = vsub.f32 %v2676, %v4553
      %v6133 = vsub.f32 %v2677, %v4562
      %v6134 = vsub.f32 %v2678, %v4562
      %v6135 = vsub.f32 %v2679, %v4562
      %v6136 = vsub.f32 %v2680, %v4562
      %v6137 = vsub.f32 %v2681, %v4571
      %v6138 = vsub.f32 %v2682, %v4571
      %v6139 = vsub.f32 %v2683, %v4571
      %v6140 = vsub.f32 %v2684, %v4571
      %v6141 = vsub.f32 %v2685, %v4580
      %v6142 = vsub.f32 %v2686, %v4580
      %v6143 = vsub.f32 %v2687, %v4580
      %v6144 = vsub.f32 %v2688, %v4580
      %v6145 = vsub.f32 %v2689, %v4589
      %v6146 = vsub.f32 %v2690, %v4589
      %v6147 = vsub.f32 %v2691, %v4589
      %v6148 = vsub.f32 %v2692, %v4589
      %v6149 = vsub.f32 %v2693, %v4598
      %v6150 = vsub.f32 %v2694, %v4598
      %v6151 = vsub.f32 %v2695, %v4598
      %v6152 = vsub.f32 %v2696, %v4598
      %v6153 = vsub.f32 %v2697, %v4607
      %v6154 = vsub.f32 %v2698, %v4607
      %v6155 = vsub.f32 %v2699, %v4607
      %v6156 = vsub.f32 %v2700, %v4607
      %v6157 = vsub.f32 %v2701, %v4616
      %v6158 = vsub.f32 %v2702, %v4616
      %v6159 = vsub.f32 %v2703, %v4616
      %v6160 = vsub.f32 %v2704, %v4616
      %v6161 = vsub.f32 %v2705, %v4625
      %v6162 = vsub.f32 %v2706, %v4625
      %v6163 = vsub.f32 %v2707, %v4625
      %v6164 = vsub.f32 %v2708, %v4625
      %v6165 = vsub.f32 %v2709, %v4634
      %v6166 = vsub.f32 %v2710, %v4634
      %v6167 = vsub.f32 %v2711, %v4634
      %v6168 = vsub.f32 %v2712, %v4634
      %v6169 = vsub.f32 %v2713, %v4643
      %v6170 = vsub.f32 %v2714, %v4643
      %v6171 = vsub.f32 %v2715, %v4643
      %v6172 = vsub.f32 %v2716, %v4643
      %v6173 = vsub.f32 %v2717, %v4652
      %v6174 = vsub.f32 %v2718, %v4652
      %v6175 = vsub.f32 %v2719, %v4652
      %v6176 = vsub.f32 %v2720, %v4652
      %v6177 = vsub.f32 %v2721, %v4661
      %v6178 = vsub.f32 %v2722, %v4661
      %v6179 = vsub.f32 %v2723, %v4661
      %v6180 = vsub.f32 %v2724, %v4661
      %v6181 = vsub.f32 %v2725, %v4670
      %v6182 = vsub.f32 %v2726, %v4670
      %v6183 = vsub.f32 %v2727, %v4670
      %v6184 = vsub.f32 %v2728, %v4670
      %v6185 = vsub.f32 %v2729, %v4679
      %v6186 = vsub.f32 %v2730, %v4679
      %v6187 = vsub.f32 %v2731, %v4679
      %v6188 = vsub.f32 %v2732, %v4679
      %v6189 = vsub.f32 %v2733, %v4688
      %v6190 = vsub.f32 %v2734, %v4688
      %v6191 = vsub.f32 %v2735, %v4688
      %v6192 = vsub.f32 %v2736, %v4688
      %v6193 = vsub.f32 %v2737, %v4697
      %v6194 = vsub.f32 %v2738, %v4697
      %v6195 = vsub.f32 %v2739, %v4697
      %v6196 = vsub.f32 %v2740, %v4697
      %v6197 = vsub.f32 %v2741, %v4706
      %v6198 = vsub.f32 %v2742, %v4706
      %v6199 = vsub.f32 %v2743, %v4706
      %v6200 = vsub.f32 %v2744, %v4706
      %v6201 = vsub.f32 %v2745, %v4715
      %v6202 = vsub.f32 %v2746, %v4715
      %v6203 = vsub.f32 %v2747, %v4715
      %v6204 = vsub.f32 %v2748, %v4715
      %v6205 = vsub.f32 %v2749, %v4724
      %v6206 = vsub.f32 %v2750, %v4724
      %v6207 = vsub.f32 %v2751, %v4724
      %v6208 = vsub.f32 %v2752, %v4724
      %v6209 = vsub.f32 %v2753, %v4733
      %v6210 = vsub.f32 %v2754, %v4733
      %v6211 = vsub.f32 %v2755, %v4733
      %v6212 = vsub.f32 %v2756, %v4733
      %v6213 = vsub.f32 %v2757, %v4742
      %v6214 = vsub.f32 %v2758, %v4742
      %v6215 = vsub.f32 %v2759, %v4742
      %v6216 = vsub.f32 %v2760, %v4742
      %v6217 = vsub.f32 %v2761, %v4751
      %v6218 = vsub.f32 %v2762, %v4751
      %v6219 = vsub.f32 %v2763, %v4751
      %v6220 = vsub.f32 %v2764, %v4751
      %v6221 = vsub.f32 %v2765, %v4760
      %v6222 = vsub.f32 %v2766, %v4760
      %v6223 = vsub.f32 %v2767, %v4760
      %v6224 = vsub.f32 %v2768, %v4760
      %v6225 = vsub.f32 %v2769, %v4769
      %v6226 = vsub.f32 %v2770, %v4769
      %v6227 = vsub.f32 %v2771, %v4769
      %v6228 = vsub.f32 %v2772, %v4769
      %v6229 = vsub.f32 %v2773, %v4778
      %v6230 = vsub.f32 %v2774, %v4778
      %v6231 = vsub.f32 %v2775, %v4778
      %v6232 = vsub.f32 %v2776, %v4778
      %v6233 = vsub.f32 %v2777, %v4787
      %v6234 = vsub.f32 %v2778, %v4787
      %v6235 = vsub.f32 %v2779, %v4787
      %v6236 = vsub.f32 %v2780, %v4787
      %v6237 = vsub.f32 %v2781, %v4796
      %v6238 = vsub.f32 %v2782, %v4796
      %v6239 = vsub.f32 %v2783, %v4796
      %v6240 = vsub.f32 %v2784, %v4796
      %v6241 = vsub.f32 %v2785, %v4805
      %v6242 = vsub.f32 %v2786, %v4805
      %v6243 = vsub.f32 %v2787, %v4805
      %v6244 = vsub.f32 %v2788, %v4805
      %v6245 = vsub.f32 %v2789, %v4814
      %v6246 = vsub.f32 %v2790, %v4814
      %v6247 = vsub.f32 %v2791, %v4814
      %v6248 = vsub.f32 %v2792, %v4814
      %v6249 = vsub.f32 %v2793, %v4823
      %v6250 = vsub.f32 %v2794, %v4823
      %v6251 = vsub.f32 %v2795, %v4823
      %v6252 = vsub.f32 %v2796, %v4823
      %v6253 = vsub.f32 %v2797, %v4832
      %v6254 = vsub.f32 %v2798, %v4832
      %v6255 = vsub.f32 %v2799, %v4832
      %v6256 = vsub.f32 %v2800, %v4832
      %v6257 = vsub.f32 %v2801, %v4841
      %v6258 = vsub.f32 %v2802, %v4841
      %v6259 = vsub.f32 %v2803, %v4841
      %v6260 = vsub.f32 %v2804, %v4841
      %v6261 = vsub.f32 %v2805, %v4850
      %v6262 = vsub.f32 %v2806, %v4850
      %v6263 = vsub.f32 %v2807, %v4850
      %v6264 = vsub.f32 %v2808, %v4850
      %v6265 = vsub.f32 %v2809, %v4859
      %v6266 = vsub.f32 %v2810, %v4859
      %v6267 = vsub.f32 %v2811, %v4859
      %v6268 = vsub.f32 %v2812, %v4859
      %v6269 = vsub.f32 %v2813, %v4868
      %v6270 = vsub.f32 %v2814, %v4868
      %v6271 = vsub.f32 %v2815, %v4868
      %v6272 = vsub.f32 %v2816, %v4868
      %v6273 = vsub.f32 %v2817, %v4877
      %v6274 = vsub.f32 %v2818, %v4877
      %v6275 = vsub.f32 %v2819, %v4877
      %v6276 = vsub.f32 %v2820, %v4877
      %v6277 = vsub.f32 %v2821, %v4886
      %v6278 = vsub.f32 %v2822, %v4886
      %v6279 = vsub.f32 %v2823, %v4886
      %v6280 = vsub.f32 %v2824, %v4886
      %v6281 = vsub.f32 %v2825, %v4895
      %v6282 = vsub.f32 %v2826, %v4895
      %v6283 = vsub.f32 %v2827, %v4895
      %v6284 = vsub.f32 %v2828, %v4895
      %v6285 = vsub.f32 %v2829, %v4904
      %v6286 = vsub.f32 %v2830, %v4904
      %v6287 = vsub.f32 %v2831, %v4904
      %v6288 = vsub.f32 %v2832, %v4904
      %v6289 = vsub.f32 %v2833, %v4913
      %v6290 = vsub.f32 %v2834, %v4913
      %v6291 = vsub.f32 %v2835, %v4913
      %v6292 = vsub.f32 %v2836, %v4913
      %v6293 = vsub.f32 %v2837, %v4922
      %v6294 = vsub.f32 %v2838, %v4922
      %v6295 = vsub.f32 %v2839, %v4922
      %v6296 = vsub.f32 %v2840, %v4922
      %v6297 = vsub.f32 %v2841, %v4931
      %v6298 = vsub.f32 %v2842, %v4931
      %v6299 = vsub.f32 %v2843, %v4931
      %v6300 = vsub.f32 %v2844, %v4931
      %v6301 = vsub.f32 %v2845, %v4940
      %v6302 = vsub.f32 %v2846, %v4940
      %v6303 = vsub.f32 %v2847, %v4940
      %v6304 = vsub.f32 %v2848, %v4940
      %v6305 = vsub.f32 %v2849, %v4949
      %v6306 = vsub.f32 %v2850, %v4949
      %v6307 = vsub.f32 %v2851, %v4949
      %v6308 = vsub.f32 %v2852, %v4949
      %v6309 = vsub.f32 %v2853, %v4958
      %v6310 = vsub.f32 %v2854, %v4958
      %v6311 = vsub.f32 %v2855, %v4958
      %v6312 = vsub.f32 %v2856, %v4958
      %v6313 = vsub.f32 %v2857, %v4967
      %v6314 = vsub.f32 %v2858, %v4967
      %v6315 = vsub.f32 %v2859, %v4967
      %v6316 = vsub.f32 %v2860, %v4967
      %v6317 = vsub.f32 %v2861, %v4976
      %v6318 = vsub.f32 %v2862, %v4976
      %v6319 = vsub.f32 %v2863, %v4976
      %v6320 = vsub.f32 %v2864, %v4976
      %v6321 = vsub.f32 %v2865, %v4985
      %v6322 = vsub.f32 %v2866, %v4985
      %v6323 = vsub.f32 %v2867, %v4985
      %v6324 = vsub.f32 %v2868, %v4985
      %v6325 = vsub.f32 %v2869, %v4994
      %v6326 = vsub.f32 %v2870, %v4994
      %v6327 = vsub.f32 %v2871, %v4994
      %v6328 = vsub.f32 %v2872, %v4994
      %v6329 = vsub.f32 %v2873, %v5003
      %v6330 = vsub.f32 %v2874, %v5003
      %v6331 = vsub.f32 %v2875, %v5003
      %v6332 = vsub.f32 %v2876, %v5003
      %v6333 = vsub.f32 %v2877, %v5012
      %v6334 = vsub.f32 %v2878, %v5012
      %v6335 = vsub.f32 %v2879, %v5012
      %v6336 = vsub.f32 %v2880, %v5012
      %v6337 = vsub.f32 %v2881, %v5021
      %v6338 = vsub.f32 %v2882, %v5021
      %v6339 = vsub.f32 %v2883, %v5021
      %v6340 = vsub.f32 %v2884, %v5021
      %v6341 = vsub.f32 %v2885, %v5030
      %v6342 = vsub.f32 %v2886, %v5030
      %v6343 = vsub.f32 %v2887, %v5030
      %v6344 = vsub.f32 %v2888, %v5030
      %v6345 = vsub.f32 %v2889, %v5039
      %v6346 = vsub.f32 %v2890, %v5039
      %v6347 = vsub.f32 %v2891, %v5039
      %v6348 = vsub.f32 %v2892, %v5039
      %v6349 = vsub.f32 %v2893, %v5048
      %v6350 = vsub.f32 %v2894, %v5048
      %v6351 = vsub.f32 %v2895, %v5048
      %v6352 = vsub.f32 %v2896, %v5048
      %v6353 = vsub.f32 %v2897, %v5057
      %v6354 = vsub.f32 %v2898, %v5057
      %v6355 = vsub.f32 %v2899, %v5057
      %v6356 = vsub.f32 %v2900, %v5057
      %v6357 = vsub.f32 %v2901, %v5066
      %v6358 = vsub.f32 %v2902, %v5066
      %v6359 = vsub.f32 %v2903, %v5066
      %v6360 = vsub.f32 %v2904, %v5066
      %v6361 = vsub.f32 %v2905, %v5075
      %v6362 = vsub.f32 %v2906, %v5075
      %v6363 = vsub.f32 %v2907, %v5075
      %v6364 = vsub.f32 %v2908, %v5075
      %v6365 = vsub.f32 %v2909, %v5084
      %v6366 = vsub.f32 %v2910, %v5084
      %v6367 = vsub.f32 %v2911, %v5084
      %v6368 = vsub.f32 %v2912, %v5084
      %v6369 = vsub.f32 %v2913, %v5093
      %v6370 = vsub.f32 %v2914, %v5093
      %v6371 = vsub.f32 %v2915, %v5093
      %v6372 = vsub.f32 %v2916, %v5093
      %v6373 = vsub.f32 %v2917, %v5102
      %v6374 = vsub.f32 %v2918, %v5102
      %v6375 = vsub.f32 %v2919, %v5102
      %v6376 = vsub.f32 %v2920, %v5102
      %v6377 = vsub.f32 %v2921, %v5111
      %v6378 = vsub.f32 %v2922, %v5111
      %v6379 = vsub.f32 %v2923, %v5111
      %v6380 = vsub.f32 %v2924, %v5111
      %v6381 = vsub.f32 %v2925, %v5120
      %v6382 = vsub.f32 %v2926, %v5120
      %v6383 = vsub.f32 %v2927, %v5120
      %v6384 = vsub.f32 %v2928, %v5120
      %v6385 = vsub.f32 %v2929, %v5129
      %v6386 = vsub.f32 %v2930, %v5129
      %v6387 = vsub.f32 %v2931, %v5129
      %v6388 = vsub.f32 %v2932, %v5129
      %v6389 = vsub.f32 %v2933, %v5138
      %v6390 = vsub.f32 %v2934, %v5138
      %v6391 = vsub.f32 %v2935, %v5138
      %v6392 = vsub.f32 %v2936, %v5138
      %v6393 = vsub.f32 %v2937, %v5147
      %v6394 = vsub.f32 %v2938, %v5147
      %v6395 = vsub.f32 %v2939, %v5147
      %v6396 = vsub.f32 %v2940, %v5147
      %v6397 = vsub.f32 %v2941, %v5156
      %v6398 = vsub.f32 %v2942, %v5156
      %v6399 = vsub.f32 %v2943, %v5156
      %v6400 = vsub.f32 %v2944, %v5156
      %v6401 = vsub.f32 %v2945, %v5165
      %v6402 = vsub.f32 %v2946, %v5165
      %v6403 = vsub.f32 %v2947, %v5165
      %v6404 = vsub.f32 %v2948, %v5165
      %v6405 = vsub.f32 %v2949, %v5174
      %v6406 = vsub.f32 %v2950, %v5174
      %v6407 = vsub.f32 %v2951, %v5174
      %v6408 = vsub.f32 %v2952, %v5174
      %v6409 = vsub.f32 %v2953, %v5183
      %v6410 = vsub.f32 %v2954, %v5183
      %v6411 = vsub.f32 %v2955, %v5183
      %v6412 = vsub.f32 %v2956, %v5183
      %v6413 = vsub.f32 %v2957, %v5192
      %v6414 = vsub.f32 %v2958, %v5192
      %v6415 = vsub.f32 %v2959, %v5192
      %v6416 = vsub.f32 %v2960, %v5192
      %v6417 = vsub.f32 %v2961, %v5201
      %v6418 = vsub.f32 %v2962, %v5201
      %v6419 = vsub.f32 %v2963, %v5201
      %v6420 = vsub.f32 %v2964, %v5201
      %v6421 = vsub.f32 %v2965, %v5210
      %v6422 = vsub.f32 %v2966, %v5210
      %v6423 = vsub.f32 %v2967, %v5210
      %v6424 = vsub.f32 %v2968, %v5210
      %v6425 = vsub.f32 %v2969, %v5219
      %v6426 = vsub.f32 %v2970, %v5219
      %v6427 = vsub.f32 %v2971, %v5219
      %v6428 = vsub.f32 %v2972, %v5219
      %v6429 = vsub.f32 %v2973, %v5228
      %v6430 = vsub.f32 %v2974, %v5228
      %v6431 = vsub.f32 %v2975, %v5228
      %v6432 = vsub.f32 %v2976, %v5228
      %v6433 = vsub.f32 %v2977, %v5237
      %v6434 = vsub.f32 %v2978, %v5237
      %v6435 = vsub.f32 %v2979, %v5237
      %v6436 = vsub.f32 %v2980, %v5237
      %v6437 = vsub.f32 %v2981, %v5246
      %v6438 = vsub.f32 %v2982, %v5246
      %v6439 = vsub.f32 %v2983, %v5246
      %v6440 = vsub.f32 %v2984, %v5246
      %v6441 = vsub.f32 %v2985, %v5255
      %v6442 = vsub.f32 %v2986, %v5255
      %v6443 = vsub.f32 %v2987, %v5255
      %v6444 = vsub.f32 %v2988, %v5255
      %v6445 = vsub.f32 %v2989, %v5264
      %v6446 = vsub.f32 %v2990, %v5264
      %v6447 = vsub.f32 %v2991, %v5264
      %v6448 = vsub.f32 %v2992, %v5264
      %v6449 = vsub.f32 %v2993, %v5273
      %v6450 = vsub.f32 %v2994, %v5273
      %v6451 = vsub.f32 %v2995, %v5273
      %v6452 = vsub.f32 %v2996, %v5273
      %v6453 = vsub.f32 %v2997, %v5282
      %v6454 = vsub.f32 %v2998, %v5282
      %v6455 = vsub.f32 %v2999, %v5282
      %v6456 = vsub.f32 %v3000, %v5282
      %v6457 = vsub.f32 %v3001, %v5291
      %v6458 = vsub.f32 %v3002, %v5291
      %v6459 = vsub.f32 %v3003, %v5291
      %v6460 = vsub.f32 %v3004, %v5291
      %v6461 = vsub.f32 %v3005, %v5300
      %v6462 = vsub.f32 %v3006, %v5300
      %v6463 = vsub.f32 %v3007, %v5300
      %v6464 = vsub.f32 %v3008, %v5300
      %v6465 = vsub.f32 %v3009, %v5309
      %v6466 = vsub.f32 %v3010, %v5309
      %v6467 = vsub.f32 %v3011, %v5309
      %v6468 = vsub.f32 %v3012, %v5309
      %v6469 = vsub.f32 %v3013, %v5318
      %v6470 = vsub.f32 %v3014, %v5318
      %v6471 = vsub.f32 %v3015, %v5318
      %v6472 = vsub.f32 %v3016, %v5318
      %v6473 = vsub.f32 %v3017, %v5327
      %v6474 = vsub.f32 %v3018, %v5327
      %v6475 = vsub.f32 %v3019, %v5327
      %v6476 = vsub.f32 %v3020, %v5327
      %v6477 = vsub.f32 %v3021, %v5336
      %v6478 = vsub.f32 %v3022, %v5336
      %v6479 = vsub.f32 %v3023, %v5336
      %v6480 = vsub.f32 %v3024, %v5336
      %v6481 = vsub.f32 %v3025, %v5345
      %v6482 = vsub.f32 %v3026, %v5345
      %v6483 = vsub.f32 %v3027, %v5345
      %v6484 = vsub.f32 %v3028, %v5345
      %v6485 = vsub.f32 %v3029, %v5354
      %v6486 = vsub.f32 %v3030, %v5354
      %v6487 = vsub.f32 %v3031, %v5354
      %v6488 = vsub.f32 %v3032, %v5354
      %v6489 = vsub.f32 %v3033, %v5363
      %v6490 = vsub.f32 %v3034, %v5363
      %v6491 = vsub.f32 %v3035, %v5363
      %v6492 = vsub.f32 %v3036, %v5363
      %v6493 = vsub.f32 %v3037, %v5372
      %v6494 = vsub.f32 %v3038, %v5372
      %v6495 = vsub.f32 %v3039, %v5372
      %v6496 = vsub.f32 %v3040, %v5372
      %v6497 = vsub.f32 %v3041, %v5381
      %v6498 = vsub.f32 %v3042, %v5381
      %v6499 = vsub.f32 %v3043, %v5381
      %v6500 = vsub.f32 %v3044, %v5381
      %v6501 = vsub.f32 %v3045, %v5390
      %v6502 = vsub.f32 %v3046, %v5390
      %v6503 = vsub.f32 %v3047, %v5390
      %v6504 = vsub.f32 %v3048, %v5390
      %v6505 = vsub.f32 %v3049, %v5399
      %v6506 = vsub.f32 %v3050, %v5399
      %v6507 = vsub.f32 %v3051, %v5399
      %v6508 = vsub.f32 %v3052, %v5399
      %v6509 = vsub.f32 %v3053, %v5408
      %v6510 = vsub.f32 %v3054, %v5408
      %v6511 = vsub.f32 %v3055, %v5408
      %v6512 = vsub.f32 %v3056, %v5408
      %v6513 = vsub.f32 %v3057, %v5417
      %v6514 = vsub.f32 %v3058, %v5417
      %v6515 = vsub.f32 %v3059, %v5417
      %v6516 = vsub.f32 %v3060, %v5417
      %v6517 = vsub.f32 %v3061, %v5426
      %v6518 = vsub.f32 %v3062, %v5426
      %v6519 = vsub.f32 %v3063, %v5426
      %v6520 = vsub.f32 %v3064, %v5426
      %v6521 = vsub.f32 %v3065, %v5435
      %v6522 = vsub.f32 %v3066, %v5435
      %v6523 = vsub.f32 %v3067, %v5435
      %v6524 = vsub.f32 %v3068, %v5435
      %v6525 = vsub.f32 %v3069, %v5444
      %v6526 = vsub.f32 %v3070, %v5444
      %v6527 = vsub.f32 %v3071, %v5444
      %v6528 = vsub.f32 %v3072, %v5444
      %v6529 = vsub.f32 %v3073, %v5453
      %v6530 = vsub.f32 %v3074, %v5453
      %v6531 = vsub.f32 %v3075, %v5453
      %v6532 = vsub.f32 %v3076, %v5453
      %v6533 = vsub.f32 %v3077, %v5462
      %v6534 = vsub.f32 %v3078, %v5462
      %v6535 = vsub.f32 %v3079, %v5462
      %v6536 = vsub.f32 %v3080, %v5462
      %v6537 = vsub.f32 %v3081, %v5471
      %v6538 = vsub.f32 %v3082, %v5471
      %v6539 = vsub.f32 %v3083, %v5471
      %v6540 = vsub.f32 %v3084, %v5471
      %v6541 = vsub.f32 %v3085, %v5480
      %v6542 = vsub.f32 %v3086, %v5480
      %v6543 = vsub.f32 %v3087, %v5480
      %v6544 = vsub.f32 %v3088, %v5480
      %v6545 = vsub.f32 %v3089, %v5489
      %v6546 = vsub.f32 %v3090, %v5489
      %v6547 = vsub.f32 %v3091, %v5489
      %v6548 = vsub.f32 %v3092, %v5489
      %v6549 = vsub.f32 %v3093, %v5498
      %v6550 = vsub.f32 %v3094, %v5498
      %v6551 = vsub.f32 %v3095, %v5498
      %v6552 = vsub.f32 %v3096, %v5498
      %v6553 = vsub.f32 %v3097, %v5507
      %v6554 = vsub.f32 %v3098, %v5507
      %v6555 = vsub.f32 %v3099, %v5507
      %v6556 = vsub.f32 %v3100, %v5507
      %v6557 = vsub.f32 %v3101, %v5516
      %v6558 = vsub.f32 %v3102, %v5516
      %v6559 = vsub.f32 %v3103, %v5516
      %v6560 = vsub.f32 %v3104, %v5516
      %v6561 = vsub.f32 %v3105, %v5525
      %v6562 = vsub.f32 %v3106, %v5525
      %v6563 = vsub.f32 %v3107, %v5525
      %v6564 = vsub.f32 %v3108, %v5525
      %v6565 = vsub.f32 %v3109, %v5534
      %v6566 = vsub.f32 %v3110, %v5534
      %v6567 = vsub.f32 %v3111, %v5534
      %v6568 = vsub.f32 %v3112, %v5534
      %v6569 = vsub.f32 %v3113, %v5543
      %v6570 = vsub.f32 %v3114, %v5543
      %v6571 = vsub.f32 %v3115, %v5543
      %v6572 = vsub.f32 %v3116, %v5543
      %v6573 = vsub.f32 %v3117, %v5552
      %v6574 = vsub.f32 %v3118, %v5552
      %v6575 = vsub.f32 %v3119, %v5552
      %v6576 = vsub.f32 %v3120, %v5552
      %v6577 = vmul.f32 %v6065, 1.442695
      %v6578 = vpow.pop %v6577
      %v6579 = vmul.f32 %v6066, 1.442695
      %v6580 = vpow.pop %v6579
      %v6581 = vmul.f32 %v6067, 1.442695
      %v6582 = vpow.pop %v6581
      %v6583 = vmul.f32 %v6068, 1.442695
      %v6584 = vpow.pop %v6583
      %v6585 = vmul.f32 %v6069, 1.442695
      %v6586 = vpow.pop %v6585
      %v6587 = vmul.f32 %v6070, 1.442695
      %v6588 = vpow.pop %v6587
      %v6589 = vmul.f32 %v6071, 1.442695
      %v6590 = vpow.pop %v6589
      %v6591 = vmul.f32 %v6072, 1.442695
      %v6592 = vpow.pop %v6591
      %v6593 = vmul.f32 %v6073, 1.442695
      %v6594 = vpow.pop %v6593
      %v6595 = vmul.f32 %v6074, 1.442695
      %v6596 = vpow.pop %v6595
      %v6597 = vmul.f32 %v6075, 1.442695
      %v6598 = vpow.pop %v6597
      %v6599 = vmul.f32 %v6076, 1.442695
      %v6600 = vpow.pop %v6599
      %v6601 = vmul.f32 %v6077, 1.442695
      %v6602 = vpow.pop %v6601
      %v6603 = vmul.f32 %v6078, 1.442695
      %v6604 = vpow.pop %v6603
      %v6605 = vmul.f32 %v6079, 1.442695
      %v6606 = vpow.pop %v6605
      %v6607 = vmul.f32 %v6080, 1.442695
      %v6608 = vpow.pop %v6607
      %v6609 = vmul.f32 %v6081, 1.442695
      %v6610 = vpow.pop %v6609
      %v6611 = vmul.f32 %v6082, 1.442695
      %v6612 = vpow.pop %v6611
      %v6613 = vmul.f32 %v6083, 1.442695
      %v6614 = vpow.pop %v6613
      %v6615 = vmul.f32 %v6084, 1.442695
      %v6616 = vpow.pop %v6615
      %v6617 = vmul.f32 %v6085, 1.442695
      %v6618 = vpow.pop %v6617
      %v6619 = vmul.f32 %v6086, 1.442695
      %v6620 = vpow.pop %v6619
      %v6621 = vmul.f32 %v6087, 1.442695
      %v6622 = vpow.pop %v6621
      %v6623 = vmul.f32 %v6088, 1.442695
      %v6624 = vpow.pop %v6623
      %v6625 = vmul.f32 %v6089, 1.442695
      %v6626 = vpow.pop %v6625
      %v6627 = vmul.f32 %v6090, 1.442695
      %v6628 = vpow.pop %v6627
      %v6629 = vmul.f32 %v6091, 1.442695
      %v6630 = vpow.pop %v6629
      %v6631 = vmul.f32 %v6092, 1.442695
      %v6632 = vpow.pop %v6631
      %v6633 = vmul.f32 %v6093, 1.442695
      %v6634 = vpow.pop %v6633
      %v6635 = vmul.f32 %v6094, 1.442695
      %v6636 = vpow.pop %v6635
      %v6637 = vmul.f32 %v6095, 1.442695
      %v6638 = vpow.pop %v6637
      %v6639 = vmul.f32 %v6096, 1.442695
      %v6640 = vpow.pop %v6639
      %v6641 = vmul.f32 %v6097, 1.442695
      %v6642 = vpow.pop %v6641
      %v6643 = vmul.f32 %v6098, 1.442695
      %v6644 = vpow.pop %v6643
      %v6645 = vmul.f32 %v6099, 1.442695
      %v6646 = vpow.pop %v6645
      %v6647 = vmul.f32 %v6100, 1.442695
      %v6648 = vpow.pop %v6647
      %v6649 = vmul.f32 %v6101, 1.442695
      %v6650 = vpow.pop %v6649
      %v6651 = vmul.f32 %v6102, 1.442695
      %v6652 = vpow.pop %v6651
      %v6653 = vmul.f32 %v6103, 1.442695
      %v6654 = vpow.pop %v6653
      %v6655 = vmul.f32 %v6104, 1.442695
      %v6656 = vpow.pop %v6655
      %v6657 = vmul.f32 %v6105, 1.442695
      %v6658 = vpow.pop %v6657
      %v6659 = vmul.f32 %v6106, 1.442695
      %v6660 = vpow.pop %v6659
      %v6661 = vmul.f32 %v6107, 1.442695
      %v6662 = vpow.pop %v6661
      %v6663 = vmul.f32 %v6108, 1.442695
      %v6664 = vpow.pop %v6663
      %v6665 = vmul.f32 %v6109, 1.442695
      %v6666 = vpow.pop %v6665
      %v6667 = vmul.f32 %v6110, 1.442695
      %v6668 = vpow.pop %v6667
      %v6669 = vmul.f32 %v6111, 1.442695
      %v6670 = vpow.pop %v6669
      %v6671 = vmul.f32 %v6112, 1.442695
      %v6672 = vpow.pop %v6671
      %v6673 = vmul.f32 %v6113, 1.442695
      %v6674 = vpow.pop %v6673
      %v6675 = vmul.f32 %v6114, 1.442695
      %v6676 = vpow.pop %v6675
      %v6677 = vmul.f32 %v6115, 1.442695
      %v6678 = vpow.pop %v6677
      %v6679 = vmul.f32 %v6116, 1.442695
      %v6680 = vpow.pop %v6679
      %v6681 = vmul.f32 %v6117, 1.442695
      %v6682 = vpow.pop %v6681
      %v6683 = vmul.f32 %v6118, 1.442695
      %v6684 = vpow.pop %v6683
      %v6685 = vmul.f32 %v6119, 1.442695
      %v6686 = vpow.pop %v6685
      %v6687 = vmul.f32 %v6120, 1.442695
      %v6688 = vpow.pop %v6687
      %v6689 = vmul.f32 %v6121, 1.442695
      %v6690 = vpow.pop %v6689
      %v6691 = vmul.f32 %v6122, 1.442695
      %v6692 = vpow.pop %v6691
      %v6693 = vmul.f32 %v6123, 1.442695
      %v6694 = vpow.pop %v6693
      %v6695 = vmul.f32 %v6124, 1.442695
      %v6696 = vpow.pop %v6695
      %v6697 = vmul.f32 %v6125, 1.442695
      %v6698 = vpow.pop %v6697
      %v6699 = vmul.f32 %v6126, 1.442695
      %v6700 = vpow.pop %v6699
      %v6701 = vmul.f32 %v6127, 1.442695
      %v6702 = vpow.pop %v6701
      %v6703 = vmul.f32 %v6128, 1.442695
      %v6704 = vpow.pop %v6703
      %v6705 = vmul.f32 %v6129, 1.442695
      %v6706 = vpow.pop %v6705
      %v6707 = vmul.f32 %v6130, 1.442695
      %v6708 = vpow.pop %v6707
      %v6709 = vmul.f32 %v6131, 1.442695
      %v6710 = vpow.pop %v6709
      %v6711 = vmul.f32 %v6132, 1.442695
      %v6712 = vpow.pop %v6711
      %v6713 = vmul.f32 %v6133, 1.442695
      %v6714 = vpow.pop %v6713
      %v6715 = vmul.f32 %v6134, 1.442695
      %v6716 = vpow.pop %v6715
      %v6717 = vmul.f32 %v6135, 1.442695
      %v6718 = vpow.pop %v6717
      %v6719 = vmul.f32 %v6136, 1.442695
      %v6720 = vpow.pop %v6719
      %v6721 = vmul.f32 %v6137, 1.442695
      %v6722 = vpow.pop %v6721
      %v6723 = vmul.f32 %v6138, 1.442695
      %v6724 = vpow.pop %v6723
      %v6725 = vmul.f32 %v6139, 1.442695
      %v6726 = vpow.pop %v6725
      %v6727 = vmul.f32 %v6140, 1.442695
      %v6728 = vpow.pop %v6727
      %v6729 = vmul.f32 %v6141, 1.442695
      %v6730 = vpow.pop %v6729
      %v6731 = vmul.f32 %v6142, 1.442695
      %v6732 = vpow.pop %v6731
      %v6733 = vmul.f32 %v6143, 1.442695
      %v6734 = vpow.pop %v6733
      %v6735 = vmul.f32 %v6144, 1.442695
      %v6736 = vpow.pop %v6735
      %v6737 = vmul.f32 %v6145, 1.442695
      %v6738 = vpow.pop %v6737
      %v6739 = vmul.f32 %v6146, 1.442695
      %v6740 = vpow.pop %v6739
      %v6741 = vmul.f32 %v6147, 1.442695
      %v6742 = vpow.pop %v6741
      %v6743 = vmul.f32 %v6148, 1.442695
      %v6744 = vpow.pop %v6743
      %v6745 = vmul.f32 %v6149, 1.442695
      %v6746 = vpow.pop %v6745
      %v6747 = vmul.f32 %v6150, 1.442695
      %v6748 = vpow.pop %v6747
      %v6749 = vmul.f32 %v6151, 1.442695
      %v6750 = vpow.pop %v6749
      %v6751 = vmul.f32 %v6152, 1.442695
      %v6752 = vpow.pop %v6751
      %v6753 = vmul.f32 %v6153, 1.442695
      %v6754 = vpow.pop %v6753
      %v6755 = vmul.f32 %v6154, 1.442695
      %v6756 = vpow.pop %v6755
      %v6757 = vmul.f32 %v6155, 1.442695
      %v6758 = vpow.pop %v6757
      %v6759 = vmul.f32 %v6156, 1.442695
      %v6760 = vpow.pop %v6759
      %v6761 = vmul.f32 %v6157, 1.442695
      %v6762 = vpow.pop %v6761
      %v6763 = vmul.f32 %v6158, 1.442695
      %v6764 = vpow.pop %v6763
      %v6765 = vmul.f32 %v6159, 1.442695
      %v6766 = vpow.pop %v6765
      %v6767 = vmul.f32 %v6160, 1.442695
      %v6768 = vpow.pop %v6767
      %v6769 = vmul.f32 %v6161, 1.442695
      %v6770 = vpow.pop %v6769
      %v6771 = vmul.f32 %v6162, 1.442695
      %v6772 = vpow.pop %v6771
      %v6773 = vmul.f32 %v6163, 1.442695
      %v6774 = vpow.pop %v6773
      %v6775 = vmul.f32 %v6164, 1.442695
      %v6776 = vpow.pop %v6775
      %v6777 = vmul.f32 %v6165, 1.442695
      %v6778 = vpow.pop %v6777
      %v6779 = vmul.f32 %v6166, 1.442695
      %v6780 = vpow.pop %v6779
      %v6781 = vmul.f32 %v6167, 1.442695
      %v6782 = vpow.pop %v6781
      %v6783 = vmul.f32 %v6168, 1.442695
      %v6784 = vpow.pop %v6783
      %v6785 = vmul.f32 %v6169, 1.442695
      %v6786 = vpow.pop %v6785
      %v6787 = vmul.f32 %v6170, 1.442695
      %v6788 = vpow.pop %v6787
      %v6789 = vmul.f32 %v6171, 1.442695
      %v6790 = vpow.pop %v6789
      %v6791 = vmul.f32 %v6172, 1.442695
      %v6792 = vpow.pop %v6791
      %v6793 = vmul.f32 %v6173, 1.442695
      %v6794 = vpow.pop %v6793
      %v6795 = vmul.f32 %v6174, 1.442695
      %v6796 = vpow.pop %v6795
      %v6797 = vmul.f32 %v6175, 1.442695
      %v6798 = vpow.pop %v6797
      %v6799 = vmul.f32 %v6176, 1.442695
      %v6800 = vpow.pop %v6799
      %v6801 = vmul.f32 %v6177, 1.442695
      %v6802 = vpow.pop %v6801
      %v6803 = vmul.f32 %v6178, 1.442695
      %v6804 = vpow.pop %v6803
      %v6805 = vmul.f32 %v6179, 1.442695
      %v6806 = vpow.pop %v6805
      %v6807 = vmul.f32 %v6180, 1.442695
      %v6808 = vpow.pop %v6807
      %v6809 = vmul.f32 %v6181, 1.442695
      %v6810 = vpow.pop %v6809
      %v6811 = vmul.f32 %v6182, 1.442695
      %v6812 = vpow.pop %v6811
      %v6813 = vmul.f32 %v6183, 1.442695
      %v6814 = vpow.pop %v6813
      %v6815 = vmul.f32 %v6184, 1.442695
      %v6816 = vpow.pop %v6815
      %v6817 = vmul.f32 %v6185, 1.442695
      %v6818 = vpow.pop %v6817
      %v6819 = vmul.f32 %v6186, 1.442695
      %v6820 = vpow.pop %v6819
      %v6821 = vmul.f32 %v6187, 1.442695
      %v6822 = vpow.pop %v6821
      %v6823 = vmul.f32 %v6188, 1.442695
      %v6824 = vpow.pop %v6823
      %v6825 = vmul.f32 %v6189, 1.442695
      %v6826 = vpow.pop %v6825
      %v6827 = vmul.f32 %v6190, 1.442695
      %v6828 = vpow.pop %v6827
      %v6829 = vmul.f32 %v6191, 1.442695
      %v6830 = vpow.pop %v6829
      %v6831 = vmul.f32 %v6192, 1.442695
      %v6832 = vpow.pop %v6831
      %v6833 = vmul.f32 %v6193, 1.442695
      %v6834 = vpow.pop %v6833
      %v6835 = vmul.f32 %v6194, 1.442695
      %v6836 = vpow.pop %v6835
      %v6837 = vmul.f32 %v6195, 1.442695
      %v6838 = vpow.pop %v6837
      %v6839 = vmul.f32 %v6196, 1.442695
      %v6840 = vpow.pop %v6839
      %v6841 = vmul.f32 %v6197, 1.442695
      %v6842 = vpow.pop %v6841
      %v6843 = vmul.f32 %v6198, 1.442695
      %v6844 = vpow.pop %v6843
      %v6845 = vmul.f32 %v6199, 1.442695
      %v6846 = vpow.pop %v6845
      %v6847 = vmul.f32 %v6200, 1.442695
      %v6848 = vpow.pop %v6847
      %v6849 = vmul.f32 %v6201, 1.442695
      %v6850 = vpow.pop %v6849
      %v6851 = vmul.f32 %v6202, 1.442695
      %v6852 = vpow.pop %v6851
      %v6853 = vmul.f32 %v6203, 1.442695
      %v6854 = vpow.pop %v6853
      %v6855 = vmul.f32 %v6204, 1.442695
      %v6856 = vpow.pop %v6855
      %v6857 = vmul.f32 %v6205, 1.442695
      %v6858 = vpow.pop %v6857
      %v6859 = vmul.f32 %v6206, 1.442695
      %v6860 = vpow.pop %v6859
      %v6861 = vmul.f32 %v6207, 1.442695
      %v6862 = vpow.pop %v6861
      %v6863 = vmul.f32 %v6208, 1.442695
      %v6864 = vpow.pop %v6863
      %v6865 = vmul.f32 %v6209, 1.442695
      %v6866 = vpow.pop %v6865
      %v6867 = vmul.f32 %v6210, 1.442695
      %v6868 = vpow.pop %v6867
      %v6869 = vmul.f32 %v6211, 1.442695
      %v6870 = vpow.pop %v6869
      %v6871 = vmul.f32 %v6212, 1.442695
      %v6872 = vpow.pop %v6871
      %v6873 = vmul.f32 %v6213, 1.442695
      %v6874 = vpow.pop %v6873
      %v6875 = vmul.f32 %v6214, 1.442695
      %v6876 = vpow.pop %v6875
      %v6877 = vmul.f32 %v6215, 1.442695
      %v6878 = vpow.pop %v6877
      %v6879 = vmul.f32 %v6216, 1.442695
      %v6880 = vpow.pop %v6879
      %v6881 = vmul.f32 %v6217, 1.442695
      %v6882 = vpow.pop %v6881
      %v6883 = vmul.f32 %v6218, 1.442695
      %v6884 = vpow.pop %v6883
      %v6885 = vmul.f32 %v6219, 1.442695
      %v6886 = vpow.pop %v6885
      %v6887 = vmul.f32 %v6220, 1.442695
      %v6888 = vpow.pop %v6887
      %v6889 = vmul.f32 %v6221, 1.442695
      %v6890 = vpow.pop %v6889
      %v6891 = vmul.f32 %v6222, 1.442695
      %v6892 = vpow.pop %v6891
      %v6893 = vmul.f32 %v6223, 1.442695
      %v6894 = vpow.pop %v6893
      %v6895 = vmul.f32 %v6224, 1.442695
      %v6896 = vpow.pop %v6895
      %v6897 = vmul.f32 %v6225, 1.442695
      %v6898 = vpow.pop %v6897
      %v6899 = vmul.f32 %v6226, 1.442695
      %v6900 = vpow.pop %v6899
      %v6901 = vmul.f32 %v6227, 1.442695
      %v6902 = vpow.pop %v6901
      %v6903 = vmul.f32 %v6228, 1.442695
      %v6904 = vpow.pop %v6903
      %v6905 = vmul.f32 %v6229, 1.442695
      %v6906 = vpow.pop %v6905
      %v6907 = vmul.f32 %v6230, 1.442695
      %v6908 = vpow.pop %v6907
      %v6909 = vmul.f32 %v6231, 1.442695
      %v6910 = vpow.pop %v6909
      %v6911 = vmul.f32 %v6232, 1.442695
      %v6912 = vpow.pop %v6911
      %v6913 = vmul.f32 %v6233, 1.442695
      %v6914 = vpow.pop %v6913
      %v6915 = vmul.f32 %v6234, 1.442695
      %v6916 = vpow.pop %v6915
      %v6917 = vmul.f32 %v6235, 1.442695
      %v6918 = vpow.pop %v6917
      %v6919 = vmul.f32 %v6236, 1.442695
      %v6920 = vpow.pop %v6919
      %v6921 = vmul.f32 %v6237, 1.442695
      %v6922 = vpow.pop %v6921
      %v6923 = vmul.f32 %v6238, 1.442695
      %v6924 = vpow.pop %v6923
      %v6925 = vmul.f32 %v6239, 1.442695
      %v6926 = vpow.pop %v6925
      %v6927 = vmul.f32 %v6240, 1.442695
      %v6928 = vpow.pop %v6927
      %v6929 = vmul.f32 %v6241, 1.442695
      %v6930 = vpow.pop %v6929
      %v6931 = vmul.f32 %v6242, 1.442695
      %v6932 = vpow.pop %v6931
      %v6933 = vmul.f32 %v6243, 1.442695
      %v6934 = vpow.pop %v6933
      %v6935 = vmul.f32 %v6244, 1.442695
      %v6936 = vpow.pop %v6935
      %v6937 = vmul.f32 %v6245, 1.442695
      %v6938 = vpow.pop %v6937
      %v6939 = vmul.f32 %v6246, 1.442695
      %v6940 = vpow.pop %v6939
      %v6941 = vmul.f32 %v6247, 1.442695
      %v6942 = vpow.pop %v6941
      %v6943 = vmul.f32 %v6248, 1.442695
      %v6944 = vpow.pop %v6943
      %v6945 = vmul.f32 %v6249, 1.442695
      %v6946 = vpow.pop %v6945
      %v6947 = vmul.f32 %v6250, 1.442695
      %v6948 = vpow.pop %v6947
      %v6949 = vmul.f32 %v6251, 1.442695
      %v6950 = vpow.pop %v6949
      %v6951 = vmul.f32 %v6252, 1.442695
      %v6952 = vpow.pop %v6951
      %v6953 = vmul.f32 %v6253, 1.442695
      %v6954 = vpow.pop %v6953
      %v6955 = vmul.f32 %v6254, 1.442695
      %v6956 = vpow.pop %v6955
      %v6957 = vmul.f32 %v6255, 1.442695
      %v6958 = vpow.pop %v6957
      %v6959 = vmul.f32 %v6256, 1.442695
      %v6960 = vpow.pop %v6959
      %v6961 = vmul.f32 %v6257, 1.442695
      %v6962 = vpow.pop %v6961
      %v6963 = vmul.f32 %v6258, 1.442695
      %v6964 = vpow.pop %v6963
      %v6965 = vmul.f32 %v6259, 1.442695
      %v6966 = vpow.pop %v6965
      %v6967 = vmul.f32 %v6260, 1.442695
      %v6968 = vpow.pop %v6967
      %v6969 = vmul.f32 %v6261, 1.442695
      %v6970 = vpow.pop %v6969
      %v6971 = vmul.f32 %v6262, 1.442695
      %v6972 = vpow.pop %v6971
      %v6973 = vmul.f32 %v6263, 1.442695
      %v6974 = vpow.pop %v6973
      %v6975 = vmul.f32 %v6264, 1.442695
      %v6976 = vpow.pop %v6975
      %v6977 = vmul.f32 %v6265, 1.442695
      %v6978 = vpow.pop %v6977
      %v6979 = vmul.f32 %v6266, 1.442695
      %v6980 = vpow.pop %v6979
      %v6981 = vmul.f32 %v6267, 1.442695
      %v6982 = vpow.pop %v6981
      %v6983 = vmul.f32 %v6268, 1.442695
      %v6984 = vpow.pop %v6983
      %v6985 = vmul.f32 %v6269, 1.442695
      %v6986 = vpow.pop %v6985
      %v6987 = vmul.f32 %v6270, 1.442695
      %v6988 = vpow.pop %v6987
      %v6989 = vmul.f32 %v6271, 1.442695
      %v6990 = vpow.pop %v6989
      %v6991 = vmul.f32 %v6272, 1.442695
      %v6992 = vpow.pop %v6991
      %v6993 = vmul.f32 %v6273, 1.442695
      %v6994 = vpow.pop %v6993
      %v6995 = vmul.f32 %v6274, 1.442695
      %v6996 = vpow.pop %v6995
      %v6997 = vmul.f32 %v6275, 1.442695
      %v6998 = vpow.pop %v6997
      %v6999 = vmul.f32 %v6276, 1.442695
      %v7000 = vpow.pop %v6999
      %v7001 = vmul.f32 %v6277, 1.442695
      %v7002 = vpow.pop %v7001
      %v7003 = vmul.f32 %v6278, 1.442695
      %v7004 = vpow.pop %v7003
      %v7005 = vmul.f32 %v6279, 1.442695
      %v7006 = vpow.pop %v7005
      %v7007 = vmul.f32 %v6280, 1.442695
      %v7008 = vpow.pop %v7007
      %v7009 = vmul.f32 %v6281, 1.442695
      %v7010 = vpow.pop %v7009
      %v7011 = vmul.f32 %v6282, 1.442695
      %v7012 = vpow.pop %v7011
      %v7013 = vmul.f32 %v6283, 1.442695
      %v7014 = vpow.pop %v7013
      %v7015 = vmul.f32 %v6284, 1.442695
      %v7016 = vpow.pop %v7015
      %v7017 = vmul.f32 %v6285, 1.442695
      %v7018 = vpow.pop %v7017
      %v7019 = vmul.f32 %v6286, 1.442695
      %v7020 = vpow.pop %v7019
      %v7021 = vmul.f32 %v6287, 1.442695
      %v7022 = vpow.pop %v7021
      %v7023 = vmul.f32 %v6288, 1.442695
      %v7024 = vpow.pop %v7023
      %v7025 = vmul.f32 %v6289, 1.442695
      %v7026 = vpow.pop %v7025
      %v7027 = vmul.f32 %v6290, 1.442695
      %v7028 = vpow.pop %v7027
      %v7029 = vmul.f32 %v6291, 1.442695
      %v7030 = vpow.pop %v7029
      %v7031 = vmul.f32 %v6292, 1.442695
      %v7032 = vpow.pop %v7031
      %v7033 = vmul.f32 %v6293, 1.442695
      %v7034 = vpow.pop %v7033
      %v7035 = vmul.f32 %v6294, 1.442695
      %v7036 = vpow.pop %v7035
      %v7037 = vmul.f32 %v6295, 1.442695
      %v7038 = vpow.pop %v7037
      %v7039 = vmul.f32 %v6296, 1.442695
      %v7040 = vpow.pop %v7039
      %v7041 = vmul.f32 %v6297, 1.442695
      %v7042 = vpow.pop %v7041
      %v7043 = vmul.f32 %v6298, 1.442695
      %v7044 = vpow.pop %v7043
      %v7045 = vmul.f32 %v6299, 1.442695
      %v7046 = vpow.pop %v7045
      %v7047 = vmul.f32 %v6300, 1.442695
      %v7048 = vpow.pop %v7047
      %v7049 = vmul.f32 %v6301, 1.442695
      %v7050 = vpow.pop %v7049
      %v7051 = vmul.f32 %v6302, 1.442695
      %v7052 = vpow.pop %v7051
      %v7053 = vmul.f32 %v6303, 1.442695
      %v7054 = vpow.pop %v7053
      %v7055 = vmul.f32 %v6304, 1.442695
      %v7056 = vpow.pop %v7055
      %v7057 = vmul.f32 %v6305, 1.442695
      %v7058 = vpow.pop %v7057
      %v7059 = vmul.f32 %v6306, 1.442695
      %v7060 = vpow.pop %v7059
      %v7061 = vmul.f32 %v6307, 1.442695
      %v7062 = vpow.pop %v7061
      %v7063 = vmul.f32 %v6308, 1.442695
      %v7064 = vpow.pop %v7063
      %v7065 = vmul.f32 %v6309, 1.442695
      %v7066 = vpow.pop %v7065
      %v7067 = vmul.f32 %v6310, 1.442695
      %v7068 = vpow.pop %v7067
      %v7069 = vmul.f32 %v6311, 1.442695
      %v7070 = vpow.pop %v7069
      %v7071 = vmul.f32 %v6312, 1.442695
      %v7072 = vpow.pop %v7071
      %v7073 = vmul.f32 %v6313, 1.442695
      %v7074 = vpow.pop %v7073
      %v7075 = vmul.f32 %v6314, 1.442695
      %v7076 = vpow.pop %v7075
      %v7077 = vmul.f32 %v6315, 1.442695
      %v7078 = vpow.pop %v7077
      %v7079 = vmul.f32 %v6316, 1.442695
      %v7080 = vpow.pop %v7079
      %v7081 = vmul.f32 %v6317, 1.442695
      %v7082 = vpow.pop %v7081
      %v7083 = vmul.f32 %v6318, 1.442695
      %v7084 = vpow.pop %v7083
      %v7085 = vmul.f32 %v6319, 1.442695
      %v7086 = vpow.pop %v7085
      %v7087 = vmul.f32 %v6320, 1.442695
      %v7088 = vpow.pop %v7087
      %v7089 = vmul.f32 %v6321, 1.442695
      %v7090 = vpow.pop %v7089
      %v7091 = vmul.f32 %v6322, 1.442695
      %v7092 = vpow.pop %v7091
      %v7093 = vmul.f32 %v6323, 1.442695
      %v7094 = vpow.pop %v7093
      %v7095 = vmul.f32 %v6324, 1.442695
      %v7096 = vpow.pop %v7095
      %v7097 = vmul.f32 %v6325, 1.442695
      %v7098 = vpow.pop %v7097
      %v7099 = vmul.f32 %v6326, 1.442695
      %v7100 = vpow.pop %v7099
      %v7101 = vmul.f32 %v6327, 1.442695
      %v7102 = vpow.pop %v7101
      %v7103 = vmul.f32 %v6328, 1.442695
      %v7104 = vpow.pop %v7103
      %v7105 = vmul.f32 %v6329, 1.442695
      %v7106 = vpow.pop %v7105
      %v7107 = vmul.f32 %v6330, 1.442695
      %v7108 = vpow.pop %v7107
      %v7109 = vmul.f32 %v6331, 1.442695
      %v7110 = vpow.pop %v7109
      %v7111 = vmul.f32 %v6332, 1.442695
      %v7112 = vpow.pop %v7111
      %v7113 = vmul.f32 %v6333, 1.442695
      %v7114 = vpow.pop %v7113
      %v7115 = vmul.f32 %v6334, 1.442695
      %v7116 = vpow.pop %v7115
      %v7117 = vmul.f32 %v6335, 1.442695
      %v7118 = vpow.pop %v7117
      %v7119 = vmul.f32 %v6336, 1.442695
      %v7120 = vpow.pop %v7119
      %v7121 = vmul.f32 %v6337, 1.442695
      %v7122 = vpow.pop %v7121
      %v7123 = vmul.f32 %v6338, 1.442695
      %v7124 = vpow.pop %v7123
      %v7125 = vmul.f32 %v6339, 1.442695
      %v7126 = vpow.pop %v7125
      %v7127 = vmul.f32 %v6340, 1.442695
      %v7128 = vpow.pop %v7127
      %v7129 = vmul.f32 %v6341, 1.442695
      %v7130 = vpow.pop %v7129
      %v7131 = vmul.f32 %v6342, 1.442695
      %v7132 = vpow.pop %v7131
      %v7133 = vmul.f32 %v6343, 1.442695
      %v7134 = vpow.pop %v7133
      %v7135 = vmul.f32 %v6344, 1.442695
      %v7136 = vpow.pop %v7135
      %v7137 = vmul.f32 %v6345, 1.442695
      %v7138 = vpow.pop %v7137
      %v7139 = vmul.f32 %v6346, 1.442695
      %v7140 = vpow.pop %v7139
      %v7141 = vmul.f32 %v6347, 1.442695
      %v7142 = vpow.pop %v7141
      %v7143 = vmul.f32 %v6348, 1.442695
      %v7144 = vpow.pop %v7143
      %v7145 = vmul.f32 %v6349, 1.442695
      %v7146 = vpow.pop %v7145
      %v7147 = vmul.f32 %v6350, 1.442695
      %v7148 = vpow.pop %v7147
      %v7149 = vmul.f32 %v6351, 1.442695
      %v7150 = vpow.pop %v7149
      %v7151 = vmul.f32 %v6352, 1.442695
      %v7152 = vpow.pop %v7151
      %v7153 = vmul.f32 %v6353, 1.442695
      %v7154 = vpow.pop %v7153
      %v7155 = vmul.f32 %v6354, 1.442695
      %v7156 = vpow.pop %v7155
      %v7157 = vmul.f32 %v6355, 1.442695
      %v7158 = vpow.pop %v7157
      %v7159 = vmul.f32 %v6356, 1.442695
      %v7160 = vpow.pop %v7159
      %v7161 = vmul.f32 %v6357, 1.442695
      %v7162 = vpow.pop %v7161
      %v7163 = vmul.f32 %v6358, 1.442695
      %v7164 = vpow.pop %v7163
      %v7165 = vmul.f32 %v6359, 1.442695
      %v7166 = vpow.pop %v7165
      %v7167 = vmul.f32 %v6360, 1.442695
      %v7168 = vpow.pop %v7167
      %v7169 = vmul.f32 %v6361, 1.442695
      %v7170 = vpow.pop %v7169
      %v7171 = vmul.f32 %v6362, 1.442695
      %v7172 = vpow.pop %v7171
      %v7173 = vmul.f32 %v6363, 1.442695
      %v7174 = vpow.pop %v7173
      %v7175 = vmul.f32 %v6364, 1.442695
      %v7176 = vpow.pop %v7175
      %v7177 = vmul.f32 %v6365, 1.442695
      %v7178 = vpow.pop %v7177
      %v7179 = vmul.f32 %v6366, 1.442695
      %v7180 = vpow.pop %v7179
      %v7181 = vmul.f32 %v6367, 1.442695
      %v7182 = vpow.pop %v7181
      %v7183 = vmul.f32 %v6368, 1.442695
      %v7184 = vpow.pop %v7183
      %v7185 = vmul.f32 %v6369, 1.442695
      %v7186 = vpow.pop %v7185
      %v7187 = vmul.f32 %v6370, 1.442695
      %v7188 = vpow.pop %v7187
      %v7189 = vmul.f32 %v6371, 1.442695
      %v7190 = vpow.pop %v7189
      %v7191 = vmul.f32 %v6372, 1.442695
      %v7192 = vpow.pop %v7191
      %v7193 = vmul.f32 %v6373, 1.442695
      %v7194 = vpow.pop %v7193
      %v7195 = vmul.f32 %v6374, 1.442695
      %v7196 = vpow.pop %v7195
      %v7197 = vmul.f32 %v6375, 1.442695
      %v7198 = vpow.pop %v7197
      %v7199 = vmul.f32 %v6376, 1.442695
      %v7200 = vpow.pop %v7199
      %v7201 = vmul.f32 %v6377, 1.442695
      %v7202 = vpow.pop %v7201
      %v7203 = vmul.f32 %v6378, 1.442695
      %v7204 = vpow.pop %v7203
      %v7205 = vmul.f32 %v6379, 1.442695
      %v7206 = vpow.pop %v7205
      %v7207 = vmul.f32 %v6380, 1.442695
      %v7208 = vpow.pop %v7207
      %v7209 = vmul.f32 %v6381, 1.442695
      %v7210 = vpow.pop %v7209
      %v7211 = vmul.f32 %v6382, 1.442695
      %v7212 = vpow.pop %v7211
      %v7213 = vmul.f32 %v6383, 1.442695
      %v7214 = vpow.pop %v7213
      %v7215 = vmul.f32 %v6384, 1.442695
      %v7216 = vpow.pop %v7215
      %v7217 = vmul.f32 %v6385, 1.442695
      %v7218 = vpow.pop %v7217
      %v7219 = vmul.f32 %v6386, 1.442695
      %v7220 = vpow.pop %v7219
      %v7221 = vmul.f32 %v6387, 1.442695
      %v7222 = vpow.pop %v7221
      %v7223 = vmul.f32 %v6388, 1.442695
      %v7224 = vpow.pop %v7223
      %v7225 = vmul.f32 %v6389, 1.442695
      %v7226 = vpow.pop %v7225
      %v7227 = vmul.f32 %v6390, 1.442695
      %v7228 = vpow.pop %v7227
      %v7229 = vmul.f32 %v6391, 1.442695
      %v7230 = vpow.pop %v7229
      %v7231 = vmul.f32 %v6392, 1.442695
      %v7232 = vpow.pop %v7231
      %v7233 = vmul.f32 %v6393, 1.442695
      %v7234 = vpow.pop %v7233
      %v7235 = vmul.f32 %v6394, 1.442695
      %v7236 = vpow.pop %v7235
      %v7237 = vmul.f32 %v6395, 1.442695
      %v7238 = vpow.pop %v7237
      %v7239 = vmul.f32 %v6396, 1.442695
      %v7240 = vpow.pop %v7239
      %v7241 = vmul.f32 %v6397, 1.442695
      %v7242 = vpow.pop %v7241
      %v7243 = vmul.f32 %v6398, 1.442695
      %v7244 = vpow.pop %v7243
      %v7245 = vmul.f32 %v6399, 1.442695
      %v7246 = vpow.pop %v7245
      %v7247 = vmul.f32 %v6400, 1.442695
      %v7248 = vpow.pop %v7247
      %v7249 = vmul.f32 %v6401, 1.442695
      %v7250 = vpow.pop %v7249
      %v7251 = vmul.f32 %v6402, 1.442695
      %v7252 = vpow.pop %v7251
      %v7253 = vmul.f32 %v6403, 1.442695
      %v7254 = vpow.pop %v7253
      %v7255 = vmul.f32 %v6404, 1.442695
      %v7256 = vpow.pop %v7255
      %v7257 = vmul.f32 %v6405, 1.442695
      %v7258 = vpow.pop %v7257
      %v7259 = vmul.f32 %v6406, 1.442695
      %v7260 = vpow.pop %v7259
      %v7261 = vmul.f32 %v6407, 1.442695
      %v7262 = vpow.pop %v7261
      %v7263 = vmul.f32 %v6408, 1.442695
      %v7264 = vpow.pop %v7263
      %v7265 = vmul.f32 %v6409, 1.442695
      %v7266 = vpow.pop %v7265
      %v7267 = vmul.f32 %v6410, 1.442695
      %v7268 = vpow.pop %v7267
      %v7269 = vmul.f32 %v6411, 1.442695
      %v7270 = vpow.pop %v7269
      %v7271 = vmul.f32 %v6412, 1.442695
      %v7272 = vpow.pop %v7271
      %v7273 = vmul.f32 %v6413, 1.442695
      %v7274 = vpow.pop %v7273
      %v7275 = vmul.f32 %v6414, 1.442695
      %v7276 = vpow.pop %v7275
      %v7277 = vmul.f32 %v6415, 1.442695
      %v7278 = vpow.pop %v7277
      %v7279 = vmul.f32 %v6416, 1.442695
      %v7280 = vpow.pop %v7279
      %v7281 = vmul.f32 %v6417, 1.442695
      %v7282 = vpow.pop %v7281
      %v7283 = vmul.f32 %v6418, 1.442695
      %v7284 = vpow.pop %v7283
      %v7285 = vmul.f32 %v6419, 1.442695
      %v7286 = vpow.pop %v7285
      %v7287 = vmul.f32 %v6420, 1.442695
      %v7288 = vpow.pop %v7287
      %v7289 = vmul.f32 %v6421, 1.442695
      %v7290 = vpow.pop %v7289
      %v7291 = vmul.f32 %v6422, 1.442695
      %v7292 = vpow.pop %v7291
      %v7293 = vmul.f32 %v6423, 1.442695
      %v7294 = vpow.pop %v7293
      %v7295 = vmul.f32 %v6424, 1.442695
      %v7296 = vpow.pop %v7295
      %v7297 = vmul.f32 %v6425, 1.442695
      %v7298 = vpow.pop %v7297
      %v7299 = vmul.f32 %v6426, 1.442695
      %v7300 = vpow.pop %v7299
      %v7301 = vmul.f32 %v6427, 1.442695
      %v7302 = vpow.pop %v7301
      %v7303 = vmul.f32 %v6428, 1.442695
      %v7304 = vpow.pop %v7303
      %v7305 = vmul.f32 %v6429, 1.442695
      %v7306 = vpow.pop %v7305
      %v7307 = vmul.f32 %v6430, 1.442695
      %v7308 = vpow.pop %v7307
      %v7309 = vmul.f32 %v6431, 1.442695
      %v7310 = vpow.pop %v7309
      %v7311 = vmul.f32 %v6432, 1.442695
      %v7312 = vpow.pop %v7311
      %v7313 = vmul.f32 %v6433, 1.442695
      %v7314 = vpow.pop %v7313
      %v7315 = vmul.f32 %v6434, 1.442695
      %v7316 = vpow.pop %v7315
      %v7317 = vmul.f32 %v6435, 1.442695
      %v7318 = vpow.pop %v7317
      %v7319 = vmul.f32 %v6436, 1.442695
      %v7320 = vpow.pop %v7319
      %v7321 = vmul.f32 %v6437, 1.442695
      %v7322 = vpow.pop %v7321
      %v7323 = vmul.f32 %v6438, 1.442695
      %v7324 = vpow.pop %v7323
      %v7325 = vmul.f32 %v6439, 1.442695
      %v7326 = vpow.pop %v7325
      %v7327 = vmul.f32 %v6440, 1.442695
      %v7328 = vpow.pop %v7327
      %v7329 = vmul.f32 %v6441, 1.442695
      %v7330 = vpow.pop %v7329
      %v7331 = vmul.f32 %v6442, 1.442695
      %v7332 = vpow.pop %v7331
      %v7333 = vmul.f32 %v6443, 1.442695
      %v7334 = vpow.pop %v7333
      %v7335 = vmul.f32 %v6444, 1.442695
      %v7336 = vpow.pop %v7335
      %v7337 = vmul.f32 %v6445, 1.442695
      %v7338 = vpow.pop %v7337
      %v7339 = vmul.f32 %v6446, 1.442695
      %v7340 = vpow.pop %v7339
      %v7341 = vmul.f32 %v6447, 1.442695
      %v7342 = vpow.pop %v7341
      %v7343 = vmul.f32 %v6448, 1.442695
      %v7344 = vpow.pop %v7343
      %v7345 = vmul.f32 %v6449, 1.442695
      %v7346 = vpow.pop %v7345
      %v7347 = vmul.f32 %v6450, 1.442695
      %v7348 = vpow.pop %v7347
      %v7349 = vmul.f32 %v6451, 1.442695
      %v7350 = vpow.pop %v7349
      %v7351 = vmul.f32 %v6452, 1.442695
      %v7352 = vpow.pop %v7351
      %v7353 = vmul.f32 %v6453, 1.442695
      %v7354 = vpow.pop %v7353
      %v7355 = vmul.f32 %v6454, 1.442695
      %v7356 = vpow.pop %v7355
      %v7357 = vmul.f32 %v6455, 1.442695
      %v7358 = vpow.pop %v7357
      %v7359 = vmul.f32 %v6456, 1.442695
      %v7360 = vpow.pop %v7359
      %v7361 = vmul.f32 %v6457, 1.442695
      %v7362 = vpow.pop %v7361
      %v7363 = vmul.f32 %v6458, 1.442695
      %v7364 = vpow.pop %v7363
      %v7365 = vmul.f32 %v6459, 1.442695
      %v7366 = vpow.pop %v7365
      %v7367 = vmul.f32 %v6460, 1.442695
      %v7368 = vpow.pop %v7367
      %v7369 = vmul.f32 %v6461, 1.442695
      %v7370 = vpow.pop %v7369
      %v7371 = vmul.f32 %v6462, 1.442695
      %v7372 = vpow.pop %v7371
      %v7373 = vmul.f32 %v6463, 1.442695
      %v7374 = vpow.pop %v7373
      %v7375 = vmul.f32 %v6464, 1.442695
      %v7376 = vpow.pop %v7375
      %v7377 = vmul.f32 %v6465, 1.442695
      %v7378 = vpow.pop %v7377
      %v7379 = vmul.f32 %v6466, 1.442695
      %v7380 = vpow.pop %v7379
      %v7381 = vmul.f32 %v6467, 1.442695
      %v7382 = vpow.pop %v7381
      %v7383 = vmul.f32 %v6468, 1.442695
      %v7384 = vpow.pop %v7383
      %v7385 = vmul.f32 %v6469, 1.442695
      %v7386 = vpow.pop %v7385
      %v7387 = vmul.f32 %v6470, 1.442695
      %v7388 = vpow.pop %v7387
      %v7389 = vmul.f32 %v6471, 1.442695
      %v7390 = vpow.pop %v7389
      %v7391 = vmul.f32 %v6472, 1.442695
      %v7392 = vpow.pop %v7391
      %v7393 = vmul.f32 %v6473, 1.442695
      %v7394 = vpow.pop %v7393
      %v7395 = vmul.f32 %v6474, 1.442695
      %v7396 = vpow.pop %v7395
      %v7397 = vmul.f32 %v6475, 1.442695
      %v7398 = vpow.pop %v7397
      %v7399 = vmul.f32 %v6476, 1.442695
      %v7400 = vpow.pop %v7399
      %v7401 = vmul.f32 %v6477, 1.442695
      %v7402 = vpow.pop %v7401
      %v7403 = vmul.f32 %v6478, 1.442695
      %v7404 = vpow.pop %v7403
      %v7405 = vmul.f32 %v6479, 1.442695
      %v7406 = vpow.pop %v7405
      %v7407 = vmul.f32 %v6480, 1.442695
      %v7408 = vpow.pop %v7407
      %v7409 = vmul.f32 %v6481, 1.442695
      %v7410 = vpow.pop %v7409
      %v7411 = vmul.f32 %v6482, 1.442695
      %v7412 = vpow.pop %v7411
      %v7413 = vmul.f32 %v6483, 1.442695
      %v7414 = vpow.pop %v7413
      %v7415 = vmul.f32 %v6484, 1.442695
      %v7416 = vpow.pop %v7415
      %v7417 = vmul.f32 %v6485, 1.442695
      %v7418 = vpow.pop %v7417
      %v7419 = vmul.f32 %v6486, 1.442695
      %v7420 = vpow.pop %v7419
      %v7421 = vmul.f32 %v6487, 1.442695
      %v7422 = vpow.pop %v7421
      %v7423 = vmul.f32 %v6488, 1.442695
      %v7424 = vpow.pop %v7423
      %v7425 = vmul.f32 %v6489, 1.442695
      %v7426 = vpow.pop %v7425
      %v7427 = vmul.f32 %v6490, 1.442695
      %v7428 = vpow.pop %v7427
      %v7429 = vmul.f32 %v6491, 1.442695
      %v7430 = vpow.pop %v7429
      %v7431 = vmul.f32 %v6492, 1.442695
      %v7432 = vpow.pop %v7431
      %v7433 = vmul.f32 %v6493, 1.442695
      %v7434 = vpow.pop %v7433
      %v7435 = vmul.f32 %v6494, 1.442695
      %v7436 = vpow.pop %v7435
      %v7437 = vmul.f32 %v6495, 1.442695
      %v7438 = vpow.pop %v7437
      %v7439 = vmul.f32 %v6496, 1.442695
      %v7440 = vpow.pop %v7439
      %v7441 = vmul.f32 %v6497, 1.442695
      %v7442 = vpow.pop %v7441
      %v7443 = vmul.f32 %v6498, 1.442695
      %v7444 = vpow.pop %v7443
      %v7445 = vmul.f32 %v6499, 1.442695
      %v7446 = vpow.pop %v7445
      %v7447 = vmul.f32 %v6500, 1.442695
      %v7448 = vpow.pop %v7447
      %v7449 = vmul.f32 %v6501, 1.442695
      %v7450 = vpow.pop %v7449
      %v7451 = vmul.f32 %v6502, 1.442695
      %v7452 = vpow.pop %v7451
      %v7453 = vmul.f32 %v6503, 1.442695
      %v7454 = vpow.pop %v7453
      %v7455 = vmul.f32 %v6504, 1.442695
      %v7456 = vpow.pop %v7455
      %v7457 = vmul.f32 %v6505, 1.442695
      %v7458 = vpow.pop %v7457
      %v7459 = vmul.f32 %v6506, 1.442695
      %v7460 = vpow.pop %v7459
      %v7461 = vmul.f32 %v6507, 1.442695
      %v7462 = vpow.pop %v7461
      %v7463 = vmul.f32 %v6508, 1.442695
      %v7464 = vpow.pop %v7463
      %v7465 = vmul.f32 %v6509, 1.442695
      %v7466 = vpow.pop %v7465
      %v7467 = vmul.f32 %v6510, 1.442695
      %v7468 = vpow.pop %v7467
      %v7469 = vmul.f32 %v6511, 1.442695
      %v7470 = vpow.pop %v7469
      %v7471 = vmul.f32 %v6512, 1.442695
      %v7472 = vpow.pop %v7471
      %v7473 = vmul.f32 %v6513, 1.442695
      %v7474 = vpow.pop %v7473
      %v7475 = vmul.f32 %v6514, 1.442695
      %v7476 = vpow.pop %v7475
      %v7477 = vmul.f32 %v6515, 1.442695
      %v7478 = vpow.pop %v7477
      %v7479 = vmul.f32 %v6516, 1.442695
      %v7480 = vpow.pop %v7479
      %v7481 = vmul.f32 %v6517, 1.442695
      %v7482 = vpow.pop %v7481
      %v7483 = vmul.f32 %v6518, 1.442695
      %v7484 = vpow.pop %v7483
      %v7485 = vmul.f32 %v6519, 1.442695
      %v7486 = vpow.pop %v7485
      %v7487 = vmul.f32 %v6520, 1.442695
      %v7488 = vpow.pop %v7487
      %v7489 = vmul.f32 %v6521, 1.442695
      %v7490 = vpow.pop %v7489
      %v7491 = vmul.f32 %v6522, 1.442695
      %v7492 = vpow.pop %v7491
      %v7493 = vmul.f32 %v6523, 1.442695
      %v7494 = vpow.pop %v7493
      %v7495 = vmul.f32 %v6524, 1.442695
      %v7496 = vpow.pop %v7495
      %v7497 = vmul.f32 %v6525, 1.442695
      %v7498 = vpow.pop %v7497
      %v7499 = vmul.f32 %v6526, 1.442695
      %v7500 = vpow.pop %v7499
      %v7501 = vmul.f32 %v6527, 1.442695
      %v7502 = vpow.pop %v7501
      %v7503 = vmul.f32 %v6528, 1.442695
      %v7504 = vpow.pop %v7503
      %v7505 = vmul.f32 %v6529, 1.442695
      %v7506 = vpow.pop %v7505
      %v7507 = vmul.f32 %v6530, 1.442695
      %v7508 = vpow.pop %v7507
      %v7509 = vmul.f32 %v6531, 1.442695
      %v7510 = vpow.pop %v7509
      %v7511 = vmul.f32 %v6532, 1.442695
      %v7512 = vpow.pop %v7511
      %v7513 = vmul.f32 %v6533, 1.442695
      %v7514 = vpow.pop %v7513
      %v7515 = vmul.f32 %v6534, 1.442695
      %v7516 = vpow.pop %v7515
      %v7517 = vmul.f32 %v6535, 1.442695
      %v7518 = vpow.pop %v7517
      %v7519 = vmul.f32 %v6536, 1.442695
      %v7520 = vpow.pop %v7519
      %v7521 = vmul.f32 %v6537, 1.442695
      %v7522 = vpow.pop %v7521
      %v7523 = vmul.f32 %v6538, 1.442695
      %v7524 = vpow.pop %v7523
      %v7525 = vmul.f32 %v6539, 1.442695
      %v7526 = vpow.pop %v7525
      %v7527 = vmul.f32 %v6540, 1.442695
      %v7528 = vpow.pop %v7527
      %v7529 = vmul.f32 %v6541, 1.442695
      %v7530 = vpow.pop %v7529
      %v7531 = vmul.f32 %v6542, 1.442695
      %v7532 = vpow.pop %v7531
      %v7533 = vmul.f32 %v6543, 1.442695
      %v7534 = vpow.pop %v7533
      %v7535 = vmul.f32 %v6544, 1.442695
      %v7536 = vpow.pop %v7535
      %v7537 = vmul.f32 %v6545, 1.442695
      %v7538 = vpow.pop %v7537
      %v7539 = vmul.f32 %v6546, 1.442695
      %v7540 = vpow.pop %v7539
      %v7541 = vmul.f32 %v6547, 1.442695
      %v7542 = vpow.pop %v7541
      %v7543 = vmul.f32 %v6548, 1.442695
      %v7544 = vpow.pop %v7543
      %v7545 = vmul.f32 %v6549, 1.442695
      %v7546 = vpow.pop %v7545
      %v7547 = vmul.f32 %v6550, 1.442695
      %v7548 = vpow.pop %v7547
      %v7549 = vmul.f32 %v6551, 1.442695
      %v7550 = vpow.pop %v7549
      %v7551 = vmul.f32 %v6552, 1.442695
      %v7552 = vpow.pop %v7551
      %v7553 = vmul.f32 %v6553, 1.442695
      %v7554 = vpow.pop %v7553
      %v7555 = vmul.f32 %v6554, 1.442695
      %v7556 = vpow.pop %v7555
      %v7557 = vmul.f32 %v6555, 1.442695
      %v7558 = vpow.pop %v7557
      %v7559 = vmul.f32 %v6556, 1.442695
      %v7560 = vpow.pop %v7559
      %v7561 = vmul.f32 %v6557, 1.442695
      %v7562 = vpow.pop %v7561
      %v7563 = vmul.f32 %v6558, 1.442695
      %v7564 = vpow.pop %v7563
      %v7565 = vmul.f32 %v6559, 1.442695
      %v7566 = vpow.pop %v7565
      %v7567 = vmul.f32 %v6560, 1.442695
      %v7568 = vpow.pop %v7567
      %v7569 = vmul.f32 %v6561, 1.442695
      %v7570 = vpow.pop %v7569
      %v7571 = vmul.f32 %v6562, 1.442695
      %v7572 = vpow.pop %v7571
      %v7573 = vmul.f32 %v6563, 1.442695
      %v7574 = vpow.pop %v7573
      %v7575 = vmul.f32 %v6564, 1.442695
      %v7576 = vpow.pop %v7575
      %v7577 = vmul.f32 %v6565, 1.442695
      %v7578 = vpow.pop %v7577
      %v7579 = vmul.f32 %v6566, 1.442695
      %v7580 = vpow.pop %v7579
      %v7581 = vmul.f32 %v6567, 1.442695
      %v7582 = vpow.pop %v7581
      %v7583 = vmul.f32 %v6568, 1.442695
      %v7584 = vpow.pop %v7583
      %v7585 = vmul.f32 %v6569, 1.442695
      %v7586 = vpow.pop %v7585
      %v7587 = vmul.f32 %v6570, 1.442695
      %v7588 = vpow.pop %v7587
      %v7589 = vmul.f32 %v6571, 1.442695
      %v7590 = vpow.pop %v7589
      %v7591 = vmul.f32 %v6572, 1.442695
      %v7592 = vpow.pop %v7591
      %v7593 = vmul.f32 %v6573, 1.442695
      %v7594 = vpow.pop %v7593
      %v7595 = vmul.f32 %v6574, 1.442695
      %v7596 = vpow.pop %v7595
      %v7597 = vmul.f32 %v6575, 1.442695
      %v7598 = vpow.pop %v7597
      %v7599 = vmul.f32 %v6576, 1.442695
      %v7600 = vpow.pop %v7599
      %v7601 = vadd.f32 %v6578, %v6580
      %v7602 = vadd.f32 %v7601, %v6582
      %v7603 = vadd.f32 %v7602, %v6584
      %v7604 = vrot.slane %v7603, 4
      %v7605 = vadd.f32 %v7603, %v7604
      %v7606 = vrot.slane %v7605, 2
      %v7607 = vadd.f32 %v7605, %v7606
      %v7608 = vrot.slane %v7607, 1
      %v7609 = vadd.f32 %v7607, %v7608
      %v7610 = vadd.f32 %v6586, %v6588
      %v7611 = vadd.f32 %v7610, %v6590
      %v7612 = vadd.f32 %v7611, %v6592
      %v7613 = vrot.slane %v7612, 4
      %v7614 = vadd.f32 %v7612, %v7613
      %v7615 = vrot.slane %v7614, 2
      %v7616 = vadd.f32 %v7614, %v7615
      %v7617 = vrot.slane %v7616, 1
      %v7618 = vadd.f32 %v7616, %v7617
      %v7619 = vadd.f32 %v6594, %v6596
      %v7620 = vadd.f32 %v7619, %v6598
      %v7621 = vadd.f32 %v7620, %v6600
      %v7622 = vrot.slane %v7621, 4
      %v7623 = vadd.f32 %v7621, %v7622
      %v7624 = vrot.slane %v7623, 2
      %v7625 = vadd.f32 %v7623, %v7624
      %v7626 = vrot.slane %v7625, 1
      %v7627 = vadd.f32 %v7625, %v7626
      %v7628 = vadd.f32 %v6602, %v6604
      %v7629 = vadd.f32 %v7628, %v6606
      %v7630 = vadd.f32 %v7629, %v6608
      %v7631 = vrot.slane %v7630, 4
      %v7632 = vadd.f32 %v7630, %v7631
      %v7633 = vrot.slane %v7632, 2
      %v7634 = vadd.f32 %v7632, %v7633
      %v7635 = vrot.slane %v7634, 1
      %v7636 = vadd.f32 %v7634, %v7635
      %v7637 = vadd.f32 %v6610, %v6612
      %v7638 = vadd.f32 %v7637, %v6614
      %v7639 = vadd.f32 %v7638, %v6616
      %v7640 = vrot.slane %v7639, 4
      %v7641 = vadd.f32 %v7639, %v7640
      %v7642 = vrot.slane %v7641, 2
      %v7643 = vadd.f32 %v7641, %v7642
      %v7644 = vrot.slane %v7643, 1
      %v7645 = vadd.f32 %v7643, %v7644
      %v7646 = vadd.f32 %v6618, %v6620
      %v7647 = vadd.f32 %v7646, %v6622
      %v7648 = vadd.f32 %v7647, %v6624
      %v7649 = vrot.slane %v7648, 4
      %v7650 = vadd.f32 %v7648, %v7649
      %v7651 = vrot.slane %v7650, 2
      %v7652 = vadd.f32 %v7650, %v7651
      %v7653 = vrot.slane %v7652, 1
      %v7654 = vadd.f32 %v7652, %v7653
      %v7655 = vadd.f32 %v6626, %v6628
      %v7656 = vadd.f32 %v7655, %v6630
      %v7657 = vadd.f32 %v7656, %v6632
      %v7658 = vrot.slane %v7657, 4
      %v7659 = vadd.f32 %v7657, %v7658
      %v7660 = vrot.slane %v7659, 2
      %v7661 = vadd.f32 %v7659, %v7660
      %v7662 = vrot.slane %v7661, 1
      %v7663 = vadd.f32 %v7661, %v7662
      %v7664 = vadd.f32 %v6634, %v6636
      %v7665 = vadd.f32 %v7664, %v6638
      %v7666 = vadd.f32 %v7665, %v6640
      %v7667 = vrot.slane %v7666, 4
      %v7668 = vadd.f32 %v7666, %v7667
      %v7669 = vrot.slane %v7668, 2
      %v7670 = vadd.f32 %v7668, %v7669
      %v7671 = vrot.slane %v7670, 1
      %v7672 = vadd.f32 %v7670, %v7671
      %v7673 = vadd.f32 %v6642, %v6644
      %v7674 = vadd.f32 %v7673, %v6646
      %v7675 = vadd.f32 %v7674, %v6648
      %v7676 = vrot.slane %v7675, 4
      %v7677 = vadd.f32 %v7675, %v7676
      %v7678 = vrot.slane %v7677, 2
      %v7679 = vadd.f32 %v7677, %v7678
      %v7680 = vrot.slane %v7679, 1
      %v7681 = vadd.f32 %v7679, %v7680
      %v7682 = vadd.f32 %v6650, %v6652
      %v7683 = vadd.f32 %v7682, %v6654
      %v7684 = vadd.f32 %v7683, %v6656
      %v7685 = vrot.slane %v7684, 4
      %v7686 = vadd.f32 %v7684, %v7685
      %v7687 = vrot.slane %v7686, 2
      %v7688 = vadd.f32 %v7686, %v7687
      %v7689 = vrot.slane %v7688, 1
      %v7690 = vadd.f32 %v7688, %v7689
      %v7691 = vadd.f32 %v6658, %v6660
      %v7692 = vadd.f32 %v7691, %v6662
      %v7693 = vadd.f32 %v7692, %v6664
      %v7694 = vrot.slane %v7693, 4
      %v7695 = vadd.f32 %v7693, %v7694
      %v7696 = vrot.slane %v7695, 2
      %v7697 = vadd.f32 %v7695, %v7696
      %v7698 = vrot.slane %v7697, 1
      %v7699 = vadd.f32 %v7697, %v7698
      %v7700 = vadd.f32 %v6666, %v6668
      %v7701 = vadd.f32 %v7700, %v6670
      %v7702 = vadd.f32 %v7701, %v6672
      %v7703 = vrot.slane %v7702, 4
      %v7704 = vadd.f32 %v7702, %v7703
      %v7705 = vrot.slane %v7704, 2
      %v7706 = vadd.f32 %v7704, %v7705
      %v7707 = vrot.slane %v7706, 1
      %v7708 = vadd.f32 %v7706, %v7707
      %v7709 = vadd.f32 %v6674, %v6676
      %v7710 = vadd.f32 %v7709, %v6678
      %v7711 = vadd.f32 %v7710, %v6680
      %v7712 = vrot.slane %v7711, 4
      %v7713 = vadd.f32 %v7711, %v7712
      %v7714 = vrot.slane %v7713, 2
      %v7715 = vadd.f32 %v7713, %v7714
      %v7716 = vrot.slane %v7715, 1
      %v7717 = vadd.f32 %v7715, %v7716
      %v7718 = vadd.f32 %v6682, %v6684
      %v7719 = vadd.f32 %v7718, %v6686
      %v7720 = vadd.f32 %v7719, %v6688
      %v7721 = vrot.slane %v7720, 4
      %v7722 = vadd.f32 %v7720, %v7721
      %v7723 = vrot.slane %v7722, 2
      %v7724 = vadd.f32 %v7722, %v7723
      %v7725 = vrot.slane %v7724, 1
      %v7726 = vadd.f32 %v7724, %v7725
      %v7727 = vadd.f32 %v6690, %v6692
      %v7728 = vadd.f32 %v7727, %v6694
      %v7729 = vadd.f32 %v7728, %v6696
      %v7730 = vrot.slane %v7729, 4
      %v7731 = vadd.f32 %v7729, %v7730
      %v7732 = vrot.slane %v7731, 2
      %v7733 = vadd.f32 %v7731, %v7732
      %v7734 = vrot.slane %v7733, 1
      %v7735 = vadd.f32 %v7733, %v7734
      %v7736 = vadd.f32 %v6698, %v6700
      %v7737 = vadd.f32 %v7736, %v6702
      %v7738 = vadd.f32 %v7737, %v6704
      %v7739 = vrot.slane %v7738, 4
      %v7740 = vadd.f32 %v7738, %v7739
      %v7741 = vrot.slane %v7740, 2
      %v7742 = vadd.f32 %v7740, %v7741
      %v7743 = vrot.slane %v7742, 1
      %v7744 = vadd.f32 %v7742, %v7743
      %v7745 = vadd.f32 %v6706, %v6708
      %v7746 = vadd.f32 %v7745, %v6710
      %v7747 = vadd.f32 %v7746, %v6712
      %v7748 = vrot.slane %v7747, 4
      %v7749 = vadd.f32 %v7747, %v7748
      %v7750 = vrot.slane %v7749, 2
      %v7751 = vadd.f32 %v7749, %v7750
      %v7752 = vrot.slane %v7751, 1
      %v7753 = vadd.f32 %v7751, %v7752
      %v7754 = vadd.f32 %v6714, %v6716
      %v7755 = vadd.f32 %v7754, %v6718
      %v7756 = vadd.f32 %v7755, %v6720
      %v7757 = vrot.slane %v7756, 4
      %v7758 = vadd.f32 %v7756, %v7757
      %v7759 = vrot.slane %v7758, 2
      %v7760 = vadd.f32 %v7758, %v7759
      %v7761 = vrot.slane %v7760, 1
      %v7762 = vadd.f32 %v7760, %v7761
      %v7763 = vadd.f32 %v6722, %v6724
      %v7764 = vadd.f32 %v7763, %v6726
      %v7765 = vadd.f32 %v7764, %v6728
      %v7766 = vrot.slane %v7765, 4
      %v7767 = vadd.f32 %v7765, %v7766
      %v7768 = vrot.slane %v7767, 2
      %v7769 = vadd.f32 %v7767, %v7768
      %v7770 = vrot.slane %v7769, 1
      %v7771 = vadd.f32 %v7769, %v7770
      %v7772 = vadd.f32 %v6730, %v6732
      %v7773 = vadd.f32 %v7772, %v6734
      %v7774 = vadd.f32 %v7773, %v6736
      %v7775 = vrot.slane %v7774, 4
      %v7776 = vadd.f32 %v7774, %v7775
      %v7777 = vrot.slane %v7776, 2
      %v7778 = vadd.f32 %v7776, %v7777
      %v7779 = vrot.slane %v7778, 1
      %v7780 = vadd.f32 %v7778, %v7779
      %v7781 = vadd.f32 %v6738, %v6740
      %v7782 = vadd.f32 %v7781, %v6742
      %v7783 = vadd.f32 %v7782, %v6744
      %v7784 = vrot.slane %v7783, 4
      %v7785 = vadd.f32 %v7783, %v7784
      %v7786 = vrot.slane %v7785, 2
      %v7787 = vadd.f32 %v7785, %v7786
      %v7788 = vrot.slane %v7787, 1
      %v7789 = vadd.f32 %v7787, %v7788
      %v7790 = vadd.f32 %v6746, %v6748
      %v7791 = vadd.f32 %v7790, %v6750
      %v7792 = vadd.f32 %v7791, %v6752
      %v7793 = vrot.slane %v7792, 4
      %v7794 = vadd.f32 %v7792, %v7793
      %v7795 = vrot.slane %v7794, 2
      %v7796 = vadd.f32 %v7794, %v7795
      %v7797 = vrot.slane %v7796, 1
      %v7798 = vadd.f32 %v7796, %v7797
      %v7799 = vadd.f32 %v6754, %v6756
      %v7800 = vadd.f32 %v7799, %v6758
      %v7801 = vadd.f32 %v7800, %v6760
      %v7802 = vrot.slane %v7801, 4
      %v7803 = vadd.f32 %v7801, %v7802
      %v7804 = vrot.slane %v7803, 2
      %v7805 = vadd.f32 %v7803, %v7804
      %v7806 = vrot.slane %v7805, 1
      %v7807 = vadd.f32 %v7805, %v7806
      %v7808 = vadd.f32 %v6762, %v6764
      %v7809 = vadd.f32 %v7808, %v6766
      %v7810 = vadd.f32 %v7809, %v6768
      %v7811 = vrot.slane %v7810, 4
      %v7812 = vadd.f32 %v7810, %v7811
      %v7813 = vrot.slane %v7812, 2
      %v7814 = vadd.f32 %v7812, %v7813
      %v7815 = vrot.slane %v7814, 1
      %v7816 = vadd.f32 %v7814, %v7815
      %v7817 = vadd.f32 %v6770, %v6772
      %v7818 = vadd.f32 %v7817, %v6774
      %v7819 = vadd.f32 %v7818, %v6776
      %v7820 = vrot.slane %v7819, 4
      %v7821 = vadd.f32 %v7819, %v7820
      %v7822 = vrot.slane %v7821, 2
      %v7823 = vadd.f32 %v7821, %v7822
      %v7824 = vrot.slane %v7823, 1
      %v7825 = vadd.f32 %v7823, %v7824
      %v7826 = vadd.f32 %v6778, %v6780
      %v7827 = vadd.f32 %v7826, %v6782
      %v7828 = vadd.f32 %v7827, %v6784
      %v7829 = vrot.slane %v7828, 4
      %v7830 = vadd.f32 %v7828, %v7829
      %v7831 = vrot.slane %v7830, 2
      %v7832 = vadd.f32 %v7830, %v7831
      %v7833 = vrot.slane %v7832, 1
      %v7834 = vadd.f32 %v7832, %v7833
      %v7835 = vadd.f32 %v6786, %v6788
      %v7836 = vadd.f32 %v7835, %v6790
      %v7837 = vadd.f32 %v7836, %v6792
      %v7838 = vrot.slane %v7837, 4
      %v7839 = vadd.f32 %v7837, %v7838
      %v7840 = vrot.slane %v7839, 2
      %v7841 = vadd.f32 %v7839, %v7840
      %v7842 = vrot.slane %v7841, 1
      %v7843 = vadd.f32 %v7841, %v7842
      %v7844 = vadd.f32 %v6794, %v6796
      %v7845 = vadd.f32 %v7844, %v6798
      %v7846 = vadd.f32 %v7845, %v6800
      %v7847 = vrot.slane %v7846, 4
      %v7848 = vadd.f32 %v7846, %v7847
      %v7849 = vrot.slane %v7848, 2
      %v7850 = vadd.f32 %v7848, %v7849
      %v7851 = vrot.slane %v7850, 1
      %v7852 = vadd.f32 %v7850, %v7851
      %v7853 = vadd.f32 %v6802, %v6804
      %v7854 = vadd.f32 %v7853, %v6806
      %v7855 = vadd.f32 %v7854, %v6808
      %v7856 = vrot.slane %v7855, 4
      %v7857 = vadd.f32 %v7855, %v7856
      %v7858 = vrot.slane %v7857, 2
      %v7859 = vadd.f32 %v7857, %v7858
      %v7860 = vrot.slane %v7859, 1
      %v7861 = vadd.f32 %v7859, %v7860
      %v7862 = vadd.f32 %v6810, %v6812
      %v7863 = vadd.f32 %v7862, %v6814
      %v7864 = vadd.f32 %v7863, %v6816
      %v7865 = vrot.slane %v7864, 4
      %v7866 = vadd.f32 %v7864, %v7865
      %v7867 = vrot.slane %v7866, 2
      %v7868 = vadd.f32 %v7866, %v7867
      %v7869 = vrot.slane %v7868, 1
      %v7870 = vadd.f32 %v7868, %v7869
      %v7871 = vadd.f32 %v6818, %v6820
      %v7872 = vadd.f32 %v7871, %v6822
      %v7873 = vadd.f32 %v7872, %v6824
      %v7874 = vrot.slane %v7873, 4
      %v7875 = vadd.f32 %v7873, %v7874
      %v7876 = vrot.slane %v7875, 2
      %v7877 = vadd.f32 %v7875, %v7876
      %v7878 = vrot.slane %v7877, 1
      %v7879 = vadd.f32 %v7877, %v7878
      %v7880 = vadd.f32 %v6826, %v6828
      %v7881 = vadd.f32 %v7880, %v6830
      %v7882 = vadd.f32 %v7881, %v6832
      %v7883 = vrot.slane %v7882, 4
      %v7884 = vadd.f32 %v7882, %v7883
      %v7885 = vrot.slane %v7884, 2
      %v7886 = vadd.f32 %v7884, %v7885
      %v7887 = vrot.slane %v7886, 1
      %v7888 = vadd.f32 %v7886, %v7887
      %v7889 = vadd.f32 %v6834, %v6836
      %v7890 = vadd.f32 %v7889, %v6838
      %v7891 = vadd.f32 %v7890, %v6840
      %v7892 = vrot.slane %v7891, 4
      %v7893 = vadd.f32 %v7891, %v7892
      %v7894 = vrot.slane %v7893, 2
      %v7895 = vadd.f32 %v7893, %v7894
      %v7896 = vrot.slane %v7895, 1
      %v7897 = vadd.f32 %v7895, %v7896
      %v7898 = vadd.f32 %v6842, %v6844
      %v7899 = vadd.f32 %v7898, %v6846
      %v7900 = vadd.f32 %v7899, %v6848
      %v7901 = vrot.slane %v7900, 4
      %v7902 = vadd.f32 %v7900, %v7901
      %v7903 = vrot.slane %v7902, 2
      %v7904 = vadd.f32 %v7902, %v7903
      %v7905 = vrot.slane %v7904, 1
      %v7906 = vadd.f32 %v7904, %v7905
      %v7907 = vadd.f32 %v6850, %v6852
      %v7908 = vadd.f32 %v7907, %v6854
      %v7909 = vadd.f32 %v7908, %v6856
      %v7910 = vrot.slane %v7909, 4
      %v7911 = vadd.f32 %v7909, %v7910
      %v7912 = vrot.slane %v7911, 2
      %v7913 = vadd.f32 %v7911, %v7912
      %v7914 = vrot.slane %v7913, 1
      %v7915 = vadd.f32 %v7913, %v7914
      %v7916 = vadd.f32 %v6858, %v6860
      %v7917 = vadd.f32 %v7916, %v6862
      %v7918 = vadd.f32 %v7917, %v6864
      %v7919 = vrot.slane %v7918, 4
      %v7920 = vadd.f32 %v7918, %v7919
      %v7921 = vrot.slane %v7920, 2
      %v7922 = vadd.f32 %v7920, %v7921
      %v7923 = vrot.slane %v7922, 1
      %v7924 = vadd.f32 %v7922, %v7923
      %v7925 = vadd.f32 %v6866, %v6868
      %v7926 = vadd.f32 %v7925, %v6870
      %v7927 = vadd.f32 %v7926, %v6872
      %v7928 = vrot.slane %v7927, 4
      %v7929 = vadd.f32 %v7927, %v7928
      %v7930 = vrot.slane %v7929, 2
      %v7931 = vadd.f32 %v7929, %v7930
      %v7932 = vrot.slane %v7931, 1
      %v7933 = vadd.f32 %v7931, %v7932
      %v7934 = vadd.f32 %v6874, %v6876
      %v7935 = vadd.f32 %v7934, %v6878
      %v7936 = vadd.f32 %v7935, %v6880
      %v7937 = vrot.slane %v7936, 4
      %v7938 = vadd.f32 %v7936, %v7937
      %v7939 = vrot.slane %v7938, 2
      %v7940 = vadd.f32 %v7938, %v7939
      %v7941 = vrot.slane %v7940, 1
      %v7942 = vadd.f32 %v7940, %v7941
      %v7943 = vadd.f32 %v6882, %v6884
      %v7944 = vadd.f32 %v7943, %v6886
      %v7945 = vadd.f32 %v7944, %v6888
      %v7946 = vrot.slane %v7945, 4
      %v7947 = vadd.f32 %v7945, %v7946
      %v7948 = vrot.slane %v7947, 2
      %v7949 = vadd.f32 %v7947, %v7948
      %v7950 = vrot.slane %v7949, 1
      %v7951 = vadd.f32 %v7949, %v7950
      %v7952 = vadd.f32 %v6890, %v6892
      %v7953 = vadd.f32 %v7952, %v6894
      %v7954 = vadd.f32 %v7953, %v6896
      %v7955 = vrot.slane %v7954, 4
      %v7956 = vadd.f32 %v7954, %v7955
      %v7957 = vrot.slane %v7956, 2
      %v7958 = vadd.f32 %v7956, %v7957
      %v7959 = vrot.slane %v7958, 1
      %v7960 = vadd.f32 %v7958, %v7959
      %v7961 = vadd.f32 %v6898, %v6900
      %v7962 = vadd.f32 %v7961, %v6902
      %v7963 = vadd.f32 %v7962, %v6904
      %v7964 = vrot.slane %v7963, 4
      %v7965 = vadd.f32 %v7963, %v7964
      %v7966 = vrot.slane %v7965, 2
      %v7967 = vadd.f32 %v7965, %v7966
      %v7968 = vrot.slane %v7967, 1
      %v7969 = vadd.f32 %v7967, %v7968
      %v7970 = vadd.f32 %v6906, %v6908
      %v7971 = vadd.f32 %v7970, %v6910
      %v7972 = vadd.f32 %v7971, %v6912
      %v7973 = vrot.slane %v7972, 4
      %v7974 = vadd.f32 %v7972, %v7973
      %v7975 = vrot.slane %v7974, 2
      %v7976 = vadd.f32 %v7974, %v7975
      %v7977 = vrot.slane %v7976, 1
      %v7978 = vadd.f32 %v7976, %v7977
      %v7979 = vadd.f32 %v6914, %v6916
      %v7980 = vadd.f32 %v7979, %v6918
      %v7981 = vadd.f32 %v7980, %v6920
      %v7982 = vrot.slane %v7981, 4
      %v7983 = vadd.f32 %v7981, %v7982
      %v7984 = vrot.slane %v7983, 2
      %v7985 = vadd.f32 %v7983, %v7984
      %v7986 = vrot.slane %v7985, 1
      %v7987 = vadd.f32 %v7985, %v7986
      %v7988 = vadd.f32 %v6922, %v6924
      %v7989 = vadd.f32 %v7988, %v6926
      %v7990 = vadd.f32 %v7989, %v6928
      %v7991 = vrot.slane %v7990, 4
      %v7992 = vadd.f32 %v7990, %v7991
      %v7993 = vrot.slane %v7992, 2
      %v7994 = vadd.f32 %v7992, %v7993
      %v7995 = vrot.slane %v7994, 1
      %v7996 = vadd.f32 %v7994, %v7995
      %v7997 = vadd.f32 %v6930, %v6932
      %v7998 = vadd.f32 %v7997, %v6934
      %v7999 = vadd.f32 %v7998, %v6936
      %v8000 = vrot.slane %v7999, 4
      %v8001 = vadd.f32 %v7999, %v8000
      %v8002 = vrot.slane %v8001, 2
      %v8003 = vadd.f32 %v8001, %v8002
      %v8004 = vrot.slane %v8003, 1
      %v8005 = vadd.f32 %v8003, %v8004
      %v8006 = vadd.f32 %v6938, %v6940
      %v8007 = vadd.f32 %v8006, %v6942
      %v8008 = vadd.f32 %v8007, %v6944
      %v8009 = vrot.slane %v8008, 4
      %v8010 = vadd.f32 %v8008, %v8009
      %v8011 = vrot.slane %v8010, 2
      %v8012 = vadd.f32 %v8010, %v8011
      %v8013 = vrot.slane %v8012, 1
      %v8014 = vadd.f32 %v8012, %v8013
      %v8015 = vadd.f32 %v6946, %v6948
      %v8016 = vadd.f32 %v8015, %v6950
      %v8017 = vadd.f32 %v8016, %v6952
      %v8018 = vrot.slane %v8017, 4
      %v8019 = vadd.f32 %v8017, %v8018
      %v8020 = vrot.slane %v8019, 2
      %v8021 = vadd.f32 %v8019, %v8020
      %v8022 = vrot.slane %v8021, 1
      %v8023 = vadd.f32 %v8021, %v8022
      %v8024 = vadd.f32 %v6954, %v6956
      %v8025 = vadd.f32 %v8024, %v6958
      %v8026 = vadd.f32 %v8025, %v6960
      %v8027 = vrot.slane %v8026, 4
      %v8028 = vadd.f32 %v8026, %v8027
      %v8029 = vrot.slane %v8028, 2
      %v8030 = vadd.f32 %v8028, %v8029
      %v8031 = vrot.slane %v8030, 1
      %v8032 = vadd.f32 %v8030, %v8031
      %v8033 = vadd.f32 %v6962, %v6964
      %v8034 = vadd.f32 %v8033, %v6966
      %v8035 = vadd.f32 %v8034, %v6968
      %v8036 = vrot.slane %v8035, 4
      %v8037 = vadd.f32 %v8035, %v8036
      %v8038 = vrot.slane %v8037, 2
      %v8039 = vadd.f32 %v8037, %v8038
      %v8040 = vrot.slane %v8039, 1
      %v8041 = vadd.f32 %v8039, %v8040
      %v8042 = vadd.f32 %v6970, %v6972
      %v8043 = vadd.f32 %v8042, %v6974
      %v8044 = vadd.f32 %v8043, %v6976
      %v8045 = vrot.slane %v8044, 4
      %v8046 = vadd.f32 %v8044, %v8045
      %v8047 = vrot.slane %v8046, 2
      %v8048 = vadd.f32 %v8046, %v8047
      %v8049 = vrot.slane %v8048, 1
      %v8050 = vadd.f32 %v8048, %v8049
      %v8051 = vadd.f32 %v6978, %v6980
      %v8052 = vadd.f32 %v8051, %v6982
      %v8053 = vadd.f32 %v8052, %v6984
      %v8054 = vrot.slane %v8053, 4
      %v8055 = vadd.f32 %v8053, %v8054
      %v8056 = vrot.slane %v8055, 2
      %v8057 = vadd.f32 %v8055, %v8056
      %v8058 = vrot.slane %v8057, 1
      %v8059 = vadd.f32 %v8057, %v8058
      %v8060 = vadd.f32 %v6986, %v6988
      %v8061 = vadd.f32 %v8060, %v6990
      %v8062 = vadd.f32 %v8061, %v6992
      %v8063 = vrot.slane %v8062, 4
      %v8064 = vadd.f32 %v8062, %v8063
      %v8065 = vrot.slane %v8064, 2
      %v8066 = vadd.f32 %v8064, %v8065
      %v8067 = vrot.slane %v8066, 1
      %v8068 = vadd.f32 %v8066, %v8067
      %v8069 = vadd.f32 %v6994, %v6996
      %v8070 = vadd.f32 %v8069, %v6998
      %v8071 = vadd.f32 %v8070, %v7000
      %v8072 = vrot.slane %v8071, 4
      %v8073 = vadd.f32 %v8071, %v8072
      %v8074 = vrot.slane %v8073, 2
      %v8075 = vadd.f32 %v8073, %v8074
      %v8076 = vrot.slane %v8075, 1
      %v8077 = vadd.f32 %v8075, %v8076
      %v8078 = vadd.f32 %v7002, %v7004
      %v8079 = vadd.f32 %v8078, %v7006
      %v8080 = vadd.f32 %v8079, %v7008
      %v8081 = vrot.slane %v8080, 4
      %v8082 = vadd.f32 %v8080, %v8081
      %v8083 = vrot.slane %v8082, 2
      %v8084 = vadd.f32 %v8082, %v8083
      %v8085 = vrot.slane %v8084, 1
      %v8086 = vadd.f32 %v8084, %v8085
      %v8087 = vadd.f32 %v7010, %v7012
      %v8088 = vadd.f32 %v8087, %v7014
      %v8089 = vadd.f32 %v8088, %v7016
      %v8090 = vrot.slane %v8089, 4
      %v8091 = vadd.f32 %v8089, %v8090
      %v8092 = vrot.slane %v8091, 2
      %v8093 = vadd.f32 %v8091, %v8092
      %v8094 = vrot.slane %v8093, 1
      %v8095 = vadd.f32 %v8093, %v8094
      %v8096 = vadd.f32 %v7018, %v7020
      %v8097 = vadd.f32 %v8096, %v7022
      %v8098 = vadd.f32 %v8097, %v7024
      %v8099 = vrot.slane %v8098, 4
      %v8100 = vadd.f32 %v8098, %v8099
      %v8101 = vrot.slane %v8100, 2
      %v8102 = vadd.f32 %v8100, %v8101
      %v8103 = vrot.slane %v8102, 1
      %v8104 = vadd.f32 %v8102, %v8103
      %v8105 = vadd.f32 %v7026, %v7028
      %v8106 = vadd.f32 %v8105, %v7030
      %v8107 = vadd.f32 %v8106, %v7032
      %v8108 = vrot.slane %v8107, 4
      %v8109 = vadd.f32 %v8107, %v8108
      %v8110 = vrot.slane %v8109, 2
      %v8111 = vadd.f32 %v8109, %v8110
      %v8112 = vrot.slane %v8111, 1
      %v8113 = vadd.f32 %v8111, %v8112
      %v8114 = vadd.f32 %v7034, %v7036
      %v8115 = vadd.f32 %v8114, %v7038
      %v8116 = vadd.f32 %v8115, %v7040
      %v8117 = vrot.slane %v8116, 4
      %v8118 = vadd.f32 %v8116, %v8117
      %v8119 = vrot.slane %v8118, 2
      %v8120 = vadd.f32 %v8118, %v8119
      %v8121 = vrot.slane %v8120, 1
      %v8122 = vadd.f32 %v8120, %v8121
      %v8123 = vadd.f32 %v7042, %v7044
      %v8124 = vadd.f32 %v8123, %v7046
      %v8125 = vadd.f32 %v8124, %v7048
      %v8126 = vrot.slane %v8125, 4
      %v8127 = vadd.f32 %v8125, %v8126
      %v8128 = vrot.slane %v8127, 2
      %v8129 = vadd.f32 %v8127, %v8128
      %v8130 = vrot.slane %v8129, 1
      %v8131 = vadd.f32 %v8129, %v8130
      %v8132 = vadd.f32 %v7050, %v7052
      %v8133 = vadd.f32 %v8132, %v7054
      %v8134 = vadd.f32 %v8133, %v7056
      %v8135 = vrot.slane %v8134, 4
      %v8136 = vadd.f32 %v8134, %v8135
      %v8137 = vrot.slane %v8136, 2
      %v8138 = vadd.f32 %v8136, %v8137
      %v8139 = vrot.slane %v8138, 1
      %v8140 = vadd.f32 %v8138, %v8139
      %v8141 = vadd.f32 %v7058, %v7060
      %v8142 = vadd.f32 %v8141, %v7062
      %v8143 = vadd.f32 %v8142, %v7064
      %v8144 = vrot.slane %v8143, 4
      %v8145 = vadd.f32 %v8143, %v8144
      %v8146 = vrot.slane %v8145, 2
      %v8147 = vadd.f32 %v8145, %v8146
      %v8148 = vrot.slane %v8147, 1
      %v8149 = vadd.f32 %v8147, %v8148
      %v8150 = vadd.f32 %v7066, %v7068
      %v8151 = vadd.f32 %v8150, %v7070
      %v8152 = vadd.f32 %v8151, %v7072
      %v8153 = vrot.slane %v8152, 4
      %v8154 = vadd.f32 %v8152, %v8153
      %v8155 = vrot.slane %v8154, 2
      %v8156 = vadd.f32 %v8154, %v8155
      %v8157 = vrot.slane %v8156, 1
      %v8158 = vadd.f32 %v8156, %v8157
      %v8159 = vadd.f32 %v7074, %v7076
      %v8160 = vadd.f32 %v8159, %v7078
      %v8161 = vadd.f32 %v8160, %v7080
      %v8162 = vrot.slane %v8161, 4
      %v8163 = vadd.f32 %v8161, %v8162
      %v8164 = vrot.slane %v8163, 2
      %v8165 = vadd.f32 %v8163, %v8164
      %v8166 = vrot.slane %v8165, 1
      %v8167 = vadd.f32 %v8165, %v8166
      %v8168 = vadd.f32 %v7082, %v7084
      %v8169 = vadd.f32 %v8168, %v7086
      %v8170 = vadd.f32 %v8169, %v7088
      %v8171 = vrot.slane %v8170, 4
      %v8172 = vadd.f32 %v8170, %v8171
      %v8173 = vrot.slane %v8172, 2
      %v8174 = vadd.f32 %v8172, %v8173
      %v8175 = vrot.slane %v8174, 1
      %v8176 = vadd.f32 %v8174, %v8175
      %v8177 = vadd.f32 %v7090, %v7092
      %v8178 = vadd.f32 %v8177, %v7094
      %v8179 = vadd.f32 %v8178, %v7096
      %v8180 = vrot.slane %v8179, 4
      %v8181 = vadd.f32 %v8179, %v8180
      %v8182 = vrot.slane %v8181, 2
      %v8183 = vadd.f32 %v8181, %v8182
      %v8184 = vrot.slane %v8183, 1
      %v8185 = vadd.f32 %v8183, %v8184
      %v8186 = vadd.f32 %v7098, %v7100
      %v8187 = vadd.f32 %v8186, %v7102
      %v8188 = vadd.f32 %v8187, %v7104
      %v8189 = vrot.slane %v8188, 4
      %v8190 = vadd.f32 %v8188, %v8189
      %v8191 = vrot.slane %v8190, 2
      %v8192 = vadd.f32 %v8190, %v8191
      %v8193 = vrot.slane %v8192, 1
      %v8194 = vadd.f32 %v8192, %v8193
      %v8195 = vadd.f32 %v7106, %v7108
      %v8196 = vadd.f32 %v8195, %v7110
      %v8197 = vadd.f32 %v8196, %v7112
      %v8198 = vrot.slane %v8197, 4
      %v8199 = vadd.f32 %v8197, %v8198
      %v8200 = vrot.slane %v8199, 2
      %v8201 = vadd.f32 %v8199, %v8200
      %v8202 = vrot.slane %v8201, 1
      %v8203 = vadd.f32 %v8201, %v8202
      %v8204 = vadd.f32 %v7114, %v7116
      %v8205 = vadd.f32 %v8204, %v7118
      %v8206 = vadd.f32 %v8205, %v7120
      %v8207 = vrot.slane %v8206, 4
      %v8208 = vadd.f32 %v8206, %v8207
      %v8209 = vrot.slane %v8208, 2
      %v8210 = vadd.f32 %v8208, %v8209
      %v8211 = vrot.slane %v8210, 1
      %v8212 = vadd.f32 %v8210, %v8211
      %v8213 = vadd.f32 %v7122, %v7124
      %v8214 = vadd.f32 %v8213, %v7126
      %v8215 = vadd.f32 %v8214, %v7128
      %v8216 = vrot.slane %v8215, 4
      %v8217 = vadd.f32 %v8215, %v8216
      %v8218 = vrot.slane %v8217, 2
      %v8219 = vadd.f32 %v8217, %v8218
      %v8220 = vrot.slane %v8219, 1
      %v8221 = vadd.f32 %v8219, %v8220
      %v8222 = vadd.f32 %v7130, %v7132
      %v8223 = vadd.f32 %v8222, %v7134
      %v8224 = vadd.f32 %v8223, %v7136
      %v8225 = vrot.slane %v8224, 4
      %v8226 = vadd.f32 %v8224, %v8225
      %v8227 = vrot.slane %v8226, 2
      %v8228 = vadd.f32 %v8226, %v8227
      %v8229 = vrot.slane %v8228, 1
      %v8230 = vadd.f32 %v8228, %v8229
      %v8231 = vadd.f32 %v7138, %v7140
      %v8232 = vadd.f32 %v8231, %v7142
      %v8233 = vadd.f32 %v8232, %v7144
      %v8234 = vrot.slane %v8233, 4
      %v8235 = vadd.f32 %v8233, %v8234
      %v8236 = vrot.slane %v8235, 2
      %v8237 = vadd.f32 %v8235, %v8236
      %v8238 = vrot.slane %v8237, 1
      %v8239 = vadd.f32 %v8237, %v8238
      %v8240 = vadd.f32 %v7146, %v7148
      %v8241 = vadd.f32 %v8240, %v7150
      %v8242 = vadd.f32 %v8241, %v7152
      %v8243 = vrot.slane %v8242, 4
      %v8244 = vadd.f32 %v8242, %v8243
      %v8245 = vrot.slane %v8244, 2
      %v8246 = vadd.f32 %v8244, %v8245
      %v8247 = vrot.slane %v8246, 1
      %v8248 = vadd.f32 %v8246, %v8247
      %v8249 = vadd.f32 %v7154, %v7156
      %v8250 = vadd.f32 %v8249, %v7158
      %v8251 = vadd.f32 %v8250, %v7160
      %v8252 = vrot.slane %v8251, 4
      %v8253 = vadd.f32 %v8251, %v8252
      %v8254 = vrot.slane %v8253, 2
      %v8255 = vadd.f32 %v8253, %v8254
      %v8256 = vrot.slane %v8255, 1
      %v8257 = vadd.f32 %v8255, %v8256
      %v8258 = vadd.f32 %v7162, %v7164
      %v8259 = vadd.f32 %v8258, %v7166
      %v8260 = vadd.f32 %v8259, %v7168
      %v8261 = vrot.slane %v8260, 4
      %v8262 = vadd.f32 %v8260, %v8261
      %v8263 = vrot.slane %v8262, 2
      %v8264 = vadd.f32 %v8262, %v8263
      %v8265 = vrot.slane %v8264, 1
      %v8266 = vadd.f32 %v8264, %v8265
      %v8267 = vadd.f32 %v7170, %v7172
      %v8268 = vadd.f32 %v8267, %v7174
      %v8269 = vadd.f32 %v8268, %v7176
      %v8270 = vrot.slane %v8269, 4
      %v8271 = vadd.f32 %v8269, %v8270
      %v8272 = vrot.slane %v8271, 2
      %v8273 = vadd.f32 %v8271, %v8272
      %v8274 = vrot.slane %v8273, 1
      %v8275 = vadd.f32 %v8273, %v8274
      %v8276 = vadd.f32 %v7178, %v7180
      %v8277 = vadd.f32 %v8276, %v7182
      %v8278 = vadd.f32 %v8277, %v7184
      %v8279 = vrot.slane %v8278, 4
      %v8280 = vadd.f32 %v8278, %v8279
      %v8281 = vrot.slane %v8280, 2
      %v8282 = vadd.f32 %v8280, %v8281
      %v8283 = vrot.slane %v8282, 1
      %v8284 = vadd.f32 %v8282, %v8283
      %v8285 = vadd.f32 %v7186, %v7188
      %v8286 = vadd.f32 %v8285, %v7190
      %v8287 = vadd.f32 %v8286, %v7192
      %v8288 = vrot.slane %v8287, 4
      %v8289 = vadd.f32 %v8287, %v8288
      %v8290 = vrot.slane %v8289, 2
      %v8291 = vadd.f32 %v8289, %v8290
      %v8292 = vrot.slane %v8291, 1
      %v8293 = vadd.f32 %v8291, %v8292
      %v8294 = vadd.f32 %v7194, %v7196
      %v8295 = vadd.f32 %v8294, %v7198
      %v8296 = vadd.f32 %v8295, %v7200
      %v8297 = vrot.slane %v8296, 4
      %v8298 = vadd.f32 %v8296, %v8297
      %v8299 = vrot.slane %v8298, 2
      %v8300 = vadd.f32 %v8298, %v8299
      %v8301 = vrot.slane %v8300, 1
      %v8302 = vadd.f32 %v8300, %v8301
      %v8303 = vadd.f32 %v7202, %v7204
      %v8304 = vadd.f32 %v8303, %v7206
      %v8305 = vadd.f32 %v8304, %v7208
      %v8306 = vrot.slane %v8305, 4
      %v8307 = vadd.f32 %v8305, %v8306
      %v8308 = vrot.slane %v8307, 2
      %v8309 = vadd.f32 %v8307, %v8308
      %v8310 = vrot.slane %v8309, 1
      %v8311 = vadd.f32 %v8309, %v8310
      %v8312 = vadd.f32 %v7210, %v7212
      %v8313 = vadd.f32 %v8312, %v7214
      %v8314 = vadd.f32 %v8313, %v7216
      %v8315 = vrot.slane %v8314, 4
      %v8316 = vadd.f32 %v8314, %v8315
      %v8317 = vrot.slane %v8316, 2
      %v8318 = vadd.f32 %v8316, %v8317
      %v8319 = vrot.slane %v8318, 1
      %v8320 = vadd.f32 %v8318, %v8319
      %v8321 = vadd.f32 %v7218, %v7220
      %v8322 = vadd.f32 %v8321, %v7222
      %v8323 = vadd.f32 %v8322, %v7224
      %v8324 = vrot.slane %v8323, 4
      %v8325 = vadd.f32 %v8323, %v8324
      %v8326 = vrot.slane %v8325, 2
      %v8327 = vadd.f32 %v8325, %v8326
      %v8328 = vrot.slane %v8327, 1
      %v8329 = vadd.f32 %v8327, %v8328
      %v8330 = vadd.f32 %v7226, %v7228
      %v8331 = vadd.f32 %v8330, %v7230
      %v8332 = vadd.f32 %v8331, %v7232
      %v8333 = vrot.slane %v8332, 4
      %v8334 = vadd.f32 %v8332, %v8333
      %v8335 = vrot.slane %v8334, 2
      %v8336 = vadd.f32 %v8334, %v8335
      %v8337 = vrot.slane %v8336, 1
      %v8338 = vadd.f32 %v8336, %v8337
      %v8339 = vadd.f32 %v7234, %v7236
      %v8340 = vadd.f32 %v8339, %v7238
      %v8341 = vadd.f32 %v8340, %v7240
      %v8342 = vrot.slane %v8341, 4
      %v8343 = vadd.f32 %v8341, %v8342
      %v8344 = vrot.slane %v8343, 2
      %v8345 = vadd.f32 %v8343, %v8344
      %v8346 = vrot.slane %v8345, 1
      %v8347 = vadd.f32 %v8345, %v8346
      %v8348 = vadd.f32 %v7242, %v7244
      %v8349 = vadd.f32 %v8348, %v7246
      %v8350 = vadd.f32 %v8349, %v7248
      %v8351 = vrot.slane %v8350, 4
      %v8352 = vadd.f32 %v8350, %v8351
      %v8353 = vrot.slane %v8352, 2
      %v8354 = vadd.f32 %v8352, %v8353
      %v8355 = vrot.slane %v8354, 1
      %v8356 = vadd.f32 %v8354, %v8355
      %v8357 = vadd.f32 %v7250, %v7252
      %v8358 = vadd.f32 %v8357, %v7254
      %v8359 = vadd.f32 %v8358, %v7256
      %v8360 = vrot.slane %v8359, 4
      %v8361 = vadd.f32 %v8359, %v8360
      %v8362 = vrot.slane %v8361, 2
      %v8363 = vadd.f32 %v8361, %v8362
      %v8364 = vrot.slane %v8363, 1
      %v8365 = vadd.f32 %v8363, %v8364
      %v8366 = vadd.f32 %v7258, %v7260
      %v8367 = vadd.f32 %v8366, %v7262
      %v8368 = vadd.f32 %v8367, %v7264
      %v8369 = vrot.slane %v8368, 4
      %v8370 = vadd.f32 %v8368, %v8369
      %v8371 = vrot.slane %v8370, 2
      %v8372 = vadd.f32 %v8370, %v8371
      %v8373 = vrot.slane %v8372, 1
      %v8374 = vadd.f32 %v8372, %v8373
      %v8375 = vadd.f32 %v7266, %v7268
      %v8376 = vadd.f32 %v8375, %v7270
      %v8377 = vadd.f32 %v8376, %v7272
      %v8378 = vrot.slane %v8377, 4
      %v8379 = vadd.f32 %v8377, %v8378
      %v8380 = vrot.slane %v8379, 2
      %v8381 = vadd.f32 %v8379, %v8380
      %v8382 = vrot.slane %v8381, 1
      %v8383 = vadd.f32 %v8381, %v8382
      %v8384 = vadd.f32 %v7274, %v7276
      %v8385 = vadd.f32 %v8384, %v7278
      %v8386 = vadd.f32 %v8385, %v7280
      %v8387 = vrot.slane %v8386, 4
      %v8388 = vadd.f32 %v8386, %v8387
      %v8389 = vrot.slane %v8388, 2
      %v8390 = vadd.f32 %v8388, %v8389
      %v8391 = vrot.slane %v8390, 1
      %v8392 = vadd.f32 %v8390, %v8391
      %v8393 = vadd.f32 %v7282, %v7284
      %v8394 = vadd.f32 %v8393, %v7286
      %v8395 = vadd.f32 %v8394, %v7288
      %v8396 = vrot.slane %v8395, 4
      %v8397 = vadd.f32 %v8395, %v8396
      %v8398 = vrot.slane %v8397, 2
      %v8399 = vadd.f32 %v8397, %v8398
      %v8400 = vrot.slane %v8399, 1
      %v8401 = vadd.f32 %v8399, %v8400
      %v8402 = vadd.f32 %v7290, %v7292
      %v8403 = vadd.f32 %v8402, %v7294
      %v8404 = vadd.f32 %v8403, %v7296
      %v8405 = vrot.slane %v8404, 4
      %v8406 = vadd.f32 %v8404, %v8405
      %v8407 = vrot.slane %v8406, 2
      %v8408 = vadd.f32 %v8406, %v8407
      %v8409 = vrot.slane %v8408, 1
      %v8410 = vadd.f32 %v8408, %v8409
      %v8411 = vadd.f32 %v7298, %v7300
      %v8412 = vadd.f32 %v8411, %v7302
      %v8413 = vadd.f32 %v8412, %v7304
      %v8414 = vrot.slane %v8413, 4
      %v8415 = vadd.f32 %v8413, %v8414
      %v8416 = vrot.slane %v8415, 2
      %v8417 = vadd.f32 %v8415, %v8416
      %v8418 = vrot.slane %v8417, 1
      %v8419 = vadd.f32 %v8417, %v8418
      %v8420 = vadd.f32 %v7306, %v7308
      %v8421 = vadd.f32 %v8420, %v7310
      %v8422 = vadd.f32 %v8421, %v7312
      %v8423 = vrot.slane %v8422, 4
      %v8424 = vadd.f32 %v8422, %v8423
      %v8425 = vrot.slane %v8424, 2
      %v8426 = vadd.f32 %v8424, %v8425
      %v8427 = vrot.slane %v8426, 1
      %v8428 = vadd.f32 %v8426, %v8427
      %v8429 = vadd.f32 %v7314, %v7316
      %v8430 = vadd.f32 %v8429, %v7318
      %v8431 = vadd.f32 %v8430, %v7320
      %v8432 = vrot.slane %v8431, 4
      %v8433 = vadd.f32 %v8431, %v8432
      %v8434 = vrot.slane %v8433, 2
      %v8435 = vadd.f32 %v8433, %v8434
      %v8436 = vrot.slane %v8435, 1
      %v8437 = vadd.f32 %v8435, %v8436
      %v8438 = vadd.f32 %v7322, %v7324
      %v8439 = vadd.f32 %v8438, %v7326
      %v8440 = vadd.f32 %v8439, %v7328
      %v8441 = vrot.slane %v8440, 4
      %v8442 = vadd.f32 %v8440, %v8441
      %v8443 = vrot.slane %v8442, 2
      %v8444 = vadd.f32 %v8442, %v8443
      %v8445 = vrot.slane %v8444, 1
      %v8446 = vadd.f32 %v8444, %v8445
      %v8447 = vadd.f32 %v7330, %v7332
      %v8448 = vadd.f32 %v8447, %v7334
      %v8449 = vadd.f32 %v8448, %v7336
      %v8450 = vrot.slane %v8449, 4
      %v8451 = vadd.f32 %v8449, %v8450
      %v8452 = vrot.slane %v8451, 2
      %v8453 = vadd.f32 %v8451, %v8452
      %v8454 = vrot.slane %v8453, 1
      %v8455 = vadd.f32 %v8453, %v8454
      %v8456 = vadd.f32 %v7338, %v7340
      %v8457 = vadd.f32 %v8456, %v7342
      %v8458 = vadd.f32 %v8457, %v7344
      %v8459 = vrot.slane %v8458, 4
      %v8460 = vadd.f32 %v8458, %v8459
      %v8461 = vrot.slane %v8460, 2
      %v8462 = vadd.f32 %v8460, %v8461
      %v8463 = vrot.slane %v8462, 1
      %v8464 = vadd.f32 %v8462, %v8463
      %v8465 = vadd.f32 %v7346, %v7348
      %v8466 = vadd.f32 %v8465, %v7350
      %v8467 = vadd.f32 %v8466, %v7352
      %v8468 = vrot.slane %v8467, 4
      %v8469 = vadd.f32 %v8467, %v8468
      %v8470 = vrot.slane %v8469, 2
      %v8471 = vadd.f32 %v8469, %v8470
      %v8472 = vrot.slane %v8471, 1
      %v8473 = vadd.f32 %v8471, %v8472
      %v8474 = vadd.f32 %v7354, %v7356
      %v8475 = vadd.f32 %v8474, %v7358
      %v8476 = vadd.f32 %v8475, %v7360
      %v8477 = vrot.slane %v8476, 4
      %v8478 = vadd.f32 %v8476, %v8477
      %v8479 = vrot.slane %v8478, 2
      %v8480 = vadd.f32 %v8478, %v8479
      %v8481 = vrot.slane %v8480, 1
      %v8482 = vadd.f32 %v8480, %v8481
      %v8483 = vadd.f32 %v7362, %v7364
      %v8484 = vadd.f32 %v8483, %v7366
      %v8485 = vadd.f32 %v8484, %v7368
      %v8486 = vrot.slane %v8485, 4
      %v8487 = vadd.f32 %v8485, %v8486
      %v8488 = vrot.slane %v8487, 2
      %v8489 = vadd.f32 %v8487, %v8488
      %v8490 = vrot.slane %v8489, 1
      %v8491 = vadd.f32 %v8489, %v8490
      %v8492 = vadd.f32 %v7370, %v7372
      %v8493 = vadd.f32 %v8492, %v7374
      %v8494 = vadd.f32 %v8493, %v7376
      %v8495 = vrot.slane %v8494, 4
      %v8496 = vadd.f32 %v8494, %v8495
      %v8497 = vrot.slane %v8496, 2
      %v8498 = vadd.f32 %v8496, %v8497
      %v8499 = vrot.slane %v8498, 1
      %v8500 = vadd.f32 %v8498, %v8499
      %v8501 = vadd.f32 %v7378, %v7380
      %v8502 = vadd.f32 %v8501, %v7382
      %v8503 = vadd.f32 %v8502, %v7384
      %v8504 = vrot.slane %v8503, 4
      %v8505 = vadd.f32 %v8503, %v8504
      %v8506 = vrot.slane %v8505, 2
      %v8507 = vadd.f32 %v8505, %v8506
      %v8508 = vrot.slane %v8507, 1
      %v8509 = vadd.f32 %v8507, %v8508
      %v8510 = vadd.f32 %v7386, %v7388
      %v8511 = vadd.f32 %v8510, %v7390
      %v8512 = vadd.f32 %v8511, %v7392
      %v8513 = vrot.slane %v8512, 4
      %v8514 = vadd.f32 %v8512, %v8513
      %v8515 = vrot.slane %v8514, 2
      %v8516 = vadd.f32 %v8514, %v8515
      %v8517 = vrot.slane %v8516, 1
      %v8518 = vadd.f32 %v8516, %v8517
      %v8519 = vadd.f32 %v7394, %v7396
      %v8520 = vadd.f32 %v8519, %v7398
      %v8521 = vadd.f32 %v8520, %v7400
      %v8522 = vrot.slane %v8521, 4
      %v8523 = vadd.f32 %v8521, %v8522
      %v8524 = vrot.slane %v8523, 2
      %v8525 = vadd.f32 %v8523, %v8524
      %v8526 = vrot.slane %v8525, 1
      %v8527 = vadd.f32 %v8525, %v8526
      %v8528 = vadd.f32 %v7402, %v7404
      %v8529 = vadd.f32 %v8528, %v7406
      %v8530 = vadd.f32 %v8529, %v7408
      %v8531 = vrot.slane %v8530, 4
      %v8532 = vadd.f32 %v8530, %v8531
      %v8533 = vrot.slane %v8532, 2
      %v8534 = vadd.f32 %v8532, %v8533
      %v8535 = vrot.slane %v8534, 1
      %v8536 = vadd.f32 %v8534, %v8535
      %v8537 = vadd.f32 %v7410, %v7412
      %v8538 = vadd.f32 %v8537, %v7414
      %v8539 = vadd.f32 %v8538, %v7416
      %v8540 = vrot.slane %v8539, 4
      %v8541 = vadd.f32 %v8539, %v8540
      %v8542 = vrot.slane %v8541, 2
      %v8543 = vadd.f32 %v8541, %v8542
      %v8544 = vrot.slane %v8543, 1
      %v8545 = vadd.f32 %v8543, %v8544
      %v8546 = vadd.f32 %v7418, %v7420
      %v8547 = vadd.f32 %v8546, %v7422
      %v8548 = vadd.f32 %v8547, %v7424
      %v8549 = vrot.slane %v8548, 4
      %v8550 = vadd.f32 %v8548, %v8549
      %v8551 = vrot.slane %v8550, 2
      %v8552 = vadd.f32 %v8550, %v8551
      %v8553 = vrot.slane %v8552, 1
      %v8554 = vadd.f32 %v8552, %v8553
      %v8555 = vadd.f32 %v7426, %v7428
      %v8556 = vadd.f32 %v8555, %v7430
      %v8557 = vadd.f32 %v8556, %v7432
      %v8558 = vrot.slane %v8557, 4
      %v8559 = vadd.f32 %v8557, %v8558
      %v8560 = vrot.slane %v8559, 2
      %v8561 = vadd.f32 %v8559, %v8560
      %v8562 = vrot.slane %v8561, 1
      %v8563 = vadd.f32 %v8561, %v8562
      %v8564 = vadd.f32 %v7434, %v7436
      %v8565 = vadd.f32 %v8564, %v7438
      %v8566 = vadd.f32 %v8565, %v7440
      %v8567 = vrot.slane %v8566, 4
      %v8568 = vadd.f32 %v8566, %v8567
      %v8569 = vrot.slane %v8568, 2
      %v8570 = vadd.f32 %v8568, %v8569
      %v8571 = vrot.slane %v8570, 1
      %v8572 = vadd.f32 %v8570, %v8571
      %v8573 = vadd.f32 %v7442, %v7444
      %v8574 = vadd.f32 %v8573, %v7446
      %v8575 = vadd.f32 %v8574, %v7448
      %v8576 = vrot.slane %v8575, 4
      %v8577 = vadd.f32 %v8575, %v8576
      %v8578 = vrot.slane %v8577, 2
      %v8579 = vadd.f32 %v8577, %v8578
      %v8580 = vrot.slane %v8579, 1
      %v8581 = vadd.f32 %v8579, %v8580
      %v8582 = vadd.f32 %v7450, %v7452
      %v8583 = vadd.f32 %v8582, %v7454
      %v8584 = vadd.f32 %v8583, %v7456
      %v8585 = vrot.slane %v8584, 4
      %v8586 = vadd.f32 %v8584, %v8585
      %v8587 = vrot.slane %v8586, 2
      %v8588 = vadd.f32 %v8586, %v8587
      %v8589 = vrot.slane %v8588, 1
      %v8590 = vadd.f32 %v8588, %v8589
      %v8591 = vadd.f32 %v7458, %v7460
      %v8592 = vadd.f32 %v8591, %v7462
      %v8593 = vadd.f32 %v8592, %v7464
      %v8594 = vrot.slane %v8593, 4
      %v8595 = vadd.f32 %v8593, %v8594
      %v8596 = vrot.slane %v8595, 2
      %v8597 = vadd.f32 %v8595, %v8596
      %v8598 = vrot.slane %v8597, 1
      %v8599 = vadd.f32 %v8597, %v8598
      %v8600 = vadd.f32 %v7466, %v7468
      %v8601 = vadd.f32 %v8600, %v7470
      %v8602 = vadd.f32 %v8601, %v7472
      %v8603 = vrot.slane %v8602, 4
      %v8604 = vadd.f32 %v8602, %v8603
      %v8605 = vrot.slane %v8604, 2
      %v8606 = vadd.f32 %v8604, %v8605
      %v8607 = vrot.slane %v8606, 1
      %v8608 = vadd.f32 %v8606, %v8607
      %v8609 = vadd.f32 %v7474, %v7476
      %v8610 = vadd.f32 %v8609, %v7478
      %v8611 = vadd.f32 %v8610, %v7480
      %v8612 = vrot.slane %v8611, 4
      %v8613 = vadd.f32 %v8611, %v8612
      %v8614 = vrot.slane %v8613, 2
      %v8615 = vadd.f32 %v8613, %v8614
      %v8616 = vrot.slane %v8615, 1
      %v8617 = vadd.f32 %v8615, %v8616
      %v8618 = vadd.f32 %v7482, %v7484
      %v8619 = vadd.f32 %v8618, %v7486
      %v8620 = vadd.f32 %v8619, %v7488
      %v8621 = vrot.slane %v8620, 4
      %v8622 = vadd.f32 %v8620, %v8621
      %v8623 = vrot.slane %v8622, 2
      %v8624 = vadd.f32 %v8622, %v8623
      %v8625 = vrot.slane %v8624, 1
      %v8626 = vadd.f32 %v8624, %v8625
      %v8627 = vadd.f32 %v7490, %v7492
      %v8628 = vadd.f32 %v8627, %v7494
      %v8629 = vadd.f32 %v8628, %v7496
      %v8630 = vrot.slane %v8629, 4
      %v8631 = vadd.f32 %v8629, %v8630
      %v8632 = vrot.slane %v8631, 2
      %v8633 = vadd.f32 %v8631, %v8632
      %v8634 = vrot.slane %v8633, 1
      %v8635 = vadd.f32 %v8633, %v8634
      %v8636 = vadd.f32 %v7498, %v7500
      %v8637 = vadd.f32 %v8636, %v7502
      %v8638 = vadd.f32 %v8637, %v7504
      %v8639 = vrot.slane %v8638, 4
      %v8640 = vadd.f32 %v8638, %v8639
      %v8641 = vrot.slane %v8640, 2
      %v8642 = vadd.f32 %v8640, %v8641
      %v8643 = vrot.slane %v8642, 1
      %v8644 = vadd.f32 %v8642, %v8643
      %v8645 = vadd.f32 %v7506, %v7508
      %v8646 = vadd.f32 %v8645, %v7510
      %v8647 = vadd.f32 %v8646, %v7512
      %v8648 = vrot.slane %v8647, 4
      %v8649 = vadd.f32 %v8647, %v8648
      %v8650 = vrot.slane %v8649, 2
      %v8651 = vadd.f32 %v8649, %v8650
      %v8652 = vrot.slane %v8651, 1
      %v8653 = vadd.f32 %v8651, %v8652
      %v8654 = vadd.f32 %v7514, %v7516
      %v8655 = vadd.f32 %v8654, %v7518
      %v8656 = vadd.f32 %v8655, %v7520
      %v8657 = vrot.slane %v8656, 4
      %v8658 = vadd.f32 %v8656, %v8657
      %v8659 = vrot.slane %v8658, 2
      %v8660 = vadd.f32 %v8658, %v8659
      %v8661 = vrot.slane %v8660, 1
      %v8662 = vadd.f32 %v8660, %v8661
      %v8663 = vadd.f32 %v7522, %v7524
      %v8664 = vadd.f32 %v8663, %v7526
      %v8665 = vadd.f32 %v8664, %v7528
      %v8666 = vrot.slane %v8665, 4
      %v8667 = vadd.f32 %v8665, %v8666
      %v8668 = vrot.slane %v8667, 2
      %v8669 = vadd.f32 %v8667, %v8668
      %v8670 = vrot.slane %v8669, 1
      %v8671 = vadd.f32 %v8669, %v8670
      %v8672 = vadd.f32 %v7530, %v7532
      %v8673 = vadd.f32 %v8672, %v7534
      %v8674 = vadd.f32 %v8673, %v7536
      %v8675 = vrot.slane %v8674, 4
      %v8676 = vadd.f32 %v8674, %v8675
      %v8677 = vrot.slane %v8676, 2
      %v8678 = vadd.f32 %v8676, %v8677
      %v8679 = vrot.slane %v8678, 1
      %v8680 = vadd.f32 %v8678, %v8679
      %v8681 = vadd.f32 %v7538, %v7540
      %v8682 = vadd.f32 %v8681, %v7542
      %v8683 = vadd.f32 %v8682, %v7544
      %v8684 = vrot.slane %v8683, 4
      %v8685 = vadd.f32 %v8683, %v8684
      %v8686 = vrot.slane %v8685, 2
      %v8687 = vadd.f32 %v8685, %v8686
      %v8688 = vrot.slane %v8687, 1
      %v8689 = vadd.f32 %v8687, %v8688
      %v8690 = vadd.f32 %v7546, %v7548
      %v8691 = vadd.f32 %v8690, %v7550
      %v8692 = vadd.f32 %v8691, %v7552
      %v8693 = vrot.slane %v8692, 4
      %v8694 = vadd.f32 %v8692, %v8693
      %v8695 = vrot.slane %v8694, 2
      %v8696 = vadd.f32 %v8694, %v8695
      %v8697 = vrot.slane %v8696, 1
      %v8698 = vadd.f32 %v8696, %v8697
      %v8699 = vadd.f32 %v7554, %v7556
      %v8700 = vadd.f32 %v8699, %v7558
      %v8701 = vadd.f32 %v8700, %v7560
      %v8702 = vrot.slane %v8701, 4
      %v8703 = vadd.f32 %v8701, %v8702
      %v8704 = vrot.slane %v8703, 2
      %v8705 = vadd.f32 %v8703, %v8704
      %v8706 = vrot.slane %v8705, 1
      %v8707 = vadd.f32 %v8705, %v8706
      %v8708 = vadd.f32 %v7562, %v7564
      %v8709 = vadd.f32 %v8708, %v7566
      %v8710 = vadd.f32 %v8709, %v7568
      %v8711 = vrot.slane %v8710, 4
      %v8712 = vadd.f32 %v8710, %v8711
      %v8713 = vrot.slane %v8712, 2
      %v8714 = vadd.f32 %v8712, %v8713
      %v8715 = vrot.slane %v8714, 1
      %v8716 = vadd.f32 %v8714, %v8715
      %v8717 = vadd.f32 %v7570, %v7572
      %v8718 = vadd.f32 %v8717, %v7574
      %v8719 = vadd.f32 %v8718, %v7576
      %v8720 = vrot.slane %v8719, 4
      %v8721 = vadd.f32 %v8719, %v8720
      %v8722 = vrot.slane %v8721, 2
      %v8723 = vadd.f32 %v8721, %v8722
      %v8724 = vrot.slane %v8723, 1
      %v8725 = vadd.f32 %v8723, %v8724
      %v8726 = vadd.f32 %v7578, %v7580
      %v8727 = vadd.f32 %v8726, %v7582
      %v8728 = vadd.f32 %v8727, %v7584
      %v8729 = vrot.slane %v8728, 4
      %v8730 = vadd.f32 %v8728, %v8729
      %v8731 = vrot.slane %v8730, 2
      %v8732 = vadd.f32 %v8730, %v8731
      %v8733 = vrot.slane %v8732, 1
      %v8734 = vadd.f32 %v8732, %v8733
      %v8735 = vadd.f32 %v7586, %v7588
      %v8736 = vadd.f32 %v8735, %v7590
      %v8737 = vadd.f32 %v8736, %v7592
      %v8738 = vrot.slane %v8737, 4
      %v8739 = vadd.f32 %v8737, %v8738
      %v8740 = vrot.slane %v8739, 2
      %v8741 = vadd.f32 %v8739, %v8740
      %v8742 = vrot.slane %v8741, 1
      %v8743 = vadd.f32 %v8741, %v8742
      %v8744 = vadd.f32 %v7594, %v7596
      %v8745 = vadd.f32 %v8744, %v7598
      %v8746 = vadd.f32 %v8745, %v7600
      %v8747 = vrot.slane %v8746, 4
      %v8748 = vadd.f32 %v8746, %v8747
      %v8749 = vrot.slane %v8748, 2
      %v8750 = vadd.f32 %v8748, %v8749
      %v8751 = vrot.slane %v8750, 1
      %v8752 = vadd.f32 %v8750, %v8751
      %v8753 = vadd.f32 %v5937, %v7609
      %v8754 = vadd.f32 %v5938, %v7618
      %v8755 = vadd.f32 %v5939, %v7627
      %v8756 = vadd.f32 %v5940, %v7636
      %v8757 = vadd.f32 %v5941, %v7645
      %v8758 = vadd.f32 %v5942, %v7654
      %v8759 = vadd.f32 %v5943, %v7663
      %v8760 = vadd.f32 %v5944, %v7672
      %v8761 = vadd.f32 %v5945, %v7681
      %v8762 = vadd.f32 %v5946, %v7690
      %v8763 = vadd.f32 %v5947, %v7699
      %v8764 = vadd.f32 %v5948, %v7708
      %v8765 = vadd.f32 %v5949, %v7717
      %v8766 = vadd.f32 %v5950, %v7726
      %v8767 = vadd.f32 %v5951, %v7735
      %v8768 = vadd.f32 %v5952, %v7744
      %v8769 = vadd.f32 %v5953, %v7753
      %v8770 = vadd.f32 %v5954, %v7762
      %v8771 = vadd.f32 %v5955, %v7771
      %v8772 = vadd.f32 %v5956, %v7780
      %v8773 = vadd.f32 %v5957, %v7789
      %v8774 = vadd.f32 %v5958, %v7798
      %v8775 = vadd.f32 %v5959, %v7807
      %v8776 = vadd.f32 %v5960, %v7816
      %v8777 = vadd.f32 %v5961, %v7825
      %v8778 = vadd.f32 %v5962, %v7834
      %v8779 = vadd.f32 %v5963, %v7843
      %v8780 = vadd.f32 %v5964, %v7852
      %v8781 = vadd.f32 %v5965, %v7861
      %v8782 = vadd.f32 %v5966, %v7870
      %v8783 = vadd.f32 %v5967, %v7879
      %v8784 = vadd.f32 %v5968, %v7888
      %v8785 = vadd.f32 %v5969, %v7897
      %v8786 = vadd.f32 %v5970, %v7906
      %v8787 = vadd.f32 %v5971, %v7915
      %v8788 = vadd.f32 %v5972, %v7924
      %v8789 = vadd.f32 %v5973, %v7933
      %v8790 = vadd.f32 %v5974, %v7942
      %v8791 = vadd.f32 %v5975, %v7951
      %v8792 = vadd.f32 %v5976, %v7960
      %v8793 = vadd.f32 %v5977, %v7969
      %v8794 = vadd.f32 %v5978, %v7978
      %v8795 = vadd.f32 %v5979, %v7987
      %v8796 = vadd.f32 %v5980, %v7996
      %v8797 = vadd.f32 %v5981, %v8005
      %v8798 = vadd.f32 %v5982, %v8014
      %v8799 = vadd.f32 %v5983, %v8023
      %v8800 = vadd.f32 %v5984, %v8032
      %v8801 = vadd.f32 %v5985, %v8041
      %v8802 = vadd.f32 %v5986, %v8050
      %v8803 = vadd.f32 %v5987, %v8059
      %v8804 = vadd.f32 %v5988, %v8068
      %v8805 = vadd.f32 %v5989, %v8077
      %v8806 = vadd.f32 %v5990, %v8086
      %v8807 = vadd.f32 %v5991, %v8095
      %v8808 = vadd.f32 %v5992, %v8104
      %v8809 = vadd.f32 %v5993, %v8113
      %v8810 = vadd.f32 %v5994, %v8122
      %v8811 = vadd.f32 %v5995, %v8131
      %v8812 = vadd.f32 %v5996, %v8140
      %v8813 = vadd.f32 %v5997, %v8149
      %v8814 = vadd.f32 %v5998, %v8158
      %v8815 = vadd.f32 %v5999, %v8167
      %v8816 = vadd.f32 %v6000, %v8176
      %v8817 = vadd.f32 %v6001, %v8185
      %v8818 = vadd.f32 %v6002, %v8194
      %v8819 = vadd.f32 %v6003, %v8203
      %v8820 = vadd.f32 %v6004, %v8212
      %v8821 = vadd.f32 %v6005, %v8221
      %v8822 = vadd.f32 %v6006, %v8230
      %v8823 = vadd.f32 %v6007, %v8239
      %v8824 = vadd.f32 %v6008, %v8248
      %v8825 = vadd.f32 %v6009, %v8257
      %v8826 = vadd.f32 %v6010, %v8266
      %v8827 = vadd.f32 %v6011, %v8275
      %v8828 = vadd.f32 %v6012, %v8284
      %v8829 = vadd.f32 %v6013, %v8293
      %v8830 = vadd.f32 %v6014, %v8302
      %v8831 = vadd.f32 %v6015, %v8311
      %v8832 = vadd.f32 %v6016, %v8320
      %v8833 = vadd.f32 %v6017, %v8329
      %v8834 = vadd.f32 %v6018, %v8338
      %v8835 = vadd.f32 %v6019, %v8347
      %v8836 = vadd.f32 %v6020, %v8356
      %v8837 = vadd.f32 %v6021, %v8365
      %v8838 = vadd.f32 %v6022, %v8374
      %v8839 = vadd.f32 %v6023, %v8383
      %v8840 = vadd.f32 %v6024, %v8392
      %v8841 = vadd.f32 %v6025, %v8401
      %v8842 = vadd.f32 %v6026, %v8410
      %v8843 = vadd.f32 %v6027, %v8419
      %v8844 = vadd.f32 %v6028, %v8428
      %v8845 = vadd.f32 %v6029, %v8437
      %v8846 = vadd.f32 %v6030, %v8446
      %v8847 = vadd.f32 %v6031, %v8455
      %v8848 = vadd.f32 %v6032, %v8464
      %v8849 = vadd.f32 %v6033, %v8473
      %v8850 = vadd.f32 %v6034, %v8482
      %v8851 = vadd.f32 %v6035, %v8491
      %v8852 = vadd.f32 %v6036, %v8500
      %v8853 = vadd.f32 %v6037, %v8509
      %v8854 = vadd.f32 %v6038, %v8518
      %v8855 = vadd.f32 %v6039, %v8527
      %v8856 = vadd.f32 %v6040, %v8536
      %v8857 = vadd.f32 %v6041, %v8545
      %v8858 = vadd.f32 %v6042, %v8554
      %v8859 = vadd.f32 %v6043, %v8563
      %v8860 = vadd.f32 %v6044, %v8572
      %v8861 = vadd.f32 %v6045, %v8581
      %v8862 = vadd.f32 %v6046, %v8590
      %v8863 = vadd.f32 %v6047, %v8599
      %v8864 = vadd.f32 %v6048, %v8608
      %v8865 = vadd.f32 %v6049, %v8617
      %v8866 = vadd.f32 %v6050, %v8626
      %v8867 = vadd.f32 %v6051, %v8635
      %v8868 = vadd.f32 %v6052, %v8644
      %v8869 = vadd.f32 %v6053, %v8653
      %v8870 = vadd.f32 %v6054, %v8662
      %v8871 = vadd.f32 %v6055, %v8671
      %v8872 = vadd.f32 %v6056, %v8680
      %v8873 = vadd.f32 %v6057, %v8689
      %v8874 = vadd.f32 %v6058, %v8698
      %v8875 = vadd.f32 %v6059, %v8707
      %v8876 = vadd.f32 %v6060, %v8716
      %v8877 = vadd.f32 %v6061, %v8725
      %v8878 = vadd.f32 %v6062, %v8734
      %v8879 = vadd.f32 %v6063, %v8743
      %v8880 = vadd.f32 %v6064, %v8752
      %v8881 = vlog2.pop %v8753
      %v8882 = vmul.f32 %v8881, 0.6931472
      %v8883 = vlog2.pop %v8754
      %v8884 = vmul.f32 %v8883, 0.6931472
      %v8885 = vlog2.pop %v8755
      %v8886 = vmul.f32 %v8885, 0.6931472
      %v8887 = vlog2.pop %v8756
      %v8888 = vmul.f32 %v8887, 0.6931472
      %v8889 = vlog2.pop %v8757
      %v8890 = vmul.f32 %v8889, 0.6931472
      %v8891 = vlog2.pop %v8758
      %v8892 = vmul.f32 %v8891, 0.6931472
      %v8893 = vlog2.pop %v8759
      %v8894 = vmul.f32 %v8893, 0.6931472
      %v8895 = vlog2.pop %v8760
      %v8896 = vmul.f32 %v8895, 0.6931472
      %v8897 = vlog2.pop %v8761
      %v8898 = vmul.f32 %v8897, 0.6931472
      %v8899 = vlog2.pop %v8762
      %v8900 = vmul.f32 %v8899, 0.6931472
      %v8901 = vlog2.pop %v8763
      %v8902 = vmul.f32 %v8901, 0.6931472
      %v8903 = vlog2.pop %v8764
      %v8904 = vmul.f32 %v8903, 0.6931472
      %v8905 = vlog2.pop %v8765
      %v8906 = vmul.f32 %v8905, 0.6931472
      %v8907 = vlog2.pop %v8766
      %v8908 = vmul.f32 %v8907, 0.6931472
      %v8909 = vlog2.pop %v8767
      %v8910 = vmul.f32 %v8909, 0.6931472
      %v8911 = vlog2.pop %v8768
      %v8912 = vmul.f32 %v8911, 0.6931472
      %v8913 = vlog2.pop %v8769
      %v8914 = vmul.f32 %v8913, 0.6931472
      %v8915 = vlog2.pop %v8770
      %v8916 = vmul.f32 %v8915, 0.6931472
      %v8917 = vlog2.pop %v8771
      %v8918 = vmul.f32 %v8917, 0.6931472
      %v8919 = vlog2.pop %v8772
      %v8920 = vmul.f32 %v8919, 0.6931472
      %v8921 = vlog2.pop %v8773
      %v8922 = vmul.f32 %v8921, 0.6931472
      %v8923 = vlog2.pop %v8774
      %v8924 = vmul.f32 %v8923, 0.6931472
      %v8925 = vlog2.pop %v8775
      %v8926 = vmul.f32 %v8925, 0.6931472
      %v8927 = vlog2.pop %v8776
      %v8928 = vmul.f32 %v8927, 0.6931472
      %v8929 = vlog2.pop %v8777
      %v8930 = vmul.f32 %v8929, 0.6931472
      %v8931 = vlog2.pop %v8778
      %v8932 = vmul.f32 %v8931, 0.6931472
      %v8933 = vlog2.pop %v8779
      %v8934 = vmul.f32 %v8933, 0.6931472
      %v8935 = vlog2.pop %v8780
      %v8936 = vmul.f32 %v8935, 0.6931472
      %v8937 = vlog2.pop %v8781
      %v8938 = vmul.f32 %v8937, 0.6931472
      %v8939 = vlog2.pop %v8782
      %v8940 = vmul.f32 %v8939, 0.6931472
      %v8941 = vlog2.pop %v8783
      %v8942 = vmul.f32 %v8941, 0.6931472
      %v8943 = vlog2.pop %v8784
      %v8944 = vmul.f32 %v8943, 0.6931472
      %v8945 = vlog2.pop %v8785
      %v8946 = vmul.f32 %v8945, 0.6931472
      %v8947 = vlog2.pop %v8786
      %v8948 = vmul.f32 %v8947, 0.6931472
      %v8949 = vlog2.pop %v8787
      %v8950 = vmul.f32 %v8949, 0.6931472
      %v8951 = vlog2.pop %v8788
      %v8952 = vmul.f32 %v8951, 0.6931472
      %v8953 = vlog2.pop %v8789
      %v8954 = vmul.f32 %v8953, 0.6931472
      %v8955 = vlog2.pop %v8790
      %v8956 = vmul.f32 %v8955, 0.6931472
      %v8957 = vlog2.pop %v8791
      %v8958 = vmul.f32 %v8957, 0.6931472
      %v8959 = vlog2.pop %v8792
      %v8960 = vmul.f32 %v8959, 0.6931472
      %v8961 = vlog2.pop %v8793
      %v8962 = vmul.f32 %v8961, 0.6931472
      %v8963 = vlog2.pop %v8794
      %v8964 = vmul.f32 %v8963, 0.6931472
      %v8965 = vlog2.pop %v8795
      %v8966 = vmul.f32 %v8965, 0.6931472
      %v8967 = vlog2.pop %v8796
      %v8968 = vmul.f32 %v8967, 0.6931472
      %v8969 = vlog2.pop %v8797
      %v8970 = vmul.f32 %v8969, 0.6931472
      %v8971 = vlog2.pop %v8798
      %v8972 = vmul.f32 %v8971, 0.6931472
      %v8973 = vlog2.pop %v8799
      %v8974 = vmul.f32 %v8973, 0.6931472
      %v8975 = vlog2.pop %v8800
      %v8976 = vmul.f32 %v8975, 0.6931472
      %v8977 = vlog2.pop %v8801
      %v8978 = vmul.f32 %v8977, 0.6931472
      %v8979 = vlog2.pop %v8802
      %v8980 = vmul.f32 %v8979, 0.6931472
      %v8981 = vlog2.pop %v8803
      %v8982 = vmul.f32 %v8981, 0.6931472
      %v8983 = vlog2.pop %v8804
      %v8984 = vmul.f32 %v8983, 0.6931472
      %v8985 = vlog2.pop %v8805
      %v8986 = vmul.f32 %v8985, 0.6931472
      %v8987 = vlog2.pop %v8806
      %v8988 = vmul.f32 %v8987, 0.6931472
      %v8989 = vlog2.pop %v8807
      %v8990 = vmul.f32 %v8989, 0.6931472
      %v8991 = vlog2.pop %v8808
      %v8992 = vmul.f32 %v8991, 0.6931472
      %v8993 = vlog2.pop %v8809
      %v8994 = vmul.f32 %v8993, 0.6931472
      %v8995 = vlog2.pop %v8810
      %v8996 = vmul.f32 %v8995, 0.6931472
      %v8997 = vlog2.pop %v8811
      %v8998 = vmul.f32 %v8997, 0.6931472
      %v8999 = vlog2.pop %v8812
      %v9000 = vmul.f32 %v8999, 0.6931472
      %v9001 = vlog2.pop %v8813
      %v9002 = vmul.f32 %v9001, 0.6931472
      %v9003 = vlog2.pop %v8814
      %v9004 = vmul.f32 %v9003, 0.6931472
      %v9005 = vlog2.pop %v8815
      %v9006 = vmul.f32 %v9005, 0.6931472
      %v9007 = vlog2.pop %v8816
      %v9008 = vmul.f32 %v9007, 0.6931472
      %v9009 = vlog2.pop %v8817
      %v9010 = vmul.f32 %v9009, 0.6931472
      %v9011 = vlog2.pop %v8818
      %v9012 = vmul.f32 %v9011, 0.6931472
      %v9013 = vlog2.pop %v8819
      %v9014 = vmul.f32 %v9013, 0.6931472
      %v9015 = vlog2.pop %v8820
      %v9016 = vmul.f32 %v9015, 0.6931472
      %v9017 = vlog2.pop %v8821
      %v9018 = vmul.f32 %v9017, 0.6931472
      %v9019 = vlog2.pop %v8822
      %v9020 = vmul.f32 %v9019, 0.6931472
      %v9021 = vlog2.pop %v8823
      %v9022 = vmul.f32 %v9021, 0.6931472
      %v9023 = vlog2.pop %v8824
      %v9024 = vmul.f32 %v9023, 0.6931472
      %v9025 = vlog2.pop %v8825
      %v9026 = vmul.f32 %v9025, 0.6931472
      %v9027 = vlog2.pop %v8826
      %v9028 = vmul.f32 %v9027, 0.6931472
      %v9029 = vlog2.pop %v8827
      %v9030 = vmul.f32 %v9029, 0.6931472
      %v9031 = vlog2.pop %v8828
      %v9032 = vmul.f32 %v9031, 0.6931472
      %v9033 = vlog2.pop %v8829
      %v9034 = vmul.f32 %v9033, 0.6931472
      %v9035 = vlog2.pop %v8830
      %v9036 = vmul.f32 %v9035, 0.6931472
      %v9037 = vlog2.pop %v8831
      %v9038 = vmul.f32 %v9037, 0.6931472
      %v9039 = vlog2.pop %v8832
      %v9040 = vmul.f32 %v9039, 0.6931472
      %v9041 = vlog2.pop %v8833
      %v9042 = vmul.f32 %v9041, 0.6931472
      %v9043 = vlog2.pop %v8834
      %v9044 = vmul.f32 %v9043, 0.6931472
      %v9045 = vlog2.pop %v8835
      %v9046 = vmul.f32 %v9045, 0.6931472
      %v9047 = vlog2.pop %v8836
      %v9048 = vmul.f32 %v9047, 0.6931472
      %v9049 = vlog2.pop %v8837
      %v9050 = vmul.f32 %v9049, 0.6931472
      %v9051 = vlog2.pop %v8838
      %v9052 = vmul.f32 %v9051, 0.6931472
      %v9053 = vlog2.pop %v8839
      %v9054 = vmul.f32 %v9053, 0.6931472
      %v9055 = vlog2.pop %v8840
      %v9056 = vmul.f32 %v9055, 0.6931472
      %v9057 = vlog2.pop %v8841
      %v9058 = vmul.f32 %v9057, 0.6931472
      %v9059 = vlog2.pop %v8842
      %v9060 = vmul.f32 %v9059, 0.6931472
      %v9061 = vlog2.pop %v8843
      %v9062 = vmul.f32 %v9061, 0.6931472
      %v9063 = vlog2.pop %v8844
      %v9064 = vmul.f32 %v9063, 0.6931472
      %v9065 = vlog2.pop %v8845
      %v9066 = vmul.f32 %v9065, 0.6931472
      %v9067 = vlog2.pop %v8846
      %v9068 = vmul.f32 %v9067, 0.6931472
      %v9069 = vlog2.pop %v8847
      %v9070 = vmul.f32 %v9069, 0.6931472
      %v9071 = vlog2.pop %v8848
      %v9072 = vmul.f32 %v9071, 0.6931472
      %v9073 = vlog2.pop %v8849
      %v9074 = vmul.f32 %v9073, 0.6931472
      %v9075 = vlog2.pop %v8850
      %v9076 = vmul.f32 %v9075, 0.6931472
      %v9077 = vlog2.pop %v8851
      %v9078 = vmul.f32 %v9077, 0.6931472
      %v9079 = vlog2.pop %v8852
      %v9080 = vmul.f32 %v9079, 0.6931472
      %v9081 = vlog2.pop %v8853
      %v9082 = vmul.f32 %v9081, 0.6931472
      %v9083 = vlog2.pop %v8854
      %v9084 = vmul.f32 %v9083, 0.6931472
      %v9085 = vlog2.pop %v8855
      %v9086 = vmul.f32 %v9085, 0.6931472
      %v9087 = vlog2.pop %v8856
      %v9088 = vmul.f32 %v9087, 0.6931472
      %v9089 = vlog2.pop %v8857
      %v9090 = vmul.f32 %v9089, 0.6931472
      %v9091 = vlog2.pop %v8858
      %v9092 = vmul.f32 %v9091, 0.6931472
      %v9093 = vlog2.pop %v8859
      %v9094 = vmul.f32 %v9093, 0.6931472
      %v9095 = vlog2.pop %v8860
      %v9096 = vmul.f32 %v9095, 0.6931472
      %v9097 = vlog2.pop %v8861
      %v9098 = vmul.f32 %v9097, 0.6931472
      %v9099 = vlog2.pop %v8862
      %v9100 = vmul.f32 %v9099, 0.6931472
      %v9101 = vlog2.pop %v8863
      %v9102 = vmul.f32 %v9101, 0.6931472
      %v9103 = vlog2.pop %v8864
      %v9104 = vmul.f32 %v9103, 0.6931472
      %v9105 = vlog2.pop %v8865
      %v9106 = vmul.f32 %v9105, 0.6931472
      %v9107 = vlog2.pop %v8866
      %v9108 = vmul.f32 %v9107, 0.6931472
      %v9109 = vlog2.pop %v8867
      %v9110 = vmul.f32 %v9109, 0.6931472
      %v9111 = vlog2.pop %v8868
      %v9112 = vmul.f32 %v9111, 0.6931472
      %v9113 = vlog2.pop %v8869
      %v9114 = vmul.f32 %v9113, 0.6931472
      %v9115 = vlog2.pop %v8870
      %v9116 = vmul.f32 %v9115, 0.6931472
      %v9117 = vlog2.pop %v8871
      %v9118 = vmul.f32 %v9117, 0.6931472
      %v9119 = vlog2.pop %v8872
      %v9120 = vmul.f32 %v9119, 0.6931472
      %v9121 = vlog2.pop %v8873
      %v9122 = vmul.f32 %v9121, 0.6931472
      %v9123 = vlog2.pop %v8874
      %v9124 = vmul.f32 %v9123, 0.6931472
      %v9125 = vlog2.pop %v8875
      %v9126 = vmul.f32 %v9125, 0.6931472
      %v9127 = vlog2.pop %v8876
      %v9128 = vmul.f32 %v9127, 0.6931472
      %v9129 = vlog2.pop %v8877
      %v9130 = vmul.f32 %v9129, 0.6931472
      %v9131 = vlog2.pop %v8878
      %v9132 = vmul.f32 %v9131, 0.6931472
      %v9133 = vlog2.pop %v8879
      %v9134 = vmul.f32 %v9133, 0.6931472
      %v9135 = vlog2.pop %v8880
      %v9136 = vmul.f32 %v9135, 0.6931472
      %v9137 = vadd.f32 %v4409, %v8882
      %v9138 = vadd.f32 %v4418, %v8884
      %v9139 = vadd.f32 %v4427, %v8886
      %v9140 = vadd.f32 %v4436, %v8888
      %v9141 = vadd.f32 %v4445, %v8890
      %v9142 = vadd.f32 %v4454, %v8892
      %v9143 = vadd.f32 %v4463, %v8894
      %v9144 = vadd.f32 %v4472, %v8896
      %v9145 = vadd.f32 %v4481, %v8898
      %v9146 = vadd.f32 %v4490, %v8900
      %v9147 = vadd.f32 %v4499, %v8902
      %v9148 = vadd.f32 %v4508, %v8904
      %v9149 = vadd.f32 %v4517, %v8906
      %v9150 = vadd.f32 %v4526, %v8908
      %v9151 = vadd.f32 %v4535, %v8910
      %v9152 = vadd.f32 %v4544, %v8912
      %v9153 = vadd.f32 %v4553, %v8914
      %v9154 = vadd.f32 %v4562, %v8916
      %v9155 = vadd.f32 %v4571, %v8918
      %v9156 = vadd.f32 %v4580, %v8920
      %v9157 = vadd.f32 %v4589, %v8922
      %v9158 = vadd.f32 %v4598, %v8924
      %v9159 = vadd.f32 %v4607, %v8926
      %v9160 = vadd.f32 %v4616, %v8928
      %v9161 = vadd.f32 %v4625, %v8930
      %v9162 = vadd.f32 %v4634, %v8932
      %v9163 = vadd.f32 %v4643, %v8934
      %v9164 = vadd.f32 %v4652, %v8936
      %v9165 = vadd.f32 %v4661, %v8938
      %v9166 = vadd.f32 %v4670, %v8940
      %v9167 = vadd.f32 %v4679, %v8942
      %v9168 = vadd.f32 %v4688, %v8944
      %v9169 = vadd.f32 %v4697, %v8946
      %v9170 = vadd.f32 %v4706, %v8948
      %v9171 = vadd.f32 %v4715, %v8950
      %v9172 = vadd.f32 %v4724, %v8952
      %v9173 = vadd.f32 %v4733, %v8954
      %v9174 = vadd.f32 %v4742, %v8956
      %v9175 = vadd.f32 %v4751, %v8958
      %v9176 = vadd.f32 %v4760, %v8960
      %v9177 = vadd.f32 %v4769, %v8962
      %v9178 = vadd.f32 %v4778, %v8964
      %v9179 = vadd.f32 %v4787, %v8966
      %v9180 = vadd.f32 %v4796, %v8968
      %v9181 = vadd.f32 %v4805, %v8970
      %v9182 = vadd.f32 %v4814, %v8972
      %v9183 = vadd.f32 %v4823, %v8974
      %v9184 = vadd.f32 %v4832, %v8976
      %v9185 = vadd.f32 %v4841, %v8978
      %v9186 = vadd.f32 %v4850, %v8980
      %v9187 = vadd.f32 %v4859, %v8982
      %v9188 = vadd.f32 %v4868, %v8984
      %v9189 = vadd.f32 %v4877, %v8986
      %v9190 = vadd.f32 %v4886, %v8988
      %v9191 = vadd.f32 %v4895, %v8990
      %v9192 = vadd.f32 %v4904, %v8992
      %v9193 = vadd.f32 %v4913, %v8994
      %v9194 = vadd.f32 %v4922, %v8996
      %v9195 = vadd.f32 %v4931, %v8998
      %v9196 = vadd.f32 %v4940, %v9000
      %v9197 = vadd.f32 %v4949, %v9002
      %v9198 = vadd.f32 %v4958, %v9004
      %v9199 = vadd.f32 %v4967, %v9006
      %v9200 = vadd.f32 %v4976, %v9008
      %v9201 = vadd.f32 %v4985, %v9010
      %v9202 = vadd.f32 %v4994, %v9012
      %v9203 = vadd.f32 %v5003, %v9014
      %v9204 = vadd.f32 %v5012, %v9016
      %v9205 = vadd.f32 %v5021, %v9018
      %v9206 = vadd.f32 %v5030, %v9020
      %v9207 = vadd.f32 %v5039, %v9022
      %v9208 = vadd.f32 %v5048, %v9024
      %v9209 = vadd.f32 %v5057, %v9026
      %v9210 = vadd.f32 %v5066, %v9028
      %v9211 = vadd.f32 %v5075, %v9030
      %v9212 = vadd.f32 %v5084, %v9032
      %v9213 = vadd.f32 %v5093, %v9034
      %v9214 = vadd.f32 %v5102, %v9036
      %v9215 = vadd.f32 %v5111, %v9038
      %v9216 = vadd.f32 %v5120, %v9040
      %v9217 = vadd.f32 %v5129, %v9042
      %v9218 = vadd.f32 %v5138, %v9044
      %v9219 = vadd.f32 %v5147, %v9046
      %v9220 = vadd.f32 %v5156, %v9048
      %v9221 = vadd.f32 %v5165, %v9050
      %v9222 = vadd.f32 %v5174, %v9052
      %v9223 = vadd.f32 %v5183, %v9054
      %v9224 = vadd.f32 %v5192, %v9056
      %v9225 = vadd.f32 %v5201, %v9058
      %v9226 = vadd.f32 %v5210, %v9060
      %v9227 = vadd.f32 %v5219, %v9062
      %v9228 = vadd.f32 %v5228, %v9064
      %v9229 = vadd.f32 %v5237, %v9066
      %v9230 = vadd.f32 %v5246, %v9068
      %v9231 = vadd.f32 %v5255, %v9070
      %v9232 = vadd.f32 %v5264, %v9072
      %v9233 = vadd.f32 %v5273, %v9074
      %v9234 = vadd.f32 %v5282, %v9076
      %v9235 = vadd.f32 %v5291, %v9078
      %v9236 = vadd.f32 %v5300, %v9080
      %v9237 = vadd.f32 %v5309, %v9082
      %v9238 = vadd.f32 %v5318, %v9084
      %v9239 = vadd.f32 %v5327, %v9086
      %v9240 = vadd.f32 %v5336, %v9088
      %v9241 = vadd.f32 %v5345, %v9090
      %v9242 = vadd.f32 %v5354, %v9092
      %v9243 = vadd.f32 %v5363, %v9094
      %v9244 = vadd.f32 %v5372, %v9096
      %v9245 = vadd.f32 %v5381, %v9098
      %v9246 = vadd.f32 %v5390, %v9100
      %v9247 = vadd.f32 %v5399, %v9102
      %v9248 = vadd.f32 %v5408, %v9104
      %v9249 = vadd.f32 %v5417, %v9106
      %v9250 = vadd.f32 %v5426, %v9108
      %v9251 = vadd.f32 %v5435, %v9110
      %v9252 = vadd.f32 %v5444, %v9112
      %v9253 = vadd.f32 %v5453, %v9114
      %v9254 = vadd.f32 %v5462, %v9116
      %v9255 = vadd.f32 %v5471, %v9118
      %v9256 = vadd.f32 %v5480, %v9120
      %v9257 = vadd.f32 %v5489, %v9122
      %v9258 = vadd.f32 %v5498, %v9124
      %v9259 = vadd.f32 %v5507, %v9126
      %v9260 = vadd.f32 %v5516, %v9128
      %v9261 = vadd.f32 %v5525, %v9130
      %v9262 = vadd.f32 %v5534, %v9132
      %v9263 = vadd.f32 %v5543, %v9134
      %v9264 = vadd.f32 %v5552, %v9136
      %v9265 = vmul.f32 %v9137, 32.0
      %v9266 = vmul.f32 %v9138, 32.0
      %v9267 = vmul.f32 %v9139, 32.0
      %v9268 = vmul.f32 %v9140, 32.0
      %v9269 = vmul.f32 %v9141, 32.0
      %v9270 = vmul.f32 %v9142, 32.0
      %v9271 = vmul.f32 %v9143, 32.0
      %v9272 = vmul.f32 %v9144, 32.0
      %v9273 = vmul.f32 %v9145, 32.0
      %v9274 = vmul.f32 %v9146, 32.0
      %v9275 = vmul.f32 %v9147, 32.0
      %v9276 = vmul.f32 %v9148, 32.0
      %v9277 = vmul.f32 %v9149, 32.0
      %v9278 = vmul.f32 %v9150, 32.0
      %v9279 = vmul.f32 %v9151, 32.0
      %v9280 = vmul.f32 %v9152, 32.0
      %v9281 = vmul.f32 %v9153, 32.0
      %v9282 = vmul.f32 %v9154, 32.0
      %v9283 = vmul.f32 %v9155, 32.0
      %v9284 = vmul.f32 %v9156, 32.0
      %v9285 = vmul.f32 %v9157, 32.0
      %v9286 = vmul.f32 %v9158, 32.0
      %v9287 = vmul.f32 %v9159, 32.0
      %v9288 = vmul.f32 %v9160, 32.0
      %v9289 = vmul.f32 %v9161, 32.0
      %v9290 = vmul.f32 %v9162, 32.0
      %v9291 = vmul.f32 %v9163, 32.0
      %v9292 = vmul.f32 %v9164, 32.0
      %v9293 = vmul.f32 %v9165, 32.0
      %v9294 = vmul.f32 %v9166, 32.0
      %v9295 = vmul.f32 %v9167, 32.0
      %v9296 = vmul.f32 %v9168, 32.0
      %v9297 = vmul.f32 %v9169, 32.0
      %v9298 = vmul.f32 %v9170, 32.0
      %v9299 = vmul.f32 %v9171, 32.0
      %v9300 = vmul.f32 %v9172, 32.0
      %v9301 = vmul.f32 %v9173, 32.0
      %v9302 = vmul.f32 %v9174, 32.0
      %v9303 = vmul.f32 %v9175, 32.0
      %v9304 = vmul.f32 %v9176, 32.0
      %v9305 = vmul.f32 %v9177, 32.0
      %v9306 = vmul.f32 %v9178, 32.0
      %v9307 = vmul.f32 %v9179, 32.0
      %v9308 = vmul.f32 %v9180, 32.0
      %v9309 = vmul.f32 %v9181, 32.0
      %v9310 = vmul.f32 %v9182, 32.0
      %v9311 = vmul.f32 %v9183, 32.0
      %v9312 = vmul.f32 %v9184, 32.0
      %v9313 = vmul.f32 %v9185, 32.0
      %v9314 = vmul.f32 %v9186, 32.0
      %v9315 = vmul.f32 %v9187, 32.0
      %v9316 = vmul.f32 %v9188, 32.0
      %v9317 = vmul.f32 %v9189, 32.0
      %v9318 = vmul.f32 %v9190, 32.0
      %v9319 = vmul.f32 %v9191, 32.0
      %v9320 = vmul.f32 %v9192, 32.0
      %v9321 = vmul.f32 %v9193, 32.0
      %v9322 = vmul.f32 %v9194, 32.0
      %v9323 = vmul.f32 %v9195, 32.0
      %v9324 = vmul.f32 %v9196, 32.0
      %v9325 = vmul.f32 %v9197, 32.0
      %v9326 = vmul.f32 %v9198, 32.0
      %v9327 = vmul.f32 %v9199, 32.0
      %v9328 = vmul.f32 %v9200, 32.0
      %v9329 = vmul.f32 %v9201, 32.0
      %v9330 = vmul.f32 %v9202, 32.0
      %v9331 = vmul.f32 %v9203, 32.0
      %v9332 = vmul.f32 %v9204, 32.0
      %v9333 = vmul.f32 %v9205, 32.0
      %v9334 = vmul.f32 %v9206, 32.0
      %v9335 = vmul.f32 %v9207, 32.0
      %v9336 = vmul.f32 %v9208, 32.0
      %v9337 = vmul.f32 %v9209, 32.0
      %v9338 = vmul.f32 %v9210, 32.0
      %v9339 = vmul.f32 %v9211, 32.0
      %v9340 = vmul.f32 %v9212, 32.0
      %v9341 = vmul.f32 %v9213, 32.0
      %v9342 = vmul.f32 %v9214, 32.0
      %v9343 = vmul.f32 %v9215, 32.0
      %v9344 = vmul.f32 %v9216, 32.0
      %v9345 = vmul.f32 %v9217, 32.0
      %v9346 = vmul.f32 %v9218, 32.0
      %v9347 = vmul.f32 %v9219, 32.0
      %v9348 = vmul.f32 %v9220, 32.0
      %v9349 = vmul.f32 %v9221, 32.0
      %v9350 = vmul.f32 %v9222, 32.0
      %v9351 = vmul.f32 %v9223, 32.0
      %v9352 = vmul.f32 %v9224, 32.0
      %v9353 = vmul.f32 %v9225, 32.0
      %v9354 = vmul.f32 %v9226, 32.0
      %v9355 = vmul.f32 %v9227, 32.0
      %v9356 = vmul.f32 %v9228, 32.0
      %v9357 = vmul.f32 %v9229, 32.0
      %v9358 = vmul.f32 %v9230, 32.0
      %v9359 = vmul.f32 %v9231, 32.0
      %v9360 = vmul.f32 %v9232, 32.0
      %v9361 = vmul.f32 %v9233, 32.0
      %v9362 = vmul.f32 %v9234, 32.0
      %v9363 = vmul.f32 %v9235, 32.0
      %v9364 = vmul.f32 %v9236, 32.0
      %v9365 = vmul.f32 %v9237, 32.0
      %v9366 = vmul.f32 %v9238, 32.0
      %v9367 = vmul.f32 %v9239, 32.0
      %v9368 = vmul.f32 %v9240, 32.0
      %v9369 = vmul.f32 %v9241, 32.0
      %v9370 = vmul.f32 %v9242, 32.0
      %v9371 = vmul.f32 %v9243, 32.0
      %v9372 = vmul.f32 %v9244, 32.0
      %v9373 = vmul.f32 %v9245, 32.0
      %v9374 = vmul.f32 %v9246, 32.0
      %v9375 = vmul.f32 %v9247, 32.0
      %v9376 = vmul.f32 %v9248, 32.0
      %v9377 = vmul.f32 %v9249, 32.0
      %v9378 = vmul.f32 %v9250, 32.0
      %v9379 = vmul.f32 %v9251, 32.0
      %v9380 = vmul.f32 %v9252, 32.0
      %v9381 = vmul.f32 %v9253, 32.0
      %v9382 = vmul.f32 %v9254, 32.0
      %v9383 = vmul.f32 %v9255, 32.0
      %v9384 = vmul.f32 %v9256, 32.0
      %v9385 = vmul.f32 %v9257, 32.0
      %v9386 = vmul.f32 %v9258, 32.0
      %v9387 = vmul.f32 %v9259, 32.0
      %v9388 = vmul.f32 %v9260, 32.0
      %v9389 = vmul.f32 %v9261, 32.0
      %v9390 = vmul.f32 %v9262, 32.0
      %v9391 = vmul.f32 %v9263, 32.0
      %v9392 = vmul.f32 %v9264, 32.0
      %v9393 = vsub.f32 %v4273, %v9265
      %v9394 = vsub.f32 %v4274, %v9266
      %v9395 = vsub.f32 %v4275, %v9267
      %v9396 = vsub.f32 %v4276, %v9268
      %v9397 = vsub.f32 %v4277, %v9269
      %v9398 = vsub.f32 %v4278, %v9270
      %v9399 = vsub.f32 %v4279, %v9271
      %v9400 = vsub.f32 %v4280, %v9272
      %v9401 = vsub.f32 %v4281, %v9273
      %v9402 = vsub.f32 %v4282, %v9274
      %v9403 = vsub.f32 %v4283, %v9275
      %v9404 = vsub.f32 %v4284, %v9276
      %v9405 = vsub.f32 %v4285, %v9277
      %v9406 = vsub.f32 %v4286, %v9278
      %v9407 = vsub.f32 %v4287, %v9279
      %v9408 = vsub.f32 %v4288, %v9280
      %v9409 = vsub.f32 %v4289, %v9281
      %v9410 = vsub.f32 %v4290, %v9282
      %v9411 = vsub.f32 %v4291, %v9283
      %v9412 = vsub.f32 %v4292, %v9284
      %v9413 = vsub.f32 %v4293, %v9285
      %v9414 = vsub.f32 %v4294, %v9286
      %v9415 = vsub.f32 %v4295, %v9287
      %v9416 = vsub.f32 %v4296, %v9288
      %v9417 = vsub.f32 %v4297, %v9289
      %v9418 = vsub.f32 %v4298, %v9290
      %v9419 = vsub.f32 %v4299, %v9291
      %v9420 = vsub.f32 %v4300, %v9292
      %v9421 = vsub.f32 %v4301, %v9293
      %v9422 = vsub.f32 %v4302, %v9294
      %v9423 = vsub.f32 %v4303, %v9295
      %v9424 = vsub.f32 %v4304, %v9296
      %v9425 = vsub.f32 %v4305, %v9297
      %v9426 = vsub.f32 %v4306, %v9298
      %v9427 = vsub.f32 %v4307, %v9299
      %v9428 = vsub.f32 %v4308, %v9300
      %v9429 = vsub.f32 %v4309, %v9301
      %v9430 = vsub.f32 %v4310, %v9302
      %v9431 = vsub.f32 %v4311, %v9303
      %v9432 = vsub.f32 %v4312, %v9304
      %v9433 = vsub.f32 %v4313, %v9305
      %v9434 = vsub.f32 %v4314, %v9306
      %v9435 = vsub.f32 %v4315, %v9307
      %v9436 = vsub.f32 %v4316, %v9308
      %v9437 = vsub.f32 %v4317, %v9309
      %v9438 = vsub.f32 %v4318, %v9310
      %v9439 = vsub.f32 %v4319, %v9311
      %v9440 = vsub.f32 %v4320, %v9312
      %v9441 = vsub.f32 %v4321, %v9313
      %v9442 = vsub.f32 %v4322, %v9314
      %v9443 = vsub.f32 %v4323, %v9315
      %v9444 = vsub.f32 %v4324, %v9316
      %v9445 = vsub.f32 %v4325, %v9317
      %v9446 = vsub.f32 %v4326, %v9318
      %v9447 = vsub.f32 %v4327, %v9319
      %v9448 = vsub.f32 %v4328, %v9320
      %v9449 = vsub.f32 %v4329, %v9321
      %v9450 = vsub.f32 %v4330, %v9322
      %v9451 = vsub.f32 %v4331, %v9323
      %v9452 = vsub.f32 %v4332, %v9324
      %v9453 = vsub.f32 %v4333, %v9325
      %v9454 = vsub.f32 %v4334, %v9326
      %v9455 = vsub.f32 %v4335, %v9327
      %v9456 = vsub.f32 %v4336, %v9328
      %v9457 = vsub.f32 %v4337, %v9329
      %v9458 = vsub.f32 %v4338, %v9330
      %v9459 = vsub.f32 %v4339, %v9331
      %v9460 = vsub.f32 %v4340, %v9332
      %v9461 = vsub.f32 %v4341, %v9333
      %v9462 = vsub.f32 %v4342, %v9334
      %v9463 = vsub.f32 %v4343, %v9335
      %v9464 = vsub.f32 %v4344, %v9336
      %v9465 = vsub.f32 %v4345, %v9337
      %v9466 = vsub.f32 %v4346, %v9338
      %v9467 = vsub.f32 %v4347, %v9339
      %v9468 = vsub.f32 %v4348, %v9340
      %v9469 = vsub.f32 %v4349, %v9341
      %v9470 = vsub.f32 %v4350, %v9342
      %v9471 = vsub.f32 %v4351, %v9343
      %v9472 = vsub.f32 %v4352, %v9344
      %v9473 = vsub.f32 %v4353, %v9345
      %v9474 = vsub.f32 %v4354, %v9346
      %v9475 = vsub.f32 %v4355, %v9347
      %v9476 = vsub.f32 %v4356, %v9348
      %v9477 = vsub.f32 %v4357, %v9349
      %v9478 = vsub.f32 %v4358, %v9350
      %v9479 = vsub.f32 %v4359, %v9351
      %v9480 = vsub.f32 %v4360, %v9352
      %v9481 = vsub.f32 %v4361, %v9353
      %v9482 = vsub.f32 %v4362, %v9354
      %v9483 = vsub.f32 %v4363, %v9355
      %v9484 = vsub.f32 %v4364, %v9356
      %v9485 = vsub.f32 %v4365, %v9357
      %v9486 = vsub.f32 %v4366, %v9358
      %v9487 = vsub.f32 %v4367, %v9359
      %v9488 = vsub.f32 %v4368, %v9360
      %v9489 = vsub.f32 %v4369, %v9361
      %v9490 = vsub.f32 %v4370, %v9362
      %v9491 = vsub.f32 %v4371, %v9363
      %v9492 = vsub.f32 %v4372, %v9364
      %v9493 = vsub.f32 %v4373, %v9365
      %v9494 = vsub.f32 %v4374, %v9366
      %v9495 = vsub.f32 %v4375, %v9367
      %v9496 = vsub.f32 %v4376, %v9368
      %v9497 = vsub.f32 %v4377, %v9369
      %v9498 = vsub.f32 %v4378, %v9370
      %v9499 = vsub.f32 %v4379, %v9371
      %v9500 = vsub.f32 %v4380, %v9372
      %v9501 = vsub.f32 %v4381, %v9373
      %v9502 = vsub.f32 %v4382, %v9374
      %v9503 = vsub.f32 %v4383, %v9375
      %v9504 = vsub.f32 %v4384, %v9376
      %v9505 = vsub.f32 %v4385, %v9377
      %v9506 = vsub.f32 %v4386, %v9378
      %v9507 = vsub.f32 %v4387, %v9379
      %v9508 = vsub.f32 %v4388, %v9380
      %v9509 = vsub.f32 %v4389, %v9381
      %v9510 = vsub.f32 %v4390, %v9382
      %v9511 = vsub.f32 %v4391, %v9383
      %v9512 = vsub.f32 %v4392, %v9384
      %v9513 = vsub.f32 %v4393, %v9385
      %v9514 = vsub.f32 %v4394, %v9386
      %v9515 = vsub.f32 %v4395, %v9387
      %v9516 = vsub.f32 %v4396, %v9388
      %v9517 = vsub.f32 %v4397, %v9389
      %v9518 = vsub.f32 %v4398, %v9390
      %v9519 = vsub.f32 %v4399, %v9391
      %v9520 = vsub.f32 %v4400, %v9392
      %v9521 = vlaneseq
      %v9522 = vand.u32 %v9521, 127
      %s9523 = smul.u32 0, 128
      %v9524 = vstv %s9523
      %v9525 = vadd.s32 %v9522, %v9524
      %v9526 = vld [vmem:[%s2] sm:$0xff]
      %v9527 = vld [vmem:[%s2 + $0x8] sm:$0xff]
      %v9528 = vld [vmem:[%s2 + $0x10] sm:$0xff]
      %v9529 = vld [vmem:[%s2 + $0x18] sm:$0xff]
      %v9530 = vld [vmem:[%s2 + $0x20] sm:$0xff]
      %v9531 = vld [vmem:[%s2 + $0x28] sm:$0xff]
      %v9532 = vld [vmem:[%s2 + $0x30] sm:$0xff]
      %v9533 = vld [vmem:[%s2 + $0x38] sm:$0xff]
      %v9534 = vld [vmem:[%s2 + $0x40] sm:$0xff]
      %v9535 = vld [vmem:[%s2 + $0x48] sm:$0xff]
      %v9536 = vld [vmem:[%s2 + $0x50] sm:$0xff]
      %v9537 = vld [vmem:[%s2 + $0x58] sm:$0xff]
      %v9538 = vld [vmem:[%s2 + $0x60] sm:$0xff]
      %v9539 = vld [vmem:[%s2 + $0x68] sm:$0xff]
      %v9540 = vld [vmem:[%s2 + $0x70] sm:$0xff]
      %v9541 = vld [vmem:[%s2 + $0x78] sm:$0xff]
      %v9542 = vld [vmem:[%s87] sm:$0x1]
      %9543 = vset.pattern.permute.xlu0 0
      %9544 = vperm.xlu0 %9543, %v9526
      %v9545 = vpop.permute.xlu0 %9544
      %9546 = vset.pattern.permute.xlu0 0
      %9547 = vperm.xlu0 %9546, %v9527
      %v9548 = vpop.permute.xlu0 %9547
      %9549 = vset.pattern.permute.xlu0 0
      %9550 = vperm.xlu0 %9549, %v9528
      %v9551 = vpop.permute.xlu0 %9550
      %9552 = vset.pattern.permute.xlu0 0
      %9553 = vperm.xlu0 %9552, %v9529
      %v9554 = vpop.permute.xlu0 %9553
      %9555 = vset.pattern.permute.xlu0 0
      %9556 = vperm.xlu0 %9555, %v9530
      %v9557 = vpop.permute.xlu0 %9556
      %9558 = vset.pattern.permute.xlu0 0
      %9559 = vperm.xlu0 %9558, %v9531
      %v9560 = vpop.permute.xlu0 %9559
      %9561 = vset.pattern.permute.xlu0 0
      %9562 = vperm.xlu0 %9561, %v9532
      %v9563 = vpop.permute.xlu0 %9562
      %9564 = vset.pattern.permute.xlu0 0
      %9565 = vperm.xlu0 %9564, %v9533
      %v9566 = vpop.permute.xlu0 %9565
      %9567 = vset.pattern.permute.xlu0 0
      %9568 = vperm.xlu0 %9567, %v9534
      %v9569 = vpop.permute.xlu0 %9568
      %9570 = vset.pattern.permute.xlu0 0
      %9571 = vperm.xlu0 %9570, %v9535
      %v9572 = vpop.permute.xlu0 %9571
      %9573 = vset.pattern.permute.xlu0 0
      %9574 = vperm.xlu0 %9573, %v9536
      %v9575 = vpop.permute.xlu0 %9574
      %9576 = vset.pattern.permute.xlu0 0
      %9577 = vperm.xlu0 %9576, %v9537
      %v9578 = vpop.permute.xlu0 %9577
      %9579 = vset.pattern.permute.xlu0 0
      %9580 = vperm.xlu0 %9579, %v9538
      %v9581 = vpop.permute.xlu0 %9580
      %9582 = vset.pattern.permute.xlu0 0
      %9583 = vperm.xlu0 %9582, %v9539
      %v9584 = vpop.permute.xlu0 %9583
      %9585 = vset.pattern.permute.xlu0 0
      %9586 = vperm.xlu0 %9585, %v9540
      %v9587 = vpop.permute.xlu0 %9586
      %9588 = vset.pattern.permute.xlu0 0
      %9589 = vperm.xlu0 %9588, %v9541
      %v9590 = vpop.permute.xlu0 %9589
      %v9591 = vlaneseq
      %v9592 = vshrl.u32 %v9591, 7
      %v9593 = vsub.s32 0, %v9592
      %v9594 = vrot.slane %v9542, %v9593
      %vm9595 = vcmp.eq.s32.totalorder %v9545, %v9594
      %vm9596 = vcmp.eq.s32.totalorder %v9548, %v9594
      %vm9597 = vcmp.eq.s32.totalorder %v9551, %v9594
      %vm9598 = vcmp.eq.s32.totalorder %v9554, %v9594
      %vm9599 = vcmp.eq.s32.totalorder %v9557, %v9594
      %vm9600 = vcmp.eq.s32.totalorder %v9560, %v9594
      %vm9601 = vcmp.eq.s32.totalorder %v9563, %v9594
      %vm9602 = vcmp.eq.s32.totalorder %v9566, %v9594
      %vm9603 = vcmp.eq.s32.totalorder %v9569, %v9594
      %vm9604 = vcmp.eq.s32.totalorder %v9572, %v9594
      %vm9605 = vcmp.eq.s32.totalorder %v9575, %v9594
      %vm9606 = vcmp.eq.s32.totalorder %v9578, %v9594
      %vm9607 = vcmp.eq.s32.totalorder %v9581, %v9594
      %vm9608 = vcmp.eq.s32.totalorder %v9584, %v9594
      %vm9609 = vcmp.eq.s32.totalorder %v9587, %v9594
      %vm9610 = vcmp.eq.s32.totalorder %v9590, %v9594
      %vm9611 = vcmp.lt.s32.totalorder %v9525, 8
      %v9612 = vsel %vm9611, 1, 0
      %vm9613 = vcmp.eq.s32.totalorder %v9612, 1
      %vm9614 = vmand %vm9595, %vm9613
      %vm9615 = vmand %vm9596, %vm9613
      %vm9616 = vmand %vm9597, %vm9613
      %vm9617 = vmand %vm9598, %vm9613
      %vm9618 = vmand %vm9599, %vm9613
      %vm9619 = vmand %vm9600, %vm9613
      %vm9620 = vmand %vm9601, %vm9613
      %vm9621 = vmand %vm9602, %vm9613
      %vm9622 = vmand %vm9603, %vm9613
      %vm9623 = vmand %vm9604, %vm9613
      %vm9624 = vmand %vm9605, %vm9613
      %vm9625 = vmand %vm9606, %vm9613
      %vm9626 = vmand %vm9607, %vm9613
      %vm9627 = vmand %vm9608, %vm9613
      %vm9628 = vmand %vm9609, %vm9613
      %vm9629 = vmand %vm9610, %vm9613
      %v9630 = vld [vmem:[#allocation5] sm:$0xff]
      %v9631 = vld [vmem:[#allocation5 + $0x8] sm:$0xff]
      %v9632 = vld [vmem:[#allocation5 + $0x10] sm:$0xff]
      %v9633 = vld [vmem:[#allocation5 + $0x18] sm:$0xff]
      %v9634 = vld [vmem:[#allocation5 + $0x20] sm:$0xff]
      %v9635 = vld [vmem:[#allocation5 + $0x28] sm:$0xff]
      %v9636 = vld [vmem:[#allocation5 + $0x30] sm:$0xff]
      %v9637 = vld [vmem:[#allocation5 + $0x38] sm:$0xff]
      %v9638 = vld [vmem:[#allocation5 + $0x40] sm:$0xff]
      %v9639 = vld [vmem:[#allocation5 + $0x48] sm:$0xff]
      %v9640 = vld [vmem:[#allocation5 + $0x50] sm:$0xff]
      %v9641 = vld [vmem:[#allocation5 + $0x58] sm:$0xff]
      %v9642 = vld [vmem:[#allocation5 + $0x60] sm:$0xff]
      %v9643 = vld [vmem:[#allocation5 + $0x68] sm:$0xff]
      %v9644 = vld [vmem:[#allocation5 + $0x70] sm:$0xff]
      %v9645 = vld [vmem:[#allocation5 + $0x78] sm:$0xff]
      %vm9774 = vcmask 1041409
      %v9775 = vsel %vm9774, %v9394, %v9393
      %vm9776 = vcmask 1042434
      %v9777 = vsel %vm9776, %v9395, %v9775
      %vm9778 = vcmask 1043459
      %v9779 = vsel %vm9778, %v9396, %v9777
      %vm9780 = vcmask 1044484
      %v9781 = vsel %vm9780, %v9397, %v9779
      %vm9782 = vcmask 1045509
      %v9783 = vsel %vm9782, %v9398, %v9781
      %vm9784 = vcmask 1046534
      %v9785 = vsel %vm9784, %v9399, %v9783
      %vm9786 = vcmask 1047559
      %v9787 = vsel %vm9786, %v9400, %v9785
      %v9788 = vsel %vm9774, %v9402, %v9401
      %v9789 = vsel %vm9776, %v9403, %v9788
      %v9790 = vsel %vm9778, %v9404, %v9789
      %v9791 = vsel %vm9780, %v9405, %v9790
      %v9792 = vsel %vm9782, %v9406, %v9791
      %v9793 = vsel %vm9784, %v9407, %v9792
      %v9794 = vsel %vm9786, %v9408, %v9793
      %v9795 = vsel %vm9774, %v9410, %v9409
      %v9796 = vsel %vm9776, %v9411, %v9795
      %v9797 = vsel %vm9778, %v9412, %v9796
      %v9798 = vsel %vm9780, %v9413, %v9797
      %v9799 = vsel %vm9782, %v9414, %v9798
      %v9800 = vsel %vm9784, %v9415, %v9799
      %v9801 = vsel %vm9786, %v9416, %v9800
      %v9802 = vsel %vm9774, %v9418, %v9417
      %v9803 = vsel %vm9776, %v9419, %v9802
      %v9804 = vsel %vm9778, %v9420, %v9803
      %v9805 = vsel %vm9780, %v9421, %v9804
      %v9806 = vsel %vm9782, %v9422, %v9805
      %v9807 = vsel %vm9784, %v9423, %v9806
      %v9808 = vsel %vm9786, %v9424, %v9807
      %v9809 = vsel %vm9774, %v9426, %v9425
      %v9810 = vsel %vm9776, %v9427, %v9809
      %v9811 = vsel %vm9778, %v9428, %v9810
      %v9812 = vsel %vm9780, %v9429, %v9811
      %v9813 = vsel %vm9782, %v9430, %v9812
      %v9814 = vsel %vm9784, %v9431, %v9813
      %v9815 = vsel %vm9786, %v9432, %v9814
      %v9816 = vsel %vm9774, %v9434, %v9433
      %v9817 = vsel %vm9776, %v9435, %v9816
      %v9818 = vsel %vm9778, %v9436, %v9817
      %v9819 = vsel %vm9780, %v9437, %v9818
      %v9820 = vsel %vm9782, %v9438, %v9819
      %v9821 = vsel %vm9784, %v9439, %v9820
      %v9822 = vsel %vm9786, %v9440, %v9821
      %v9823 = vsel %vm9774, %v9442, %v9441
      %v9824 = vsel %vm9776, %v9443, %v9823
      %v9825 = vsel %vm9778, %v9444, %v9824
      %v9826 = vsel %vm9780, %v9445, %v9825
      %v9827 = vsel %vm9782, %v9446, %v9826
      %v9828 = vsel %vm9784, %v9447, %v9827
      %v9829 = vsel %vm9786, %v9448, %v9828
      %v9830 = vsel %vm9774, %v9450, %v9449
      %v9831 = vsel %vm9776, %v9451, %v9830
      %v9832 = vsel %vm9778, %v9452, %v9831
      %v9833 = vsel %vm9780, %v9453, %v9832
      %v9834 = vsel %vm9782, %v9454, %v9833
      %v9835 = vsel %vm9784, %v9455, %v9834
      %v9836 = vsel %vm9786, %v9456, %v9835
      %v9837 = vsel %vm9774, %v9458, %v9457
      %v9838 = vsel %vm9776, %v9459, %v9837
      %v9839 = vsel %vm9778, %v9460, %v9838
      %v9840 = vsel %vm9780, %v9461, %v9839
      %v9841 = vsel %vm9782, %v9462, %v9840
      %v9842 = vsel %vm9784, %v9463, %v9841
      %v9843 = vsel %vm9786, %v9464, %v9842
      %v9844 = vsel %vm9774, %v9466, %v9465
      %v9845 = vsel %vm9776, %v9467, %v9844
      %v9846 = vsel %vm9778, %v9468, %v9845
      %v9847 = vsel %vm9780, %v9469, %v9846
      %v9848 = vsel %vm9782, %v9470, %v9847
      %v9849 = vsel %vm9784, %v9471, %v9848
      %v9850 = vsel %vm9786, %v9472, %v9849
      %v9851 = vsel %vm9774, %v9474, %v9473
      %v9852 = vsel %vm9776, %v9475, %v9851
      %v9853 = vsel %vm9778, %v9476, %v9852
      %v9854 = vsel %vm9780, %v9477, %v9853
      %v9855 = vsel %vm9782, %v9478, %v9854
      %v9856 = vsel %vm9784, %v9479, %v9855
      %v9857 = vsel %vm9786, %v9480, %v9856
      %v9858 = vsel %vm9774, %v9482, %v9481
      %v9859 = vsel %vm9776, %v9483, %v9858
      %v9860 = vsel %vm9778, %v9484, %v9859
      %v9861 = vsel %vm9780, %v9485, %v9860
      %v9862 = vsel %vm9782, %v9486, %v9861
      %v9863 = vsel %vm9784, %v9487, %v9862
      %v9864 = vsel %vm9786, %v9488, %v9863
      %v9865 = vsel %vm9774, %v9490, %v9489
      %v9866 = vsel %vm9776, %v9491, %v9865
      %v9867 = vsel %vm9778, %v9492, %v9866
      %v9868 = vsel %vm9780, %v9493, %v9867
      %v9869 = vsel %vm9782, %v9494, %v9868
      %v9870 = vsel %vm9784, %v9495, %v9869
      %v9871 = vsel %vm9786, %v9496, %v9870
      %v9872 = vsel %vm9774, %v9498, %v9497
      %v9873 = vsel %vm9776, %v9499, %v9872
      %v9874 = vsel %vm9778, %v9500, %v9873
      %v9875 = vsel %vm9780, %v9501, %v9874
      %v9876 = vsel %vm9782, %v9502, %v9875
      %v9877 = vsel %vm9784, %v9503, %v9876
      %v9878 = vsel %vm9786, %v9504, %v9877
      %v9879 = vsel %vm9774, %v9506, %v9505
      %v9880 = vsel %vm9776, %v9507, %v9879
      %v9881 = vsel %vm9778, %v9508, %v9880
      %v9882 = vsel %vm9780, %v9509, %v9881
      %v9883 = vsel %vm9782, %v9510, %v9882
      %v9884 = vsel %vm9784, %v9511, %v9883
      %v9885 = vsel %vm9786, %v9512, %v9884
      %v9886 = vsel %vm9774, %v9514, %v9513
      %v9887 = vsel %vm9776, %v9515, %v9886
      %v9888 = vsel %vm9778, %v9516, %v9887
      %v9889 = vsel %vm9780, %v9517, %v9888
      %v9890 = vsel %vm9782, %v9518, %v9889
      %v9891 = vsel %vm9784, %v9519, %v9890
      %v9892 = vsel %vm9786, %v9520, %v9891
      %v9909 = vsel %vm9614, %v9787, 0.0
      %v9910 = vsel %vm9615, %v9794, 0.0
      %v9911 = vsel %vm9616, %v9801, 0.0
      %v9912 = vsel %vm9617, %v9808, 0.0
      %v9913 = vsel %vm9618, %v9815, 0.0
      %v9914 = vsel %vm9619, %v9822, 0.0
      %v9915 = vsel %vm9620, %v9829, 0.0
      %v9916 = vsel %vm9621, %v9836, 0.0
      %v9917 = vsel %vm9622, %v9843, 0.0
      %v9918 = vsel %vm9623, %v9850, 0.0
      %v9919 = vsel %vm9624, %v9857, 0.0
      %v9920 = vsel %vm9625, %v9864, 0.0
      %v9921 = vsel %vm9626, %v9871, 0.0
      %v9922 = vsel %vm9627, %v9878, 0.0
      %v9923 = vsel %vm9628, %v9885, 0.0
      %v9924 = vsel %vm9629, %v9892, 0.0
      %v9925 = vadd.f32 %v9630, %v9909
      %v9926 = vadd.f32 %v9631, %v9910
      %v9927 = vadd.f32 %v9632, %v9911
      %v9928 = vadd.f32 %v9633, %v9912
      %v9929 = vadd.f32 %v9634, %v9913
      %v9930 = vadd.f32 %v9635, %v9914
      %v9931 = vadd.f32 %v9636, %v9915
      %v9932 = vadd.f32 %v9637, %v9916
      %v9933 = vadd.f32 %v9638, %v9917
      %v9934 = vadd.f32 %v9639, %v9918
      %v9935 = vadd.f32 %v9640, %v9919
      %v9936 = vadd.f32 %v9641, %v9920
      %v9937 = vadd.f32 %v9642, %v9921
      %v9938 = vadd.f32 %v9643, %v9922
      %v9939 = vadd.f32 %v9644, %v9923
      %v9940 = vadd.f32 %v9645, %v9924
      %9941 = vst [vmem:[#allocation5] sm:$0xff] %v9925
      %9942 = vst [vmem:[#allocation5 + $0x8] sm:$0xff] %v9926
      %9943 = vst [vmem:[#allocation5 + $0x10] sm:$0xff] %v9927
      %9944 = vst [vmem:[#allocation5 + $0x18] sm:$0xff] %v9928
      %9945 = vst [vmem:[#allocation5 + $0x20] sm:$0xff] %v9929
      %9946 = vst [vmem:[#allocation5 + $0x28] sm:$0xff] %v9930
      %9947 = vst [vmem:[#allocation5 + $0x30] sm:$0xff] %v9931
      %9948 = vst [vmem:[#allocation5 + $0x38] sm:$0xff] %v9932
      %9949 = vst [vmem:[#allocation5 + $0x40] sm:$0xff] %v9933
      %9950 = vst [vmem:[#allocation5 + $0x48] sm:$0xff] %v9934
      %9951 = vst [vmem:[#allocation5 + $0x50] sm:$0xff] %v9935
      %9952 = vst [vmem:[#allocation5 + $0x58] sm:$0xff] %v9936
      %9953 = vst [vmem:[#allocation5 + $0x60] sm:$0xff] %v9937
      %9954 = vst [vmem:[#allocation5 + $0x68] sm:$0xff] %v9938
      %9955 = vst [vmem:[#allocation5 + $0x70] sm:$0xff] %v9939
      %9956 = vst [vmem:[#allocation5 + $0x78] sm:$0xff] %v9940
    $region25: #{tpu_custom_call.1} parent=1 // pred_fallthru
      _
    // Predicated region
    $region26: #{tpu_custom_call.1} parent=1 // pred_check
      _
    $region27: #{tpu_custom_call.1} parent=1 // pred_check_branch
      %9958 = sbr.rel (0) target = $region29
    $region28: #{tpu_custom_call.1} parent=1 // pred_region
      %s9960 = ssub.s32 2048, 2048
      %9961 = vsyncadd [#allocation6], %s9960
      %s9962 = sshll.u32 [#allocation5], 4
      %s9963 = int_to_ptr.vmem [resolvable:$true] %s9962
      %9968 = dma.vmem_to_hbm [thread:$0]  %s9963, 2048, %s6, [#allocation6], 128, 128, 8
    $region29: #{tpu_custom_call.1} parent=1 // pred_fallthru
      _
    // Predicated region
    $region30: #{tpu_custom_call.1} parent=1 // pred_check
      _
    $region31: #{tpu_custom_call.1} parent=1 // pred_check_branch
      %9970 = sbr.rel (0) target = $region33
    $region32: #{tpu_custom_call.1} parent=1 // pred_region
      %9971 = dma.done [#allocation6], 2048
    $region33: #{tpu_custom_call.1} parent=1 // pred_fallthru
      _
    %9972 = vsyncpa [#allocation6], 1

</llo_original>
